<compile_context>
chip_gen: v7x
topology: tpu7x:2x2x1
jax: 0.10.0
libtpu: 0.0.40
codegen_flags: <defaults>
</compile_context>

<pallas_src>
import functools

import jax
import jax.numpy as jnp
from jax.experimental import pallas as pl
from jax.experimental.pallas import tpu as pltpu


# ------------------------------ fused kernel ------------------------------- #
def _fused_kernel(x_ref,                           # (tb*N, 8)   f32
                  w1r, b1r,                        # (8, 64) f32, (1, 64) f32
                  w2r, b2r,                        # (64, 128) bf16, (1, 128) f32
                  w3r, b3r,                        # (128, 256) bf16, (1, 256) f32
                  w4r, b4r,                        # (256, 1024) bf16, (1, 1024) f32
                  wf1r, bf1r,                      # (1024, 512) bf16, (1, 512) f32
                  wf2r, bf2r,                      # (512, 256) bf16, (1, 256) f32
                  wf3r, bf3r,                      # (256, 256) bf16, (1, 256) f32
                  out_ref,                         # (tb, 256)   f32
                  *, tb, n):
    # --- per-point MLP (Conv1d k=1 == channel matmul), folded BN, ReLU ---
    # Layer 1 stays f32: K=8 is negligible work and keeps raw-xyz precision.
    h = jnp.dot(x_ref[...], w1r[...], preferred_element_type=jnp.float32) + b1r[...]
    h = jnp.maximum(h, 0.0).astype(jnp.bfloat16)                  # (tb*n, 64)
    h = jnp.dot(h, w2r[...], preferred_element_type=jnp.float32) + b2r[...]
    h = jnp.maximum(h, 0.0).astype(jnp.bfloat16)                  # (tb*n, 128)
    h = jnp.dot(h, w3r[...], preferred_element_type=jnp.float32) + b3r[...]
    h = jnp.maximum(h, 0.0).astype(jnp.bfloat16)                  # (tb*n, 256)

    # --- layer 4 + symmetric max-pool (torch.max over points), chunked ---
    # 256-lane column chunks of w4: never materialize the (tb*n, 1024) f32 h.
    # NOTE: no ReLU after bn4 in the reference module.
    cchunk = 256
    pooled = []
    for c in range(1024 // cchunk):                # static 4-iteration unroll
        lo, hi = c * cchunk, (c + 1) * cchunk
        hc = jnp.dot(h, w4r[:, lo:hi], preferred_element_type=jnp.float32)
        hc = hc + b4r[:, lo:hi]                                   # (tb*n, 256)
        pooled.append(jnp.max(hc.reshape(tb, n, cchunk), axis=1))  # (tb, 256)
    g = jnp.concatenate(pooled, axis=-1).astype(jnp.bfloat16)     # (tb, 1024)

    # --- fused FC head ---
    f = jnp.dot(g, wf1r[...], preferred_element_type=jnp.float32) + bf1r[...]
    f = jnp.maximum(f, 0.0).astype(jnp.bfloat16)                  # (tb, 512)
    f = jnp.dot(f, wf2r[...], preferred_element_type=jnp.float32) + bf2r[...]
    f = jnp.maximum(f, 0.0).astype(jnp.bfloat16)                  # (tb, 256)
    f = jnp.dot(f, wf3r[...], preferred_element_type=jnp.float32) + bf3r[...]
    out_ref[...] = f.astype(out_ref.dtype)                        # (tb, 256)


# --------------------------------- wrapper --------------------------------- #
def _tensorcores_per_device():
    """One grid step per TensorCore: 2 on v7x, 1 on v5e/v6e."""
    try:
        kind = jax.devices()[0].device_kind.lower()
    except Exception:
        return 1
    return 2 if "v7" in kind else 1


def point_encoder(x, params):
    """x: (B, N, 3) float32. Returns (B, 256) float32."""
    B, N, C = x.shape
    assert C == 3

    g_steps = max(1, min(_tensorcores_per_device(), B))
    B_pad = -(-B // g_steps) * g_steps
    tb = B_pad // g_steps
    if (tb * N) % 8 != 0:            # keep input blocks sublane-aligned
        g_steps, B_pad, tb = 1, B, B

    # Pad xyz channels 3 -> 8 (zeros; w1 rows padded to match) and pad batch.
    xp = jnp.pad(x, ((0, B_pad - B), (0, 0), (0, 5)))
    x_flat = xp.reshape(B_pad * N, 8)                             # f32, no pre-cast

    bf16 = jnp.bfloat16
    w1 = jnp.pad(params["w1"], ((0, 5), (0, 0)))                  # (8, 64) f32
    w2 = params["w2"].astype(bf16)
    w3 = params["w3"].astype(bf16)
    w4 = params["w4"].astype(bf16)
    wf1 = params["wf1"].astype(bf16)
    wf2 = params["wf2"].astype(bf16)
    wf3 = params["wf3"].astype(bf16)
    b1, b2, b3, b4 = params["b1"], params["b2"], params["b3"], params["b4"]
    bf1, bf2, bf3 = params["bf1"], params["bf2"], params["bf3"]

    weights = [w1, b1, w2, b2, w3, b3, w4, b4,
               wf1, bf1, wf2, bf2, wf3, bf3]

    in_specs = [pl.BlockSpec((tb * N, 8), lambda i: (i, 0))]
    in_specs += [pl.BlockSpec(a.shape, lambda i: (0, 0)) for a in weights]

    flops = (2 * B_pad * N * (3 * 64 + 64 * 128 + 128 * 256 + 256 * 1024)
             + 2 * B_pad * (1024 * 512 + 512 * 256 + 256 * 256))
    bytes_acc = (int(x_flat.size) * 4
                 + sum(int(a.size) * a.dtype.itemsize for a in weights)
                 + B_pad * 256 * 4)

    out3 = pl.pallas_call(
        functools.partial(_fused_kernel, tb=tb, n=N),
        out_shape=jax.ShapeDtypeStruct((g_steps, tb, 256), jnp.float32),
        grid=(g_steps,),
        in_specs=in_specs,
        # Leading grid dim squeezed; last two block dims == full array dims,
        # so stores are always sublane/lane aligned regardless of tb.
        out_specs=pl.BlockSpec((None, tb, 256), lambda i: (i, 0, 0)),
        compiler_params=pltpu.CompilerParams(
            dimension_semantics=("parallel",),
            vmem_limit_bytes=32 << 20,
        ),
        cost_estimate=pl.CostEstimate(
            flops=flops, transcendentals=0, bytes_accessed=bytes_acc),
    )(x_flat, *weights)

    return out3.reshape(B_pad, 256)[:B]


# ------------------------- parameter construction ------------------------- #
def _init_linear(key, c_in, c_out):
    kw, kb = jax.random.split(key)
    scale = 1.0 / jnp.sqrt(jnp.float32(c_in))
    w = jax.random.uniform(kw, (c_in, c_out), jnp.float32, -scale, scale)
    b = jax.random.uniform(kb, (1, c_out), jnp.float32, -scale, scale)
    return w, b


def _init_bn(key, c):
    k1, k2, k3, k4 = jax.random.split(key, 4)
    gamma = 1.0 + 0.1 * jax.random.normal(k1, (c,), jnp.float32)
    beta = 0.1 * jax.random.normal(k2, (c,), jnp.float32)
    mean = 0.1 * jax.random.normal(k3, (c,), jnp.float32)
    var = 1.0 + 0.1 * jnp.abs(jax.random.normal(k4, (c,), jnp.float32))
    return gamma, beta, mean, var


def _fold_bn(w, b, gamma, beta, mean, var, eps=1e-5):
    # y = ((x @ w + b) - mean) / sqrt(var + eps) * gamma + beta
    scale = gamma / jnp.sqrt(var + eps)                           # (c_out,)
    w_eff = w * scale[None, :]
    b_eff = (b - mean[None, :]) * scale[None, :] + beta[None, :]
    return w_eff, b_eff


def make_params(key):
    keys = jax.random.split(key, 11)
    params = {}
    dims = [(3, 64), (64, 128), (128, 256), (256, 1024)]
    for i, (ci, co) in enumerate(dims, start=1):
        w, b = _init_linear(keys[i - 1], ci, co)
        g, bt, m, v = _init_bn(keys[3 + i], co)
        w, b = _fold_bn(w, b, g, bt, m, v)
        params[f"w{i}"], params[f"b{i}"] = w, b
    params["wf1"], params["bf1"] = _init_linear(keys[8], 1024, 512)
    params["wf2"], params["bf2"] = _init_linear(keys[9], 512, 256)
    params["wf3"], params["bf3"] = _init_linear(keys[10], 256, 256)
    return params


def point_encoder_ref(x, p):
    """Pure-JAX f32 reference for validation."""
    h = jax.nn.relu(jnp.einsum("bnc,cd->bnd", x, p["w1"]) + p["b1"])
    h = jax.nn.relu(jnp.einsum("bnc,cd->bnd", h, p["w2"]) + p["b2"])
    h = jax.nn.relu(jnp.einsum("bnc,cd->bnd", h, p["w3"]) + p["b3"])
    h = jnp.einsum("bnc,cd->bnd", h, p["w4"]) + p["b4"]
    g = jnp.max(h, axis=1)                                        # (B, 1024)
    f = jax.nn.relu(g @ p["wf1"] + p["bf1"])
    f = jax.nn.relu(f @ p["wf2"] + p["bf2"])
    return f @ p["wf3"] + p["bf3"]


if __name__ == "__main__":
    B, N = 8, 128                                                 # batch, num points
    key = jax.random.PRNGKey(0)
    k_x, k_p = jax.random.split(key)
    x = jax.random.normal(k_x, (B, N, 3), jnp.float32)
    params = make_params(k_p)

    out = jax.block_until_ready(point_encoder(x, params))

    ref = point_encoder_ref(x, params)
    assert out.shape == (B, 256), out.shape
    assert bool(jnp.all(jnp.isfinite(out)))
    # bf16 MXU inputs (layers 2+) with f32 accumulation -> looser tolerance.
    assert jnp.allclose(out, ref, atol=5e-2, rtol=5e-2), float(
        jnp.max(jnp.abs(out - ref)))
    print("KERNEL_OK")
</pallas_src>

<mosaic_0001>
module attributes {stable_mosaic.version = 11 : i64} {
  func.func @_fused_kernel(%arg0: i32, %arg1: memref<1024x8xf32, #tpu.memory_space<vmem>>, %arg2: memref<8x64xf32, #tpu.memory_space<vmem>>, %arg3: memref<1x64xf32, #tpu.memory_space<vmem>>, %arg4: memref<64x128xbf16, #tpu.memory_space<vmem>>, %arg5: memref<1x128xf32, #tpu.memory_space<vmem>>, %arg6: memref<128x256xbf16, #tpu.memory_space<vmem>>, %arg7: memref<1x256xf32, #tpu.memory_space<vmem>>, %arg8: memref<256x1024xbf16, #tpu.memory_space<vmem>>, %arg9: memref<1x1024xf32, #tpu.memory_space<vmem>>, %arg10: memref<1024x512xbf16, #tpu.memory_space<vmem>>, %arg11: memref<1x512xf32, #tpu.memory_space<vmem>>, %arg12: memref<512x256xbf16, #tpu.memory_space<vmem>>, %arg13: memref<1x256xf32, #tpu.memory_space<vmem>>, %arg14: memref<256x256xbf16, #tpu.memory_space<vmem>>, %arg15: memref<1x256xf32, #tpu.memory_space<vmem>>, %arg16: memref<1x8x256xf32, #tpu.memory_space<vmem>>) attributes {dimension_semantics = [#tpu.dimension_semantics<parallel>], iteration_bounds = array<i64: 1>, scalar_prefetch = 0 : i64, scratch_operands = 0 : i64, tpu.core_type = #tpu.core_type<tc>, window_params = [{transform_indices = @transform_0, window_bounds = array<i64: 1024, 8>}, {pipeline_mode = #tpu.pipeline_mode<synchronous>, transform_indices = @transform_1, window_bounds = array<i64: 8, 64>}, {pipeline_mode = #tpu.pipeline_mode<synchronous>, transform_indices = @transform_2, window_bounds = array<i64: 1, 64>}, {pipeline_mode = #tpu.pipeline_mode<synchronous>, transform_indices = @transform_3, window_bounds = array<i64: 64, 128>}, {pipeline_mode = #tpu.pipeline_mode<synchronous>, transform_indices = @transform_4, window_bounds = array<i64: 1, 128>}, {pipeline_mode = #tpu.pipeline_mode<synchronous>, transform_indices = @transform_5, window_bounds = array<i64: 128, 256>}, {pipeline_mode = #tpu.pipeline_mode<synchronous>, transform_indices = @transform_6, window_bounds = array<i64: 1, 256>}, {pipeline_mode = #tpu.pipeline_mode<synchronous>, transform_indices = @transform_7, window_bounds = array<i64: 256, 1024>}, {pipeline_mode = #tpu.pipeline_mode<synchronous>, transform_indices = @transform_8, window_bounds = array<i64: 1, 1024>}, {pipeline_mode = #tpu.pipeline_mode<synchronous>, transform_indices = @transform_9, window_bounds = array<i64: 1024, 512>}, {pipeline_mode = #tpu.pipeline_mode<synchronous>, transform_indices = @transform_10, window_bounds = array<i64: 1, 512>}, {pipeline_mode = #tpu.pipeline_mode<synchronous>, transform_indices = @transform_11, window_bounds = array<i64: 512, 256>}, {pipeline_mode = #tpu.pipeline_mode<synchronous>, transform_indices = @transform_12, window_bounds = array<i64: 1, 256>}, {pipeline_mode = #tpu.pipeline_mode<synchronous>, transform_indices = @transform_13, window_bounds = array<i64: 256, 256>}, {pipeline_mode = #tpu.pipeline_mode<synchronous>, transform_indices = @transform_14, window_bounds = array<i64: 1, 256>}, {transform_indices = @transform_15, window_bounds = array<i64: 1, 8, 256>}]} {
    %c0 = arith.constant 0 : index
    %c0_0 = arith.constant 0 : index
    %0 = vector.load %arg1[%c0, %c0_0] : memref<1024x8xf32, #tpu.memory_space<vmem>>, vector<1024x8xf32>
    %c0_1 = arith.constant 0 : index
    %c0_2 = arith.constant 0 : index
    %1 = vector.load %arg2[%c0_1, %c0_2] : memref<8x64xf32, #tpu.memory_space<vmem>>, vector<8x64xf32>
    %cst = arith.constant dense<0.000000e+00> : vector<1024x64xf32>
    %2 = tpu.matmul %0, %1, %cst {dimension_numbers = #tpu.dot_dimension_numbers<[1], [0], [0], [1], [0, 0, 1, 1], [], []>} : vector<1024x8xf32>, vector<8x64xf32>, vector<1024x64xf32> -> vector<1024x64xf32>
    %c0_3 = arith.constant 0 : index
    %c0_4 = arith.constant 0 : index
    %3 = vector.load %arg3[%c0_3, %c0_4] : memref<1x64xf32, #tpu.memory_space<vmem>>, vector<1x64xf32>
    %4 = vector.broadcast %3 : vector<1x64xf32> to vector<1024x64xf32>
    %5 = arith.addf %2, %4 : vector<1024x64xf32>
    %cst_5 = arith.constant 0.000000e+00 : f32
    %6 = vector.broadcast %cst_5 : f32 to vector<1024x64xf32>
    %7 = arith.maximumf %5, %6 : vector<1024x64xf32>
    %8 = arith.truncf %7 : vector<1024x64xf32> to vector<1024x64xbf16>
    %c0_6 = arith.constant 0 : index
    %c0_7 = arith.constant 0 : index
    %9 = vector.load %arg4[%c0_6, %c0_7] : memref<64x128xbf16, #tpu.memory_space<vmem>>, vector<64x128xbf16>
    %cst_8 = arith.constant dense<0.000000e+00> : vector<1024x128xf32>
    %10 = tpu.matmul %8, %9, %cst_8 {dimension_numbers = #tpu.dot_dimension_numbers<[1], [0], [0], [1], [0, 0, 1, 1], [], []>} : vector<1024x64xbf16>, vector<64x128xbf16>, vector<1024x128xf32> -> vector<1024x128xf32>
    %c0_9 = arith.constant 0 : index
    %c0_10 = arith.constant 0 : index
    %11 = vector.load %arg5[%c0_9, %c0_10] : memref<1x128xf32, #tpu.memory_space<vmem>>, vector<1x128xf32>
    %12 = vector.broadcast %11 : vector<1x128xf32> to vector<1024x128xf32>
    %13 = arith.addf %10, %12 : vector<1024x128xf32>
    %cst_11 = arith.constant 0.000000e+00 : f32
    %14 = vector.broadcast %cst_11 : f32 to vector<1024x128xf32>
    %15 = arith.maximumf %13, %14 : vector<1024x128xf32>
    %16 = arith.truncf %15 : vector<1024x128xf32> to vector<1024x128xbf16>
    %c0_12 = arith.constant 0 : index
    %c0_13 = arith.constant 0 : index
    %17 = vector.load %arg6[%c0_12, %c0_13] : memref<128x256xbf16, #tpu.memory_space<vmem>>, vector<128x256xbf16>
    %cst_14 = arith.constant dense<0.000000e+00> : vector<1024x256xf32>
    %18 = tpu.matmul %16, %17, %cst_14 {dimension_numbers = #tpu.dot_dimension_numbers<[1], [0], [0], [1], [0, 0, 1, 1], [], []>} : vector<1024x128xbf16>, vector<128x256xbf16>, vector<1024x256xf32> -> vector<1024x256xf32>
    %c0_15 = arith.constant 0 : index
    %c0_16 = arith.constant 0 : index
    %19 = vector.load %arg7[%c0_15, %c0_16] : memref<1x256xf32, #tpu.memory_space<vmem>>, vector<1x256xf32>
    %20 = vector.broadcast %19 : vector<1x256xf32> to vector<1024x256xf32>
    %21 = arith.addf %18, %20 : vector<1024x256xf32>
    %cst_17 = arith.constant 0.000000e+00 : f32
    %22 = vector.broadcast %cst_17 : f32 to vector<1024x256xf32>
    %23 = arith.maximumf %21, %22 : vector<1024x256xf32>
    %24 = arith.truncf %23 : vector<1024x256xf32> to vector<1024x256xbf16>
    %c0_18 = arith.constant 0 : index
    %c0_19 = arith.constant 0 : index
    %25 = vector.load %arg8[%c0_18, %c0_19] : memref<256x1024xbf16, #tpu.memory_space<vmem>>, vector<256x256xbf16>
    %cst_20 = arith.constant dense<0.000000e+00> : vector<1024x256xf32>
    %26 = tpu.matmul %24, %25, %cst_20 {dimension_numbers = #tpu.dot_dimension_numbers<[1], [0], [0], [1], [0, 0, 1, 1], [], []>} : vector<1024x256xbf16>, vector<256x256xbf16>, vector<1024x256xf32> -> vector<1024x256xf32>
    %c0_21 = arith.constant 0 : index
    %c0_22 = arith.constant 0 : index
    %27 = vector.load %arg9[%c0_21, %c0_22] : memref<1x1024xf32, #tpu.memory_space<vmem>>, vector<1x256xf32>
    %28 = vector.broadcast %27 : vector<1x256xf32> to vector<1024x256xf32>
    %29 = arith.addf %26, %28 : vector<1024x256xf32>
    %30 = vector.shape_cast %29 : vector<1024x256xf32> to vector<8x128x256xf32>
    %cst_23 = arith.constant dense<0xFF800000> : vector<8x256xf32>
    %31 = vector.multi_reduction <maximumf>, %30, %cst_23 [1] : vector<8x128x256xf32> to vector<8x256xf32>
    %c0_24 = arith.constant 0 : index
    %c256 = arith.constant 256 : index
    %32 = vector.load %arg8[%c0_24, %c256] : memref<256x1024xbf16, #tpu.memory_space<vmem>>, vector<256x256xbf16>
    %cst_25 = arith.constant dense<0.000000e+00> : vector<1024x256xf32>
    %33 = tpu.matmul %24, %32, %cst_25 {dimension_numbers = #tpu.dot_dimension_numbers<[1], [0], [0], [1], [0, 0, 1, 1], [], []>} : vector<1024x256xbf16>, vector<256x256xbf16>, vector<1024x256xf32> -> vector<1024x256xf32>
    %c0_26 = arith.constant 0 : index
    %c256_27 = arith.constant 256 : index
    %34 = vector.load %arg9[%c0_26, %c256_27] : memref<1x1024xf32, #tpu.memory_space<vmem>>, vector<1x256xf32>
    %35 = vector.broadcast %34 : vector<1x256xf32> to vector<1024x256xf32>
    %36 = arith.addf %33, %35 : vector<1024x256xf32>
    %37 = vector.shape_cast %36 : vector<1024x256xf32> to vector<8x128x256xf32>
    %cst_28 = arith.constant dense<0xFF800000> : vector<8x256xf32>
    %38 = vector.multi_reduction <maximumf>, %37, %cst_28 [1] : vector<8x128x256xf32> to vector<8x256xf32>
    %c0_29 = arith.constant 0 : index
    %c512 = arith.constant 512 : index
    %39 = vector.load %arg8[%c0_29, %c512] : memref<256x1024xbf16, #tpu.memory_space<vmem>>, vector<256x256xbf16>
    %cst_30 = arith.constant dense<0.000000e+00> : vector<1024x256xf32>
    %40 = tpu.matmul %24, %39, %cst_30 {dimension_numbers = #tpu.dot_dimension_numbers<[1], [0], [0], [1], [0, 0, 1, 1], [], []>} : vector<1024x256xbf16>, vector<256x256xbf16>, vector<1024x256xf32> -> vector<1024x256xf32>
    %c0_31 = arith.constant 0 : index
    %c512_32 = arith.constant 512 : index
    %41 = vector.load %arg9[%c0_31, %c512_32] : memref<1x1024xf32, #tpu.memory_space<vmem>>, vector<1x256xf32>
    %42 = vector.broadcast %41 : vector<1x256xf32> to vector<1024x256xf32>
    %43 = arith.addf %40, %42 : vector<1024x256xf32>
    %44 = vector.shape_cast %43 : vector<1024x256xf32> to vector<8x128x256xf32>
    %cst_33 = arith.constant dense<0xFF800000> : vector<8x256xf32>
    %45 = vector.multi_reduction <maximumf>, %44, %cst_33 [1] : vector<8x128x256xf32> to vector<8x256xf32>
    %c0_34 = arith.constant 0 : index
    %c768 = arith.constant 768 : index
    %46 = vector.load %arg8[%c0_34, %c768] : memref<256x1024xbf16, #tpu.memory_space<vmem>>, vector<256x256xbf16>
    %cst_35 = arith.constant dense<0.000000e+00> : vector<1024x256xf32>
    %47 = tpu.matmul %24, %46, %cst_35 {dimension_numbers = #tpu.dot_dimension_numbers<[1], [0], [0], [1], [0, 0, 1, 1], [], []>} : vector<1024x256xbf16>, vector<256x256xbf16>, vector<1024x256xf32> -> vector<1024x256xf32>
    %c0_36 = arith.constant 0 : index
    %c768_37 = arith.constant 768 : index
    %48 = vector.load %arg9[%c0_36, %c768_37] : memref<1x1024xf32, #tpu.memory_space<vmem>>, vector<1x256xf32>
    %49 = vector.broadcast %48 : vector<1x256xf32> to vector<1024x256xf32>
    %50 = arith.addf %47, %49 : vector<1024x256xf32>
    %51 = vector.shape_cast %50 : vector<1024x256xf32> to vector<8x128x256xf32>
    %cst_38 = arith.constant dense<0xFF800000> : vector<8x256xf32>
    %52 = vector.multi_reduction <maximumf>, %51, %cst_38 [1] : vector<8x128x256xf32> to vector<8x256xf32>
    %53 = tpu.concatenate %31, %38, %45, %52 in 1 : vector<8x256xf32>, vector<8x256xf32>, vector<8x256xf32>, vector<8x256xf32> -> vector<8x1024xf32>
    %54 = arith.truncf %53 : vector<8x1024xf32> to vector<8x1024xbf16>
    %c0_39 = arith.constant 0 : index
    %c0_40 = arith.constant 0 : index
    %55 = vector.load %arg10[%c0_39, %c0_40] : memref<1024x512xbf16, #tpu.memory_space<vmem>>, vector<1024x512xbf16>
    %cst_41 = arith.constant dense<0.000000e+00> : vector<8x512xf32>
    %56 = tpu.matmul %54, %55, %cst_41 {dimension_numbers = #tpu.dot_dimension_numbers<[1], [0], [0], [1], [0, 0, 1, 1], [], []>} : vector<8x1024xbf16>, vector<1024x512xbf16>, vector<8x512xf32> -> vector<8x512xf32>
    %c0_42 = arith.constant 0 : index
    %c0_43 = arith.constant 0 : index
    %57 = vector.load %arg11[%c0_42, %c0_43] : memref<1x512xf32, #tpu.memory_space<vmem>>, vector<1x512xf32>
    %58 = vector.broadcast %57 : vector<1x512xf32> to vector<8x512xf32>
    %59 = arith.addf %56, %58 : vector<8x512xf32>
    %cst_44 = arith.constant 0.000000e+00 : f32
    %60 = vector.broadcast %cst_44 : f32 to vector<8x512xf32>
    %61 = arith.maximumf %59, %60 : vector<8x512xf32>
    %62 = arith.truncf %61 : vector<8x512xf32> to vector<8x512xbf16>
    %c0_45 = arith.constant 0 : index
    %c0_46 = arith.constant 0 : index
    %63 = vector.load %arg12[%c0_45, %c0_46] : memref<512x256xbf16, #tpu.memory_space<vmem>>, vector<512x256xbf16>
    %cst_47 = arith.constant dense<0.000000e+00> : vector<8x256xf32>
    %64 = tpu.matmul %62, %63, %cst_47 {dimension_numbers = #tpu.dot_dimension_numbers<[1], [0], [0], [1], [0, 0, 1, 1], [], []>} : vector<8x512xbf16>, vector<512x256xbf16>, vector<8x256xf32> -> vector<8x256xf32>
    %c0_48 = arith.constant 0 : index
    %c0_49 = arith.constant 0 : index
    %65 = vector.load %arg13[%c0_48, %c0_49] : memref<1x256xf32, #tpu.memory_space<vmem>>, vector<1x256xf32>
    %66 = vector.broadcast %65 : vector<1x256xf32> to vector<8x256xf32>
    %67 = arith.addf %64, %66 : vector<8x256xf32>
    %cst_50 = arith.constant 0.000000e+00 : f32
    %68 = vector.broadcast %cst_50 : f32 to vector<8x256xf32>
    %69 = arith.maximumf %67, %68 : vector<8x256xf32>
    %70 = arith.truncf %69 : vector<8x256xf32> to vector<8x256xbf16>
    %c0_51 = arith.constant 0 : index
    %c0_52 = arith.constant 0 : index
    %71 = vector.load %arg14[%c0_51, %c0_52] : memref<256x256xbf16, #tpu.memory_space<vmem>>, vector<256x256xbf16>
    %cst_53 = arith.constant dense<0.000000e+00> : vector<8x256xf32>
    %72 = tpu.matmul %70, %71, %cst_53 {dimension_numbers = #tpu.dot_dimension_numbers<[1], [0], [0], [1], [0, 0, 1, 1], [], []>} : vector<8x256xbf16>, vector<256x256xbf16>, vector<8x256xf32> -> vector<8x256xf32>
    %c0_54 = arith.constant 0 : index
    %c0_55 = arith.constant 0 : index
    %73 = vector.load %arg15[%c0_54, %c0_55] : memref<1x256xf32, #tpu.memory_space<vmem>>, vector<1x256xf32>
    %74 = vector.broadcast %73 : vector<1x256xf32> to vector<8x256xf32>
    %75 = arith.addf %72, %74 : vector<8x256xf32>
    %c0_56 = arith.constant 0 : index
    %c0_57 = arith.constant 0 : index
    %c0_58 = arith.constant 0 : index
    %76 = vector.load %arg16[%c0_56, %c0_57, %c0_58] : memref<1x8x256xf32, #tpu.memory_space<vmem>>, vector<1x8x256xf32>
    %77 = vector.shape_cast %76 : vector<1x8x256xf32> to vector<8x256xf32>
    %78 = vector.shape_cast %75 : vector<8x256xf32> to vector<1x8x256xf32>
    tpu.vector_store %arg16[%c0_56, %c0_57, %c0_58], %78 {strides = array<i32>} : memref<1x8x256xf32, #tpu.memory_space<vmem>>, vector<1x8x256xf32>,
    return
  }
  func.func @transform_0(%arg0: i32) -> (i32, i32) {
    %c0_i32 = arith.constant 0 : i32
    %c0_i32_0 = arith.constant 0 : i32
    return %arg0, %c0_i32 : i32, i32
  }
  func.func @transform_1(%arg0: i32) -> (i32, i32) {
    %c0_i32 = arith.constant 0 : i32
    %c0_i32_0 = arith.constant 0 : i32
    %c0_i32_1 = arith.constant 0 : i32
    return %c0_i32, %c0_i32_0 : i32, i32
  }
  func.func @transform_2(%arg0: i32) -> (i32, i32) {
    %c0_i32 = arith.constant 0 : i32
    %c0_i32_0 = arith.constant 0 : i32
    %c0_i32_1 = arith.constant 0 : i32
    return %c0_i32, %c0_i32_0 : i32, i32
  }
  func.func @transform_3(%arg0: i32) -> (i32, i32) {
    %c0_i32 = arith.constant 0 : i32
    %c0_i32_0 = arith.constant 0 : i32
    %c0_i32_1 = arith.constant 0 : i32
    return %c0_i32, %c0_i32_0 : i32, i32
  }
  func.func @transform_4(%arg0: i32) -> (i32, i32) {
    %c0_i32 = arith.constant 0 : i32
    %c0_i32_0 = arith.constant 0 : i32
    %c0_i32_1 = arith.constant 0 : i32
    return %c0_i32, %c0_i32_0 : i32, i32
  }
  func.func @transform_5(%arg0: i32) -> (i32, i32) {
    %c0_i32 = arith.constant 0 : i32
    %c0_i32_0 = arith.constant 0 : i32
    %c0_i32_1 = arith.constant 0 : i32
    return %c0_i32, %c0_i32_0 : i32, i32
  }
  func.func @transform_6(%arg0: i32) -> (i32, i32) {
    %c0_i32 = arith.constant 0 : i32
    %c0_i32_0 = arith.constant 0 : i32
    %c0_i32_1 = arith.constant 0 : i32
    return %c0_i32, %c0_i32_0 : i32, i32
  }
  func.func @transform_7(%arg0: i32) -> (i32, i32) {
    %c0_i32 = arith.constant 0 : i32
    %c0_i32_0 = arith.constant 0 : i32
    %c0_i32_1 = arith.constant 0 : i32
    return %c0_i32, %c0_i32_0 : i32, i32
  }
  func.func @transform_8(%arg0: i32) -> (i32, i32) {
    %c0_i32 = arith.constant 0 : i32
    %c0_i32_0 = arith.constant 0 : i32
    %c0_i32_1 = arith.constant 0 : i32
    return %c0_i32, %c0_i32_0 : i32, i32
  }
  func.func @transform_9(%arg0: i32) -> (i32, i32) {
    %c0_i32 = arith.constant 0 : i32
    %c0_i32_0 = arith.constant 0 : i32
    %c0_i32_1 = arith.constant 0 : i32
    return %c0_i32, %c0_i32_0 : i32, i32
  }
  func.func @transform_10(%arg0: i32) -> (i32, i32) {
    %c0_i32 = arith.constant 0 : i32
    %c0_i32_0 = arith.constant 0 : i32
    %c0_i32_1 = arith.constant 0 : i32
    return %c0_i32, %c0_i32_0 : i32, i32
  }
  func.func @transform_11(%arg0: i32) -> (i32, i32) {
    %c0_i32 = arith.constant 0 : i32
    %c0_i32_0 = arith.constant 0 : i32
    %c0_i32_1 = arith.constant 0 : i32
    return %c0_i32, %c0_i32_0 : i32, i32
  }
  func.func @transform_12(%arg0: i32) -> (i32, i32) {
    %c0_i32 = arith.constant 0 : i32
    %c0_i32_0 = arith.constant 0 : i32
    %c0_i32_1 = arith.constant 0 : i32
    return %c0_i32, %c0_i32_0 : i32, i32
  }
  func.func @transform_13(%arg0: i32) -> (i32, i32) {
    %c0_i32 = arith.constant 0 : i32
    %c0_i32_0 = arith.constant 0 : i32
    %c0_i32_1 = arith.constant 0 : i32
    return %c0_i32, %c0_i32_0 : i32, i32
  }
  func.func @transform_14(%arg0: i32) -> (i32, i32) {
    %c0_i32 = arith.constant 0 : i32
    %c0_i32_0 = arith.constant 0 : i32
    %c0_i32_1 = arith.constant 0 : i32
    return %c0_i32, %c0_i32_0 : i32, i32
  }
  func.func @transform_15(%arg0: i32) -> (i32, i32, i32) {
    %c0_i32 = arith.constant 0 : i32
    %c0_i32_0 = arith.constant 0 : i32
    %c0_i32_1 = arith.constant 0 : i32
    return %arg0, %c0_i32, %c0_i32_0 : i32, i32, i32
  }
}

</mosaic_0001>

<llo_original>
// kernel: tpu_custom_call.1
$region0: #{tpu_custom_call.1}
  #allocation0 [shape = 'u32[]', space=smem, size = 0x4, offset = 0x4, fixed_abs, tag = 'smem constant byte address 0x4 - core index']
  #allocation1 [shape = 'u32[144,128]{1,0:T(1,128)}', space=vmem, size = 0x12000, scoped, tag = 'internal scratch']
  %s0 = inlined_call_operand.vmem [shape: f32[1024,8], index: 0, kind: input, shape index: {}]
  %s1 = inlined_call_operand.vmem [shape: f32[8,64], index: 1, kind: input, shape index: {}]
  %s2 = inlined_call_operand.vmem [shape: f32[1,64], index: 2, kind: input, shape index: {}]
  %s3 = inlined_call_operand.vmem [shape: bf16[64,128], index: 3, kind: input, shape index: {}]
  %s4 = inlined_call_operand.vmem [shape: f32[1,128], index: 4, kind: input, shape index: {}]
  %s5 = inlined_call_operand.hbm [shape: bf16[128,256], index: 5, kind: input, shape index: {}]
  %s6 = inlined_call_operand.vmem [shape: f32[1,256], index: 6, kind: input, shape index: {}]
  %s7 = inlined_call_operand.vmem [shape: bf16[256,1024], index: 7, kind: input, shape index: {}]
  %s8 = inlined_call_operand.vmem [shape: f32[1,1024], index: 8, kind: input, shape index: {}]
  %s9 = inlined_call_operand.hbm [shape: bf16[1024,512], index: 9, kind: input, shape index: {}]
  %s10 = inlined_call_operand.vmem [shape: f32[1,512], index: 10, kind: input, shape index: {}]
  %s11 = inlined_call_operand.hbm [shape: bf16[512,256], index: 11, kind: input, shape index: {}]
  %s12 = inlined_call_operand.vmem [shape: f32[1,256], index: 12, kind: input, shape index: {}]
  %s13 = inlined_call_operand.hbm [shape: bf16[256,256], index: 13, kind: input, shape index: {}]
  %s14 = inlined_call_operand.vmem [shape: f32[1,256], index: 14, kind: input, shape index: {}]
  %s15 = inlined_call_operand.hbm [shape: f32[1,8,256], index: 15, kind: output, shape index: {}]
  %s16 = sld [smem:[#allocation0]]
  $region86: #{tpu_custom_call.1} parent=0
    _
  %s18 = ssub.s32 1, %s16
  %s19 = scalar_select 0, %s18, %s16
  $region1: #{tpu_custom_call.1} parent=0
    #allocation2 [shape = 'u8[65536]{0}', space=vmem, size = 0x10000, scoped, tag = 'input window, operand 5, single buffered']
    #allocation3 [shape = 's32[1]{0}', space=sflag, size = 0x4, scoped, tag = 'scoped memory for tpu_custom_call.1']
    #allocation4 [shape = 's32[1]{0}', space=sflag, size = 0x4, scoped, tag = 'scoped memory for tpu_custom_call.1']
    #allocation5 [shape = 'u8[1048576]{0}', space=vmem, size = 0x100000, scoped, tag = 'input window, operand 9, single buffered']
    #allocation6 [shape = 's32[1]{0}', space=sflag, size = 0x4, scoped, tag = 'scoped memory for tpu_custom_call.1']
    #allocation7 [shape = 'u8[262144]{0}', space=vmem, size = 0x40000, scoped, tag = 'input window, operand 11, single buffered']
    #allocation8 [shape = 'u8[131072]{0}', space=vmem, size = 0x20000, scoped, tag = 'input window, operand 13, single buffered']
    #allocation9 [shape = 's32[1]{0}', space=sflag, size = 0x4, scoped, tag = 'scoped memory for tpu_custom_call.1']
    #allocation10 [shape = 'u8[8192]{0}', space=vmem, size = 0x2000, scoped, tag = 'output window, operand 0, single buffered']
    %20 = vsyncpa [#allocation3], 0
    %21 = vsyncpa [#allocation6], 0
    %22 = vsyncpa [#allocation9], 0
    %23 = vsyncpa [#allocation4], 0
    // Predicated region
    $region2: #{tpu_custom_call.1} parent=1 // pred_check
      _
    $region3: #{tpu_custom_call.1} parent=1 // pred_check_branch
      %25 = sbr.rel (0) target = $region5
    $region4: #{tpu_custom_call.1} parent=1 // pred_region
      _
    $region5: #{tpu_custom_call.1} parent=1 // pred_fallthru
      _
    // Predicated region
    $region6: #{tpu_custom_call.1} parent=1 // pred_check
      _
    $region7: #{tpu_custom_call.1} parent=1 // pred_check_branch
      %27 = sbr.rel (0) target = $region9
    $region8: #{tpu_custom_call.1} parent=1 // pred_region
      _
    $region9: #{tpu_custom_call.1} parent=1 // pred_fallthru
      _
    // Predicated region
    $region10: #{tpu_custom_call.1} parent=1 // pred_check
      _
    $region11: #{tpu_custom_call.1} parent=1 // pred_check_branch
      %29 = sbr.rel (0) target = $region13
    $region12: #{tpu_custom_call.1} parent=1 // pred_region
      _
    $region13: #{tpu_custom_call.1} parent=1 // pred_fallthru
      _
    // Predicated region
    $region14: #{tpu_custom_call.1} parent=1 // pred_check
      _
    $region15: #{tpu_custom_call.1} parent=1 // pred_check_branch
      %31 = sbr.rel (0) target = $region17
    $region16: #{tpu_custom_call.1} parent=1 // pred_region
      _
    $region17: #{tpu_custom_call.1} parent=1 // pred_fallthru
      _
    // Predicated region
    $region18: #{tpu_custom_call.1} parent=1 // pred_check
      _
    $region19: #{tpu_custom_call.1} parent=1 // pred_check_branch
      %33 = sbr.rel (0) target = $region21
    $region20: #{tpu_custom_call.1} parent=1 // pred_region
      _
    $region21: #{tpu_custom_call.1} parent=1 // pred_fallthru
      _
    // Predicated region
    $region22: #{tpu_custom_call.1} parent=1 // pred_check
      _
    $region23: #{tpu_custom_call.1} parent=1 // pred_check_branch
      %35 = sbr.rel (0) target = $region25
    $region24: #{tpu_custom_call.1} parent=1 // pred_region
      %s37 = ssub.s32 2048, 2048
      %38 = vsyncadd [#allocation3], %s37
      %s39 = sshll.u32 [#allocation2], 4
      %s40 = int_to_ptr.vmem [resolvable:$true] %s39
      %45 = dma.hbm_to_vmem [thread:$0]  %s5, 2048, %s40, [#allocation3], 128, 128, 8
    $region25: #{tpu_custom_call.1} parent=1 // pred_fallthru
      _
    // Predicated region
    $region26: #{tpu_custom_call.1} parent=1 // pred_check
      _
    $region27: #{tpu_custom_call.1} parent=1 // pred_check_branch
      %47 = sbr.rel (0) target = $region29
    $region28: #{tpu_custom_call.1} parent=1 // pred_region
      _
    $region29: #{tpu_custom_call.1} parent=1 // pred_fallthru
      _
    // Predicated region
    $region30: #{tpu_custom_call.1} parent=1 // pred_check
      _
    $region31: #{tpu_custom_call.1} parent=1 // pred_check_branch
      %49 = sbr.rel (0) target = $region33
    $region32: #{tpu_custom_call.1} parent=1 // pred_region
      _
    $region33: #{tpu_custom_call.1} parent=1 // pred_fallthru
      _
    // Predicated region
    $region34: #{tpu_custom_call.1} parent=1 // pred_check
      _
    $region35: #{tpu_custom_call.1} parent=1 // pred_check_branch
      %51 = sbr.rel (0) target = $region37
    $region36: #{tpu_custom_call.1} parent=1 // pred_region
      _
    $region37: #{tpu_custom_call.1} parent=1 // pred_fallthru
      _
    // Predicated region
    $region38: #{tpu_custom_call.1} parent=1 // pred_check
      _
    $region39: #{tpu_custom_call.1} parent=1 // pred_check_branch
      %53 = sbr.rel (0) target = $region41
    $region40: #{tpu_custom_call.1} parent=1 // pred_region
      %s55 = ssub.s32 32768, 32768
      %56 = vsyncadd [#allocation6], %s55
      %s57 = sshll.u32 [#allocation5], 4
      %s58 = int_to_ptr.vmem [resolvable:$true] %s57
      %63 = dma.hbm_to_vmem [thread:$0]  %s9, 32768, %s58, [#allocation6], 256, 256, 16
    $region41: #{tpu_custom_call.1} parent=1 // pred_fallthru
      _
    // Predicated region
    $region42: #{tpu_custom_call.1} parent=1 // pred_check
      _
    $region43: #{tpu_custom_call.1} parent=1 // pred_check_branch
      %65 = sbr.rel (0) target = $region45
    $region44: #{tpu_custom_call.1} parent=1 // pred_region
      _
    $region45: #{tpu_custom_call.1} parent=1 // pred_fallthru
      _
    // Predicated region
    $region46: #{tpu_custom_call.1} parent=1 // pred_check
      _
    $region47: #{tpu_custom_call.1} parent=1 // pred_check_branch
      %67 = sbr.rel (0) target = $region49
    $region48: #{tpu_custom_call.1} parent=1 // pred_region
      %s69 = ssub.s32 8192, 8192
      %70 = vsyncadd [#allocation6], %s69
      %s71 = sshll.u32 [#allocation7], 4
      %s72 = int_to_ptr.vmem [resolvable:$true] %s71
      %77 = dma.hbm_to_vmem [thread:$0]  %s11, 8192, %s72, [#allocation6], 128, 128, 8
    $region49: #{tpu_custom_call.1} parent=1 // pred_fallthru
      _
    // Predicated region
    $region50: #{tpu_custom_call.1} parent=1 // pred_check
      _
    $region51: #{tpu_custom_call.1} parent=1 // pred_check_branch
      %79 = sbr.rel (0) target = $region53
    $region52: #{tpu_custom_call.1} parent=1 // pred_region
      _
    $region53: #{tpu_custom_call.1} parent=1 // pred_fallthru
      _
    // Predicated region
    $region54: #{tpu_custom_call.1} parent=1 // pred_check
      _
    $region55: #{tpu_custom_call.1} parent=1 // pred_check_branch
      %81 = sbr.rel (0) target = $region57
    $region56: #{tpu_custom_call.1} parent=1 // pred_region
      %s83 = ssub.s32 4096, 4096
      %84 = vsyncadd [#allocation9], %s83
      %s85 = sshll.u32 [#allocation8], 4
      %s86 = int_to_ptr.vmem [resolvable:$true] %s85
      %91 = dma.hbm_to_vmem [thread:$0]  %s13, 4096, %s86, [#allocation9], 128, 128, 8
    $region57: #{tpu_custom_call.1} parent=1 // pred_fallthru
      _
    // Predicated region
    $region58: #{tpu_custom_call.1} parent=1 // pred_check
      _
    $region59: #{tpu_custom_call.1} parent=1 // pred_check_branch
      %93 = sbr.rel (0) target = $region61
    $region60: #{tpu_custom_call.1} parent=1 // pred_region
      _
    $region61: #{tpu_custom_call.1} parent=1 // pred_fallthru
      _
    // Predicated region
    $region62: #{tpu_custom_call.1} parent=1 // pred_check
      _
    $region63: #{tpu_custom_call.1} parent=1 // pred_check_branch
      %95 = sbr.rel (0) target = $region65
    $region64: #{tpu_custom_call.1} parent=1 // pred_region
      %96 = dma.done [#allocation3], 2048
    $region65: #{tpu_custom_call.1} parent=1 // pred_fallthru
      _
    // Predicated region
    $region66: #{tpu_custom_call.1} parent=1 // pred_check
      _
    $region67: #{tpu_custom_call.1} parent=1 // pred_check_branch
      %98 = sbr.rel (0) target = $region69
    $region68: #{tpu_custom_call.1} parent=1 // pred_region
      %99 = dma.done [#allocation6], 32768
    $region69: #{tpu_custom_call.1} parent=1 // pred_fallthru
      _
    // Predicated region
    $region70: #{tpu_custom_call.1} parent=1 // pred_check
      _
    $region71: #{tpu_custom_call.1} parent=1 // pred_check_branch
      %101 = sbr.rel (0) target = $region73
    $region72: #{tpu_custom_call.1} parent=1 // pred_region
      %102 = dma.done [#allocation6], 8192
    $region73: #{tpu_custom_call.1} parent=1 // pred_fallthru
      _
    // Predicated region
    $region74: #{tpu_custom_call.1} parent=1 // pred_check
      _
    $region75: #{tpu_custom_call.1} parent=1 // pred_check_branch
      %104 = sbr.rel (0) target = $region77
    $region76: #{tpu_custom_call.1} parent=1 // pred_region
      %105 = dma.done [#allocation9], 4096
    $region77: #{tpu_custom_call.1} parent=1 // pred_fallthru
      _
    %v107 = vld [vmem:[%s0] sm:$0xff]
    %v108 = vld [vmem:[%s0 + $0x8] sm:$0xff]
    %v109 = vld [vmem:[%s0 + $0x10] sm:$0xff]
    %v110 = vld [vmem:[%s0 + $0x18] sm:$0xff]
    %v111 = vld [vmem:[%s0 + $0x20] sm:$0xff]
    %v112 = vld [vmem:[%s0 + $0x28] sm:$0xff]
    %v113 = vld [vmem:[%s0 + $0x30] sm:$0xff]
    %v114 = vld [vmem:[%s0 + $0x38] sm:$0xff]
    %v115 = vld [vmem:[%s0 + $0x40] sm:$0xff]
    %v116 = vld [vmem:[%s0 + $0x48] sm:$0xff]
    %v117 = vld [vmem:[%s0 + $0x50] sm:$0xff]
    %v118 = vld [vmem:[%s0 + $0x58] sm:$0xff]
    %v119 = vld [vmem:[%s0 + $0x60] sm:$0xff]
    %v120 = vld [vmem:[%s0 + $0x68] sm:$0xff]
    %v121 = vld [vmem:[%s0 + $0x70] sm:$0xff]
    %v122 = vld [vmem:[%s0 + $0x78] sm:$0xff]
    %v123 = vld [vmem:[%s0 + $0x80] sm:$0xff]
    %v124 = vld [vmem:[%s0 + $0x88] sm:$0xff]
    %v125 = vld [vmem:[%s0 + $0x90] sm:$0xff]
    %v126 = vld [vmem:[%s0 + $0x98] sm:$0xff]
    %v127 = vld [vmem:[%s0 + $0xa0] sm:$0xff]
    %v128 = vld [vmem:[%s0 + $0xa8] sm:$0xff]
    %v129 = vld [vmem:[%s0 + $0xb0] sm:$0xff]
    %v130 = vld [vmem:[%s0 + $0xb8] sm:$0xff]
    %v131 = vld [vmem:[%s0 + $0xc0] sm:$0xff]
    %v132 = vld [vmem:[%s0 + $0xc8] sm:$0xff]
    %v133 = vld [vmem:[%s0 + $0xd0] sm:$0xff]
    %v134 = vld [vmem:[%s0 + $0xd8] sm:$0xff]
    %v135 = vld [vmem:[%s0 + $0xe0] sm:$0xff]
    %v136 = vld [vmem:[%s0 + $0xe8] sm:$0xff]
    %v137 = vld [vmem:[%s0 + $0xf0] sm:$0xff]
    %v138 = vld [vmem:[%s0 + $0xf8] sm:$0xff]
    %v139 = vld [vmem:[%s0 + $0x100] sm:$0xff]
    %v140 = vld [vmem:[%s0 + $0x108] sm:$0xff]
    %v141 = vld [vmem:[%s0 + $0x110] sm:$0xff]
    %v142 = vld [vmem:[%s0 + $0x118] sm:$0xff]
    %v143 = vld [vmem:[%s0 + $0x120] sm:$0xff]
    %v144 = vld [vmem:[%s0 + $0x128] sm:$0xff]
    %v145 = vld [vmem:[%s0 + $0x130] sm:$0xff]
    %v146 = vld [vmem:[%s0 + $0x138] sm:$0xff]
    %v147 = vld [vmem:[%s0 + $0x140] sm:$0xff]
    %v148 = vld [vmem:[%s0 + $0x148] sm:$0xff]
    %v149 = vld [vmem:[%s0 + $0x150] sm:$0xff]
    %v150 = vld [vmem:[%s0 + $0x158] sm:$0xff]
    %v151 = vld [vmem:[%s0 + $0x160] sm:$0xff]
    %v152 = vld [vmem:[%s0 + $0x168] sm:$0xff]
    %v153 = vld [vmem:[%s0 + $0x170] sm:$0xff]
    %v154 = vld [vmem:[%s0 + $0x178] sm:$0xff]
    %v155 = vld [vmem:[%s0 + $0x180] sm:$0xff]
    %v156 = vld [vmem:[%s0 + $0x188] sm:$0xff]
    %v157 = vld [vmem:[%s0 + $0x190] sm:$0xff]
    %v158 = vld [vmem:[%s0 + $0x198] sm:$0xff]
    %v159 = vld [vmem:[%s0 + $0x1a0] sm:$0xff]
    %v160 = vld [vmem:[%s0 + $0x1a8] sm:$0xff]
    %v161 = vld [vmem:[%s0 + $0x1b0] sm:$0xff]
    %v162 = vld [vmem:[%s0 + $0x1b8] sm:$0xff]
    %v163 = vld [vmem:[%s0 + $0x1c0] sm:$0xff]
    %v164 = vld [vmem:[%s0 + $0x1c8] sm:$0xff]
    %v165 = vld [vmem:[%s0 + $0x1d0] sm:$0xff]
    %v166 = vld [vmem:[%s0 + $0x1d8] sm:$0xff]
    %v167 = vld [vmem:[%s0 + $0x1e0] sm:$0xff]
    %v168 = vld [vmem:[%s0 + $0x1e8] sm:$0xff]
    %v169 = vld [vmem:[%s0 + $0x1f0] sm:$0xff]
    %v170 = vld [vmem:[%s0 + $0x1f8] sm:$0xff]
    %v171 = vld [vmem:[%s0 + $0x200] sm:$0xff]
    %v172 = vld [vmem:[%s0 + $0x208] sm:$0xff]
    %v173 = vld [vmem:[%s0 + $0x210] sm:$0xff]
    %v174 = vld [vmem:[%s0 + $0x218] sm:$0xff]
    %v175 = vld [vmem:[%s0 + $0x220] sm:$0xff]
    %v176 = vld [vmem:[%s0 + $0x228] sm:$0xff]
    %v177 = vld [vmem:[%s0 + $0x230] sm:$0xff]
    %v178 = vld [vmem:[%s0 + $0x238] sm:$0xff]
    %v179 = vld [vmem:[%s0 + $0x240] sm:$0xff]
    %v180 = vld [vmem:[%s0 + $0x248] sm:$0xff]
    %v181 = vld [vmem:[%s0 + $0x250] sm:$0xff]
    %v182 = vld [vmem:[%s0 + $0x258] sm:$0xff]
    %v183 = vld [vmem:[%s0 + $0x260] sm:$0xff]
    %v184 = vld [vmem:[%s0 + $0x268] sm:$0xff]
    %v185 = vld [vmem:[%s0 + $0x270] sm:$0xff]
    %v186 = vld [vmem:[%s0 + $0x278] sm:$0xff]
    %v187 = vld [vmem:[%s0 + $0x280] sm:$0xff]
    %v188 = vld [vmem:[%s0 + $0x288] sm:$0xff]
    %v189 = vld [vmem:[%s0 + $0x290] sm:$0xff]
    %v190 = vld [vmem:[%s0 + $0x298] sm:$0xff]
    %v191 = vld [vmem:[%s0 + $0x2a0] sm:$0xff]
    %v192 = vld [vmem:[%s0 + $0x2a8] sm:$0xff]
    %v193 = vld [vmem:[%s0 + $0x2b0] sm:$0xff]
    %v194 = vld [vmem:[%s0 + $0x2b8] sm:$0xff]
    %v195 = vld [vmem:[%s0 + $0x2c0] sm:$0xff]
    %v196 = vld [vmem:[%s0 + $0x2c8] sm:$0xff]
    %v197 = vld [vmem:[%s0 + $0x2d0] sm:$0xff]
    %v198 = vld [vmem:[%s0 + $0x2d8] sm:$0xff]
    %v199 = vld [vmem:[%s0 + $0x2e0] sm:$0xff]
    %v200 = vld [vmem:[%s0 + $0x2e8] sm:$0xff]
    %v201 = vld [vmem:[%s0 + $0x2f0] sm:$0xff]
    %v202 = vld [vmem:[%s0 + $0x2f8] sm:$0xff]
    %v203 = vld [vmem:[%s0 + $0x300] sm:$0xff]
    %v204 = vld [vmem:[%s0 + $0x308] sm:$0xff]
    %v205 = vld [vmem:[%s0 + $0x310] sm:$0xff]
    %v206 = vld [vmem:[%s0 + $0x318] sm:$0xff]
    %v207 = vld [vmem:[%s0 + $0x320] sm:$0xff]
    %v208 = vld [vmem:[%s0 + $0x328] sm:$0xff]
    %v209 = vld [vmem:[%s0 + $0x330] sm:$0xff]
    %v210 = vld [vmem:[%s0 + $0x338] sm:$0xff]
    %v211 = vld [vmem:[%s0 + $0x340] sm:$0xff]
    %v212 = vld [vmem:[%s0 + $0x348] sm:$0xff]
    %v213 = vld [vmem:[%s0 + $0x350] sm:$0xff]
    %v214 = vld [vmem:[%s0 + $0x358] sm:$0xff]
    %v215 = vld [vmem:[%s0 + $0x360] sm:$0xff]
    %v216 = vld [vmem:[%s0 + $0x368] sm:$0xff]
    %v217 = vld [vmem:[%s0 + $0x370] sm:$0xff]
    %v218 = vld [vmem:[%s0 + $0x378] sm:$0xff]
    %v219 = vld [vmem:[%s0 + $0x380] sm:$0xff]
    %v220 = vld [vmem:[%s0 + $0x388] sm:$0xff]
    %v221 = vld [vmem:[%s0 + $0x390] sm:$0xff]
    %v222 = vld [vmem:[%s0 + $0x398] sm:$0xff]
    %v223 = vld [vmem:[%s0 + $0x3a0] sm:$0xff]
    %v224 = vld [vmem:[%s0 + $0x3a8] sm:$0xff]
    %v225 = vld [vmem:[%s0 + $0x3b0] sm:$0xff]
    %v226 = vld [vmem:[%s0 + $0x3b8] sm:$0xff]
    %v227 = vld [vmem:[%s0 + $0x3c0] sm:$0xff]
    %v228 = vld [vmem:[%s0 + $0x3c8] sm:$0xff]
    %v229 = vld [vmem:[%s0 + $0x3d0] sm:$0xff]
    %v230 = vld [vmem:[%s0 + $0x3d8] sm:$0xff]
    %v231 = vld [vmem:[%s0 + $0x3e0] sm:$0xff]
    %v232 = vld [vmem:[%s0 + $0x3e8] sm:$0xff]
    %v233 = vld [vmem:[%s0 + $0x3f0] sm:$0xff]
    %v234 = vld [vmem:[%s0 + $0x3f8] sm:$0xff]
    %v235 = vld [vmem:[%s1] sm:$0xff]
    %v236 = vld [vmem:[%s2] sm:$0x1]
    %v238 = vlaneseq
    %v239 = vshrl.u32 %v238, 7
    %v240 = vsub.s32 0, %v239
    %v241 = vrot.slane %v236, %v240
    %vm243 = vcmask 64512
    %v245 = vsel %vm243, %v107, 0
    %v248 = vsel %vm243, %v108, 0
    %v251 = vsel %vm243, %v109, 0
    %v254 = vsel %vm243, %v110, 0
    %v257 = vsel %vm243, %v111, 0
    %v260 = vsel %vm243, %v112, 0
    %v263 = vsel %vm243, %v113, 0
    %v266 = vsel %vm243, %v114, 0
    %v269 = vsel %vm243, %v115, 0
    %v272 = vsel %vm243, %v116, 0
    %v275 = vsel %vm243, %v117, 0
    %v278 = vsel %vm243, %v118, 0
    %v281 = vsel %vm243, %v119, 0
    %v284 = vsel %vm243, %v120, 0
    %v287 = vsel %vm243, %v121, 0
    %v290 = vsel %vm243, %v122, 0
    %v293 = vsel %vm243, %v123, 0
    %v296 = vsel %vm243, %v124, 0
    %v299 = vsel %vm243, %v125, 0
    %v302 = vsel %vm243, %v126, 0
    %v305 = vsel %vm243, %v127, 0
    %v308 = vsel %vm243, %v128, 0
    %v311 = vsel %vm243, %v129, 0
    %v314 = vsel %vm243, %v130, 0
    %v317 = vsel %vm243, %v131, 0
    %v320 = vsel %vm243, %v132, 0
    %v323 = vsel %vm243, %v133, 0
    %v326 = vsel %vm243, %v134, 0
    %v329 = vsel %vm243, %v135, 0
    %v332 = vsel %vm243, %v136, 0
    %v335 = vsel %vm243, %v137, 0
    %v338 = vsel %vm243, %v138, 0
    %v341 = vsel %vm243, %v139, 0
    %v344 = vsel %vm243, %v140, 0
    %v347 = vsel %vm243, %v141, 0
    %v350 = vsel %vm243, %v142, 0
    %v353 = vsel %vm243, %v143, 0
    %v356 = vsel %vm243, %v144, 0
    %v359 = vsel %vm243, %v145, 0
    %v362 = vsel %vm243, %v146, 0
    %v365 = vsel %vm243, %v147, 0
    %v368 = vsel %vm243, %v148, 0
    %v371 = vsel %vm243, %v149, 0
    %v374 = vsel %vm243, %v150, 0
    %v377 = vsel %vm243, %v151, 0
    %v380 = vsel %vm243, %v152, 0
    %v383 = vsel %vm243, %v153, 0
    %v386 = vsel %vm243, %v154, 0
    %v389 = vsel %vm243, %v155, 0
    %v392 = vsel %vm243, %v156, 0
    %v395 = vsel %vm243, %v157, 0
    %v398 = vsel %vm243, %v158, 0
    %v401 = vsel %vm243, %v159, 0
    %v404 = vsel %vm243, %v160, 0
    %v407 = vsel %vm243, %v161, 0
    %v410 = vsel %vm243, %v162, 0
    %v413 = vsel %vm243, %v163, 0
    %v416 = vsel %vm243, %v164, 0
    %v419 = vsel %vm243, %v165, 0
    %v422 = vsel %vm243, %v166, 0
    %v425 = vsel %vm243, %v167, 0
    %v428 = vsel %vm243, %v168, 0
    %v431 = vsel %vm243, %v169, 0
    %v434 = vsel %vm243, %v170, 0
    %v437 = vsel %vm243, %v171, 0
    %v440 = vsel %vm243, %v172, 0
    %v443 = vsel %vm243, %v173, 0
    %v446 = vsel %vm243, %v174, 0
    %v449 = vsel %vm243, %v175, 0
    %v452 = vsel %vm243, %v176, 0
    %v455 = vsel %vm243, %v177, 0
    %v458 = vsel %vm243, %v178, 0
    %v461 = vsel %vm243, %v179, 0
    %v464 = vsel %vm243, %v180, 0
    %v467 = vsel %vm243, %v181, 0
    %v470 = vsel %vm243, %v182, 0
    %v473 = vsel %vm243, %v183, 0
    %v476 = vsel %vm243, %v184, 0
    %v479 = vsel %vm243, %v185, 0
    %v482 = vsel %vm243, %v186, 0
    %v485 = vsel %vm243, %v187, 0
    %v488 = vsel %vm243, %v188, 0
    %v491 = vsel %vm243, %v189, 0
    %v494 = vsel %vm243, %v190, 0
    %v497 = vsel %vm243, %v191, 0
    %v500 = vsel %vm243, %v192, 0
    %v503 = vsel %vm243, %v193, 0
    %v506 = vsel %vm243, %v194, 0
    %v509 = vsel %vm243, %v195, 0
    %v512 = vsel %vm243, %v196, 0
    %v515 = vsel %vm243, %v197, 0
    %v518 = vsel %vm243, %v198, 0
    %v521 = vsel %vm243, %v199, 0
    %v524 = vsel %vm243, %v200, 0
    %v527 = vsel %vm243, %v201, 0
    %v530 = vsel %vm243, %v202, 0
    %v533 = vsel %vm243, %v203, 0
    %v536 = vsel %vm243, %v204, 0
    %v539 = vsel %vm243, %v205, 0
    %v542 = vsel %vm243, %v206, 0
    %v545 = vsel %vm243, %v207, 0
    %v548 = vsel %vm243, %v208, 0
    %v551 = vsel %vm243, %v209, 0
    %v554 = vsel %vm243, %v210, 0
    %v557 = vsel %vm243, %v211, 0
    %v560 = vsel %vm243, %v212, 0
    %v563 = vsel %vm243, %v213, 0
    %v566 = vsel %vm243, %v214, 0
    %v569 = vsel %vm243, %v215, 0
    %v572 = vsel %vm243, %v216, 0
    %v575 = vsel %vm243, %v217, 0
    %v578 = vsel %vm243, %v218, 0
    %v581 = vsel %vm243, %v219, 0
    %v584 = vsel %vm243, %v220, 0
    %v587 = vsel %vm243, %v221, 0
    %v590 = vsel %vm243, %v222, 0
    %v593 = vsel %vm243, %v223, 0
    %v596 = vsel %vm243, %v224, 0
    %v599 = vsel %vm243, %v225, 0
    %v602 = vsel %vm243, %v226, 0
    %v605 = vsel %vm243, %v227, 0
    %v608 = vsel %vm243, %v228, 0
    %v611 = vsel %vm243, %v229, 0
    %v614 = vsel %vm243, %v230, 0
    %v617 = vsel %vm243, %v231, 0
    %v620 = vsel %vm243, %v232, 0
    %v623 = vsel %vm243, %v233, 0
    %v626 = vsel %vm243, %v234, 0
    %628 = vmatprep.subr.mxu0 0.0
    %629 = vmatpush1.msra.mxu0 %v235
    %630 = vmatprep.subr.mxu0 0.0
    %631 = vmatpush1.msra.mxu0 0.0
    %632 = vmatprep.subr.mxu0 0.0
    %633 = vmatpush1.msra.mxu0 0.0
    %634 = vmatprep.subr.mxu0 0.0
    %635 = vmatpush1.msra.mxu0 0.0
    %636 = vmatprep.subr.mxu0 0.0
    %637 = vmatpush1.msra.mxu0 0.0
    %638 = vmatprep.subr.mxu0 0.0
    %639 = vmatpush1.msra.mxu0 0.0
    %640 = vmatprep.subr.mxu0 0.0
    %641 = vmatpush1.msra.mxu0 0.0
    %642 = vmatprep.subr.mxu0 0.0
    %643 = vmatpush1.msra.mxu0 0.0
    %644 = vmatprep.subr.mxu0 0.0
    %645 = vmatpush1.msra.mxu0 0.0
    %646 = vmatprep.subr.mxu0 0.0
    %647 = vmatpush1.msra.mxu0 0.0
    %648 = vmatprep.subr.mxu0 0.0
    %649 = vmatpush1.msra.mxu0 0.0
    %650 = vmatprep.subr.mxu0 0.0
    %651 = vmatpush1.msra.mxu0 0.0
    %652 = vmatprep.subr.mxu0 0.0
    %653 = vmatpush1.msra.mxu0 0.0
    %654 = vmatprep.subr.mxu0 0.0
    %655 = vmatpush1.msra.mxu0 0.0
    %656 = vmatprep.subr.mxu0 0.0
    %657 = vmatpush1.msra.mxu0 0.0
    %658 = vmatprep.subr.mxu0 0.0
    %659 = vmatpush1.msra.mxu0 0.0
    %660 = vmatprep.subr.mxu0 0.0
    %661 = vmatpush1.msra.mxu0 0.0
    %662 = vmatprep.subr.mxu0 0.0
    %663 = vmatpush1.msra.mxu0 0.0
    %664 = vmatprep.subr.mxu0 0.0
    %665 = vmatpush1.msra.mxu0 0.0
    %666 = vmatprep.subr.mxu0 0.0
    %667 = vmatpush1.msra.mxu0 0.0
    %668 = vmatprep.subr.mxu0 0.0
    %669 = vmatpush1.msra.mxu0 0.0
    %670 = vmatprep.subr.mxu0 0.0
    %671 = vmatpush1.msra.mxu0 0.0
    %672 = vmatprep.subr.mxu0 0.0
    %673 = vmatpush1.msra.mxu0 0.0
    %674 = vmatprep.subr.mxu0 0.0
    %675 = vmatpush1.msra.mxu0 0.0
    %676 = vmatprep.subr.mxu0 0.0
    %677 = vmatpush1.msra.mxu0 0.0
    %678 = vmatprep.subr.mxu0 0.0
    %679 = vmatpush1.msra.mxu0 0.0
    %680 = vmatprep.subr.mxu0 0.0
    %681 = vmatpush1.msra.mxu0 0.0
    %682 = vmatprep.subr.mxu0 0.0
    %683 = vmatpush1.msra.mxu0 0.0
    %684 = vmatprep.subr.mxu0 0.0
    %685 = vmatpush1.msra.mxu0 0.0
    %686 = vmatprep.subr.mxu0 0.0
    %687 = vmatpush1.msra.mxu0 0.0
    %688 = vmatprep.subr.mxu0 0.0
    %689 = vmatpush1.msra.mxu0 0.0
    %690 = vmatprep.subr.mxu0 0.0
    %691 = vmatpush1.msra.mxu0 0.0
    %692 = vmatprep.mubr.f32.mxu0 0.0
    %693 = vmatmul.mubr.f32.gmra.mrb[0].mxu0 %v245
    %v694 = vpop.f32.mrb[0].mxu0
    %v695 = vadd.f32 %v241, %v694
    %v696 = vpop.f32.mrb[0].mxu0
    %697 = vmatprep.mubr.f32.mxu0 0.0
    %698 = vmatmul.mubr.f32.gmra.mrb[0].mxu0 %v248
    %v699 = vpop.f32.mrb[0].mxu0
    %v700 = vadd.f32 %v241, %v699
    %v701 = vpop.f32.mrb[0].mxu0
    %702 = vmatprep.mubr.f32.mxu0 0.0
    %703 = vmatmul.mubr.f32.gmra.mrb[0].mxu0 %v251
    %v704 = vpop.f32.mrb[0].mxu0
    %v705 = vadd.f32 %v241, %v704
    %v706 = vpop.f32.mrb[0].mxu0
    %707 = vmatprep.mubr.f32.mxu0 0.0
    %708 = vmatmul.mubr.f32.gmra.mrb[0].mxu0 %v254
    %v709 = vpop.f32.mrb[0].mxu0
    %v710 = vadd.f32 %v241, %v709
    %v711 = vpop.f32.mrb[0].mxu0
    %712 = vmatprep.mubr.f32.mxu0 0.0
    %713 = vmatmul.mubr.f32.gmra.mrb[0].mxu0 %v257
    %v714 = vpop.f32.mrb[0].mxu0
    %v715 = vadd.f32 %v241, %v714
    %v716 = vpop.f32.mrb[0].mxu0
    %717 = vmatprep.mubr.f32.mxu0 0.0
    %718 = vmatmul.mubr.f32.gmra.mrb[0].mxu0 %v260
    %v719 = vpop.f32.mrb[0].mxu0
    %v720 = vadd.f32 %v241, %v719
    %v721 = vpop.f32.mrb[0].mxu0
    %722 = vmatprep.mubr.f32.mxu0 0.0
    %723 = vmatmul.mubr.f32.gmra.mrb[0].mxu0 %v263
    %v724 = vpop.f32.mrb[0].mxu0
    %v725 = vadd.f32 %v241, %v724
    %v726 = vpop.f32.mrb[0].mxu0
    %727 = vmatprep.mubr.f32.mxu0 0.0
    %728 = vmatmul.mubr.f32.gmra.mrb[0].mxu0 %v266
    %v729 = vpop.f32.mrb[0].mxu0
    %v730 = vadd.f32 %v241, %v729
    %v731 = vpop.f32.mrb[0].mxu0
    %732 = vmatprep.mubr.f32.mxu0 0.0
    %733 = vmatmul.mubr.f32.gmra.mrb[0].mxu0 %v269
    %v734 = vpop.f32.mrb[0].mxu0
    %v735 = vadd.f32 %v241, %v734
    %v736 = vpop.f32.mrb[0].mxu0
    %737 = vmatprep.mubr.f32.mxu0 0.0
    %738 = vmatmul.mubr.f32.gmra.mrb[0].mxu0 %v272
    %v739 = vpop.f32.mrb[0].mxu0
    %v740 = vadd.f32 %v241, %v739
    %v741 = vpop.f32.mrb[0].mxu0
    %742 = vmatprep.mubr.f32.mxu0 0.0
    %743 = vmatmul.mubr.f32.gmra.mrb[0].mxu0 %v275
    %v744 = vpop.f32.mrb[0].mxu0
    %v745 = vadd.f32 %v241, %v744
    %v746 = vpop.f32.mrb[0].mxu0
    %747 = vmatprep.mubr.f32.mxu0 0.0
    %748 = vmatmul.mubr.f32.gmra.mrb[0].mxu0 %v278
    %v749 = vpop.f32.mrb[0].mxu0
    %v750 = vadd.f32 %v241, %v749
    %v751 = vpop.f32.mrb[0].mxu0
    %752 = vmatprep.mubr.f32.mxu0 0.0
    %753 = vmatmul.mubr.f32.gmra.mrb[0].mxu0 %v281
    %v754 = vpop.f32.mrb[0].mxu0
    %v755 = vadd.f32 %v241, %v754
    %v756 = vpop.f32.mrb[0].mxu0
    %757 = vmatprep.mubr.f32.mxu0 0.0
    %758 = vmatmul.mubr.f32.gmra.mrb[0].mxu0 %v284
    %v759 = vpop.f32.mrb[0].mxu0
    %v760 = vadd.f32 %v241, %v759
    %v761 = vpop.f32.mrb[0].mxu0
    %762 = vmatprep.mubr.f32.mxu0 0.0
    %763 = vmatmul.mubr.f32.gmra.mrb[0].mxu0 %v287
    %v764 = vpop.f32.mrb[0].mxu0
    %v765 = vadd.f32 %v241, %v764
    %v766 = vpop.f32.mrb[0].mxu0
    %767 = vmatprep.mubr.f32.mxu0 0.0
    %768 = vmatmul.mubr.f32.gmra.mrb[0].mxu0 %v290
    %v769 = vpop.f32.mrb[0].mxu0
    %v770 = vadd.f32 %v241, %v769
    %v771 = vpop.f32.mrb[0].mxu0
    %772 = vmatprep.mubr.f32.mxu0 0.0
    %773 = vmatmul.mubr.f32.gmra.mrb[0].mxu0 %v293
    %v774 = vpop.f32.mrb[0].mxu0
    %v775 = vadd.f32 %v241, %v774
    %v776 = vpop.f32.mrb[0].mxu0
    %777 = vmatprep.mubr.f32.mxu0 0.0
    %778 = vmatmul.mubr.f32.gmra.mrb[0].mxu0 %v296
    %v779 = vpop.f32.mrb[0].mxu0
    %v780 = vadd.f32 %v241, %v779
    %v781 = vpop.f32.mrb[0].mxu0
    %782 = vmatprep.mubr.f32.mxu0 0.0
    %783 = vmatmul.mubr.f32.gmra.mrb[0].mxu0 %v299
    %v784 = vpop.f32.mrb[0].mxu0
    %v785 = vadd.f32 %v241, %v784
    %v786 = vpop.f32.mrb[0].mxu0
    %787 = vmatprep.mubr.f32.mxu0 0.0
    %788 = vmatmul.mubr.f32.gmra.mrb[0].mxu0 %v302
    %v789 = vpop.f32.mrb[0].mxu0
    %v790 = vadd.f32 %v241, %v789
    %v791 = vpop.f32.mrb[0].mxu0
    %792 = vmatprep.mubr.f32.mxu0 0.0
    %793 = vmatmul.mubr.f32.gmra.mrb[0].mxu0 %v305
    %v794 = vpop.f32.mrb[0].mxu0
    %v795 = vadd.f32 %v241, %v794
    %v796 = vpop.f32.mrb[0].mxu0
    %797 = vmatprep.mubr.f32.mxu0 0.0
    %798 = vmatmul.mubr.f32.gmra.mrb[0].mxu0 %v308
    %v799 = vpop.f32.mrb[0].mxu0
    %v800 = vadd.f32 %v241, %v799
    %v801 = vpop.f32.mrb[0].mxu0
    %802 = vmatprep.mubr.f32.mxu0 0.0
    %803 = vmatmul.mubr.f32.gmra.mrb[0].mxu0 %v311
    %v804 = vpop.f32.mrb[0].mxu0
    %v805 = vadd.f32 %v241, %v804
    %v806 = vpop.f32.mrb[0].mxu0
    %807 = vmatprep.mubr.f32.mxu0 0.0
    %808 = vmatmul.mubr.f32.gmra.mrb[0].mxu0 %v314
    %v809 = vpop.f32.mrb[0].mxu0
    %v810 = vadd.f32 %v241, %v809
    %v811 = vpop.f32.mrb[0].mxu0
    %812 = vmatprep.mubr.f32.mxu0 0.0
    %813 = vmatmul.mubr.f32.gmra.mrb[0].mxu0 %v317
    %v814 = vpop.f32.mrb[0].mxu0
    %v815 = vadd.f32 %v241, %v814
    %v816 = vpop.f32.mrb[0].mxu0
    %817 = vmatprep.mubr.f32.mxu0 0.0
    %818 = vmatmul.mubr.f32.gmra.mrb[0].mxu0 %v320
    %v819 = vpop.f32.mrb[0].mxu0
    %v820 = vadd.f32 %v241, %v819
    %v821 = vpop.f32.mrb[0].mxu0
    %822 = vmatprep.mubr.f32.mxu0 0.0
    %823 = vmatmul.mubr.f32.gmra.mrb[0].mxu0 %v323
    %v824 = vpop.f32.mrb[0].mxu0
    %v825 = vadd.f32 %v241, %v824
    %v826 = vpop.f32.mrb[0].mxu0
    %827 = vmatprep.mubr.f32.mxu0 0.0
    %828 = vmatmul.mubr.f32.gmra.mrb[0].mxu0 %v326
    %v829 = vpop.f32.mrb[0].mxu0
    %v830 = vadd.f32 %v241, %v829
    %v831 = vpop.f32.mrb[0].mxu0
    %832 = vmatprep.mubr.f32.mxu0 0.0
    %833 = vmatmul.mubr.f32.gmra.mrb[0].mxu0 %v329
    %v834 = vpop.f32.mrb[0].mxu0
    %v835 = vadd.f32 %v241, %v834
    %v836 = vpop.f32.mrb[0].mxu0
    %837 = vmatprep.mubr.f32.mxu0 0.0
    %838 = vmatmul.mubr.f32.gmra.mrb[0].mxu0 %v332
    %v839 = vpop.f32.mrb[0].mxu0
    %v840 = vadd.f32 %v241, %v839
    %v841 = vpop.f32.mrb[0].mxu0
    %842 = vmatprep.mubr.f32.mxu0 0.0
    %843 = vmatmul.mubr.f32.gmra.mrb[0].mxu0 %v335
    %v844 = vpop.f32.mrb[0].mxu0
    %v845 = vadd.f32 %v241, %v844
    %v846 = vpop.f32.mrb[0].mxu0
    %847 = vmatprep.mubr.f32.mxu0 0.0
    %848 = vmatmul.mubr.f32.gmra.mrb[0].mxu0 %v338
    %v849 = vpop.f32.mrb[0].mxu0
    %v850 = vadd.f32 %v241, %v849
    %v851 = vpop.f32.mrb[0].mxu0
    %852 = vmatprep.mubr.f32.mxu0 0.0
    %853 = vmatmul.mubr.f32.gmra.mrb[0].mxu0 %v341
    %v854 = vpop.f32.mrb[0].mxu0
    %v855 = vadd.f32 %v241, %v854
    %v856 = vpop.f32.mrb[0].mxu0
    %857 = vmatprep.mubr.f32.mxu0 0.0
    %858 = vmatmul.mubr.f32.gmra.mrb[0].mxu0 %v344
    %v859 = vpop.f32.mrb[0].mxu0
    %v860 = vadd.f32 %v241, %v859
    %v861 = vpop.f32.mrb[0].mxu0
    %862 = vmatprep.mubr.f32.mxu0 0.0
    %863 = vmatmul.mubr.f32.gmra.mrb[0].mxu0 %v347
    %v864 = vpop.f32.mrb[0].mxu0
    %v865 = vadd.f32 %v241, %v864
    %v866 = vpop.f32.mrb[0].mxu0
    %867 = vmatprep.mubr.f32.mxu0 0.0
    %868 = vmatmul.mubr.f32.gmra.mrb[0].mxu0 %v350
    %v869 = vpop.f32.mrb[0].mxu0
    %v870 = vadd.f32 %v241, %v869
    %v871 = vpop.f32.mrb[0].mxu0
    %872 = vmatprep.mubr.f32.mxu0 0.0
    %873 = vmatmul.mubr.f32.gmra.mrb[0].mxu0 %v353
    %v874 = vpop.f32.mrb[0].mxu0
    %v875 = vadd.f32 %v241, %v874
    %v876 = vpop.f32.mrb[0].mxu0
    %877 = vmatprep.mubr.f32.mxu0 0.0
    %878 = vmatmul.mubr.f32.gmra.mrb[0].mxu0 %v356
    %v879 = vpop.f32.mrb[0].mxu0
    %v880 = vadd.f32 %v241, %v879
    %v881 = vpop.f32.mrb[0].mxu0
    %882 = vmatprep.mubr.f32.mxu0 0.0
    %883 = vmatmul.mubr.f32.gmra.mrb[0].mxu0 %v359
    %v884 = vpop.f32.mrb[0].mxu0
    %v885 = vadd.f32 %v241, %v884
    %v886 = vpop.f32.mrb[0].mxu0
    %887 = vmatprep.mubr.f32.mxu0 0.0
    %888 = vmatmul.mubr.f32.gmra.mrb[0].mxu0 %v362
    %v889 = vpop.f32.mrb[0].mxu0
    %v890 = vadd.f32 %v241, %v889
    %v891 = vpop.f32.mrb[0].mxu0
    %892 = vmatprep.mubr.f32.mxu0 0.0
    %893 = vmatmul.mubr.f32.gmra.mrb[0].mxu0 %v365
    %v894 = vpop.f32.mrb[0].mxu0
    %v895 = vadd.f32 %v241, %v894
    %v896 = vpop.f32.mrb[0].mxu0
    %897 = vmatprep.mubr.f32.mxu0 0.0
    %898 = vmatmul.mubr.f32.gmra.mrb[0].mxu0 %v368
    %v899 = vpop.f32.mrb[0].mxu0
    %v900 = vadd.f32 %v241, %v899
    %v901 = vpop.f32.mrb[0].mxu0
    %902 = vmatprep.mubr.f32.mxu0 0.0
    %903 = vmatmul.mubr.f32.gmra.mrb[0].mxu0 %v371
    %v904 = vpop.f32.mrb[0].mxu0
    %v905 = vadd.f32 %v241, %v904
    %v906 = vpop.f32.mrb[0].mxu0
    %907 = vmatprep.mubr.f32.mxu0 0.0
    %908 = vmatmul.mubr.f32.gmra.mrb[0].mxu0 %v374
    %v909 = vpop.f32.mrb[0].mxu0
    %v910 = vadd.f32 %v241, %v909
    %v911 = vpop.f32.mrb[0].mxu0
    %912 = vmatprep.mubr.f32.mxu0 0.0
    %913 = vmatmul.mubr.f32.gmra.mrb[0].mxu0 %v377
    %v914 = vpop.f32.mrb[0].mxu0
    %v915 = vadd.f32 %v241, %v914
    %v916 = vpop.f32.mrb[0].mxu0
    %917 = vmatprep.mubr.f32.mxu0 0.0
    %918 = vmatmul.mubr.f32.gmra.mrb[0].mxu0 %v380
    %v919 = vpop.f32.mrb[0].mxu0
    %v920 = vadd.f32 %v241, %v919
    %v921 = vpop.f32.mrb[0].mxu0
    %922 = vmatprep.mubr.f32.mxu0 0.0
    %923 = vmatmul.mubr.f32.gmra.mrb[0].mxu0 %v383
    %v924 = vpop.f32.mrb[0].mxu0
    %v925 = vadd.f32 %v241, %v924
    %v926 = vpop.f32.mrb[0].mxu0
    %927 = vmatprep.mubr.f32.mxu0 0.0
    %928 = vmatmul.mubr.f32.gmra.mrb[0].mxu0 %v386
    %v929 = vpop.f32.mrb[0].mxu0
    %v930 = vadd.f32 %v241, %v929
    %v931 = vpop.f32.mrb[0].mxu0
    %932 = vmatprep.mubr.f32.mxu0 0.0
    %933 = vmatmul.mubr.f32.gmra.mrb[0].mxu0 %v389
    %v934 = vpop.f32.mrb[0].mxu0
    %v935 = vadd.f32 %v241, %v934
    %v936 = vpop.f32.mrb[0].mxu0
    %937 = vmatprep.mubr.f32.mxu0 0.0
    %938 = vmatmul.mubr.f32.gmra.mrb[0].mxu0 %v392
    %v939 = vpop.f32.mrb[0].mxu0
    %v940 = vadd.f32 %v241, %v939
    %v941 = vpop.f32.mrb[0].mxu0
    %942 = vmatprep.mubr.f32.mxu0 0.0
    %943 = vmatmul.mubr.f32.gmra.mrb[0].mxu0 %v395
    %v944 = vpop.f32.mrb[0].mxu0
    %v945 = vadd.f32 %v241, %v944
    %v946 = vpop.f32.mrb[0].mxu0
    %947 = vmatprep.mubr.f32.mxu0 0.0
    %948 = vmatmul.mubr.f32.gmra.mrb[0].mxu0 %v398
    %v949 = vpop.f32.mrb[0].mxu0
    %v950 = vadd.f32 %v241, %v949
    %v951 = vpop.f32.mrb[0].mxu0
    %952 = vmatprep.mubr.f32.mxu0 0.0
    %953 = vmatmul.mubr.f32.gmra.mrb[0].mxu0 %v401
    %v954 = vpop.f32.mrb[0].mxu0
    %v955 = vadd.f32 %v241, %v954
    %v956 = vpop.f32.mrb[0].mxu0
    %957 = vmatprep.mubr.f32.mxu0 0.0
    %958 = vmatmul.mubr.f32.gmra.mrb[0].mxu0 %v404
    %v959 = vpop.f32.mrb[0].mxu0
    %v960 = vadd.f32 %v241, %v959
    %v961 = vpop.f32.mrb[0].mxu0
    %962 = vmatprep.mubr.f32.mxu0 0.0
    %963 = vmatmul.mubr.f32.gmra.mrb[0].mxu0 %v407
    %v964 = vpop.f32.mrb[0].mxu0
    %v965 = vadd.f32 %v241, %v964
    %v966 = vpop.f32.mrb[0].mxu0
    %967 = vmatprep.mubr.f32.mxu0 0.0
    %968 = vmatmul.mubr.f32.gmra.mrb[0].mxu0 %v410
    %v969 = vpop.f32.mrb[0].mxu0
    %v970 = vadd.f32 %v241, %v969
    %v971 = vpop.f32.mrb[0].mxu0
    %972 = vmatprep.mubr.f32.mxu0 0.0
    %973 = vmatmul.mubr.f32.gmra.mrb[0].mxu0 %v413
    %v974 = vpop.f32.mrb[0].mxu0
    %v975 = vadd.f32 %v241, %v974
    %v976 = vpop.f32.mrb[0].mxu0
    %977 = vmatprep.mubr.f32.mxu0 0.0
    %978 = vmatmul.mubr.f32.gmra.mrb[0].mxu0 %v416
    %v979 = vpop.f32.mrb[0].mxu0
    %v980 = vadd.f32 %v241, %v979
    %v981 = vpop.f32.mrb[0].mxu0
    %982 = vmatprep.mubr.f32.mxu0 0.0
    %983 = vmatmul.mubr.f32.gmra.mrb[0].mxu0 %v419
    %v984 = vpop.f32.mrb[0].mxu0
    %v985 = vadd.f32 %v241, %v984
    %v986 = vpop.f32.mrb[0].mxu0
    %987 = vmatprep.mubr.f32.mxu0 0.0
    %988 = vmatmul.mubr.f32.gmra.mrb[0].mxu0 %v422
    %v989 = vpop.f32.mrb[0].mxu0
    %v990 = vadd.f32 %v241, %v989
    %v991 = vpop.f32.mrb[0].mxu0
    %992 = vmatprep.mubr.f32.mxu0 0.0
    %993 = vmatmul.mubr.f32.gmra.mrb[0].mxu0 %v425
    %v994 = vpop.f32.mrb[0].mxu0
    %v995 = vadd.f32 %v241, %v994
    %v996 = vpop.f32.mrb[0].mxu0
    %997 = vmatprep.mubr.f32.mxu0 0.0
    %998 = vmatmul.mubr.f32.gmra.mrb[0].mxu0 %v428
    %v999 = vpop.f32.mrb[0].mxu0
    %v1000 = vadd.f32 %v241, %v999
    %v1001 = vpop.f32.mrb[0].mxu0
    %1002 = vmatprep.mubr.f32.mxu0 0.0
    %1003 = vmatmul.mubr.f32.gmra.mrb[0].mxu0 %v431
    %v1004 = vpop.f32.mrb[0].mxu0
    %v1005 = vadd.f32 %v241, %v1004
    %v1006 = vpop.f32.mrb[0].mxu0
    %1007 = vmatprep.mubr.f32.mxu0 0.0
    %1008 = vmatmul.mubr.f32.gmra.mrb[0].mxu0 %v434
    %v1009 = vpop.f32.mrb[0].mxu0
    %v1010 = vadd.f32 %v241, %v1009
    %v1011 = vpop.f32.mrb[0].mxu0
    %1012 = vmatprep.mubr.f32.mxu0 0.0
    %1013 = vmatmul.mubr.f32.gmra.mrb[0].mxu0 %v437
    %v1014 = vpop.f32.mrb[0].mxu0
    %v1015 = vadd.f32 %v241, %v1014
    %v1016 = vpop.f32.mrb[0].mxu0
    %1017 = vmatprep.mubr.f32.mxu0 0.0
    %1018 = vmatmul.mubr.f32.gmra.mrb[0].mxu0 %v440
    %v1019 = vpop.f32.mrb[0].mxu0
    %v1020 = vadd.f32 %v241, %v1019
    %v1021 = vpop.f32.mrb[0].mxu0
    %1022 = vmatprep.mubr.f32.mxu0 0.0
    %1023 = vmatmul.mubr.f32.gmra.mrb[0].mxu0 %v443
    %v1024 = vpop.f32.mrb[0].mxu0
    %v1025 = vadd.f32 %v241, %v1024
    %v1026 = vpop.f32.mrb[0].mxu0
    %1027 = vmatprep.mubr.f32.mxu0 0.0
    %1028 = vmatmul.mubr.f32.gmra.mrb[0].mxu0 %v446
    %v1029 = vpop.f32.mrb[0].mxu0
    %v1030 = vadd.f32 %v241, %v1029
    %v1031 = vpop.f32.mrb[0].mxu0
    %1032 = vmatprep.mubr.f32.mxu0 0.0
    %1033 = vmatmul.mubr.f32.gmra.mrb[0].mxu0 %v449
    %v1034 = vpop.f32.mrb[0].mxu0
    %v1035 = vadd.f32 %v241, %v1034
    %v1036 = vpop.f32.mrb[0].mxu0
    %1037 = vmatprep.mubr.f32.mxu0 0.0
    %1038 = vmatmul.mubr.f32.gmra.mrb[0].mxu0 %v452
    %v1039 = vpop.f32.mrb[0].mxu0
    %v1040 = vadd.f32 %v241, %v1039
    %v1041 = vpop.f32.mrb[0].mxu0
    %1042 = vmatprep.mubr.f32.mxu0 0.0
    %1043 = vmatmul.mubr.f32.gmra.mrb[0].mxu0 %v455
    %v1044 = vpop.f32.mrb[0].mxu0
    %v1045 = vadd.f32 %v241, %v1044
    %v1046 = vpop.f32.mrb[0].mxu0
    %1047 = vmatprep.mubr.f32.mxu0 0.0
    %1048 = vmatmul.mubr.f32.gmra.mrb[0].mxu0 %v458
    %v1049 = vpop.f32.mrb[0].mxu0
    %v1050 = vadd.f32 %v241, %v1049
    %v1051 = vpop.f32.mrb[0].mxu0
    %1052 = vmatprep.mubr.f32.mxu0 0.0
    %1053 = vmatmul.mubr.f32.gmra.mrb[0].mxu0 %v461
    %v1054 = vpop.f32.mrb[0].mxu0
    %v1055 = vadd.f32 %v241, %v1054
    %v1056 = vpop.f32.mrb[0].mxu0
    %1057 = vmatprep.mubr.f32.mxu0 0.0
    %1058 = vmatmul.mubr.f32.gmra.mrb[0].mxu0 %v464
    %v1059 = vpop.f32.mrb[0].mxu0
    %v1060 = vadd.f32 %v241, %v1059
    %v1061 = vpop.f32.mrb[0].mxu0
    %1062 = vmatprep.mubr.f32.mxu0 0.0
    %1063 = vmatmul.mubr.f32.gmra.mrb[0].mxu0 %v467
    %v1064 = vpop.f32.mrb[0].mxu0
    %v1065 = vadd.f32 %v241, %v1064
    %v1066 = vpop.f32.mrb[0].mxu0
    %1067 = vmatprep.mubr.f32.mxu0 0.0
    %1068 = vmatmul.mubr.f32.gmra.mrb[0].mxu0 %v470
    %v1069 = vpop.f32.mrb[0].mxu0
    %v1070 = vadd.f32 %v241, %v1069
    %v1071 = vpop.f32.mrb[0].mxu0
    %1072 = vmatprep.mubr.f32.mxu0 0.0
    %1073 = vmatmul.mubr.f32.gmra.mrb[0].mxu0 %v473
    %v1074 = vpop.f32.mrb[0].mxu0
    %v1075 = vadd.f32 %v241, %v1074
    %v1076 = vpop.f32.mrb[0].mxu0
    %1077 = vmatprep.mubr.f32.mxu0 0.0
    %1078 = vmatmul.mubr.f32.gmra.mrb[0].mxu0 %v476
    %v1079 = vpop.f32.mrb[0].mxu0
    %v1080 = vadd.f32 %v241, %v1079
    %v1081 = vpop.f32.mrb[0].mxu0
    %1082 = vmatprep.mubr.f32.mxu0 0.0
    %1083 = vmatmul.mubr.f32.gmra.mrb[0].mxu0 %v479
    %v1084 = vpop.f32.mrb[0].mxu0
    %v1085 = vadd.f32 %v241, %v1084
    %v1086 = vpop.f32.mrb[0].mxu0
    %1087 = vmatprep.mubr.f32.mxu0 0.0
    %1088 = vmatmul.mubr.f32.gmra.mrb[0].mxu0 %v482
    %v1089 = vpop.f32.mrb[0].mxu0
    %v1090 = vadd.f32 %v241, %v1089
    %v1091 = vpop.f32.mrb[0].mxu0
    %1092 = vmatprep.mubr.f32.mxu0 0.0
    %1093 = vmatmul.mubr.f32.gmra.mrb[0].mxu0 %v485
    %v1094 = vpop.f32.mrb[0].mxu0
    %v1095 = vadd.f32 %v241, %v1094
    %v1096 = vpop.f32.mrb[0].mxu0
    %1097 = vmatprep.mubr.f32.mxu0 0.0
    %1098 = vmatmul.mubr.f32.gmra.mrb[0].mxu0 %v488
    %v1099 = vpop.f32.mrb[0].mxu0
    %v1100 = vadd.f32 %v241, %v1099
    %v1101 = vpop.f32.mrb[0].mxu0
    %1102 = vmatprep.mubr.f32.mxu0 0.0
    %1103 = vmatmul.mubr.f32.gmra.mrb[0].mxu0 %v491
    %v1104 = vpop.f32.mrb[0].mxu0
    %v1105 = vadd.f32 %v241, %v1104
    %v1106 = vpop.f32.mrb[0].mxu0
    %1107 = vmatprep.mubr.f32.mxu0 0.0
    %1108 = vmatmul.mubr.f32.gmra.mrb[0].mxu0 %v494
    %v1109 = vpop.f32.mrb[0].mxu0
    %v1110 = vadd.f32 %v241, %v1109
    %v1111 = vpop.f32.mrb[0].mxu0
    %1112 = vmatprep.mubr.f32.mxu0 0.0
    %1113 = vmatmul.mubr.f32.gmra.mrb[0].mxu0 %v497
    %v1114 = vpop.f32.mrb[0].mxu0
    %v1115 = vadd.f32 %v241, %v1114
    %v1116 = vpop.f32.mrb[0].mxu0
    %1117 = vmatprep.mubr.f32.mxu0 0.0
    %1118 = vmatmul.mubr.f32.gmra.mrb[0].mxu0 %v500
    %v1119 = vpop.f32.mrb[0].mxu0
    %v1120 = vadd.f32 %v241, %v1119
    %v1121 = vpop.f32.mrb[0].mxu0
    %1122 = vmatprep.mubr.f32.mxu0 0.0
    %1123 = vmatmul.mubr.f32.gmra.mrb[0].mxu0 %v503
    %v1124 = vpop.f32.mrb[0].mxu0
    %v1125 = vadd.f32 %v241, %v1124
    %v1126 = vpop.f32.mrb[0].mxu0
    %1127 = vmatprep.mubr.f32.mxu0 0.0
    %1128 = vmatmul.mubr.f32.gmra.mrb[0].mxu0 %v506
    %v1129 = vpop.f32.mrb[0].mxu0
    %v1130 = vadd.f32 %v241, %v1129
    %v1131 = vpop.f32.mrb[0].mxu0
    %1132 = vmatprep.mubr.f32.mxu0 0.0
    %1133 = vmatmul.mubr.f32.gmra.mrb[0].mxu0 %v509
    %v1134 = vpop.f32.mrb[0].mxu0
    %v1135 = vadd.f32 %v241, %v1134
    %v1136 = vpop.f32.mrb[0].mxu0
    %1137 = vmatprep.mubr.f32.mxu0 0.0
    %1138 = vmatmul.mubr.f32.gmra.mrb[0].mxu0 %v512
    %v1139 = vpop.f32.mrb[0].mxu0
    %v1140 = vadd.f32 %v241, %v1139
    %v1141 = vpop.f32.mrb[0].mxu0
    %1142 = vmatprep.mubr.f32.mxu0 0.0
    %1143 = vmatmul.mubr.f32.gmra.mrb[0].mxu0 %v515
    %v1144 = vpop.f32.mrb[0].mxu0
    %v1145 = vadd.f32 %v241, %v1144
    %v1146 = vpop.f32.mrb[0].mxu0
    %1147 = vmatprep.mubr.f32.mxu0 0.0
    %1148 = vmatmul.mubr.f32.gmra.mrb[0].mxu0 %v518
    %v1149 = vpop.f32.mrb[0].mxu0
    %v1150 = vadd.f32 %v241, %v1149
    %v1151 = vpop.f32.mrb[0].mxu0
    %1152 = vmatprep.mubr.f32.mxu0 0.0
    %1153 = vmatmul.mubr.f32.gmra.mrb[0].mxu0 %v521
    %v1154 = vpop.f32.mrb[0].mxu0
    %v1155 = vadd.f32 %v241, %v1154
    %v1156 = vpop.f32.mrb[0].mxu0
    %1157 = vmatprep.mubr.f32.mxu0 0.0
    %1158 = vmatmul.mubr.f32.gmra.mrb[0].mxu0 %v524
    %v1159 = vpop.f32.mrb[0].mxu0
    %v1160 = vadd.f32 %v241, %v1159
    %v1161 = vpop.f32.mrb[0].mxu0
    %1162 = vmatprep.mubr.f32.mxu0 0.0
    %1163 = vmatmul.mubr.f32.gmra.mrb[0].mxu0 %v527
    %v1164 = vpop.f32.mrb[0].mxu0
    %v1165 = vadd.f32 %v241, %v1164
    %v1166 = vpop.f32.mrb[0].mxu0
    %1167 = vmatprep.mubr.f32.mxu0 0.0
    %1168 = vmatmul.mubr.f32.gmra.mrb[0].mxu0 %v530
    %v1169 = vpop.f32.mrb[0].mxu0
    %v1170 = vadd.f32 %v241, %v1169
    %v1171 = vpop.f32.mrb[0].mxu0
    %1172 = vmatprep.mubr.f32.mxu0 0.0
    %1173 = vmatmul.mubr.f32.gmra.mrb[0].mxu0 %v533
    %v1174 = vpop.f32.mrb[0].mxu0
    %v1175 = vadd.f32 %v241, %v1174
    %v1176 = vpop.f32.mrb[0].mxu0
    %1177 = vmatprep.mubr.f32.mxu0 0.0
    %1178 = vmatmul.mubr.f32.gmra.mrb[0].mxu0 %v536
    %v1179 = vpop.f32.mrb[0].mxu0
    %v1180 = vadd.f32 %v241, %v1179
    %v1181 = vpop.f32.mrb[0].mxu0
    %1182 = vmatprep.mubr.f32.mxu0 0.0
    %1183 = vmatmul.mubr.f32.gmra.mrb[0].mxu0 %v539
    %v1184 = vpop.f32.mrb[0].mxu0
    %v1185 = vadd.f32 %v241, %v1184
    %v1186 = vpop.f32.mrb[0].mxu0
    %1187 = vmatprep.mubr.f32.mxu0 0.0
    %1188 = vmatmul.mubr.f32.gmra.mrb[0].mxu0 %v542
    %v1189 = vpop.f32.mrb[0].mxu0
    %v1190 = vadd.f32 %v241, %v1189
    %v1191 = vpop.f32.mrb[0].mxu0
    %1192 = vmatprep.mubr.f32.mxu0 0.0
    %1193 = vmatmul.mubr.f32.gmra.mrb[0].mxu0 %v545
    %v1194 = vpop.f32.mrb[0].mxu0
    %v1195 = vadd.f32 %v241, %v1194
    %v1196 = vpop.f32.mrb[0].mxu0
    %1197 = vmatprep.mubr.f32.mxu0 0.0
    %1198 = vmatmul.mubr.f32.gmra.mrb[0].mxu0 %v548
    %v1199 = vpop.f32.mrb[0].mxu0
    %v1200 = vadd.f32 %v241, %v1199
    %v1201 = vpop.f32.mrb[0].mxu0
    %1202 = vmatprep.mubr.f32.mxu0 0.0
    %1203 = vmatmul.mubr.f32.gmra.mrb[0].mxu0 %v551
    %v1204 = vpop.f32.mrb[0].mxu0
    %v1205 = vadd.f32 %v241, %v1204
    %v1206 = vpop.f32.mrb[0].mxu0
    %1207 = vmatprep.mubr.f32.mxu0 0.0
    %1208 = vmatmul.mubr.f32.gmra.mrb[0].mxu0 %v554
    %v1209 = vpop.f32.mrb[0].mxu0
    %v1210 = vadd.f32 %v241, %v1209
    %v1211 = vpop.f32.mrb[0].mxu0
    %1212 = vmatprep.mubr.f32.mxu0 0.0
    %1213 = vmatmul.mubr.f32.gmra.mrb[0].mxu0 %v557
    %v1214 = vpop.f32.mrb[0].mxu0
    %v1215 = vadd.f32 %v241, %v1214
    %v1216 = vpop.f32.mrb[0].mxu0
    %1217 = vmatprep.mubr.f32.mxu0 0.0
    %1218 = vmatmul.mubr.f32.gmra.mrb[0].mxu0 %v560
    %v1219 = vpop.f32.mrb[0].mxu0
    %v1220 = vadd.f32 %v241, %v1219
    %v1221 = vpop.f32.mrb[0].mxu0
    %1222 = vmatprep.mubr.f32.mxu0 0.0
    %1223 = vmatmul.mubr.f32.gmra.mrb[0].mxu0 %v563
    %v1224 = vpop.f32.mrb[0].mxu0
    %v1225 = vadd.f32 %v241, %v1224
    %v1226 = vpop.f32.mrb[0].mxu0
    %1227 = vmatprep.mubr.f32.mxu0 0.0
    %1228 = vmatmul.mubr.f32.gmra.mrb[0].mxu0 %v566
    %v1229 = vpop.f32.mrb[0].mxu0
    %v1230 = vadd.f32 %v241, %v1229
    %v1231 = vpop.f32.mrb[0].mxu0
    %1232 = vmatprep.mubr.f32.mxu0 0.0
    %1233 = vmatmul.mubr.f32.gmra.mrb[0].mxu0 %v569
    %v1234 = vpop.f32.mrb[0].mxu0
    %v1235 = vadd.f32 %v241, %v1234
    %v1236 = vpop.f32.mrb[0].mxu0
    %1237 = vmatprep.mubr.f32.mxu0 0.0
    %1238 = vmatmul.mubr.f32.gmra.mrb[0].mxu0 %v572
    %v1239 = vpop.f32.mrb[0].mxu0
    %v1240 = vadd.f32 %v241, %v1239
    %v1241 = vpop.f32.mrb[0].mxu0
    %1242 = vmatprep.mubr.f32.mxu0 0.0
    %1243 = vmatmul.mubr.f32.gmra.mrb[0].mxu0 %v575
    %v1244 = vpop.f32.mrb[0].mxu0
    %v1245 = vadd.f32 %v241, %v1244
    %v1246 = vpop.f32.mrb[0].mxu0
    %1247 = vmatprep.mubr.f32.mxu0 0.0
    %1248 = vmatmul.mubr.f32.gmra.mrb[0].mxu0 %v578
    %v1249 = vpop.f32.mrb[0].mxu0
    %v1250 = vadd.f32 %v241, %v1249
    %v1251 = vpop.f32.mrb[0].mxu0
    %1252 = vmatprep.mubr.f32.mxu0 0.0
    %1253 = vmatmul.mubr.f32.gmra.mrb[0].mxu0 %v581
    %v1254 = vpop.f32.mrb[0].mxu0
    %v1255 = vadd.f32 %v241, %v1254
    %v1256 = vpop.f32.mrb[0].mxu0
    %1257 = vmatprep.mubr.f32.mxu0 0.0
    %1258 = vmatmul.mubr.f32.gmra.mrb[0].mxu0 %v584
    %v1259 = vpop.f32.mrb[0].mxu0
    %v1260 = vadd.f32 %v241, %v1259
    %v1261 = vpop.f32.mrb[0].mxu0
    %1262 = vmatprep.mubr.f32.mxu0 0.0
    %1263 = vmatmul.mubr.f32.gmra.mrb[0].mxu0 %v587
    %v1264 = vpop.f32.mrb[0].mxu0
    %v1265 = vadd.f32 %v241, %v1264
    %v1266 = vpop.f32.mrb[0].mxu0
    %1267 = vmatprep.mubr.f32.mxu0 0.0
    %1268 = vmatmul.mubr.f32.gmra.mrb[0].mxu0 %v590
    %v1269 = vpop.f32.mrb[0].mxu0
    %v1270 = vadd.f32 %v241, %v1269
    %v1271 = vpop.f32.mrb[0].mxu0
    %1272 = vmatprep.mubr.f32.mxu0 0.0
    %1273 = vmatmul.mubr.f32.gmra.mrb[0].mxu0 %v593
    %v1274 = vpop.f32.mrb[0].mxu0
    %v1275 = vadd.f32 %v241, %v1274
    %v1276 = vpop.f32.mrb[0].mxu0
    %1277 = vmatprep.mubr.f32.mxu0 0.0
    %1278 = vmatmul.mubr.f32.gmra.mrb[0].mxu0 %v596
    %v1279 = vpop.f32.mrb[0].mxu0
    %v1280 = vadd.f32 %v241, %v1279
    %v1281 = vpop.f32.mrb[0].mxu0
    %1282 = vmatprep.mubr.f32.mxu0 0.0
    %1283 = vmatmul.mubr.f32.gmra.mrb[0].mxu0 %v599
    %v1284 = vpop.f32.mrb[0].mxu0
    %v1285 = vadd.f32 %v241, %v1284
    %v1286 = vpop.f32.mrb[0].mxu0
    %1287 = vmatprep.mubr.f32.mxu0 0.0
    %1288 = vmatmul.mubr.f32.gmra.mrb[0].mxu0 %v602
    %v1289 = vpop.f32.mrb[0].mxu0
    %v1290 = vadd.f32 %v241, %v1289
    %v1291 = vpop.f32.mrb[0].mxu0
    %1292 = vmatprep.mubr.f32.mxu0 0.0
    %1293 = vmatmul.mubr.f32.gmra.mrb[0].mxu0 %v605
    %v1294 = vpop.f32.mrb[0].mxu0
    %v1295 = vadd.f32 %v241, %v1294
    %v1296 = vpop.f32.mrb[0].mxu0
    %1297 = vmatprep.mubr.f32.mxu0 0.0
    %1298 = vmatmul.mubr.f32.gmra.mrb[0].mxu0 %v608
    %v1299 = vpop.f32.mrb[0].mxu0
    %v1300 = vadd.f32 %v241, %v1299
    %v1301 = vpop.f32.mrb[0].mxu0
    %1302 = vmatprep.mubr.f32.mxu0 0.0
    %1303 = vmatmul.mubr.f32.gmra.mrb[0].mxu0 %v611
    %v1304 = vpop.f32.mrb[0].mxu0
    %v1305 = vadd.f32 %v241, %v1304
    %v1306 = vpop.f32.mrb[0].mxu0
    %1307 = vmatprep.mubr.f32.mxu0 0.0
    %1308 = vmatmul.mubr.f32.gmra.mrb[0].mxu0 %v614
    %v1309 = vpop.f32.mrb[0].mxu0
    %v1310 = vadd.f32 %v241, %v1309
    %v1311 = vpop.f32.mrb[0].mxu0
    %1312 = vmatprep.mubr.f32.mxu0 0.0
    %1313 = vmatmul.mubr.f32.gmra.mrb[0].mxu0 %v617
    %v1314 = vpop.f32.mrb[0].mxu0
    %v1315 = vadd.f32 %v241, %v1314
    %v1316 = vpop.f32.mrb[0].mxu0
    %1317 = vmatprep.mubr.f32.mxu0 0.0
    %1318 = vmatmul.mubr.f32.gmra.mrb[0].mxu0 %v620
    %v1319 = vpop.f32.mrb[0].mxu0
    %v1320 = vadd.f32 %v241, %v1319
    %v1321 = vpop.f32.mrb[0].mxu0
    %1322 = vmatprep.mubr.f32.mxu0 0.0
    %1323 = vmatmul.mubr.f32.gmra.mrb[0].mxu0 %v623
    %v1324 = vpop.f32.mrb[0].mxu0
    %v1325 = vadd.f32 %v241, %v1324
    %v1326 = vpop.f32.mrb[0].mxu0
    %1327 = vmatprep.mubr.f32.mxu0 0.0
    %1328 = vmatmul.mubr.f32.gmra.mrb[0].mxu0 %v626
    %v1329 = vpop.f32.mrb[0].mxu0
    %v1330 = vadd.f32 %v241, %v1329
    %v1331 = vpop.f32.mrb[0].mxu0
    %1332 = vdwg.mxu0
    %v1333 = vmax.f32 %v695, 0.0
    %v1334 = vmax.f32 %v700, 0.0
    %v1335 = vmax.f32 %v705, 0.0
    %v1336 = vmax.f32 %v710, 0.0
    %v1337 = vmax.f32 %v715, 0.0
    %v1338 = vmax.f32 %v720, 0.0
    %v1339 = vmax.f32 %v725, 0.0
    %v1340 = vmax.f32 %v730, 0.0
    %v1341 = vmax.f32 %v735, 0.0
    %v1342 = vmax.f32 %v740, 0.0
    %v1343 = vmax.f32 %v745, 0.0
    %v1344 = vmax.f32 %v750, 0.0
    %v1345 = vmax.f32 %v755, 0.0
    %v1346 = vmax.f32 %v760, 0.0
    %v1347 = vmax.f32 %v765, 0.0
    %v1348 = vmax.f32 %v770, 0.0
    %v1349 = vmax.f32 %v775, 0.0
    %v1350 = vmax.f32 %v780, 0.0
    %v1351 = vmax.f32 %v785, 0.0
    %v1352 = vmax.f32 %v790, 0.0
    %v1353 = vmax.f32 %v795, 0.0
    %v1354 = vmax.f32 %v800, 0.0
    %v1355 = vmax.f32 %v805, 0.0
    %v1356 = vmax.f32 %v810, 0.0
    %v1357 = vmax.f32 %v815, 0.0
    %v1358 = vmax.f32 %v820, 0.0
    %v1359 = vmax.f32 %v825, 0.0
    %v1360 = vmax.f32 %v830, 0.0
    %v1361 = vmax.f32 %v835, 0.0
    %v1362 = vmax.f32 %v840, 0.0
    %v1363 = vmax.f32 %v845, 0.0
    %v1364 = vmax.f32 %v850, 0.0
    %v1365 = vmax.f32 %v855, 0.0
    %v1366 = vmax.f32 %v860, 0.0
    %v1367 = vmax.f32 %v865, 0.0
    %v1368 = vmax.f32 %v870, 0.0
    %v1369 = vmax.f32 %v875, 0.0
    %v1370 = vmax.f32 %v880, 0.0
    %v1371 = vmax.f32 %v885, 0.0
    %v1372 = vmax.f32 %v890, 0.0
    %v1373 = vmax.f32 %v895, 0.0
    %v1374 = vmax.f32 %v900, 0.0
    %v1375 = vmax.f32 %v905, 0.0
    %v1376 = vmax.f32 %v910, 0.0
    %v1377 = vmax.f32 %v915, 0.0
    %v1378 = vmax.f32 %v920, 0.0
    %v1379 = vmax.f32 %v925, 0.0
    %v1380 = vmax.f32 %v930, 0.0
    %v1381 = vmax.f32 %v935, 0.0
    %v1382 = vmax.f32 %v940, 0.0
    %v1383 = vmax.f32 %v945, 0.0
    %v1384 = vmax.f32 %v950, 0.0
    %v1385 = vmax.f32 %v955, 0.0
    %v1386 = vmax.f32 %v960, 0.0
    %v1387 = vmax.f32 %v965, 0.0
    %v1388 = vmax.f32 %v970, 0.0
    %v1389 = vmax.f32 %v975, 0.0
    %v1390 = vmax.f32 %v980, 0.0
    %v1391 = vmax.f32 %v985, 0.0
    %v1392 = vmax.f32 %v990, 0.0
    %v1393 = vmax.f32 %v995, 0.0
    %v1394 = vmax.f32 %v1000, 0.0
    %v1395 = vmax.f32 %v1005, 0.0
    %v1396 = vmax.f32 %v1010, 0.0
    %v1397 = vmax.f32 %v1015, 0.0
    %v1398 = vmax.f32 %v1020, 0.0
    %v1399 = vmax.f32 %v1025, 0.0
    %v1400 = vmax.f32 %v1030, 0.0
    %v1401 = vmax.f32 %v1035, 0.0
    %v1402 = vmax.f32 %v1040, 0.0
    %v1403 = vmax.f32 %v1045, 0.0
    %v1404 = vmax.f32 %v1050, 0.0
    %v1405 = vmax.f32 %v1055, 0.0
    %v1406 = vmax.f32 %v1060, 0.0
    %v1407 = vmax.f32 %v1065, 0.0
    %v1408 = vmax.f32 %v1070, 0.0
    %v1409 = vmax.f32 %v1075, 0.0
    %v1410 = vmax.f32 %v1080, 0.0
    %v1411 = vmax.f32 %v1085, 0.0
    %v1412 = vmax.f32 %v1090, 0.0
    %v1413 = vmax.f32 %v1095, 0.0
    %v1414 = vmax.f32 %v1100, 0.0
    %v1415 = vmax.f32 %v1105, 0.0
    %v1416 = vmax.f32 %v1110, 0.0
    %v1417 = vmax.f32 %v1115, 0.0
    %v1418 = vmax.f32 %v1120, 0.0
    %v1419 = vmax.f32 %v1125, 0.0
    %v1420 = vmax.f32 %v1130, 0.0
    %v1421 = vmax.f32 %v1135, 0.0
    %v1422 = vmax.f32 %v1140, 0.0
    %v1423 = vmax.f32 %v1145, 0.0
    %v1424 = vmax.f32 %v1150, 0.0
    %v1425 = vmax.f32 %v1155, 0.0
    %v1426 = vmax.f32 %v1160, 0.0
    %v1427 = vmax.f32 %v1165, 0.0
    %v1428 = vmax.f32 %v1170, 0.0
    %v1429 = vmax.f32 %v1175, 0.0
    %v1430 = vmax.f32 %v1180, 0.0
    %v1431 = vmax.f32 %v1185, 0.0
    %v1432 = vmax.f32 %v1190, 0.0
    %v1433 = vmax.f32 %v1195, 0.0
    %v1434 = vmax.f32 %v1200, 0.0
    %v1435 = vmax.f32 %v1205, 0.0
    %v1436 = vmax.f32 %v1210, 0.0
    %v1437 = vmax.f32 %v1215, 0.0
    %v1438 = vmax.f32 %v1220, 0.0
    %v1439 = vmax.f32 %v1225, 0.0
    %v1440 = vmax.f32 %v1230, 0.0
    %v1441 = vmax.f32 %v1235, 0.0
    %v1442 = vmax.f32 %v1240, 0.0
    %v1443 = vmax.f32 %v1245, 0.0
    %v1444 = vmax.f32 %v1250, 0.0
    %v1445 = vmax.f32 %v1255, 0.0
    %v1446 = vmax.f32 %v1260, 0.0
    %v1447 = vmax.f32 %v1265, 0.0
    %v1448 = vmax.f32 %v1270, 0.0
    %v1449 = vmax.f32 %v1275, 0.0
    %v1450 = vmax.f32 %v1280, 0.0
    %v1451 = vmax.f32 %v1285, 0.0
    %v1452 = vmax.f32 %v1290, 0.0
    %v1453 = vmax.f32 %v1295, 0.0
    %v1454 = vmax.f32 %v1300, 0.0
    %v1455 = vmax.f32 %v1305, 0.0
    %v1456 = vmax.f32 %v1310, 0.0
    %v1457 = vmax.f32 %v1315, 0.0
    %v1458 = vmax.f32 %v1320, 0.0
    %v1459 = vmax.f32 %v1325, 0.0
    %v1460 = vmax.f32 %v1330, 0.0
    %v1461 = vpack.c.bf16 %v1334, %v1333
    %v1462 = vpack.c.bf16 %v1336, %v1335
    %v1463 = vpack.c.bf16 %v1338, %v1337
    %v1464 = vpack.c.bf16 %v1340, %v1339
    %v1465 = vpack.c.bf16 %v1342, %v1341
    %v1466 = vpack.c.bf16 %v1344, %v1343
    %v1467 = vpack.c.bf16 %v1346, %v1345
    %v1468 = vpack.c.bf16 %v1348, %v1347
    %v1469 = vpack.c.bf16 %v1350, %v1349
    %v1470 = vpack.c.bf16 %v1352, %v1351
    %v1471 = vpack.c.bf16 %v1354, %v1353
    %v1472 = vpack.c.bf16 %v1356, %v1355
    %v1473 = vpack.c.bf16 %v1358, %v1357
    %v1474 = vpack.c.bf16 %v1360, %v1359
    %v1475 = vpack.c.bf16 %v1362, %v1361
    %v1476 = vpack.c.bf16 %v1364, %v1363
    %v1477 = vpack.c.bf16 %v1366, %v1365
    %v1478 = vpack.c.bf16 %v1368, %v1367
    %v1479 = vpack.c.bf16 %v1370, %v1369
    %v1480 = vpack.c.bf16 %v1372, %v1371
    %v1481 = vpack.c.bf16 %v1374, %v1373
    %v1482 = vpack.c.bf16 %v1376, %v1375
    %v1483 = vpack.c.bf16 %v1378, %v1377
    %v1484 = vpack.c.bf16 %v1380, %v1379
    %v1485 = vpack.c.bf16 %v1382, %v1381
    %v1486 = vpack.c.bf16 %v1384, %v1383
    %v1487 = vpack.c.bf16 %v1386, %v1385
    %v1488 = vpack.c.bf16 %v1388, %v1387
    %v1489 = vpack.c.bf16 %v1390, %v1389
    %v1490 = vpack.c.bf16 %v1392, %v1391
    %v1491 = vpack.c.bf16 %v1394, %v1393
    %v1492 = vpack.c.bf16 %v1396, %v1395
    %v1493 = vpack.c.bf16 %v1398, %v1397
    %v1494 = vpack.c.bf16 %v1400, %v1399
    %v1495 = vpack.c.bf16 %v1402, %v1401
    %v1496 = vpack.c.bf16 %v1404, %v1403
    %v1497 = vpack.c.bf16 %v1406, %v1405
    %v1498 = vpack.c.bf16 %v1408, %v1407
    %v1499 = vpack.c.bf16 %v1410, %v1409
    %v1500 = vpack.c.bf16 %v1412, %v1411
    %v1501 = vpack.c.bf16 %v1414, %v1413
    %v1502 = vpack.c.bf16 %v1416, %v1415
    %v1503 = vpack.c.bf16 %v1418, %v1417
    %v1504 = vpack.c.bf16 %v1420, %v1419
    %v1505 = vpack.c.bf16 %v1422, %v1421
    %v1506 = vpack.c.bf16 %v1424, %v1423
    %v1507 = vpack.c.bf16 %v1426, %v1425
    %v1508 = vpack.c.bf16 %v1428, %v1427
    %v1509 = vpack.c.bf16 %v1430, %v1429
    %v1510 = vpack.c.bf16 %v1432, %v1431
    %v1511 = vpack.c.bf16 %v1434, %v1433
    %v1512 = vpack.c.bf16 %v1436, %v1435
    %v1513 = vpack.c.bf16 %v1438, %v1437
    %v1514 = vpack.c.bf16 %v1440, %v1439
    %v1515 = vpack.c.bf16 %v1442, %v1441
    %v1516 = vpack.c.bf16 %v1444, %v1443
    %v1517 = vpack.c.bf16 %v1446, %v1445
    %v1518 = vpack.c.bf16 %v1448, %v1447
    %v1519 = vpack.c.bf16 %v1450, %v1449
    %v1520 = vpack.c.bf16 %v1452, %v1451
    %v1521 = vpack.c.bf16 %v1454, %v1453
    %v1522 = vpack.c.bf16 %v1456, %v1455
    %v1523 = vpack.c.bf16 %v1458, %v1457
    %v1524 = vpack.c.bf16 %v1460, %v1459
    %v1525 = vld [vmem:[%s3] sm:$0xf]
    %v1526 = vld [vmem:[%s3 + $0x4] sm:$0xf]
    %v1527 = vld [vmem:[%s3 + $0x8] sm:$0xf]
    %v1528 = vld [vmem:[%s3 + $0xc] sm:$0xf]
    %v1529 = vld [vmem:[%s3 + $0x10] sm:$0xf]
    %v1530 = vld [vmem:[%s3 + $0x14] sm:$0xf]
    %v1531 = vld [vmem:[%s3 + $0x18] sm:$0xf]
    %v1532 = vld [vmem:[%s3 + $0x1c] sm:$0xf]
    %v1533 = vld [vmem:[%s4] sm:$0x1]
    %v1535 = vlaneseq
    %v1536 = vshrl.u32 %v1535, 7
    %v1537 = vsub.s32 0, %v1536
    %v1538 = vrot.slane %v1533, %v1537
    %v1548 = vunpack.c.l.b16 %v1525
    %v1549 = vunpack.c.l.b16 %v1526
    %v1550 = vunpack.c.l.b16 %v1527
    %v1551 = vunpack.c.l.b16 %v1528
    %v1552 = vunpack.c.l.b16 %v1529
    %v1553 = vunpack.c.l.b16 %v1530
    %v1554 = vunpack.c.l.b16 %v1531
    %v1555 = vunpack.c.l.b16 %v1532
    %v1556 = vpack.c.b16 %v1549, %v1548
    %v1557 = vpack.c.b16 %v1551, %v1550
    %v1558 = vpack.c.b16 %v1553, %v1552
    %v1559 = vpack.c.b16 %v1555, %v1554
    %vm1564 = vcmask 523264
    %v1566 = vsel %vm1564, %v1461, 0
    %v1569 = vsel %vm1564, %v1462, 0
    %v1572 = vsel %vm1564, %v1463, 0
    %v1575 = vsel %vm1564, %v1464, 0
    %v1578 = vsel %vm1564, %v1465, 0
    %v1581 = vsel %vm1564, %v1466, 0
    %v1584 = vsel %vm1564, %v1467, 0
    %v1587 = vsel %vm1564, %v1468, 0
    %v1590 = vsel %vm1564, %v1469, 0
    %v1593 = vsel %vm1564, %v1470, 0
    %v1596 = vsel %vm1564, %v1471, 0
    %v1599 = vsel %vm1564, %v1472, 0
    %v1602 = vsel %vm1564, %v1473, 0
    %v1605 = vsel %vm1564, %v1474, 0
    %v1608 = vsel %vm1564, %v1475, 0
    %v1611 = vsel %vm1564, %v1476, 0
    %v1614 = vsel %vm1564, %v1477, 0
    %v1617 = vsel %vm1564, %v1478, 0
    %v1620 = vsel %vm1564, %v1479, 0
    %v1623 = vsel %vm1564, %v1480, 0
    %v1626 = vsel %vm1564, %v1481, 0
    %v1629 = vsel %vm1564, %v1482, 0
    %v1632 = vsel %vm1564, %v1483, 0
    %v1635 = vsel %vm1564, %v1484, 0
    %v1638 = vsel %vm1564, %v1485, 0
    %v1641 = vsel %vm1564, %v1486, 0
    %v1644 = vsel %vm1564, %v1487, 0
    %v1647 = vsel %vm1564, %v1488, 0
    %v1650 = vsel %vm1564, %v1489, 0
    %v1653 = vsel %vm1564, %v1490, 0
    %v1656 = vsel %vm1564, %v1491, 0
    %v1659 = vsel %vm1564, %v1492, 0
    %v1662 = vsel %vm1564, %v1493, 0
    %v1665 = vsel %vm1564, %v1494, 0
    %v1668 = vsel %vm1564, %v1495, 0
    %v1671 = vsel %vm1564, %v1496, 0
    %v1674 = vsel %vm1564, %v1497, 0
    %v1677 = vsel %vm1564, %v1498, 0
    %v1680 = vsel %vm1564, %v1499, 0
    %v1683 = vsel %vm1564, %v1500, 0
    %v1686 = vsel %vm1564, %v1501, 0
    %v1689 = vsel %vm1564, %v1502, 0
    %v1692 = vsel %vm1564, %v1503, 0
    %v1695 = vsel %vm1564, %v1504, 0
    %v1698 = vsel %vm1564, %v1505, 0
    %v1701 = vsel %vm1564, %v1506, 0
    %v1704 = vsel %vm1564, %v1507, 0
    %v1707 = vsel %vm1564, %v1508, 0
    %v1710 = vsel %vm1564, %v1509, 0
    %v1713 = vsel %vm1564, %v1510, 0
    %v1716 = vsel %vm1564, %v1511, 0
    %v1719 = vsel %vm1564, %v1512, 0
    %v1722 = vsel %vm1564, %v1513, 0
    %v1725 = vsel %vm1564, %v1514, 0
    %v1728 = vsel %vm1564, %v1515, 0
    %v1731 = vsel %vm1564, %v1516, 0
    %v1734 = vsel %vm1564, %v1517, 0
    %v1737 = vsel %vm1564, %v1518, 0
    %v1740 = vsel %vm1564, %v1519, 0
    %v1743 = vsel %vm1564, %v1520, 0
    %v1746 = vsel %vm1564, %v1521, 0
    %v1749 = vsel %vm1564, %v1522, 0
    %v1752 = vsel %vm1564, %v1523, 0
    %v1755 = vsel %vm1564, %v1524, 0
    %1757 = vmatprep.subr.bf16.mxu0 0
    %1758 = vmatpush1.bf16.msra.mxu0 %v1556
    %1759 = vmatprep.subr.bf16.mxu0 0
    %1760 = vmatpush1.bf16.msra.mxu0 %v1557
    %1761 = vmatprep.subr.bf16.mxu0 0
    %1762 = vmatpush1.bf16.msra.mxu0 %v1558
    %1763 = vmatprep.subr.bf16.mxu0 0
    %1764 = vmatpush1.bf16.msra.mxu0 %v1559
    %1765 = vmatprep.subr.bf16.mxu0 0
    %1766 = vmatpush1.bf16.msra.mxu0 0
    %1767 = vmatprep.subr.bf16.mxu0 0
    %1768 = vmatpush1.bf16.msra.mxu0 0
    %1769 = vmatprep.subr.bf16.mxu0 0
    %1770 = vmatpush1.bf16.msra.mxu0 0
    %1771 = vmatprep.subr.bf16.mxu0 0
    %1772 = vmatpush1.bf16.msra.mxu0 0
    %1773 = vmatprep.subr.bf16.mxu0 0
    %1774 = vmatpush1.bf16.msra.mxu0 0
    %1775 = vmatprep.subr.bf16.mxu0 0
    %1776 = vmatpush1.bf16.msra.mxu0 0
    %1777 = vmatprep.subr.bf16.mxu0 0
    %1778 = vmatpush1.bf16.msra.mxu0 0
    %1779 = vmatprep.subr.bf16.mxu0 0
    %1780 = vmatpush1.bf16.msra.mxu0 0
    %1781 = vmatprep.subr.bf16.mxu0 0
    %1782 = vmatpush1.bf16.msra.mxu0 0
    %1783 = vmatprep.subr.bf16.mxu0 0
    %1784 = vmatpush1.bf16.msra.mxu0 0
    %1785 = vmatprep.subr.bf16.mxu0 0
    %1786 = vmatpush1.bf16.msra.mxu0 0
    %1787 = vmatprep.subr.bf16.mxu0 0
    %1788 = vmatpush1.bf16.msra.mxu0 0
    %1789 = vmatprep.mubr.bf16.mxu0 0
    %1790 = vmatmul.mubr.bf16.gmra.mrb[0].mxu0 %v1566
    %v1791 = vpop.f32.mrb[0].mxu0
    %v1792 = vadd.f32 %v1538, %v1791
    %v1793 = vpop.f32.mrb[0].mxu0
    %v1794 = vpop.f32.mrb[0].mxu0
    %v1795 = vadd.f32 %v1538, %v1794
    %v1796 = vpop.f32.mrb[0].mxu0
    %1797 = vmatprep.mubr.bf16.mxu0 0
    %1798 = vmatmul.mubr.bf16.gmra.mrb[0].mxu0 %v1569
    %v1799 = vpop.f32.mrb[0].mxu0
    %v1800 = vadd.f32 %v1538, %v1799
    %v1801 = vpop.f32.mrb[0].mxu0
    %v1802 = vpop.f32.mrb[0].mxu0
    %v1803 = vadd.f32 %v1538, %v1802
    %v1804 = vpop.f32.mrb[0].mxu0
    %1805 = vmatprep.mubr.bf16.mxu0 0
    %1806 = vmatmul.mubr.bf16.gmra.mrb[0].mxu0 %v1572
    %v1807 = vpop.f32.mrb[0].mxu0
    %v1808 = vadd.f32 %v1538, %v1807
    %v1809 = vpop.f32.mrb[0].mxu0
    %v1810 = vpop.f32.mrb[0].mxu0
    %v1811 = vadd.f32 %v1538, %v1810
    %v1812 = vpop.f32.mrb[0].mxu0
    %1813 = vmatprep.mubr.bf16.mxu0 0
    %1814 = vmatmul.mubr.bf16.gmra.mrb[0].mxu0 %v1575
    %v1815 = vpop.f32.mrb[0].mxu0
    %v1816 = vadd.f32 %v1538, %v1815
    %v1817 = vpop.f32.mrb[0].mxu0
    %v1818 = vpop.f32.mrb[0].mxu0
    %v1819 = vadd.f32 %v1538, %v1818
    %v1820 = vpop.f32.mrb[0].mxu0
    %1821 = vmatprep.mubr.bf16.mxu0 0
    %1822 = vmatmul.mubr.bf16.gmra.mrb[0].mxu0 %v1578
    %v1823 = vpop.f32.mrb[0].mxu0
    %v1824 = vadd.f32 %v1538, %v1823
    %v1825 = vpop.f32.mrb[0].mxu0
    %v1826 = vpop.f32.mrb[0].mxu0
    %v1827 = vadd.f32 %v1538, %v1826
    %v1828 = vpop.f32.mrb[0].mxu0
    %1829 = vmatprep.mubr.bf16.mxu0 0
    %1830 = vmatmul.mubr.bf16.gmra.mrb[0].mxu0 %v1581
    %v1831 = vpop.f32.mrb[0].mxu0
    %v1832 = vadd.f32 %v1538, %v1831
    %v1833 = vpop.f32.mrb[0].mxu0
    %v1834 = vpop.f32.mrb[0].mxu0
    %v1835 = vadd.f32 %v1538, %v1834
    %v1836 = vpop.f32.mrb[0].mxu0
    %1837 = vmatprep.mubr.bf16.mxu0 0
    %1838 = vmatmul.mubr.bf16.gmra.mrb[0].mxu0 %v1584
    %v1839 = vpop.f32.mrb[0].mxu0
    %v1840 = vadd.f32 %v1538, %v1839
    %v1841 = vpop.f32.mrb[0].mxu0
    %v1842 = vpop.f32.mrb[0].mxu0
    %v1843 = vadd.f32 %v1538, %v1842
    %v1844 = vpop.f32.mrb[0].mxu0
    %1845 = vmatprep.mubr.bf16.mxu0 0
    %1846 = vmatmul.mubr.bf16.gmra.mrb[0].mxu0 %v1587
    %v1847 = vpop.f32.mrb[0].mxu0
    %v1848 = vadd.f32 %v1538, %v1847
    %v1849 = vpop.f32.mrb[0].mxu0
    %v1850 = vpop.f32.mrb[0].mxu0
    %v1851 = vadd.f32 %v1538, %v1850
    %v1852 = vpop.f32.mrb[0].mxu0
    %1853 = vmatprep.mubr.bf16.mxu0 0
    %1854 = vmatmul.mubr.bf16.gmra.mrb[0].mxu0 %v1590
    %v1855 = vpop.f32.mrb[0].mxu0
    %v1856 = vadd.f32 %v1538, %v1855
    %v1857 = vpop.f32.mrb[0].mxu0
    %v1858 = vpop.f32.mrb[0].mxu0
    %v1859 = vadd.f32 %v1538, %v1858
    %v1860 = vpop.f32.mrb[0].mxu0
    %1861 = vmatprep.mubr.bf16.mxu0 0
    %1862 = vmatmul.mubr.bf16.gmra.mrb[0].mxu0 %v1593
    %v1863 = vpop.f32.mrb[0].mxu0
    %v1864 = vadd.f32 %v1538, %v1863
    %v1865 = vpop.f32.mrb[0].mxu0
    %v1866 = vpop.f32.mrb[0].mxu0
    %v1867 = vadd.f32 %v1538, %v1866
    %v1868 = vpop.f32.mrb[0].mxu0
    %1869 = vmatprep.mubr.bf16.mxu0 0
    %1870 = vmatmul.mubr.bf16.gmra.mrb[0].mxu0 %v1596
    %v1871 = vpop.f32.mrb[0].mxu0
    %v1872 = vadd.f32 %v1538, %v1871
    %v1873 = vpop.f32.mrb[0].mxu0
    %v1874 = vpop.f32.mrb[0].mxu0
    %v1875 = vadd.f32 %v1538, %v1874
    %v1876 = vpop.f32.mrb[0].mxu0
    %1877 = vmatprep.mubr.bf16.mxu0 0
    %1878 = vmatmul.mubr.bf16.gmra.mrb[0].mxu0 %v1599
    %v1879 = vpop.f32.mrb[0].mxu0
    %v1880 = vadd.f32 %v1538, %v1879
    %v1881 = vpop.f32.mrb[0].mxu0
    %v1882 = vpop.f32.mrb[0].mxu0
    %v1883 = vadd.f32 %v1538, %v1882
    %v1884 = vpop.f32.mrb[0].mxu0
    %1885 = vmatprep.mubr.bf16.mxu0 0
    %1886 = vmatmul.mubr.bf16.gmra.mrb[0].mxu0 %v1602
    %v1887 = vpop.f32.mrb[0].mxu0
    %v1888 = vadd.f32 %v1538, %v1887
    %v1889 = vpop.f32.mrb[0].mxu0
    %v1890 = vpop.f32.mrb[0].mxu0
    %v1891 = vadd.f32 %v1538, %v1890
    %v1892 = vpop.f32.mrb[0].mxu0
    %1893 = vmatprep.mubr.bf16.mxu0 0
    %1894 = vmatmul.mubr.bf16.gmra.mrb[0].mxu0 %v1605
    %v1895 = vpop.f32.mrb[0].mxu0
    %v1896 = vadd.f32 %v1538, %v1895
    %v1897 = vpop.f32.mrb[0].mxu0
    %v1898 = vpop.f32.mrb[0].mxu0
    %v1899 = vadd.f32 %v1538, %v1898
    %v1900 = vpop.f32.mrb[0].mxu0
    %1901 = vmatprep.mubr.bf16.mxu0 0
    %1902 = vmatmul.mubr.bf16.gmra.mrb[0].mxu0 %v1608
    %v1903 = vpop.f32.mrb[0].mxu0
    %v1904 = vadd.f32 %v1538, %v1903
    %v1905 = vpop.f32.mrb[0].mxu0
    %v1906 = vpop.f32.mrb[0].mxu0
    %v1907 = vadd.f32 %v1538, %v1906
    %v1908 = vpop.f32.mrb[0].mxu0
    %1909 = vmatprep.mubr.bf16.mxu0 0
    %1910 = vmatmul.mubr.bf16.gmra.mrb[0].mxu0 %v1611
    %v1911 = vpop.f32.mrb[0].mxu0
    %v1912 = vadd.f32 %v1538, %v1911
    %v1913 = vpop.f32.mrb[0].mxu0
    %v1914 = vpop.f32.mrb[0].mxu0
    %v1915 = vadd.f32 %v1538, %v1914
    %v1916 = vpop.f32.mrb[0].mxu0
    %1917 = vmatprep.mubr.bf16.mxu0 0
    %1918 = vmatmul.mubr.bf16.gmra.mrb[0].mxu0 %v1614
    %v1919 = vpop.f32.mrb[0].mxu0
    %v1920 = vadd.f32 %v1538, %v1919
    %v1921 = vpop.f32.mrb[0].mxu0
    %v1922 = vpop.f32.mrb[0].mxu0
    %v1923 = vadd.f32 %v1538, %v1922
    %v1924 = vpop.f32.mrb[0].mxu0
    %1925 = vmatprep.mubr.bf16.mxu0 0
    %1926 = vmatmul.mubr.bf16.gmra.mrb[0].mxu0 %v1617
    %v1927 = vpop.f32.mrb[0].mxu0
    %v1928 = vadd.f32 %v1538, %v1927
    %v1929 = vpop.f32.mrb[0].mxu0
    %v1930 = vpop.f32.mrb[0].mxu0
    %v1931 = vadd.f32 %v1538, %v1930
    %v1932 = vpop.f32.mrb[0].mxu0
    %1933 = vmatprep.mubr.bf16.mxu0 0
    %1934 = vmatmul.mubr.bf16.gmra.mrb[0].mxu0 %v1620
    %v1935 = vpop.f32.mrb[0].mxu0
    %v1936 = vadd.f32 %v1538, %v1935
    %v1937 = vpop.f32.mrb[0].mxu0
    %v1938 = vpop.f32.mrb[0].mxu0
    %v1939 = vadd.f32 %v1538, %v1938
    %v1940 = vpop.f32.mrb[0].mxu0
    %1941 = vmatprep.mubr.bf16.mxu0 0
    %1942 = vmatmul.mubr.bf16.gmra.mrb[0].mxu0 %v1623
    %v1943 = vpop.f32.mrb[0].mxu0
    %v1944 = vadd.f32 %v1538, %v1943
    %v1945 = vpop.f32.mrb[0].mxu0
    %v1946 = vpop.f32.mrb[0].mxu0
    %v1947 = vadd.f32 %v1538, %v1946
    %v1948 = vpop.f32.mrb[0].mxu0
    %1949 = vmatprep.mubr.bf16.mxu0 0
    %1950 = vmatmul.mubr.bf16.gmra.mrb[0].mxu0 %v1626
    %v1951 = vpop.f32.mrb[0].mxu0
    %v1952 = vadd.f32 %v1538, %v1951
    %v1953 = vpop.f32.mrb[0].mxu0
    %v1954 = vpop.f32.mrb[0].mxu0
    %v1955 = vadd.f32 %v1538, %v1954
    %v1956 = vpop.f32.mrb[0].mxu0
    %1957 = vmatprep.mubr.bf16.mxu0 0
    %1958 = vmatmul.mubr.bf16.gmra.mrb[0].mxu0 %v1629
    %v1959 = vpop.f32.mrb[0].mxu0
    %v1960 = vadd.f32 %v1538, %v1959
    %v1961 = vpop.f32.mrb[0].mxu0
    %v1962 = vpop.f32.mrb[0].mxu0
    %v1963 = vadd.f32 %v1538, %v1962
    %v1964 = vpop.f32.mrb[0].mxu0
    %1965 = vmatprep.mubr.bf16.mxu0 0
    %1966 = vmatmul.mubr.bf16.gmra.mrb[0].mxu0 %v1632
    %v1967 = vpop.f32.mrb[0].mxu0
    %v1968 = vadd.f32 %v1538, %v1967
    %v1969 = vpop.f32.mrb[0].mxu0
    %v1970 = vpop.f32.mrb[0].mxu0
    %v1971 = vadd.f32 %v1538, %v1970
    %v1972 = vpop.f32.mrb[0].mxu0
    %1973 = vmatprep.mubr.bf16.mxu0 0
    %1974 = vmatmul.mubr.bf16.gmra.mrb[0].mxu0 %v1635
    %v1975 = vpop.f32.mrb[0].mxu0
    %v1976 = vadd.f32 %v1538, %v1975
    %v1977 = vpop.f32.mrb[0].mxu0
    %v1978 = vpop.f32.mrb[0].mxu0
    %v1979 = vadd.f32 %v1538, %v1978
    %v1980 = vpop.f32.mrb[0].mxu0
    %1981 = vmatprep.mubr.bf16.mxu0 0
    %1982 = vmatmul.mubr.bf16.gmra.mrb[0].mxu0 %v1638
    %v1983 = vpop.f32.mrb[0].mxu0
    %v1984 = vadd.f32 %v1538, %v1983
    %v1985 = vpop.f32.mrb[0].mxu0
    %v1986 = vpop.f32.mrb[0].mxu0
    %v1987 = vadd.f32 %v1538, %v1986
    %v1988 = vpop.f32.mrb[0].mxu0
    %1989 = vmatprep.mubr.bf16.mxu0 0
    %1990 = vmatmul.mubr.bf16.gmra.mrb[0].mxu0 %v1641
    %v1991 = vpop.f32.mrb[0].mxu0
    %v1992 = vadd.f32 %v1538, %v1991
    %v1993 = vpop.f32.mrb[0].mxu0
    %v1994 = vpop.f32.mrb[0].mxu0
    %v1995 = vadd.f32 %v1538, %v1994
    %v1996 = vpop.f32.mrb[0].mxu0
    %1997 = vmatprep.mubr.bf16.mxu0 0
    %1998 = vmatmul.mubr.bf16.gmra.mrb[0].mxu0 %v1644
    %v1999 = vpop.f32.mrb[0].mxu0
    %v2000 = vadd.f32 %v1538, %v1999
    %v2001 = vpop.f32.mrb[0].mxu0
    %v2002 = vpop.f32.mrb[0].mxu0
    %v2003 = vadd.f32 %v1538, %v2002
    %v2004 = vpop.f32.mrb[0].mxu0
    %2005 = vmatprep.mubr.bf16.mxu0 0
    %2006 = vmatmul.mubr.bf16.gmra.mrb[0].mxu0 %v1647
    %v2007 = vpop.f32.mrb[0].mxu0
    %v2008 = vadd.f32 %v1538, %v2007
    %v2009 = vpop.f32.mrb[0].mxu0
    %v2010 = vpop.f32.mrb[0].mxu0
    %v2011 = vadd.f32 %v1538, %v2010
    %v2012 = vpop.f32.mrb[0].mxu0
    %2013 = vmatprep.mubr.bf16.mxu0 0
    %2014 = vmatmul.mubr.bf16.gmra.mrb[0].mxu0 %v1650
    %v2015 = vpop.f32.mrb[0].mxu0
    %v2016 = vadd.f32 %v1538, %v2015
    %v2017 = vpop.f32.mrb[0].mxu0
    %v2018 = vpop.f32.mrb[0].mxu0
    %v2019 = vadd.f32 %v1538, %v2018
    %v2020 = vpop.f32.mrb[0].mxu0
    %2021 = vmatprep.mubr.bf16.mxu0 0
    %2022 = vmatmul.mubr.bf16.gmra.mrb[0].mxu0 %v1653
    %v2023 = vpop.f32.mrb[0].mxu0
    %v2024 = vadd.f32 %v1538, %v2023
    %v2025 = vpop.f32.mrb[0].mxu0
    %v2026 = vpop.f32.mrb[0].mxu0
    %v2027 = vadd.f32 %v1538, %v2026
    %v2028 = vpop.f32.mrb[0].mxu0
    %2029 = vmatprep.mubr.bf16.mxu0 0
    %2030 = vmatmul.mubr.bf16.gmra.mrb[0].mxu0 %v1656
    %v2031 = vpop.f32.mrb[0].mxu0
    %v2032 = vadd.f32 %v1538, %v2031
    %v2033 = vpop.f32.mrb[0].mxu0
    %v2034 = vpop.f32.mrb[0].mxu0
    %v2035 = vadd.f32 %v1538, %v2034
    %v2036 = vpop.f32.mrb[0].mxu0
    %2037 = vmatprep.mubr.bf16.mxu0 0
    %2038 = vmatmul.mubr.bf16.gmra.mrb[0].mxu0 %v1659
    %v2039 = vpop.f32.mrb[0].mxu0
    %v2040 = vadd.f32 %v1538, %v2039
    %v2041 = vpop.f32.mrb[0].mxu0
    %v2042 = vpop.f32.mrb[0].mxu0
    %v2043 = vadd.f32 %v1538, %v2042
    %v2044 = vpop.f32.mrb[0].mxu0
    %2045 = vmatprep.mubr.bf16.mxu0 0
    %2046 = vmatmul.mubr.bf16.gmra.mrb[0].mxu0 %v1662
    %v2047 = vpop.f32.mrb[0].mxu0
    %v2048 = vadd.f32 %v1538, %v2047
    %v2049 = vpop.f32.mrb[0].mxu0
    %v2050 = vpop.f32.mrb[0].mxu0
    %v2051 = vadd.f32 %v1538, %v2050
    %v2052 = vpop.f32.mrb[0].mxu0
    %2053 = vmatprep.mubr.bf16.mxu0 0
    %2054 = vmatmul.mubr.bf16.gmra.mrb[0].mxu0 %v1665
    %v2055 = vpop.f32.mrb[0].mxu0
    %v2056 = vadd.f32 %v1538, %v2055
    %v2057 = vpop.f32.mrb[0].mxu0
    %v2058 = vpop.f32.mrb[0].mxu0
    %v2059 = vadd.f32 %v1538, %v2058
    %v2060 = vpop.f32.mrb[0].mxu0
    %2061 = vmatprep.mubr.bf16.mxu0 0
    %2062 = vmatmul.mubr.bf16.gmra.mrb[0].mxu0 %v1668
    %v2063 = vpop.f32.mrb[0].mxu0
    %v2064 = vadd.f32 %v1538, %v2063
    %v2065 = vpop.f32.mrb[0].mxu0
    %v2066 = vpop.f32.mrb[0].mxu0
    %v2067 = vadd.f32 %v1538, %v2066
    %v2068 = vpop.f32.mrb[0].mxu0
    %2069 = vmatprep.mubr.bf16.mxu0 0
    %2070 = vmatmul.mubr.bf16.gmra.mrb[0].mxu0 %v1671
    %v2071 = vpop.f32.mrb[0].mxu0
    %v2072 = vadd.f32 %v1538, %v2071
    %v2073 = vpop.f32.mrb[0].mxu0
    %v2074 = vpop.f32.mrb[0].mxu0
    %v2075 = vadd.f32 %v1538, %v2074
    %v2076 = vpop.f32.mrb[0].mxu0
    %2077 = vmatprep.mubr.bf16.mxu0 0
    %2078 = vmatmul.mubr.bf16.gmra.mrb[0].mxu0 %v1674
    %v2079 = vpop.f32.mrb[0].mxu0
    %v2080 = vadd.f32 %v1538, %v2079
    %v2081 = vpop.f32.mrb[0].mxu0
    %v2082 = vpop.f32.mrb[0].mxu0
    %v2083 = vadd.f32 %v1538, %v2082
    %v2084 = vpop.f32.mrb[0].mxu0
    %2085 = vmatprep.mubr.bf16.mxu0 0
    %2086 = vmatmul.mubr.bf16.gmra.mrb[0].mxu0 %v1677
    %v2087 = vpop.f32.mrb[0].mxu0
    %v2088 = vadd.f32 %v1538, %v2087
    %v2089 = vpop.f32.mrb[0].mxu0
    %v2090 = vpop.f32.mrb[0].mxu0
    %v2091 = vadd.f32 %v1538, %v2090
    %v2092 = vpop.f32.mrb[0].mxu0
    %2093 = vmatprep.mubr.bf16.mxu0 0
    %2094 = vmatmul.mubr.bf16.gmra.mrb[0].mxu0 %v1680
    %v2095 = vpop.f32.mrb[0].mxu0
    %v2096 = vadd.f32 %v1538, %v2095
    %v2097 = vpop.f32.mrb[0].mxu0
    %v2098 = vpop.f32.mrb[0].mxu0
    %v2099 = vadd.f32 %v1538, %v2098
    %v2100 = vpop.f32.mrb[0].mxu0
    %2101 = vmatprep.mubr.bf16.mxu0 0
    %2102 = vmatmul.mubr.bf16.gmra.mrb[0].mxu0 %v1683
    %v2103 = vpop.f32.mrb[0].mxu0
    %v2104 = vadd.f32 %v1538, %v2103
    %v2105 = vpop.f32.mrb[0].mxu0
    %v2106 = vpop.f32.mrb[0].mxu0
    %v2107 = vadd.f32 %v1538, %v2106
    %v2108 = vpop.f32.mrb[0].mxu0
    %2109 = vmatprep.mubr.bf16.mxu0 0
    %2110 = vmatmul.mubr.bf16.gmra.mrb[0].mxu0 %v1686
    %v2111 = vpop.f32.mrb[0].mxu0
    %v2112 = vadd.f32 %v1538, %v2111
    %v2113 = vpop.f32.mrb[0].mxu0
    %v2114 = vpop.f32.mrb[0].mxu0
    %v2115 = vadd.f32 %v1538, %v2114
    %v2116 = vpop.f32.mrb[0].mxu0
    %2117 = vmatprep.mubr.bf16.mxu0 0
    %2118 = vmatmul.mubr.bf16.gmra.mrb[0].mxu0 %v1689
    %v2119 = vpop.f32.mrb[0].mxu0
    %v2120 = vadd.f32 %v1538, %v2119
    %v2121 = vpop.f32.mrb[0].mxu0
    %v2122 = vpop.f32.mrb[0].mxu0
    %v2123 = vadd.f32 %v1538, %v2122
    %v2124 = vpop.f32.mrb[0].mxu0
    %2125 = vmatprep.mubr.bf16.mxu0 0
    %2126 = vmatmul.mubr.bf16.gmra.mrb[0].mxu0 %v1692
    %v2127 = vpop.f32.mrb[0].mxu0
    %v2128 = vadd.f32 %v1538, %v2127
    %v2129 = vpop.f32.mrb[0].mxu0
    %v2130 = vpop.f32.mrb[0].mxu0
    %v2131 = vadd.f32 %v1538, %v2130
    %v2132 = vpop.f32.mrb[0].mxu0
    %2133 = vmatprep.mubr.bf16.mxu0 0
    %2134 = vmatmul.mubr.bf16.gmra.mrb[0].mxu0 %v1695
    %v2135 = vpop.f32.mrb[0].mxu0
    %v2136 = vadd.f32 %v1538, %v2135
    %v2137 = vpop.f32.mrb[0].mxu0
    %v2138 = vpop.f32.mrb[0].mxu0
    %v2139 = vadd.f32 %v1538, %v2138
    %v2140 = vpop.f32.mrb[0].mxu0
    %2141 = vmatprep.mubr.bf16.mxu0 0
    %2142 = vmatmul.mubr.bf16.gmra.mrb[0].mxu0 %v1698
    %v2143 = vpop.f32.mrb[0].mxu0
    %v2144 = vadd.f32 %v1538, %v2143
    %v2145 = vpop.f32.mrb[0].mxu0
    %v2146 = vpop.f32.mrb[0].mxu0
    %v2147 = vadd.f32 %v1538, %v2146
    %v2148 = vpop.f32.mrb[0].mxu0
    %2149 = vmatprep.mubr.bf16.mxu0 0
    %2150 = vmatmul.mubr.bf16.gmra.mrb[0].mxu0 %v1701
    %v2151 = vpop.f32.mrb[0].mxu0
    %v2152 = vadd.f32 %v1538, %v2151
    %v2153 = vpop.f32.mrb[0].mxu0
    %v2154 = vpop.f32.mrb[0].mxu0
    %v2155 = vadd.f32 %v1538, %v2154
    %v2156 = vpop.f32.mrb[0].mxu0
    %2157 = vmatprep.mubr.bf16.mxu0 0
    %2158 = vmatmul.mubr.bf16.gmra.mrb[0].mxu0 %v1704
    %v2159 = vpop.f32.mrb[0].mxu0
    %v2160 = vadd.f32 %v1538, %v2159
    %v2161 = vpop.f32.mrb[0].mxu0
    %v2162 = vpop.f32.mrb[0].mxu0
    %v2163 = vadd.f32 %v1538, %v2162
    %v2164 = vpop.f32.mrb[0].mxu0
    %2165 = vmatprep.mubr.bf16.mxu0 0
    %2166 = vmatmul.mubr.bf16.gmra.mrb[0].mxu0 %v1707
    %v2167 = vpop.f32.mrb[0].mxu0
    %v2168 = vadd.f32 %v1538, %v2167
    %v2169 = vpop.f32.mrb[0].mxu0
    %v2170 = vpop.f32.mrb[0].mxu0
    %v2171 = vadd.f32 %v1538, %v2170
    %v2172 = vpop.f32.mrb[0].mxu0
    %2173 = vmatprep.mubr.bf16.mxu0 0
    %2174 = vmatmul.mubr.bf16.gmra.mrb[0].mxu0 %v1710
    %v2175 = vpop.f32.mrb[0].mxu0
    %v2176 = vadd.f32 %v1538, %v2175
    %v2177 = vpop.f32.mrb[0].mxu0
    %v2178 = vpop.f32.mrb[0].mxu0
    %v2179 = vadd.f32 %v1538, %v2178
    %v2180 = vpop.f32.mrb[0].mxu0
    %2181 = vmatprep.mubr.bf16.mxu0 0
    %2182 = vmatmul.mubr.bf16.gmra.mrb[0].mxu0 %v1713
    %v2183 = vpop.f32.mrb[0].mxu0
    %v2184 = vadd.f32 %v1538, %v2183
    %v2185 = vpop.f32.mrb[0].mxu0
    %v2186 = vpop.f32.mrb[0].mxu0
    %v2187 = vadd.f32 %v1538, %v2186
    %v2188 = vpop.f32.mrb[0].mxu0
    %2189 = vmatprep.mubr.bf16.mxu0 0
    %2190 = vmatmul.mubr.bf16.gmra.mrb[0].mxu0 %v1716
    %v2191 = vpop.f32.mrb[0].mxu0
    %v2192 = vadd.f32 %v1538, %v2191
    %v2193 = vpop.f32.mrb[0].mxu0
    %v2194 = vpop.f32.mrb[0].mxu0
    %v2195 = vadd.f32 %v1538, %v2194
    %v2196 = vpop.f32.mrb[0].mxu0
    %2197 = vmatprep.mubr.bf16.mxu0 0
    %2198 = vmatmul.mubr.bf16.gmra.mrb[0].mxu0 %v1719
    %v2199 = vpop.f32.mrb[0].mxu0
    %v2200 = vadd.f32 %v1538, %v2199
    %v2201 = vpop.f32.mrb[0].mxu0
    %v2202 = vpop.f32.mrb[0].mxu0
    %v2203 = vadd.f32 %v1538, %v2202
    %v2204 = vpop.f32.mrb[0].mxu0
    %2205 = vmatprep.mubr.bf16.mxu0 0
    %2206 = vmatmul.mubr.bf16.gmra.mrb[0].mxu0 %v1722
    %v2207 = vpop.f32.mrb[0].mxu0
    %v2208 = vadd.f32 %v1538, %v2207
    %v2209 = vpop.f32.mrb[0].mxu0
    %v2210 = vpop.f32.mrb[0].mxu0
    %v2211 = vadd.f32 %v1538, %v2210
    %v2212 = vpop.f32.mrb[0].mxu0
    %2213 = vmatprep.mubr.bf16.mxu0 0
    %2214 = vmatmul.mubr.bf16.gmra.mrb[0].mxu0 %v1725
    %v2215 = vpop.f32.mrb[0].mxu0
    %v2216 = vadd.f32 %v1538, %v2215
    %v2217 = vpop.f32.mrb[0].mxu0
    %v2218 = vpop.f32.mrb[0].mxu0
    %v2219 = vadd.f32 %v1538, %v2218
    %v2220 = vpop.f32.mrb[0].mxu0
    %2221 = vmatprep.mubr.bf16.mxu0 0
    %2222 = vmatmul.mubr.bf16.gmra.mrb[0].mxu0 %v1728
    %v2223 = vpop.f32.mrb[0].mxu0
    %v2224 = vadd.f32 %v1538, %v2223
    %v2225 = vpop.f32.mrb[0].mxu0
    %v2226 = vpop.f32.mrb[0].mxu0
    %v2227 = vadd.f32 %v1538, %v2226
    %v2228 = vpop.f32.mrb[0].mxu0
    %2229 = vmatprep.mubr.bf16.mxu0 0
    %2230 = vmatmul.mubr.bf16.gmra.mrb[0].mxu0 %v1731
    %v2231 = vpop.f32.mrb[0].mxu0
    %v2232 = vadd.f32 %v1538, %v2231
    %v2233 = vpop.f32.mrb[0].mxu0
    %v2234 = vpop.f32.mrb[0].mxu0
    %v2235 = vadd.f32 %v1538, %v2234
    %v2236 = vpop.f32.mrb[0].mxu0
    %2237 = vmatprep.mubr.bf16.mxu0 0
    %2238 = vmatmul.mubr.bf16.gmra.mrb[0].mxu0 %v1734
    %v2239 = vpop.f32.mrb[0].mxu0
    %v2240 = vadd.f32 %v1538, %v2239
    %v2241 = vpop.f32.mrb[0].mxu0
    %v2242 = vpop.f32.mrb[0].mxu0
    %v2243 = vadd.f32 %v1538, %v2242
    %v2244 = vpop.f32.mrb[0].mxu0
    %2245 = vmatprep.mubr.bf16.mxu0 0
    %2246 = vmatmul.mubr.bf16.gmra.mrb[0].mxu0 %v1737
    %v2247 = vpop.f32.mrb[0].mxu0
    %v2248 = vadd.f32 %v1538, %v2247
    %v2249 = vpop.f32.mrb[0].mxu0
    %v2250 = vpop.f32.mrb[0].mxu0
    %v2251 = vadd.f32 %v1538, %v2250
    %v2252 = vpop.f32.mrb[0].mxu0
    %2253 = vmatprep.mubr.bf16.mxu0 0
    %2254 = vmatmul.mubr.bf16.gmra.mrb[0].mxu0 %v1740
    %v2255 = vpop.f32.mrb[0].mxu0
    %v2256 = vadd.f32 %v1538, %v2255
    %v2257 = vpop.f32.mrb[0].mxu0
    %v2258 = vpop.f32.mrb[0].mxu0
    %v2259 = vadd.f32 %v1538, %v2258
    %v2260 = vpop.f32.mrb[0].mxu0
    %2261 = vmatprep.mubr.bf16.mxu0 0
    %2262 = vmatmul.mubr.bf16.gmra.mrb[0].mxu0 %v1743
    %v2263 = vpop.f32.mrb[0].mxu0
    %v2264 = vadd.f32 %v1538, %v2263
    %v2265 = vpop.f32.mrb[0].mxu0
    %v2266 = vpop.f32.mrb[0].mxu0
    %v2267 = vadd.f32 %v1538, %v2266
    %v2268 = vpop.f32.mrb[0].mxu0
    %2269 = vmatprep.mubr.bf16.mxu0 0
    %2270 = vmatmul.mubr.bf16.gmra.mrb[0].mxu0 %v1746
    %v2271 = vpop.f32.mrb[0].mxu0
    %v2272 = vadd.f32 %v1538, %v2271
    %v2273 = vpop.f32.mrb[0].mxu0
    %v2274 = vpop.f32.mrb[0].mxu0
    %v2275 = vadd.f32 %v1538, %v2274
    %v2276 = vpop.f32.mrb[0].mxu0
    %2277 = vmatprep.mubr.bf16.mxu0 0
    %2278 = vmatmul.mubr.bf16.gmra.mrb[0].mxu0 %v1749
    %v2279 = vpop.f32.mrb[0].mxu0
    %v2280 = vadd.f32 %v1538, %v2279
    %v2281 = vpop.f32.mrb[0].mxu0
    %v2282 = vpop.f32.mrb[0].mxu0
    %v2283 = vadd.f32 %v1538, %v2282
    %v2284 = vpop.f32.mrb[0].mxu0
    %2285 = vmatprep.mubr.bf16.mxu0 0
    %2286 = vmatmul.mubr.bf16.gmra.mrb[0].mxu0 %v1752
    %v2287 = vpop.f32.mrb[0].mxu0
    %v2288 = vadd.f32 %v1538, %v2287
    %v2289 = vpop.f32.mrb[0].mxu0
    %v2290 = vpop.f32.mrb[0].mxu0
    %v2291 = vadd.f32 %v1538, %v2290
    %v2292 = vpop.f32.mrb[0].mxu0
    %2293 = vmatprep.mubr.bf16.mxu0 0
    %2294 = vmatmul.mubr.bf16.gmra.mrb[0].mxu0 %v1755
    %v2295 = vpop.f32.mrb[0].mxu0
    %v2296 = vadd.f32 %v1538, %v2295
    %v2297 = vpop.f32.mrb[0].mxu0
    %v2298 = vpop.f32.mrb[0].mxu0
    %v2299 = vadd.f32 %v1538, %v2298
    %v2300 = vpop.f32.mrb[0].mxu0
    %2301 = vdwg.mxu0
    %v2302 = vmax.f32 %v1792, 0.0
    %v2303 = vmax.f32 %v1795, 0.0
    %v2304 = vmax.f32 %v1800, 0.0
    %v2305 = vmax.f32 %v1803, 0.0
    %v2306 = vmax.f32 %v1808, 0.0
    %v2307 = vmax.f32 %v1811, 0.0
    %v2308 = vmax.f32 %v1816, 0.0
    %v2309 = vmax.f32 %v1819, 0.0
    %v2310 = vmax.f32 %v1824, 0.0
    %v2311 = vmax.f32 %v1827, 0.0
    %v2312 = vmax.f32 %v1832, 0.0
    %v2313 = vmax.f32 %v1835, 0.0
    %v2314 = vmax.f32 %v1840, 0.0
    %v2315 = vmax.f32 %v1843, 0.0
    %v2316 = vmax.f32 %v1848, 0.0
    %v2317 = vmax.f32 %v1851, 0.0
    %v2318 = vmax.f32 %v1856, 0.0
    %v2319 = vmax.f32 %v1859, 0.0
    %v2320 = vmax.f32 %v1864, 0.0
    %v2321 = vmax.f32 %v1867, 0.0
    %v2322 = vmax.f32 %v1872, 0.0
    %v2323 = vmax.f32 %v1875, 0.0
    %v2324 = vmax.f32 %v1880, 0.0
    %v2325 = vmax.f32 %v1883, 0.0
    %v2326 = vmax.f32 %v1888, 0.0
    %v2327 = vmax.f32 %v1891, 0.0
    %v2328 = vmax.f32 %v1896, 0.0
    %v2329 = vmax.f32 %v1899, 0.0
    %v2330 = vmax.f32 %v1904, 0.0
    %v2331 = vmax.f32 %v1907, 0.0
    %v2332 = vmax.f32 %v1912, 0.0
    %v2333 = vmax.f32 %v1915, 0.0
    %v2334 = vmax.f32 %v1920, 0.0
    %v2335 = vmax.f32 %v1923, 0.0
    %v2336 = vmax.f32 %v1928, 0.0
    %v2337 = vmax.f32 %v1931, 0.0
    %v2338 = vmax.f32 %v1936, 0.0
    %v2339 = vmax.f32 %v1939, 0.0
    %v2340 = vmax.f32 %v1944, 0.0
    %v2341 = vmax.f32 %v1947, 0.0
    %v2342 = vmax.f32 %v1952, 0.0
    %v2343 = vmax.f32 %v1955, 0.0
    %v2344 = vmax.f32 %v1960, 0.0
    %v2345 = vmax.f32 %v1963, 0.0
    %v2346 = vmax.f32 %v1968, 0.0
    %v2347 = vmax.f32 %v1971, 0.0
    %v2348 = vmax.f32 %v1976, 0.0
    %v2349 = vmax.f32 %v1979, 0.0
    %v2350 = vmax.f32 %v1984, 0.0
    %v2351 = vmax.f32 %v1987, 0.0
    %v2352 = vmax.f32 %v1992, 0.0
    %v2353 = vmax.f32 %v1995, 0.0
    %v2354 = vmax.f32 %v2000, 0.0
    %v2355 = vmax.f32 %v2003, 0.0
    %v2356 = vmax.f32 %v2008, 0.0
    %v2357 = vmax.f32 %v2011, 0.0
    %v2358 = vmax.f32 %v2016, 0.0
    %v2359 = vmax.f32 %v2019, 0.0
    %v2360 = vmax.f32 %v2024, 0.0
    %v2361 = vmax.f32 %v2027, 0.0
    %v2362 = vmax.f32 %v2032, 0.0
    %v2363 = vmax.f32 %v2035, 0.0
    %v2364 = vmax.f32 %v2040, 0.0
    %v2365 = vmax.f32 %v2043, 0.0
    %v2366 = vmax.f32 %v2048, 0.0
    %v2367 = vmax.f32 %v2051, 0.0
    %v2368 = vmax.f32 %v2056, 0.0
    %v2369 = vmax.f32 %v2059, 0.0
    %v2370 = vmax.f32 %v2064, 0.0
    %v2371 = vmax.f32 %v2067, 0.0
    %v2372 = vmax.f32 %v2072, 0.0
    %v2373 = vmax.f32 %v2075, 0.0
    %v2374 = vmax.f32 %v2080, 0.0
    %v2375 = vmax.f32 %v2083, 0.0
    %v2376 = vmax.f32 %v2088, 0.0
    %v2377 = vmax.f32 %v2091, 0.0
    %v2378 = vmax.f32 %v2096, 0.0
    %v2379 = vmax.f32 %v2099, 0.0
    %v2380 = vmax.f32 %v2104, 0.0
    %v2381 = vmax.f32 %v2107, 0.0
    %v2382 = vmax.f32 %v2112, 0.0
    %v2383 = vmax.f32 %v2115, 0.0
    %v2384 = vmax.f32 %v2120, 0.0
    %v2385 = vmax.f32 %v2123, 0.0
    %v2386 = vmax.f32 %v2128, 0.0
    %v2387 = vmax.f32 %v2131, 0.0
    %v2388 = vmax.f32 %v2136, 0.0
    %v2389 = vmax.f32 %v2139, 0.0
    %v2390 = vmax.f32 %v2144, 0.0
    %v2391 = vmax.f32 %v2147, 0.0
    %v2392 = vmax.f32 %v2152, 0.0
    %v2393 = vmax.f32 %v2155, 0.0
    %v2394 = vmax.f32 %v2160, 0.0
    %v2395 = vmax.f32 %v2163, 0.0
    %v2396 = vmax.f32 %v2168, 0.0
    %v2397 = vmax.f32 %v2171, 0.0
    %v2398 = vmax.f32 %v2176, 0.0
    %v2399 = vmax.f32 %v2179, 0.0
    %v2400 = vmax.f32 %v2184, 0.0
    %v2401 = vmax.f32 %v2187, 0.0
    %v2402 = vmax.f32 %v2192, 0.0
    %v2403 = vmax.f32 %v2195, 0.0
    %v2404 = vmax.f32 %v2200, 0.0
    %v2405 = vmax.f32 %v2203, 0.0
    %v2406 = vmax.f32 %v2208, 0.0
    %v2407 = vmax.f32 %v2211, 0.0
    %v2408 = vmax.f32 %v2216, 0.0
    %v2409 = vmax.f32 %v2219, 0.0
    %v2410 = vmax.f32 %v2224, 0.0
    %v2411 = vmax.f32 %v2227, 0.0
    %v2412 = vmax.f32 %v2232, 0.0
    %v2413 = vmax.f32 %v2235, 0.0
    %v2414 = vmax.f32 %v2240, 0.0
    %v2415 = vmax.f32 %v2243, 0.0
    %v2416 = vmax.f32 %v2248, 0.0
    %v2417 = vmax.f32 %v2251, 0.0
    %v2418 = vmax.f32 %v2256, 0.0
    %v2419 = vmax.f32 %v2259, 0.0
    %v2420 = vmax.f32 %v2264, 0.0
    %v2421 = vmax.f32 %v2267, 0.0
    %v2422 = vmax.f32 %v2272, 0.0
    %v2423 = vmax.f32 %v2275, 0.0
    %v2424 = vmax.f32 %v2280, 0.0
    %v2425 = vmax.f32 %v2283, 0.0
    %v2426 = vmax.f32 %v2288, 0.0
    %v2427 = vmax.f32 %v2291, 0.0
    %v2428 = vmax.f32 %v2296, 0.0
    %v2429 = vmax.f32 %v2299, 0.0
    %v2430 = vpack.c.bf16 %v2303, %v2302
    %v2431 = vpack.c.bf16 %v2305, %v2304
    %v2432 = vpack.c.bf16 %v2307, %v2306
    %v2433 = vpack.c.bf16 %v2309, %v2308
    %v2434 = vpack.c.bf16 %v2311, %v2310
    %v2435 = vpack.c.bf16 %v2313, %v2312
    %v2436 = vpack.c.bf16 %v2315, %v2314
    %v2437 = vpack.c.bf16 %v2317, %v2316
    %v2438 = vpack.c.bf16 %v2319, %v2318
    %v2439 = vpack.c.bf16 %v2321, %v2320
    %v2440 = vpack.c.bf16 %v2323, %v2322
    %v2441 = vpack.c.bf16 %v2325, %v2324
    %v2442 = vpack.c.bf16 %v2327, %v2326
    %v2443 = vpack.c.bf16 %v2329, %v2328
    %v2444 = vpack.c.bf16 %v2331, %v2330
    %v2445 = vpack.c.bf16 %v2333, %v2332
    %v2446 = vpack.c.bf16 %v2335, %v2334
    %v2447 = vpack.c.bf16 %v2337, %v2336
    %v2448 = vpack.c.bf16 %v2339, %v2338
    %v2449 = vpack.c.bf16 %v2341, %v2340
    %v2450 = vpack.c.bf16 %v2343, %v2342
    %v2451 = vpack.c.bf16 %v2345, %v2344
    %v2452 = vpack.c.bf16 %v2347, %v2346
    %v2453 = vpack.c.bf16 %v2349, %v2348
    %v2454 = vpack.c.bf16 %v2351, %v2350
    %v2455 = vpack.c.bf16 %v2353, %v2352
    %v2456 = vpack.c.bf16 %v2355, %v2354
    %v2457 = vpack.c.bf16 %v2357, %v2356
    %v2458 = vpack.c.bf16 %v2359, %v2358
    %v2459 = vpack.c.bf16 %v2361, %v2360
    %v2460 = vpack.c.bf16 %v2363, %v2362
    %v2461 = vpack.c.bf16 %v2365, %v2364
    %v2462 = vpack.c.bf16 %v2367, %v2366
    %v2463 = vpack.c.bf16 %v2369, %v2368
    %v2464 = vpack.c.bf16 %v2371, %v2370
    %v2465 = vpack.c.bf16 %v2373, %v2372
    %v2466 = vpack.c.bf16 %v2375, %v2374
    %v2467 = vpack.c.bf16 %v2377, %v2376
    %v2468 = vpack.c.bf16 %v2379, %v2378
    %v2469 = vpack.c.bf16 %v2381, %v2380
    %v2470 = vpack.c.bf16 %v2383, %v2382
    %v2471 = vpack.c.bf16 %v2385, %v2384
    %v2472 = vpack.c.bf16 %v2387, %v2386
    %v2473 = vpack.c.bf16 %v2389, %v2388
    %v2474 = vpack.c.bf16 %v2391, %v2390
    %v2475 = vpack.c.bf16 %v2393, %v2392
    %v2476 = vpack.c.bf16 %v2395, %v2394
    %v2477 = vpack.c.bf16 %v2397, %v2396
    %v2478 = vpack.c.bf16 %v2399, %v2398
    %v2479 = vpack.c.bf16 %v2401, %v2400
    %v2480 = vpack.c.bf16 %v2403, %v2402
    %v2481 = vpack.c.bf16 %v2405, %v2404
    %v2482 = vpack.c.bf16 %v2407, %v2406
    %v2483 = vpack.c.bf16 %v2409, %v2408
    %v2484 = vpack.c.bf16 %v2411, %v2410
    %v2485 = vpack.c.bf16 %v2413, %v2412
    %v2486 = vpack.c.bf16 %v2415, %v2414
    %v2487 = vpack.c.bf16 %v2417, %v2416
    %v2488 = vpack.c.bf16 %v2419, %v2418
    %v2489 = vpack.c.bf16 %v2421, %v2420
    %v2490 = vpack.c.bf16 %v2423, %v2422
    %v2491 = vpack.c.bf16 %v2425, %v2424
    %v2492 = vpack.c.bf16 %v2427, %v2426
    %v2493 = vpack.c.bf16 %v2429, %v2428
    %v2494 = vld [vmem:[#allocation2] sm:$0xff]
    %v2495 = vld [vmem:[#allocation2 + $0x8] sm:$0xff]
    %v2496 = vld [vmem:[#allocation2 + $0x10] sm:$0xff]
    %v2497 = vld [vmem:[#allocation2 + $0x18] sm:$0xff]
    %v2498 = vld [vmem:[#allocation2 + $0x20] sm:$0xff]
    %v2499 = vld [vmem:[#allocation2 + $0x28] sm:$0xff]
    %v2500 = vld [vmem:[#allocation2 + $0x30] sm:$0xff]
    %v2501 = vld [vmem:[#allocation2 + $0x38] sm:$0xff]
    %v2502 = vld [vmem:[#allocation2 + $0x40] sm:$0xff]
    %v2503 = vld [vmem:[#allocation2 + $0x48] sm:$0xff]
    %v2504 = vld [vmem:[#allocation2 + $0x50] sm:$0xff]
    %v2505 = vld [vmem:[#allocation2 + $0x58] sm:$0xff]
    %v2506 = vld [vmem:[#allocation2 + $0x60] sm:$0xff]
    %v2507 = vld [vmem:[#allocation2 + $0x68] sm:$0xff]
    %v2508 = vld [vmem:[#allocation2 + $0x70] sm:$0xff]
    %v2509 = vld [vmem:[#allocation2 + $0x78] sm:$0xff]
    %v2510 = vld [vmem:[%s6] sm:$0x3]
    %v2512 = vlaneseq
    %v2513 = vshrl.u32 %v2512, 7
    %v2514 = vsub.s32 0, %v2513
    %v2515 = vrot.slane %v2510, %v2514
    %v2516 = vlaneseq
    %v2517 = vshrl.u32 %v2516, 7
    %v2518 = vsub.s32 1, %v2517
    %v2519 = vrot.slane %v2510, %v2518
    %v2538 = vunpack.c.l.b16 %v2494
    %v2539 = vunpack.c.h.b16 %v2494
    %v2540 = vunpack.c.l.b16 %v2495
    %v2541 = vunpack.c.h.b16 %v2495
    %v2542 = vunpack.c.l.b16 %v2496
    %v2543 = vunpack.c.h.b16 %v2496
    %v2544 = vunpack.c.l.b16 %v2497
    %v2545 = vunpack.c.h.b16 %v2497
    %v2546 = vunpack.c.l.b16 %v2498
    %v2547 = vunpack.c.h.b16 %v2498
    %v2548 = vunpack.c.l.b16 %v2499
    %v2549 = vunpack.c.h.b16 %v2499
    %v2550 = vunpack.c.l.b16 %v2500
    %v2551 = vunpack.c.h.b16 %v2500
    %v2552 = vunpack.c.l.b16 %v2501
    %v2553 = vunpack.c.h.b16 %v2501
    %v2554 = vunpack.c.l.b16 %v2502
    %v2555 = vunpack.c.h.b16 %v2502
    %v2556 = vunpack.c.l.b16 %v2503
    %v2557 = vunpack.c.h.b16 %v2503
    %v2558 = vunpack.c.l.b16 %v2504
    %v2559 = vunpack.c.h.b16 %v2504
    %v2560 = vunpack.c.l.b16 %v2505
    %v2561 = vunpack.c.h.b16 %v2505
    %v2562 = vunpack.c.l.b16 %v2506
    %v2563 = vunpack.c.h.b16 %v2506
    %v2564 = vunpack.c.l.b16 %v2507
    %v2565 = vunpack.c.h.b16 %v2507
    %v2566 = vunpack.c.l.b16 %v2508
    %v2567 = vunpack.c.h.b16 %v2508
    %v2568 = vunpack.c.l.b16 %v2509
    %v2569 = vunpack.c.h.b16 %v2509
    %v2570 = vpack.c.b16 %v2540, %v2538
    %v2571 = vpack.c.b16 %v2541, %v2539
    %v2572 = vpack.c.b16 %v2544, %v2542
    %v2573 = vpack.c.b16 %v2545, %v2543
    %v2574 = vpack.c.b16 %v2548, %v2546
    %v2575 = vpack.c.b16 %v2549, %v2547
    %v2576 = vpack.c.b16 %v2552, %v2550
    %v2577 = vpack.c.b16 %v2553, %v2551
    %v2578 = vpack.c.b16 %v2556, %v2554
    %v2579 = vpack.c.b16 %v2557, %v2555
    %v2580 = vpack.c.b16 %v2560, %v2558
    %v2581 = vpack.c.b16 %v2561, %v2559
    %v2582 = vpack.c.b16 %v2564, %v2562
    %v2583 = vpack.c.b16 %v2565, %v2563
    %v2584 = vpack.c.b16 %v2568, %v2566
    %v2585 = vpack.c.b16 %v2569, %v2567
    %2602 = vmatprep.subr.bf16.mxu0 %v2571
    %2603 = vmatpush1.bf16.msra.mxu0 %v2570
    %2604 = vmatprep.subr.bf16.mxu0 %v2573
    %2605 = vmatpush1.bf16.msra.mxu0 %v2572
    %2606 = vmatprep.subr.bf16.mxu0 %v2575
    %2607 = vmatpush1.bf16.msra.mxu0 %v2574
    %2608 = vmatprep.subr.bf16.mxu0 %v2577
    %2609 = vmatpush1.bf16.msra.mxu0 %v2576
    %2610 = vmatprep.subr.bf16.mxu0 %v2579
    %2611 = vmatpush1.bf16.msra.mxu0 %v2578
    %2612 = vmatprep.subr.bf16.mxu0 %v2581
    %2613 = vmatpush1.bf16.msra.mxu0 %v2580
    %2614 = vmatprep.subr.bf16.mxu0 %v2583
    %2615 = vmatpush1.bf16.msra.mxu0 %v2582
    %2616 = vmatprep.subr.bf16.mxu0 %v2585
    %2617 = vmatpush1.bf16.msra.mxu0 %v2584
    %2618 = vmatprep.subr.bf16.mxu0 0
    %2619 = vmatpush1.bf16.msra.mxu0 0
    %2620 = vmatprep.subr.bf16.mxu0 0
    %2621 = vmatpush1.bf16.msra.mxu0 0
    %2622 = vmatprep.subr.bf16.mxu0 0
    %2623 = vmatpush1.bf16.msra.mxu0 0
    %2624 = vmatprep.subr.bf16.mxu0 0
    %2625 = vmatpush1.bf16.msra.mxu0 0
    %2626 = vmatprep.subr.bf16.mxu0 0
    %2627 = vmatpush1.bf16.msra.mxu0 0
    %2628 = vmatprep.subr.bf16.mxu0 0
    %2629 = vmatpush1.bf16.msra.mxu0 0
    %2630 = vmatprep.subr.bf16.mxu0 0
    %2631 = vmatpush1.bf16.msra.mxu0 0
    %2632 = vmatprep.subr.bf16.mxu0 0
    %2633 = vmatpush1.bf16.msra.mxu0 0
    %2634 = vmatprep.mubr.bf16.mxu0 0
    %2635 = vmatmul.mubr.bf16.gmra.mrb[0].mxu0 %v2430
    %v2636 = vpop.f32.mrb[0].mxu0
    %v2637 = vadd.f32 %v2515, %v2636
    %v2638 = vpop.f32.mrb[0].mxu0
    %v2639 = vadd.f32 %v2519, %v2638
    %v2640 = vpop.f32.mrb[0].mxu0
    %v2641 = vadd.f32 %v2515, %v2640
    %v2642 = vpop.f32.mrb[0].mxu0
    %v2643 = vadd.f32 %v2519, %v2642
    %2644 = vmatprep.mubr.bf16.mxu0 0
    %2645 = vmatmul.mubr.bf16.gmra.mrb[0].mxu0 %v2431
    %v2646 = vpop.f32.mrb[0].mxu0
    %v2647 = vadd.f32 %v2515, %v2646
    %v2648 = vpop.f32.mrb[0].mxu0
    %v2649 = vadd.f32 %v2519, %v2648
    %v2650 = vpop.f32.mrb[0].mxu0
    %v2651 = vadd.f32 %v2515, %v2650
    %v2652 = vpop.f32.mrb[0].mxu0
    %v2653 = vadd.f32 %v2519, %v2652
    %2654 = vmatprep.mubr.bf16.mxu0 0
    %2655 = vmatmul.mubr.bf16.gmra.mrb[0].mxu0 %v2432
    %v2656 = vpop.f32.mrb[0].mxu0
    %v2657 = vadd.f32 %v2515, %v2656
    %v2658 = vpop.f32.mrb[0].mxu0
    %v2659 = vadd.f32 %v2519, %v2658
    %v2660 = vpop.f32.mrb[0].mxu0
    %v2661 = vadd.f32 %v2515, %v2660
    %v2662 = vpop.f32.mrb[0].mxu0
    %v2663 = vadd.f32 %v2519, %v2662
    %2664 = vmatprep.mubr.bf16.mxu0 0
    %2665 = vmatmul.mubr.bf16.gmra.mrb[0].mxu0 %v2433
    %v2666 = vpop.f32.mrb[0].mxu0
    %v2667 = vadd.f32 %v2515, %v2666
    %v2668 = vpop.f32.mrb[0].mxu0
    %v2669 = vadd.f32 %v2519, %v2668
    %v2670 = vpop.f32.mrb[0].mxu0
    %v2671 = vadd.f32 %v2515, %v2670
    %v2672 = vpop.f32.mrb[0].mxu0
    %v2673 = vadd.f32 %v2519, %v2672
    %2674 = vmatprep.mubr.bf16.mxu0 0
    %2675 = vmatmul.mubr.bf16.gmra.mrb[0].mxu0 %v2434
    %v2676 = vpop.f32.mrb[0].mxu0
    %v2677 = vadd.f32 %v2515, %v2676
    %v2678 = vpop.f32.mrb[0].mxu0
    %v2679 = vadd.f32 %v2519, %v2678
    %v2680 = vpop.f32.mrb[0].mxu0
    %v2681 = vadd.f32 %v2515, %v2680
    %v2682 = vpop.f32.mrb[0].mxu0
    %v2683 = vadd.f32 %v2519, %v2682
    %2684 = vmatprep.mubr.bf16.mxu0 0
    %2685 = vmatmul.mubr.bf16.gmra.mrb[0].mxu0 %v2435
    %v2686 = vpop.f32.mrb[0].mxu0
    %v2687 = vadd.f32 %v2515, %v2686
    %v2688 = vpop.f32.mrb[0].mxu0
    %v2689 = vadd.f32 %v2519, %v2688
    %v2690 = vpop.f32.mrb[0].mxu0
    %v2691 = vadd.f32 %v2515, %v2690
    %v2692 = vpop.f32.mrb[0].mxu0
    %v2693 = vadd.f32 %v2519, %v2692
    %2694 = vmatprep.mubr.bf16.mxu0 0
    %2695 = vmatmul.mubr.bf16.gmra.mrb[0].mxu0 %v2436
    %v2696 = vpop.f32.mrb[0].mxu0
    %v2697 = vadd.f32 %v2515, %v2696
    %v2698 = vpop.f32.mrb[0].mxu0
    %v2699 = vadd.f32 %v2519, %v2698
    %v2700 = vpop.f32.mrb[0].mxu0
    %v2701 = vadd.f32 %v2515, %v2700
    %v2702 = vpop.f32.mrb[0].mxu0
    %v2703 = vadd.f32 %v2519, %v2702
    %2704 = vmatprep.mubr.bf16.mxu0 0
    %2705 = vmatmul.mubr.bf16.gmra.mrb[0].mxu0 %v2437
    %v2706 = vpop.f32.mrb[0].mxu0
    %v2707 = vadd.f32 %v2515, %v2706
    %v2708 = vpop.f32.mrb[0].mxu0
    %v2709 = vadd.f32 %v2519, %v2708
    %v2710 = vpop.f32.mrb[0].mxu0
    %v2711 = vadd.f32 %v2515, %v2710
    %v2712 = vpop.f32.mrb[0].mxu0
    %v2713 = vadd.f32 %v2519, %v2712
    %2714 = vmatprep.mubr.bf16.mxu0 0
    %2715 = vmatmul.mubr.bf16.gmra.mrb[0].mxu0 %v2438
    %v2716 = vpop.f32.mrb[0].mxu0
    %v2717 = vadd.f32 %v2515, %v2716
    %v2718 = vpop.f32.mrb[0].mxu0
    %v2719 = vadd.f32 %v2519, %v2718
    %v2720 = vpop.f32.mrb[0].mxu0
    %v2721 = vadd.f32 %v2515, %v2720
    %v2722 = vpop.f32.mrb[0].mxu0
    %v2723 = vadd.f32 %v2519, %v2722
    %2724 = vmatprep.mubr.bf16.mxu0 0
    %2725 = vmatmul.mubr.bf16.gmra.mrb[0].mxu0 %v2439
    %v2726 = vpop.f32.mrb[0].mxu0
    %v2727 = vadd.f32 %v2515, %v2726
    %v2728 = vpop.f32.mrb[0].mxu0
    %v2729 = vadd.f32 %v2519, %v2728
    %v2730 = vpop.f32.mrb[0].mxu0
    %v2731 = vadd.f32 %v2515, %v2730
    %v2732 = vpop.f32.mrb[0].mxu0
    %v2733 = vadd.f32 %v2519, %v2732
    %2734 = vmatprep.mubr.bf16.mxu0 0
    %2735 = vmatmul.mubr.bf16.gmra.mrb[0].mxu0 %v2440
    %v2736 = vpop.f32.mrb[0].mxu0
    %v2737 = vadd.f32 %v2515, %v2736
    %v2738 = vpop.f32.mrb[0].mxu0
    %v2739 = vadd.f32 %v2519, %v2738
    %v2740 = vpop.f32.mrb[0].mxu0
    %v2741 = vadd.f32 %v2515, %v2740
    %v2742 = vpop.f32.mrb[0].mxu0
    %v2743 = vadd.f32 %v2519, %v2742
    %2744 = vmatprep.mubr.bf16.mxu0 0
    %2745 = vmatmul.mubr.bf16.gmra.mrb[0].mxu0 %v2441
    %v2746 = vpop.f32.mrb[0].mxu0
    %v2747 = vadd.f32 %v2515, %v2746
    %v2748 = vpop.f32.mrb[0].mxu0
    %v2749 = vadd.f32 %v2519, %v2748
    %v2750 = vpop.f32.mrb[0].mxu0
    %v2751 = vadd.f32 %v2515, %v2750
    %v2752 = vpop.f32.mrb[0].mxu0
    %v2753 = vadd.f32 %v2519, %v2752
    %2754 = vmatprep.mubr.bf16.mxu0 0
    %2755 = vmatmul.mubr.bf16.gmra.mrb[0].mxu0 %v2442
    %v2756 = vpop.f32.mrb[0].mxu0
    %v2757 = vadd.f32 %v2515, %v2756
    %v2758 = vpop.f32.mrb[0].mxu0
    %v2759 = vadd.f32 %v2519, %v2758
    %v2760 = vpop.f32.mrb[0].mxu0
    %v2761 = vadd.f32 %v2515, %v2760
    %v2762 = vpop.f32.mrb[0].mxu0
    %v2763 = vadd.f32 %v2519, %v2762
    %2764 = vmatprep.mubr.bf16.mxu0 0
    %2765 = vmatmul.mubr.bf16.gmra.mrb[0].mxu0 %v2443
    %v2766 = vpop.f32.mrb[0].mxu0
    %v2767 = vadd.f32 %v2515, %v2766
    %v2768 = vpop.f32.mrb[0].mxu0
    %v2769 = vadd.f32 %v2519, %v2768
    %v2770 = vpop.f32.mrb[0].mxu0
    %v2771 = vadd.f32 %v2515, %v2770
    %v2772 = vpop.f32.mrb[0].mxu0
    %v2773 = vadd.f32 %v2519, %v2772
    %2774 = vmatprep.mubr.bf16.mxu0 0
    %2775 = vmatmul.mubr.bf16.gmra.mrb[0].mxu0 %v2444
    %v2776 = vpop.f32.mrb[0].mxu0
    %v2777 = vadd.f32 %v2515, %v2776
    %v2778 = vpop.f32.mrb[0].mxu0
    %v2779 = vadd.f32 %v2519, %v2778
    %v2780 = vpop.f32.mrb[0].mxu0
    %v2781 = vadd.f32 %v2515, %v2780
    %v2782 = vpop.f32.mrb[0].mxu0
    %v2783 = vadd.f32 %v2519, %v2782
    %2784 = vmatprep.mubr.bf16.mxu0 0
    %2785 = vmatmul.mubr.bf16.gmra.mrb[0].mxu0 %v2445
    %v2786 = vpop.f32.mrb[0].mxu0
    %v2787 = vadd.f32 %v2515, %v2786
    %v2788 = vpop.f32.mrb[0].mxu0
    %v2789 = vadd.f32 %v2519, %v2788
    %v2790 = vpop.f32.mrb[0].mxu0
    %v2791 = vadd.f32 %v2515, %v2790
    %v2792 = vpop.f32.mrb[0].mxu0
    %v2793 = vadd.f32 %v2519, %v2792
    %2794 = vmatprep.mubr.bf16.mxu0 0
    %2795 = vmatmul.mubr.bf16.gmra.mrb[0].mxu0 %v2446
    %v2796 = vpop.f32.mrb[0].mxu0
    %v2797 = vadd.f32 %v2515, %v2796
    %v2798 = vpop.f32.mrb[0].mxu0
    %v2799 = vadd.f32 %v2519, %v2798
    %v2800 = vpop.f32.mrb[0].mxu0
    %v2801 = vadd.f32 %v2515, %v2800
    %v2802 = vpop.f32.mrb[0].mxu0
    %v2803 = vadd.f32 %v2519, %v2802
    %2804 = vmatprep.mubr.bf16.mxu0 0
    %2805 = vmatmul.mubr.bf16.gmra.mrb[0].mxu0 %v2447
    %v2806 = vpop.f32.mrb[0].mxu0
    %v2807 = vadd.f32 %v2515, %v2806
    %v2808 = vpop.f32.mrb[0].mxu0
    %v2809 = vadd.f32 %v2519, %v2808
    %v2810 = vpop.f32.mrb[0].mxu0
    %v2811 = vadd.f32 %v2515, %v2810
    %v2812 = vpop.f32.mrb[0].mxu0
    %v2813 = vadd.f32 %v2519, %v2812
    %2814 = vmatprep.mubr.bf16.mxu0 0
    %2815 = vmatmul.mubr.bf16.gmra.mrb[0].mxu0 %v2448
    %v2816 = vpop.f32.mrb[0].mxu0
    %v2817 = vadd.f32 %v2515, %v2816
    %v2818 = vpop.f32.mrb[0].mxu0
    %v2819 = vadd.f32 %v2519, %v2818
    %v2820 = vpop.f32.mrb[0].mxu0
    %v2821 = vadd.f32 %v2515, %v2820
    %v2822 = vpop.f32.mrb[0].mxu0
    %v2823 = vadd.f32 %v2519, %v2822
    %2824 = vmatprep.mubr.bf16.mxu0 0
    %2825 = vmatmul.mubr.bf16.gmra.mrb[0].mxu0 %v2449
    %v2826 = vpop.f32.mrb[0].mxu0
    %v2827 = vadd.f32 %v2515, %v2826
    %v2828 = vpop.f32.mrb[0].mxu0
    %v2829 = vadd.f32 %v2519, %v2828
    %v2830 = vpop.f32.mrb[0].mxu0
    %v2831 = vadd.f32 %v2515, %v2830
    %v2832 = vpop.f32.mrb[0].mxu0
    %v2833 = vadd.f32 %v2519, %v2832
    %2834 = vmatprep.mubr.bf16.mxu0 0
    %2835 = vmatmul.mubr.bf16.gmra.mrb[0].mxu0 %v2450
    %v2836 = vpop.f32.mrb[0].mxu0
    %v2837 = vadd.f32 %v2515, %v2836
    %v2838 = vpop.f32.mrb[0].mxu0
    %v2839 = vadd.f32 %v2519, %v2838
    %v2840 = vpop.f32.mrb[0].mxu0
    %v2841 = vadd.f32 %v2515, %v2840
    %v2842 = vpop.f32.mrb[0].mxu0
    %v2843 = vadd.f32 %v2519, %v2842
    %2844 = vmatprep.mubr.bf16.mxu0 0
    %2845 = vmatmul.mubr.bf16.gmra.mrb[0].mxu0 %v2451
    %v2846 = vpop.f32.mrb[0].mxu0
    %v2847 = vadd.f32 %v2515, %v2846
    %v2848 = vpop.f32.mrb[0].mxu0
    %v2849 = vadd.f32 %v2519, %v2848
    %v2850 = vpop.f32.mrb[0].mxu0
    %v2851 = vadd.f32 %v2515, %v2850
    %v2852 = vpop.f32.mrb[0].mxu0
    %v2853 = vadd.f32 %v2519, %v2852
    %2854 = vmatprep.mubr.bf16.mxu0 0
    %2855 = vmatmul.mubr.bf16.gmra.mrb[0].mxu0 %v2452
    %v2856 = vpop.f32.mrb[0].mxu0
    %v2857 = vadd.f32 %v2515, %v2856
    %v2858 = vpop.f32.mrb[0].mxu0
    %v2859 = vadd.f32 %v2519, %v2858
    %v2860 = vpop.f32.mrb[0].mxu0
    %v2861 = vadd.f32 %v2515, %v2860
    %v2862 = vpop.f32.mrb[0].mxu0
    %v2863 = vadd.f32 %v2519, %v2862
    %2864 = vmatprep.mubr.bf16.mxu0 0
    %2865 = vmatmul.mubr.bf16.gmra.mrb[0].mxu0 %v2453
    %v2866 = vpop.f32.mrb[0].mxu0
    %v2867 = vadd.f32 %v2515, %v2866
    %v2868 = vpop.f32.mrb[0].mxu0
    %v2869 = vadd.f32 %v2519, %v2868
    %v2870 = vpop.f32.mrb[0].mxu0
    %v2871 = vadd.f32 %v2515, %v2870
    %v2872 = vpop.f32.mrb[0].mxu0
    %v2873 = vadd.f32 %v2519, %v2872
    %2874 = vmatprep.mubr.bf16.mxu0 0
    %2875 = vmatmul.mubr.bf16.gmra.mrb[0].mxu0 %v2454
    %v2876 = vpop.f32.mrb[0].mxu0
    %v2877 = vadd.f32 %v2515, %v2876
    %v2878 = vpop.f32.mrb[0].mxu0
    %v2879 = vadd.f32 %v2519, %v2878
    %v2880 = vpop.f32.mrb[0].mxu0
    %v2881 = vadd.f32 %v2515, %v2880
    %v2882 = vpop.f32.mrb[0].mxu0
    %v2883 = vadd.f32 %v2519, %v2882
    %2884 = vmatprep.mubr.bf16.mxu0 0
    %2885 = vmatmul.mubr.bf16.gmra.mrb[0].mxu0 %v2455
    %v2886 = vpop.f32.mrb[0].mxu0
    %v2887 = vadd.f32 %v2515, %v2886
    %v2888 = vpop.f32.mrb[0].mxu0
    %v2889 = vadd.f32 %v2519, %v2888
    %v2890 = vpop.f32.mrb[0].mxu0
    %v2891 = vadd.f32 %v2515, %v2890
    %v2892 = vpop.f32.mrb[0].mxu0
    %v2893 = vadd.f32 %v2519, %v2892
    %2894 = vmatprep.mubr.bf16.mxu0 0
    %2895 = vmatmul.mubr.bf16.gmra.mrb[0].mxu0 %v2456
    %v2896 = vpop.f32.mrb[0].mxu0
    %v2897 = vadd.f32 %v2515, %v2896
    %v2898 = vpop.f32.mrb[0].mxu0
    %v2899 = vadd.f32 %v2519, %v2898
    %v2900 = vpop.f32.mrb[0].mxu0
    %v2901 = vadd.f32 %v2515, %v2900
    %v2902 = vpop.f32.mrb[0].mxu0
    %v2903 = vadd.f32 %v2519, %v2902
    %2904 = vmatprep.mubr.bf16.mxu0 0
    %2905 = vmatmul.mubr.bf16.gmra.mrb[0].mxu0 %v2457
    %v2906 = vpop.f32.mrb[0].mxu0
    %v2907 = vadd.f32 %v2515, %v2906
    %v2908 = vpop.f32.mrb[0].mxu0
    %v2909 = vadd.f32 %v2519, %v2908
    %v2910 = vpop.f32.mrb[0].mxu0
    %v2911 = vadd.f32 %v2515, %v2910
    %v2912 = vpop.f32.mrb[0].mxu0
    %v2913 = vadd.f32 %v2519, %v2912
    %2914 = vmatprep.mubr.bf16.mxu0 0
    %2915 = vmatmul.mubr.bf16.gmra.mrb[0].mxu0 %v2458
    %v2916 = vpop.f32.mrb[0].mxu0
    %v2917 = vadd.f32 %v2515, %v2916
    %v2918 = vpop.f32.mrb[0].mxu0
    %v2919 = vadd.f32 %v2519, %v2918
    %v2920 = vpop.f32.mrb[0].mxu0
    %v2921 = vadd.f32 %v2515, %v2920
    %v2922 = vpop.f32.mrb[0].mxu0
    %v2923 = vadd.f32 %v2519, %v2922
    %2924 = vmatprep.mubr.bf16.mxu0 0
    %2925 = vmatmul.mubr.bf16.gmra.mrb[0].mxu0 %v2459
    %v2926 = vpop.f32.mrb[0].mxu0
    %v2927 = vadd.f32 %v2515, %v2926
    %v2928 = vpop.f32.mrb[0].mxu0
    %v2929 = vadd.f32 %v2519, %v2928
    %v2930 = vpop.f32.mrb[0].mxu0
    %v2931 = vadd.f32 %v2515, %v2930
    %v2932 = vpop.f32.mrb[0].mxu0
    %v2933 = vadd.f32 %v2519, %v2932
    %2934 = vmatprep.mubr.bf16.mxu0 0
    %2935 = vmatmul.mubr.bf16.gmra.mrb[0].mxu0 %v2460
    %v2936 = vpop.f32.mrb[0].mxu0
    %v2937 = vadd.f32 %v2515, %v2936
    %v2938 = vpop.f32.mrb[0].mxu0
    %v2939 = vadd.f32 %v2519, %v2938
    %v2940 = vpop.f32.mrb[0].mxu0
    %v2941 = vadd.f32 %v2515, %v2940
    %v2942 = vpop.f32.mrb[0].mxu0
    %v2943 = vadd.f32 %v2519, %v2942
    %2944 = vmatprep.mubr.bf16.mxu0 0
    %2945 = vmatmul.mubr.bf16.gmra.mrb[0].mxu0 %v2461
    %v2946 = vpop.f32.mrb[0].mxu0
    %v2947 = vadd.f32 %v2515, %v2946
    %v2948 = vpop.f32.mrb[0].mxu0
    %v2949 = vadd.f32 %v2519, %v2948
    %v2950 = vpop.f32.mrb[0].mxu0
    %v2951 = vadd.f32 %v2515, %v2950
    %v2952 = vpop.f32.mrb[0].mxu0
    %v2953 = vadd.f32 %v2519, %v2952
    %2954 = vmatprep.mubr.bf16.mxu0 0
    %2955 = vmatmul.mubr.bf16.gmra.mrb[0].mxu0 %v2462
    %v2956 = vpop.f32.mrb[0].mxu0
    %v2957 = vadd.f32 %v2515, %v2956
    %v2958 = vpop.f32.mrb[0].mxu0
    %v2959 = vadd.f32 %v2519, %v2958
    %v2960 = vpop.f32.mrb[0].mxu0
    %v2961 = vadd.f32 %v2515, %v2960
    %v2962 = vpop.f32.mrb[0].mxu0
    %v2963 = vadd.f32 %v2519, %v2962
    %2964 = vmatprep.mubr.bf16.mxu0 0
    %2965 = vmatmul.mubr.bf16.gmra.mrb[0].mxu0 %v2463
    %v2966 = vpop.f32.mrb[0].mxu0
    %v2967 = vadd.f32 %v2515, %v2966
    %v2968 = vpop.f32.mrb[0].mxu0
    %v2969 = vadd.f32 %v2519, %v2968
    %v2970 = vpop.f32.mrb[0].mxu0
    %v2971 = vadd.f32 %v2515, %v2970
    %v2972 = vpop.f32.mrb[0].mxu0
    %v2973 = vadd.f32 %v2519, %v2972
    %2974 = vmatprep.mubr.bf16.mxu0 0
    %2975 = vmatmul.mubr.bf16.gmra.mrb[0].mxu0 %v2464
    %v2976 = vpop.f32.mrb[0].mxu0
    %v2977 = vadd.f32 %v2515, %v2976
    %v2978 = vpop.f32.mrb[0].mxu0
    %v2979 = vadd.f32 %v2519, %v2978
    %v2980 = vpop.f32.mrb[0].mxu0
    %v2981 = vadd.f32 %v2515, %v2980
    %v2982 = vpop.f32.mrb[0].mxu0
    %v2983 = vadd.f32 %v2519, %v2982
    %2984 = vmatprep.mubr.bf16.mxu0 0
    %2985 = vmatmul.mubr.bf16.gmra.mrb[0].mxu0 %v2465
    %v2986 = vpop.f32.mrb[0].mxu0
    %v2987 = vadd.f32 %v2515, %v2986
    %v2988 = vpop.f32.mrb[0].mxu0
    %v2989 = vadd.f32 %v2519, %v2988
    %v2990 = vpop.f32.mrb[0].mxu0
    %v2991 = vadd.f32 %v2515, %v2990
    %v2992 = vpop.f32.mrb[0].mxu0
    %v2993 = vadd.f32 %v2519, %v2992
    %2994 = vmatprep.mubr.bf16.mxu0 0
    %2995 = vmatmul.mubr.bf16.gmra.mrb[0].mxu0 %v2466
    %v2996 = vpop.f32.mrb[0].mxu0
    %v2997 = vadd.f32 %v2515, %v2996
    %v2998 = vpop.f32.mrb[0].mxu0
    %v2999 = vadd.f32 %v2519, %v2998
    %v3000 = vpop.f32.mrb[0].mxu0
    %v3001 = vadd.f32 %v2515, %v3000
    %v3002 = vpop.f32.mrb[0].mxu0
    %v3003 = vadd.f32 %v2519, %v3002
    %3004 = vmatprep.mubr.bf16.mxu0 0
    %3005 = vmatmul.mubr.bf16.gmra.mrb[0].mxu0 %v2467
    %v3006 = vpop.f32.mrb[0].mxu0
    %v3007 = vadd.f32 %v2515, %v3006
    %v3008 = vpop.f32.mrb[0].mxu0
    %v3009 = vadd.f32 %v2519, %v3008
    %v3010 = vpop.f32.mrb[0].mxu0
    %v3011 = vadd.f32 %v2515, %v3010
    %v3012 = vpop.f32.mrb[0].mxu0
    %v3013 = vadd.f32 %v2519, %v3012
    %3014 = vmatprep.mubr.bf16.mxu0 0
    %3015 = vmatmul.mubr.bf16.gmra.mrb[0].mxu0 %v2468
    %v3016 = vpop.f32.mrb[0].mxu0
    %v3017 = vadd.f32 %v2515, %v3016
    %v3018 = vpop.f32.mrb[0].mxu0
    %v3019 = vadd.f32 %v2519, %v3018
    %v3020 = vpop.f32.mrb[0].mxu0
    %v3021 = vadd.f32 %v2515, %v3020
    %v3022 = vpop.f32.mrb[0].mxu0
    %v3023 = vadd.f32 %v2519, %v3022
    %3024 = vmatprep.mubr.bf16.mxu0 0
    %3025 = vmatmul.mubr.bf16.gmra.mrb[0].mxu0 %v2469
    %v3026 = vpop.f32.mrb[0].mxu0
    %v3027 = vadd.f32 %v2515, %v3026
    %v3028 = vpop.f32.mrb[0].mxu0
    %v3029 = vadd.f32 %v2519, %v3028
    %v3030 = vpop.f32.mrb[0].mxu0
    %v3031 = vadd.f32 %v2515, %v3030
    %v3032 = vpop.f32.mrb[0].mxu0
    %v3033 = vadd.f32 %v2519, %v3032
    %3034 = vmatprep.mubr.bf16.mxu0 0
    %3035 = vmatmul.mubr.bf16.gmra.mrb[0].mxu0 %v2470
    %v3036 = vpop.f32.mrb[0].mxu0
    %v3037 = vadd.f32 %v2515, %v3036
    %v3038 = vpop.f32.mrb[0].mxu0
    %v3039 = vadd.f32 %v2519, %v3038
    %v3040 = vpop.f32.mrb[0].mxu0
    %v3041 = vadd.f32 %v2515, %v3040
    %v3042 = vpop.f32.mrb[0].mxu0
    %v3043 = vadd.f32 %v2519, %v3042
    %3044 = vmatprep.mubr.bf16.mxu0 0
    %3045 = vmatmul.mubr.bf16.gmra.mrb[0].mxu0 %v2471
    %v3046 = vpop.f32.mrb[0].mxu0
    %v3047 = vadd.f32 %v2515, %v3046
    %v3048 = vpop.f32.mrb[0].mxu0
    %v3049 = vadd.f32 %v2519, %v3048
    %v3050 = vpop.f32.mrb[0].mxu0
    %v3051 = vadd.f32 %v2515, %v3050
    %v3052 = vpop.f32.mrb[0].mxu0
    %v3053 = vadd.f32 %v2519, %v3052
    %3054 = vmatprep.mubr.bf16.mxu0 0
    %3055 = vmatmul.mubr.bf16.gmra.mrb[0].mxu0 %v2472
    %v3056 = vpop.f32.mrb[0].mxu0
    %v3057 = vadd.f32 %v2515, %v3056
    %v3058 = vpop.f32.mrb[0].mxu0
    %v3059 = vadd.f32 %v2519, %v3058
    %v3060 = vpop.f32.mrb[0].mxu0
    %v3061 = vadd.f32 %v2515, %v3060
    %v3062 = vpop.f32.mrb[0].mxu0
    %v3063 = vadd.f32 %v2519, %v3062
    %3064 = vmatprep.mubr.bf16.mxu0 0
    %3065 = vmatmul.mubr.bf16.gmra.mrb[0].mxu0 %v2473
    %v3066 = vpop.f32.mrb[0].mxu0
    %v3067 = vadd.f32 %v2515, %v3066
    %v3068 = vpop.f32.mrb[0].mxu0
    %v3069 = vadd.f32 %v2519, %v3068
    %v3070 = vpop.f32.mrb[0].mxu0
    %v3071 = vadd.f32 %v2515, %v3070
    %v3072 = vpop.f32.mrb[0].mxu0
    %v3073 = vadd.f32 %v2519, %v3072
    %3074 = vmatprep.mubr.bf16.mxu0 0
    %3075 = vmatmul.mubr.bf16.gmra.mrb[0].mxu0 %v2474
    %v3076 = vpop.f32.mrb[0].mxu0
    %v3077 = vadd.f32 %v2515, %v3076
    %v3078 = vpop.f32.mrb[0].mxu0
    %v3079 = vadd.f32 %v2519, %v3078
    %v3080 = vpop.f32.mrb[0].mxu0
    %v3081 = vadd.f32 %v2515, %v3080
    %v3082 = vpop.f32.mrb[0].mxu0
    %v3083 = vadd.f32 %v2519, %v3082
    %3084 = vmatprep.mubr.bf16.mxu0 0
    %3085 = vmatmul.mubr.bf16.gmra.mrb[0].mxu0 %v2475
    %v3086 = vpop.f32.mrb[0].mxu0
    %v3087 = vadd.f32 %v2515, %v3086
    %v3088 = vpop.f32.mrb[0].mxu0
    %v3089 = vadd.f32 %v2519, %v3088
    %v3090 = vpop.f32.mrb[0].mxu0
    %v3091 = vadd.f32 %v2515, %v3090
    %v3092 = vpop.f32.mrb[0].mxu0
    %v3093 = vadd.f32 %v2519, %v3092
    %3094 = vmatprep.mubr.bf16.mxu0 0
    %3095 = vmatmul.mubr.bf16.gmra.mrb[0].mxu0 %v2476
    %v3096 = vpop.f32.mrb[0].mxu0
    %v3097 = vadd.f32 %v2515, %v3096
    %v3098 = vpop.f32.mrb[0].mxu0
    %v3099 = vadd.f32 %v2519, %v3098
    %v3100 = vpop.f32.mrb[0].mxu0
    %v3101 = vadd.f32 %v2515, %v3100
    %v3102 = vpop.f32.mrb[0].mxu0
    %v3103 = vadd.f32 %v2519, %v3102
    %3104 = vmatprep.mubr.bf16.mxu0 0
    %3105 = vmatmul.mubr.bf16.gmra.mrb[0].mxu0 %v2477
    %v3106 = vpop.f32.mrb[0].mxu0
    %v3107 = vadd.f32 %v2515, %v3106
    %v3108 = vpop.f32.mrb[0].mxu0
    %v3109 = vadd.f32 %v2519, %v3108
    %v3110 = vpop.f32.mrb[0].mxu0
    %v3111 = vadd.f32 %v2515, %v3110
    %v3112 = vpop.f32.mrb[0].mxu0
    %v3113 = vadd.f32 %v2519, %v3112
    %3114 = vmatprep.mubr.bf16.mxu0 0
    %3115 = vmatmul.mubr.bf16.gmra.mrb[0].mxu0 %v2478
    %v3116 = vpop.f32.mrb[0].mxu0
    %v3117 = vadd.f32 %v2515, %v3116
    %v3118 = vpop.f32.mrb[0].mxu0
    %v3119 = vadd.f32 %v2519, %v3118
    %v3120 = vpop.f32.mrb[0].mxu0
    %v3121 = vadd.f32 %v2515, %v3120
    %v3122 = vpop.f32.mrb[0].mxu0
    %v3123 = vadd.f32 %v2519, %v3122
    %3124 = vmatprep.mubr.bf16.mxu0 0
    %3125 = vmatmul.mubr.bf16.gmra.mrb[0].mxu0 %v2479
    %v3126 = vpop.f32.mrb[0].mxu0
    %v3127 = vadd.f32 %v2515, %v3126
    %v3128 = vpop.f32.mrb[0].mxu0
    %v3129 = vadd.f32 %v2519, %v3128
    %v3130 = vpop.f32.mrb[0].mxu0
    %v3131 = vadd.f32 %v2515, %v3130
    %v3132 = vpop.f32.mrb[0].mxu0
    %v3133 = vadd.f32 %v2519, %v3132
    %3134 = vmatprep.mubr.bf16.mxu0 0
    %3135 = vmatmul.mubr.bf16.gmra.mrb[0].mxu0 %v2480
    %v3136 = vpop.f32.mrb[0].mxu0
    %v3137 = vadd.f32 %v2515, %v3136
    %v3138 = vpop.f32.mrb[0].mxu0
    %v3139 = vadd.f32 %v2519, %v3138
    %v3140 = vpop.f32.mrb[0].mxu0
    %v3141 = vadd.f32 %v2515, %v3140
    %v3142 = vpop.f32.mrb[0].mxu0
    %v3143 = vadd.f32 %v2519, %v3142
    %3144 = vmatprep.mubr.bf16.mxu0 0
    %3145 = vmatmul.mubr.bf16.gmra.mrb[0].mxu0 %v2481
    %v3146 = vpop.f32.mrb[0].mxu0
    %v3147 = vadd.f32 %v2515, %v3146
    %v3148 = vpop.f32.mrb[0].mxu0
    %v3149 = vadd.f32 %v2519, %v3148
    %v3150 = vpop.f32.mrb[0].mxu0
    %v3151 = vadd.f32 %v2515, %v3150
    %v3152 = vpop.f32.mrb[0].mxu0
    %v3153 = vadd.f32 %v2519, %v3152
    %3154 = vmatprep.mubr.bf16.mxu0 0
    %3155 = vmatmul.mubr.bf16.gmra.mrb[0].mxu0 %v2482
    %v3156 = vpop.f32.mrb[0].mxu0
    %v3157 = vadd.f32 %v2515, %v3156
    %v3158 = vpop.f32.mrb[0].mxu0
    %v3159 = vadd.f32 %v2519, %v3158
    %v3160 = vpop.f32.mrb[0].mxu0
    %v3161 = vadd.f32 %v2515, %v3160
    %v3162 = vpop.f32.mrb[0].mxu0
    %v3163 = vadd.f32 %v2519, %v3162
    %3164 = vmatprep.mubr.bf16.mxu0 0
    %3165 = vmatmul.mubr.bf16.gmra.mrb[0].mxu0 %v2483
    %v3166 = vpop.f32.mrb[0].mxu0
    %v3167 = vadd.f32 %v2515, %v3166
    %v3168 = vpop.f32.mrb[0].mxu0
    %v3169 = vadd.f32 %v2519, %v3168
    %v3170 = vpop.f32.mrb[0].mxu0
    %v3171 = vadd.f32 %v2515, %v3170
    %v3172 = vpop.f32.mrb[0].mxu0
    %v3173 = vadd.f32 %v2519, %v3172
    %3174 = vmatprep.mubr.bf16.mxu0 0
    %3175 = vmatmul.mubr.bf16.gmra.mrb[0].mxu0 %v2484
    %v3176 = vpop.f32.mrb[0].mxu0
    %v3177 = vadd.f32 %v2515, %v3176
    %v3178 = vpop.f32.mrb[0].mxu0
    %v3179 = vadd.f32 %v2519, %v3178
    %v3180 = vpop.f32.mrb[0].mxu0
    %v3181 = vadd.f32 %v2515, %v3180
    %v3182 = vpop.f32.mrb[0].mxu0
    %v3183 = vadd.f32 %v2519, %v3182
    %3184 = vmatprep.mubr.bf16.mxu0 0
    %3185 = vmatmul.mubr.bf16.gmra.mrb[0].mxu0 %v2485
    %v3186 = vpop.f32.mrb[0].mxu0
    %v3187 = vadd.f32 %v2515, %v3186
    %v3188 = vpop.f32.mrb[0].mxu0
    %v3189 = vadd.f32 %v2519, %v3188
    %v3190 = vpop.f32.mrb[0].mxu0
    %v3191 = vadd.f32 %v2515, %v3190
    %v3192 = vpop.f32.mrb[0].mxu0
    %v3193 = vadd.f32 %v2519, %v3192
    %3194 = vmatprep.mubr.bf16.mxu0 0
    %3195 = vmatmul.mubr.bf16.gmra.mrb[0].mxu0 %v2486
    %v3196 = vpop.f32.mrb[0].mxu0
    %v3197 = vadd.f32 %v2515, %v3196
    %v3198 = vpop.f32.mrb[0].mxu0
    %v3199 = vadd.f32 %v2519, %v3198
    %v3200 = vpop.f32.mrb[0].mxu0
    %v3201 = vadd.f32 %v2515, %v3200
    %v3202 = vpop.f32.mrb[0].mxu0
    %v3203 = vadd.f32 %v2519, %v3202
    %3204 = vmatprep.mubr.bf16.mxu0 0
    %3205 = vmatmul.mubr.bf16.gmra.mrb[0].mxu0 %v2487
    %v3206 = vpop.f32.mrb[0].mxu0
    %v3207 = vadd.f32 %v2515, %v3206
    %v3208 = vpop.f32.mrb[0].mxu0
    %v3209 = vadd.f32 %v2519, %v3208
    %v3210 = vpop.f32.mrb[0].mxu0
    %v3211 = vadd.f32 %v2515, %v3210
    %v3212 = vpop.f32.mrb[0].mxu0
    %v3213 = vadd.f32 %v2519, %v3212
    %3214 = vmatprep.mubr.bf16.mxu0 0
    %3215 = vmatmul.mubr.bf16.gmra.mrb[0].mxu0 %v2488
    %v3216 = vpop.f32.mrb[0].mxu0
    %v3217 = vadd.f32 %v2515, %v3216
    %v3218 = vpop.f32.mrb[0].mxu0
    %v3219 = vadd.f32 %v2519, %v3218
    %v3220 = vpop.f32.mrb[0].mxu0
    %v3221 = vadd.f32 %v2515, %v3220
    %v3222 = vpop.f32.mrb[0].mxu0
    %v3223 = vadd.f32 %v2519, %v3222
    %3224 = vmatprep.mubr.bf16.mxu0 0
    %3225 = vmatmul.mubr.bf16.gmra.mrb[0].mxu0 %v2489
    %v3226 = vpop.f32.mrb[0].mxu0
    %v3227 = vadd.f32 %v2515, %v3226
    %v3228 = vpop.f32.mrb[0].mxu0
    %v3229 = vadd.f32 %v2519, %v3228
    %v3230 = vpop.f32.mrb[0].mxu0
    %v3231 = vadd.f32 %v2515, %v3230
    %v3232 = vpop.f32.mrb[0].mxu0
    %v3233 = vadd.f32 %v2519, %v3232
    %3234 = vmatprep.mubr.bf16.mxu0 0
    %3235 = vmatmul.mubr.bf16.gmra.mrb[0].mxu0 %v2490
    %v3236 = vpop.f32.mrb[0].mxu0
    %v3237 = vadd.f32 %v2515, %v3236
    %v3238 = vpop.f32.mrb[0].mxu0
    %v3239 = vadd.f32 %v2519, %v3238
    %v3240 = vpop.f32.mrb[0].mxu0
    %v3241 = vadd.f32 %v2515, %v3240
    %v3242 = vpop.f32.mrb[0].mxu0
    %v3243 = vadd.f32 %v2519, %v3242
    %3244 = vmatprep.mubr.bf16.mxu0 0
    %3245 = vmatmul.mubr.bf16.gmra.mrb[0].mxu0 %v2491
    %v3246 = vpop.f32.mrb[0].mxu0
    %v3247 = vadd.f32 %v2515, %v3246
    %v3248 = vpop.f32.mrb[0].mxu0
    %v3249 = vadd.f32 %v2519, %v3248
    %v3250 = vpop.f32.mrb[0].mxu0
    %v3251 = vadd.f32 %v2515, %v3250
    %v3252 = vpop.f32.mrb[0].mxu0
    %v3253 = vadd.f32 %v2519, %v3252
    %3254 = vmatprep.mubr.bf16.mxu0 0
    %3255 = vmatmul.mubr.bf16.gmra.mrb[0].mxu0 %v2492
    %v3256 = vpop.f32.mrb[0].mxu0
    %v3257 = vadd.f32 %v2515, %v3256
    %v3258 = vpop.f32.mrb[0].mxu0
    %v3259 = vadd.f32 %v2519, %v3258
    %v3260 = vpop.f32.mrb[0].mxu0
    %v3261 = vadd.f32 %v2515, %v3260
    %v3262 = vpop.f32.mrb[0].mxu0
    %v3263 = vadd.f32 %v2519, %v3262
    %3264 = vmatprep.mubr.bf16.mxu0 0
    %3265 = vmatmul.mubr.bf16.gmra.mrb[0].mxu0 %v2493
    %v3266 = vpop.f32.mrb[0].mxu0
    %v3267 = vadd.f32 %v2515, %v3266
    %v3268 = vpop.f32.mrb[0].mxu0
    %v3269 = vadd.f32 %v2519, %v3268
    %v3270 = vpop.f32.mrb[0].mxu0
    %v3271 = vadd.f32 %v2515, %v3270
    %v3272 = vpop.f32.mrb[0].mxu0
    %v3273 = vadd.f32 %v2519, %v3272
    %3274 = vdwg.mxu0
    %v3275 = vmax.f32 %v2637, 0.0
    %v3276 = vmax.f32 %v2639, 0.0
    %v3277 = vmax.f32 %v2641, 0.0
    %v3278 = vmax.f32 %v2643, 0.0
    %v3279 = vmax.f32 %v2647, 0.0
    %v3280 = vmax.f32 %v2649, 0.0
    %v3281 = vmax.f32 %v2651, 0.0
    %v3282 = vmax.f32 %v2653, 0.0
    %v3283 = vmax.f32 %v2657, 0.0
    %v3284 = vmax.f32 %v2659, 0.0
    %v3285 = vmax.f32 %v2661, 0.0
    %v3286 = vmax.f32 %v2663, 0.0
    %v3287 = vmax.f32 %v2667, 0.0
    %v3288 = vmax.f32 %v2669, 0.0
    %v3289 = vmax.f32 %v2671, 0.0
    %v3290 = vmax.f32 %v2673, 0.0
    %v3291 = vmax.f32 %v2677, 0.0
    %v3292 = vmax.f32 %v2679, 0.0
    %v3293 = vmax.f32 %v2681, 0.0
    %v3294 = vmax.f32 %v2683, 0.0
    %v3295 = vmax.f32 %v2687, 0.0
    %v3296 = vmax.f32 %v2689, 0.0
    %v3297 = vmax.f32 %v2691, 0.0
    %v3298 = vmax.f32 %v2693, 0.0
    %v3299 = vmax.f32 %v2697, 0.0
    %v3300 = vmax.f32 %v2699, 0.0
    %v3301 = vmax.f32 %v2701, 0.0
    %v3302 = vmax.f32 %v2703, 0.0
    %v3303 = vmax.f32 %v2707, 0.0
    %v3304 = vmax.f32 %v2709, 0.0
    %v3305 = vmax.f32 %v2711, 0.0
    %v3306 = vmax.f32 %v2713, 0.0
    %v3307 = vmax.f32 %v2717, 0.0
    %v3308 = vmax.f32 %v2719, 0.0
    %v3309 = vmax.f32 %v2721, 0.0
    %v3310 = vmax.f32 %v2723, 0.0
    %v3311 = vmax.f32 %v2727, 0.0
    %v3312 = vmax.f32 %v2729, 0.0
    %v3313 = vmax.f32 %v2731, 0.0
    %v3314 = vmax.f32 %v2733, 0.0
    %v3315 = vmax.f32 %v2737, 0.0
    %v3316 = vmax.f32 %v2739, 0.0
    %v3317 = vmax.f32 %v2741, 0.0
    %v3318 = vmax.f32 %v2743, 0.0
    %v3319 = vmax.f32 %v2747, 0.0
    %v3320 = vmax.f32 %v2749, 0.0
    %v3321 = vmax.f32 %v2751, 0.0
    %v3322 = vmax.f32 %v2753, 0.0
    %v3323 = vmax.f32 %v2757, 0.0
    %v3324 = vmax.f32 %v2759, 0.0
    %v3325 = vmax.f32 %v2761, 0.0
    %v3326 = vmax.f32 %v2763, 0.0
    %v3327 = vmax.f32 %v2767, 0.0
    %v3328 = vmax.f32 %v2769, 0.0
    %v3329 = vmax.f32 %v2771, 0.0
    %v3330 = vmax.f32 %v2773, 0.0
    %v3331 = vmax.f32 %v2777, 0.0
    %v3332 = vmax.f32 %v2779, 0.0
    %v3333 = vmax.f32 %v2781, 0.0
    %v3334 = vmax.f32 %v2783, 0.0
    %v3335 = vmax.f32 %v2787, 0.0
    %v3336 = vmax.f32 %v2789, 0.0
    %v3337 = vmax.f32 %v2791, 0.0
    %v3338 = vmax.f32 %v2793, 0.0
    %v3339 = vmax.f32 %v2797, 0.0
    %v3340 = vmax.f32 %v2799, 0.0
    %v3341 = vmax.f32 %v2801, 0.0
    %v3342 = vmax.f32 %v2803, 0.0
    %v3343 = vmax.f32 %v2807, 0.0
    %v3344 = vmax.f32 %v2809, 0.0
    %v3345 = vmax.f32 %v2811, 0.0
    %v3346 = vmax.f32 %v2813, 0.0
    %v3347 = vmax.f32 %v2817, 0.0
    %v3348 = vmax.f32 %v2819, 0.0
    %v3349 = vmax.f32 %v2821, 0.0
    %v3350 = vmax.f32 %v2823, 0.0
    %v3351 = vmax.f32 %v2827, 0.0
    %v3352 = vmax.f32 %v2829, 0.0
    %v3353 = vmax.f32 %v2831, 0.0
    %v3354 = vmax.f32 %v2833, 0.0
    %v3355 = vmax.f32 %v2837, 0.0
    %v3356 = vmax.f32 %v2839, 0.0
    %v3357 = vmax.f32 %v2841, 0.0
    %v3358 = vmax.f32 %v2843, 0.0
    %v3359 = vmax.f32 %v2847, 0.0
    %v3360 = vmax.f32 %v2849, 0.0
    %v3361 = vmax.f32 %v2851, 0.0
    %v3362 = vmax.f32 %v2853, 0.0
    %v3363 = vmax.f32 %v2857, 0.0
    %v3364 = vmax.f32 %v2859, 0.0
    %v3365 = vmax.f32 %v2861, 0.0
    %v3366 = vmax.f32 %v2863, 0.0
    %v3367 = vmax.f32 %v2867, 0.0
    %v3368 = vmax.f32 %v2869, 0.0
    %v3369 = vmax.f32 %v2871, 0.0
    %v3370 = vmax.f32 %v2873, 0.0
    %v3371 = vmax.f32 %v2877, 0.0
    %v3372 = vmax.f32 %v2879, 0.0
    %v3373 = vmax.f32 %v2881, 0.0
    %v3374 = vmax.f32 %v2883, 0.0
    %v3375 = vmax.f32 %v2887, 0.0
    %v3376 = vmax.f32 %v2889, 0.0
    %v3377 = vmax.f32 %v2891, 0.0
    %v3378 = vmax.f32 %v2893, 0.0
    %v3379 = vmax.f32 %v2897, 0.0
    %v3380 = vmax.f32 %v2899, 0.0
    %v3381 = vmax.f32 %v2901, 0.0
    %v3382 = vmax.f32 %v2903, 0.0
    %v3383 = vmax.f32 %v2907, 0.0
    %v3384 = vmax.f32 %v2909, 0.0
    %v3385 = vmax.f32 %v2911, 0.0
    %v3386 = vmax.f32 %v2913, 0.0
    %v3387 = vmax.f32 %v2917, 0.0
    %v3388 = vmax.f32 %v2919, 0.0
    %v3389 = vmax.f32 %v2921, 0.0
    %v3390 = vmax.f32 %v2923, 0.0
    %v3391 = vmax.f32 %v2927, 0.0
    %v3392 = vmax.f32 %v2929, 0.0
    %v3393 = vmax.f32 %v2931, 0.0
    %v3394 = vmax.f32 %v2933, 0.0
    %v3395 = vmax.f32 %v2937, 0.0
    %v3396 = vmax.f32 %v2939, 0.0
    %v3397 = vmax.f32 %v2941, 0.0
    %v3398 = vmax.f32 %v2943, 0.0
    %v3399 = vmax.f32 %v2947, 0.0
    %v3400 = vmax.f32 %v2949, 0.0
    %v3401 = vmax.f32 %v2951, 0.0
    %v3402 = vmax.f32 %v2953, 0.0
    %v3403 = vmax.f32 %v2957, 0.0
    %v3404 = vmax.f32 %v2959, 0.0
    %v3405 = vmax.f32 %v2961, 0.0
    %v3406 = vmax.f32 %v2963, 0.0
    %v3407 = vmax.f32 %v2967, 0.0
    %v3408 = vmax.f32 %v2969, 0.0
    %v3409 = vmax.f32 %v2971, 0.0
    %v3410 = vmax.f32 %v2973, 0.0
    %v3411 = vmax.f32 %v2977, 0.0
    %v3412 = vmax.f32 %v2979, 0.0
    %v3413 = vmax.f32 %v2981, 0.0
    %v3414 = vmax.f32 %v2983, 0.0
    %v3415 = vmax.f32 %v2987, 0.0
    %v3416 = vmax.f32 %v2989, 0.0
    %v3417 = vmax.f32 %v2991, 0.0
    %v3418 = vmax.f32 %v2993, 0.0
    %v3419 = vmax.f32 %v2997, 0.0
    %v3420 = vmax.f32 %v2999, 0.0
    %v3421 = vmax.f32 %v3001, 0.0
    %v3422 = vmax.f32 %v3003, 0.0
    %v3423 = vmax.f32 %v3007, 0.0
    %v3424 = vmax.f32 %v3009, 0.0
    %v3425 = vmax.f32 %v3011, 0.0
    %v3426 = vmax.f32 %v3013, 0.0
    %v3427 = vmax.f32 %v3017, 0.0
    %v3428 = vmax.f32 %v3019, 0.0
    %v3429 = vmax.f32 %v3021, 0.0
    %v3430 = vmax.f32 %v3023, 0.0
    %v3431 = vmax.f32 %v3027, 0.0
    %v3432 = vmax.f32 %v3029, 0.0
    %v3433 = vmax.f32 %v3031, 0.0
    %v3434 = vmax.f32 %v3033, 0.0
    %v3435 = vmax.f32 %v3037, 0.0
    %v3436 = vmax.f32 %v3039, 0.0
    %v3437 = vmax.f32 %v3041, 0.0
    %v3438 = vmax.f32 %v3043, 0.0
    %v3439 = vmax.f32 %v3047, 0.0
    %v3440 = vmax.f32 %v3049, 0.0
    %v3441 = vmax.f32 %v3051, 0.0
    %v3442 = vmax.f32 %v3053, 0.0
    %v3443 = vmax.f32 %v3057, 0.0
    %v3444 = vmax.f32 %v3059, 0.0
    %v3445 = vmax.f32 %v3061, 0.0
    %v3446 = vmax.f32 %v3063, 0.0
    %v3447 = vmax.f32 %v3067, 0.0
    %v3448 = vmax.f32 %v3069, 0.0
    %v3449 = vmax.f32 %v3071, 0.0
    %v3450 = vmax.f32 %v3073, 0.0
    %v3451 = vmax.f32 %v3077, 0.0
    %v3452 = vmax.f32 %v3079, 0.0
    %v3453 = vmax.f32 %v3081, 0.0
    %v3454 = vmax.f32 %v3083, 0.0
    %v3455 = vmax.f32 %v3087, 0.0
    %v3456 = vmax.f32 %v3089, 0.0
    %v3457 = vmax.f32 %v3091, 0.0
    %v3458 = vmax.f32 %v3093, 0.0
    %v3459 = vmax.f32 %v3097, 0.0
    %v3460 = vmax.f32 %v3099, 0.0
    %v3461 = vmax.f32 %v3101, 0.0
    %v3462 = vmax.f32 %v3103, 0.0
    %v3463 = vmax.f32 %v3107, 0.0
    %v3464 = vmax.f32 %v3109, 0.0
    %v3465 = vmax.f32 %v3111, 0.0
    %v3466 = vmax.f32 %v3113, 0.0
    %v3467 = vmax.f32 %v3117, 0.0
    %v3468 = vmax.f32 %v3119, 0.0
    %v3469 = vmax.f32 %v3121, 0.0
    %v3470 = vmax.f32 %v3123, 0.0
    %v3471 = vmax.f32 %v3127, 0.0
    %v3472 = vmax.f32 %v3129, 0.0
    %v3473 = vmax.f32 %v3131, 0.0
    %v3474 = vmax.f32 %v3133, 0.0
    %v3475 = vmax.f32 %v3137, 0.0
    %v3476 = vmax.f32 %v3139, 0.0
    %v3477 = vmax.f32 %v3141, 0.0
    %v3478 = vmax.f32 %v3143, 0.0
    %v3479 = vmax.f32 %v3147, 0.0
    %v3480 = vmax.f32 %v3149, 0.0
    %v3481 = vmax.f32 %v3151, 0.0
    %v3482 = vmax.f32 %v3153, 0.0
    %v3483 = vmax.f32 %v3157, 0.0
    %v3484 = vmax.f32 %v3159, 0.0
    %v3485 = vmax.f32 %v3161, 0.0
    %v3486 = vmax.f32 %v3163, 0.0
    %v3487 = vmax.f32 %v3167, 0.0
    %v3488 = vmax.f32 %v3169, 0.0
    %v3489 = vmax.f32 %v3171, 0.0
    %v3490 = vmax.f32 %v3173, 0.0
    %v3491 = vmax.f32 %v3177, 0.0
    %v3492 = vmax.f32 %v3179, 0.0
    %v3493 = vmax.f32 %v3181, 0.0
    %v3494 = vmax.f32 %v3183, 0.0
    %v3495 = vmax.f32 %v3187, 0.0
    %v3496 = vmax.f32 %v3189, 0.0
    %v3497 = vmax.f32 %v3191, 0.0
    %v3498 = vmax.f32 %v3193, 0.0
    %v3499 = vmax.f32 %v3197, 0.0
    %v3500 = vmax.f32 %v3199, 0.0
    %v3501 = vmax.f32 %v3201, 0.0
    %v3502 = vmax.f32 %v3203, 0.0
    %v3503 = vmax.f32 %v3207, 0.0
    %v3504 = vmax.f32 %v3209, 0.0
    %v3505 = vmax.f32 %v3211, 0.0
    %v3506 = vmax.f32 %v3213, 0.0
    %v3507 = vmax.f32 %v3217, 0.0
    %v3508 = vmax.f32 %v3219, 0.0
    %v3509 = vmax.f32 %v3221, 0.0
    %v3510 = vmax.f32 %v3223, 0.0
    %v3511 = vmax.f32 %v3227, 0.0
    %v3512 = vmax.f32 %v3229, 0.0
    %v3513 = vmax.f32 %v3231, 0.0
    %v3514 = vmax.f32 %v3233, 0.0
    %v3515 = vmax.f32 %v3237, 0.0
    %v3516 = vmax.f32 %v3239, 0.0
    %v3517 = vmax.f32 %v3241, 0.0
    %v3518 = vmax.f32 %v3243, 0.0
    %v3519 = vmax.f32 %v3247, 0.0
    %v3520 = vmax.f32 %v3249, 0.0
    %v3521 = vmax.f32 %v3251, 0.0
    %v3522 = vmax.f32 %v3253, 0.0
    %v3523 = vmax.f32 %v3257, 0.0
    %v3524 = vmax.f32 %v3259, 0.0
    %v3525 = vmax.f32 %v3261, 0.0
    %v3526 = vmax.f32 %v3263, 0.0
    %v3527 = vmax.f32 %v3267, 0.0
    %v3528 = vmax.f32 %v3269, 0.0
    %v3529 = vmax.f32 %v3271, 0.0
    %v3530 = vmax.f32 %v3273, 0.0
    %v3531 = vpack.c.bf16 %v3277, %v3275
    %v3532 = vpack.c.bf16 %v3278, %v3276
    %v3533 = vpack.c.bf16 %v3281, %v3279
    %v3534 = vpack.c.bf16 %v3282, %v3280
    %v3535 = vpack.c.bf16 %v3285, %v3283
    %v3536 = vpack.c.bf16 %v3286, %v3284
    %v3537 = vpack.c.bf16 %v3289, %v3287
    %v3538 = vpack.c.bf16 %v3290, %v3288
    %v3539 = vpack.c.bf16 %v3293, %v3291
    %v3540 = vpack.c.bf16 %v3294, %v3292
    %v3541 = vpack.c.bf16 %v3297, %v3295
    %v3542 = vpack.c.bf16 %v3298, %v3296
    %v3543 = vpack.c.bf16 %v3301, %v3299
    %v3544 = vpack.c.bf16 %v3302, %v3300
    %v3545 = vpack.c.bf16 %v3305, %v3303
    %v3546 = vpack.c.bf16 %v3306, %v3304
    %v3547 = vpack.c.bf16 %v3309, %v3307
    %v3548 = vpack.c.bf16 %v3310, %v3308
    %v3549 = vpack.c.bf16 %v3313, %v3311
    %v3550 = vpack.c.bf16 %v3314, %v3312
    %v3551 = vpack.c.bf16 %v3317, %v3315
    %v3552 = vpack.c.bf16 %v3318, %v3316
    %v3553 = vpack.c.bf16 %v3321, %v3319
    %v3554 = vpack.c.bf16 %v3322, %v3320
    %v3555 = vpack.c.bf16 %v3325, %v3323
    %v3556 = vpack.c.bf16 %v3326, %v3324
    %v3557 = vpack.c.bf16 %v3329, %v3327
    %v3558 = vpack.c.bf16 %v3330, %v3328
    %v3559 = vpack.c.bf16 %v3333, %v3331
    %v3560 = vpack.c.bf16 %v3334, %v3332
    %v3561 = vpack.c.bf16 %v3337, %v3335
    %v3562 = vpack.c.bf16 %v3338, %v3336
    %v3563 = vpack.c.bf16 %v3341, %v3339
    %v3564 = vpack.c.bf16 %v3342, %v3340
    %v3565 = vpack.c.bf16 %v3345, %v3343
    %v3566 = vpack.c.bf16 %v3346, %v3344
    %v3567 = vpack.c.bf16 %v3349, %v3347
    %v3568 = vpack.c.bf16 %v3350, %v3348
    %v3569 = vpack.c.bf16 %v3353, %v3351
    %v3570 = vpack.c.bf16 %v3354, %v3352
    %v3571 = vpack.c.bf16 %v3357, %v3355
    %v3572 = vpack.c.bf16 %v3358, %v3356
    %v3573 = vpack.c.bf16 %v3361, %v3359
    %v3574 = vpack.c.bf16 %v3362, %v3360
    %v3575 = vpack.c.bf16 %v3365, %v3363
    %v3576 = vpack.c.bf16 %v3366, %v3364
    %v3577 = vpack.c.bf16 %v3369, %v3367
    %v3578 = vpack.c.bf16 %v3370, %v3368
    %v3579 = vpack.c.bf16 %v3373, %v3371
    %v3580 = vpack.c.bf16 %v3374, %v3372
    %v3581 = vpack.c.bf16 %v3377, %v3375
    %v3582 = vpack.c.bf16 %v3378, %v3376
    %v3583 = vpack.c.bf16 %v3381, %v3379
    %v3584 = vpack.c.bf16 %v3382, %v3380
    %v3585 = vpack.c.bf16 %v3385, %v3383
    %v3586 = vpack.c.bf16 %v3386, %v3384
    %v3587 = vpack.c.bf16 %v3389, %v3387
    %v3588 = vpack.c.bf16 %v3390, %v3388
    %v3589 = vpack.c.bf16 %v3393, %v3391
    %v3590 = vpack.c.bf16 %v3394, %v3392
    %v3591 = vpack.c.bf16 %v3397, %v3395
    %v3592 = vpack.c.bf16 %v3398, %v3396
    %v3593 = vpack.c.bf16 %v3401, %v3399
    %v3594 = vpack.c.bf16 %v3402, %v3400
    %v3595 = vpack.c.bf16 %v3405, %v3403
    %v3596 = vpack.c.bf16 %v3406, %v3404
    %v3597 = vpack.c.bf16 %v3409, %v3407
    %v3598 = vpack.c.bf16 %v3410, %v3408
    %v3599 = vpack.c.bf16 %v3413, %v3411
    %v3600 = vpack.c.bf16 %v3414, %v3412
    %v3601 = vpack.c.bf16 %v3417, %v3415
    %v3602 = vpack.c.bf16 %v3418, %v3416
    %v3603 = vpack.c.bf16 %v3421, %v3419
    %v3604 = vpack.c.bf16 %v3422, %v3420
    %v3605 = vpack.c.bf16 %v3425, %v3423
    %v3606 = vpack.c.bf16 %v3426, %v3424
    %v3607 = vpack.c.bf16 %v3429, %v3427
    %v3608 = vpack.c.bf16 %v3430, %v3428
    %v3609 = vpack.c.bf16 %v3433, %v3431
    %v3610 = vpack.c.bf16 %v3434, %v3432
    %v3611 = vpack.c.bf16 %v3437, %v3435
    %v3612 = vpack.c.bf16 %v3438, %v3436
    %v3613 = vpack.c.bf16 %v3441, %v3439
    %v3614 = vpack.c.bf16 %v3442, %v3440
    %v3615 = vpack.c.bf16 %v3445, %v3443
    %v3616 = vpack.c.bf16 %v3446, %v3444
    %v3617 = vpack.c.bf16 %v3449, %v3447
    %v3618 = vpack.c.bf16 %v3450, %v3448
    %v3619 = vpack.c.bf16 %v3453, %v3451
    %v3620 = vpack.c.bf16 %v3454, %v3452
    %v3621 = vpack.c.bf16 %v3457, %v3455
    %v3622 = vpack.c.bf16 %v3458, %v3456
    %v3623 = vpack.c.bf16 %v3461, %v3459
    %v3624 = vpack.c.bf16 %v3462, %v3460
    %v3625 = vpack.c.bf16 %v3465, %v3463
    %v3626 = vpack.c.bf16 %v3466, %v3464
    %v3627 = vpack.c.bf16 %v3469, %v3467
    %v3628 = vpack.c.bf16 %v3470, %v3468
    %v3629 = vpack.c.bf16 %v3473, %v3471
    %v3630 = vpack.c.bf16 %v3474, %v3472
    %v3631 = vpack.c.bf16 %v3477, %v3475
    %v3632 = vpack.c.bf16 %v3478, %v3476
    %v3633 = vpack.c.bf16 %v3481, %v3479
    %v3634 = vpack.c.bf16 %v3482, %v3480
    %v3635 = vpack.c.bf16 %v3485, %v3483
    %v3636 = vpack.c.bf16 %v3486, %v3484
    %v3637 = vpack.c.bf16 %v3489, %v3487
    %v3638 = vpack.c.bf16 %v3490, %v3488
    %v3639 = vpack.c.bf16 %v3493, %v3491
    %v3640 = vpack.c.bf16 %v3494, %v3492
    %v3641 = vpack.c.bf16 %v3497, %v3495
    %v3642 = vpack.c.bf16 %v3498, %v3496
    %v3643 = vpack.c.bf16 %v3501, %v3499
    %v3644 = vpack.c.bf16 %v3502, %v3500
    %v3645 = vpack.c.bf16 %v3505, %v3503
    %v3646 = vpack.c.bf16 %v3506, %v3504
    %v3647 = vpack.c.bf16 %v3509, %v3507
    %v3648 = vpack.c.bf16 %v3510, %v3508
    %v3649 = vpack.c.bf16 %v3513, %v3511
    %v3650 = vpack.c.bf16 %v3514, %v3512
    %v3651 = vpack.c.bf16 %v3517, %v3515
    %v3652 = vpack.c.bf16 %v3518, %v3516
    %v3653 = vpack.c.bf16 %v3521, %v3519
    %v3654 = vpack.c.bf16 %v3522, %v3520
    %v3655 = vpack.c.bf16 %v3525, %v3523
    %v3656 = vpack.c.bf16 %v3526, %v3524
    %v3657 = vpack.c.bf16 %v3529, %v3527
    %v3658 = vpack.c.bf16 %v3530, %v3528
    %v3659 = vld [vmem:[%s7] sm:$0xff]
    %v3660 = vld [vmem:[%s7 + $0x20] sm:$0xff]
    %v3661 = vld [vmem:[%s7 + $0x40] sm:$0xff]
    %v3662 = vld [vmem:[%s7 + $0x60] sm:$0xff]
    %v3663 = vld [vmem:[%s7 + $0x80] sm:$0xff]
    %v3664 = vld [vmem:[%s7 + $0xa0] sm:$0xff]
    %v3665 = vld [vmem:[%s7 + $0xc0] sm:$0xff]
    %v3666 = vld [vmem:[%s7 + $0xe0] sm:$0xff]
    %v3667 = vld [vmem:[%s7 + $0x100] sm:$0xff]
    %v3668 = vld [vmem:[%s7 + $0x120] sm:$0xff]
    %v3669 = vld [vmem:[%s7 + $0x140] sm:$0xff]
    %v3670 = vld [vmem:[%s7 + $0x160] sm:$0xff]
    %v3671 = vld [vmem:[%s7 + $0x180] sm:$0xff]
    %v3672 = vld [vmem:[%s7 + $0x1a0] sm:$0xff]
    %v3673 = vld [vmem:[%s7 + $0x1c0] sm:$0xff]
    %v3674 = vld [vmem:[%s7 + $0x1e0] sm:$0xff]
    %v3675 = vld [vmem:[%s7 + $0x200] sm:$0xff]
    %v3676 = vld [vmem:[%s7 + $0x220] sm:$0xff]
    %v3677 = vld [vmem:[%s7 + $0x240] sm:$0xff]
    %v3678 = vld [vmem:[%s7 + $0x260] sm:$0xff]
    %v3679 = vld [vmem:[%s7 + $0x280] sm:$0xff]
    %v3680 = vld [vmem:[%s7 + $0x2a0] sm:$0xff]
    %v3681 = vld [vmem:[%s7 + $0x2c0] sm:$0xff]
    %v3682 = vld [vmem:[%s7 + $0x2e0] sm:$0xff]
    %v3683 = vld [vmem:[%s7 + $0x300] sm:$0xff]
    %v3684 = vld [vmem:[%s7 + $0x320] sm:$0xff]
    %v3685 = vld [vmem:[%s7 + $0x340] sm:$0xff]
    %v3686 = vld [vmem:[%s7 + $0x360] sm:$0xff]
    %v3687 = vld [vmem:[%s7 + $0x380] sm:$0xff]
    %v3688 = vld [vmem:[%s7 + $0x3a0] sm:$0xff]
    %v3689 = vld [vmem:[%s7 + $0x3c0] sm:$0xff]
    %v3690 = vld [vmem:[%s7 + $0x3e0] sm:$0xff]
    %v3691 = vld [vmem:[%s8] sm:$0x3]
    %v3693 = vlaneseq
    %v3694 = vshrl.u32 %v3693, 7
    %v3695 = vsub.s32 0, %v3694
    %v3696 = vrot.slane %v3691, %v3695
    %v3697 = vlaneseq
    %v3698 = vshrl.u32 %v3697, 7
    %v3699 = vsub.s32 1, %v3698
    %v3700 = vrot.slane %v3691, %v3699
    %v3735 = vunpack.c.l.b16 %v3659
    %v3736 = vunpack.c.h.b16 %v3659
    %v3737 = vunpack.c.l.b16 %v3660
    %v3738 = vunpack.c.h.b16 %v3660
    %v3739 = vunpack.c.l.b16 %v3661
    %v3740 = vunpack.c.h.b16 %v3661
    %v3741 = vunpack.c.l.b16 %v3662
    %v3742 = vunpack.c.h.b16 %v3662
    %v3743 = vunpack.c.l.b16 %v3663
    %v3744 = vunpack.c.h.b16 %v3663
    %v3745 = vunpack.c.l.b16 %v3664
    %v3746 = vunpack.c.h.b16 %v3664
    %v3747 = vunpack.c.l.b16 %v3665
    %v3748 = vunpack.c.h.b16 %v3665
    %v3749 = vunpack.c.l.b16 %v3666
    %v3750 = vunpack.c.h.b16 %v3666
    %v3751 = vunpack.c.l.b16 %v3667
    %v3752 = vunpack.c.h.b16 %v3667
    %v3753 = vunpack.c.l.b16 %v3668
    %v3754 = vunpack.c.h.b16 %v3668
    %v3755 = vunpack.c.l.b16 %v3669
    %v3756 = vunpack.c.h.b16 %v3669
    %v3757 = vunpack.c.l.b16 %v3670
    %v3758 = vunpack.c.h.b16 %v3670
    %v3759 = vunpack.c.l.b16 %v3671
    %v3760 = vunpack.c.h.b16 %v3671
    %v3761 = vunpack.c.l.b16 %v3672
    %v3762 = vunpack.c.h.b16 %v3672
    %v3763 = vunpack.c.l.b16 %v3673
    %v3764 = vunpack.c.h.b16 %v3673
    %v3765 = vunpack.c.l.b16 %v3674
    %v3766 = vunpack.c.h.b16 %v3674
    %v3767 = vunpack.c.l.b16 %v3675
    %v3768 = vunpack.c.h.b16 %v3675
    %v3769 = vunpack.c.l.b16 %v3676
    %v3770 = vunpack.c.h.b16 %v3676
    %v3771 = vunpack.c.l.b16 %v3677
    %v3772 = vunpack.c.h.b16 %v3677
    %v3773 = vunpack.c.l.b16 %v3678
    %v3774 = vunpack.c.h.b16 %v3678
    %v3775 = vunpack.c.l.b16 %v3679
    %v3776 = vunpack.c.h.b16 %v3679
    %v3777 = vunpack.c.l.b16 %v3680
    %v3778 = vunpack.c.h.b16 %v3680
    %v3779 = vunpack.c.l.b16 %v3681
    %v3780 = vunpack.c.h.b16 %v3681
    %v3781 = vunpack.c.l.b16 %v3682
    %v3782 = vunpack.c.h.b16 %v3682
    %v3783 = vunpack.c.l.b16 %v3683
    %v3784 = vunpack.c.h.b16 %v3683
    %v3785 = vunpack.c.l.b16 %v3684
    %v3786 = vunpack.c.h.b16 %v3684
    %v3787 = vunpack.c.l.b16 %v3685
    %v3788 = vunpack.c.h.b16 %v3685
    %v3789 = vunpack.c.l.b16 %v3686
    %v3790 = vunpack.c.h.b16 %v3686
    %v3791 = vunpack.c.l.b16 %v3687
    %v3792 = vunpack.c.h.b16 %v3687
    %v3793 = vunpack.c.l.b16 %v3688
    %v3794 = vunpack.c.h.b16 %v3688
    %v3795 = vunpack.c.l.b16 %v3689
    %v3796 = vunpack.c.h.b16 %v3689
    %v3797 = vunpack.c.l.b16 %v3690
    %v3798 = vunpack.c.h.b16 %v3690
    %v3799 = vpack.c.b16 %v3737, %v3735
    %v3800 = vpack.c.b16 %v3738, %v3736
    %v3801 = vpack.c.b16 %v3741, %v3739
    %v3802 = vpack.c.b16 %v3742, %v3740
    %v3803 = vpack.c.b16 %v3745, %v3743
    %v3804 = vpack.c.b16 %v3746, %v3744
    %v3805 = vpack.c.b16 %v3749, %v3747
    %v3806 = vpack.c.b16 %v3750, %v3748
    %v3807 = vpack.c.b16 %v3753, %v3751
    %v3808 = vpack.c.b16 %v3754, %v3752
    %v3809 = vpack.c.b16 %v3757, %v3755
    %v3810 = vpack.c.b16 %v3758, %v3756
    %v3811 = vpack.c.b16 %v3761, %v3759
    %v3812 = vpack.c.b16 %v3762, %v3760
    %v3813 = vpack.c.b16 %v3765, %v3763
    %v3814 = vpack.c.b16 %v3766, %v3764
    %v3815 = vpack.c.b16 %v3769, %v3767
    %v3816 = vpack.c.b16 %v3770, %v3768
    %v3817 = vpack.c.b16 %v3773, %v3771
    %v3818 = vpack.c.b16 %v3774, %v3772
    %v3819 = vpack.c.b16 %v3777, %v3775
    %v3820 = vpack.c.b16 %v3778, %v3776
    %v3821 = vpack.c.b16 %v3781, %v3779
    %v3822 = vpack.c.b16 %v3782, %v3780
    %v3823 = vpack.c.b16 %v3785, %v3783
    %v3824 = vpack.c.b16 %v3786, %v3784
    %v3825 = vpack.c.b16 %v3789, %v3787
    %v3826 = vpack.c.b16 %v3790, %v3788
    %v3827 = vpack.c.b16 %v3793, %v3791
    %v3828 = vpack.c.b16 %v3794, %v3792
    %v3829 = vpack.c.b16 %v3797, %v3795
    %v3830 = vpack.c.b16 %v3798, %v3796
    %3863 = vmatprep.subr.bf16.mxu0 %v3800
    %3864 = vmatpush1.bf16.msra.mxu0 %v3799
    %3865 = vmatprep.subr.bf16.mxu0 %v3802
    %3866 = vmatpush1.bf16.msra.mxu0 %v3801
    %3867 = vmatprep.subr.bf16.mxu0 %v3804
    %3868 = vmatpush1.bf16.msra.mxu0 %v3803
    %3869 = vmatprep.subr.bf16.mxu0 %v3806
    %3870 = vmatpush1.bf16.msra.mxu0 %v3805
    %3871 = vmatprep.subr.bf16.mxu0 %v3808
    %3872 = vmatpush1.bf16.msra.mxu0 %v3807
    %3873 = vmatprep.subr.bf16.mxu0 %v3810
    %3874 = vmatpush1.bf16.msra.mxu0 %v3809
    %3875 = vmatprep.subr.bf16.mxu0 %v3812
    %3876 = vmatpush1.bf16.msra.mxu0 %v3811
    %3877 = vmatprep.subr.bf16.mxu0 %v3814
    %3878 = vmatpush1.bf16.msra.mxu0 %v3813
    %3879 = vmatprep.subr.bf16.mxu0 %v3816
    %3880 = vmatpush1.bf16.msra.mxu0 %v3815
    %3881 = vmatprep.subr.bf16.mxu0 %v3818
    %3882 = vmatpush1.bf16.msra.mxu0 %v3817
    %3883 = vmatprep.subr.bf16.mxu0 %v3820
    %3884 = vmatpush1.bf16.msra.mxu0 %v3819
    %3885 = vmatprep.subr.bf16.mxu0 %v3822
    %3886 = vmatpush1.bf16.msra.mxu0 %v3821
    %3887 = vmatprep.subr.bf16.mxu0 %v3824
    %3888 = vmatpush1.bf16.msra.mxu0 %v3823
    %3889 = vmatprep.subr.bf16.mxu0 %v3826
    %3890 = vmatpush1.bf16.msra.mxu0 %v3825
    %3891 = vmatprep.subr.bf16.mxu0 %v3828
    %3892 = vmatpush1.bf16.msra.mxu0 %v3827
    %3893 = vmatprep.subr.bf16.mxu0 %v3830
    %3894 = vmatpush1.bf16.msra.mxu0 %v3829
    %3895 = vmatprep.mubr.bf16.mxu0 %v3532
    %3896 = vmatmul.mubr.bf16.gmra.mrb[0].mxu0 %v3531
    %v3897 = vpop.f32.mrb[0].mxu0
    %v3898 = vadd.f32 %v3696, %v3897
    %v3899 = vpop.f32.mrb[0].mxu0
    %v3900 = vadd.f32 %v3700, %v3899
    %v3901 = vpop.f32.mrb[0].mxu0
    %v3902 = vadd.f32 %v3696, %v3901
    %v3903 = vpop.f32.mrb[0].mxu0
    %v3904 = vadd.f32 %v3700, %v3903
    %3905 = vmatprep.mubr.bf16.mxu0 %v3534
    %3906 = vmatmul.mubr.bf16.gmra.mrb[0].mxu0 %v3533
    %v3907 = vpop.f32.mrb[0].mxu0
    %v3908 = vadd.f32 %v3696, %v3907
    %v3909 = vpop.f32.mrb[0].mxu0
    %v3910 = vadd.f32 %v3700, %v3909
    %v3911 = vpop.f32.mrb[0].mxu0
    %v3912 = vadd.f32 %v3696, %v3911
    %v3913 = vpop.f32.mrb[0].mxu0
    %v3914 = vadd.f32 %v3700, %v3913
    %3915 = vmatprep.mubr.bf16.mxu0 %v3536
    %3916 = vmatmul.mubr.bf16.gmra.mrb[0].mxu0 %v3535
    %v3917 = vpop.f32.mrb[0].mxu0
    %v3918 = vadd.f32 %v3696, %v3917
    %v3919 = vpop.f32.mrb[0].mxu0
    %v3920 = vadd.f32 %v3700, %v3919
    %v3921 = vpop.f32.mrb[0].mxu0
    %v3922 = vadd.f32 %v3696, %v3921
    %v3923 = vpop.f32.mrb[0].mxu0
    %v3924 = vadd.f32 %v3700, %v3923
    %3925 = vmatprep.mubr.bf16.mxu0 %v3538
    %3926 = vmatmul.mubr.bf16.gmra.mrb[0].mxu0 %v3537
    %v3927 = vpop.f32.mrb[0].mxu0
    %v3928 = vadd.f32 %v3696, %v3927
    %v3929 = vpop.f32.mrb[0].mxu0
    %v3930 = vadd.f32 %v3700, %v3929
    %v3931 = vpop.f32.mrb[0].mxu0
    %v3932 = vadd.f32 %v3696, %v3931
    %v3933 = vpop.f32.mrb[0].mxu0
    %v3934 = vadd.f32 %v3700, %v3933
    %3935 = vmatprep.mubr.bf16.mxu0 %v3540
    %3936 = vmatmul.mubr.bf16.gmra.mrb[0].mxu0 %v3539
    %v3937 = vpop.f32.mrb[0].mxu0
    %v3938 = vadd.f32 %v3696, %v3937
    %v3939 = vpop.f32.mrb[0].mxu0
    %v3940 = vadd.f32 %v3700, %v3939
    %v3941 = vpop.f32.mrb[0].mxu0
    %v3942 = vadd.f32 %v3696, %v3941
    %v3943 = vpop.f32.mrb[0].mxu0
    %v3944 = vadd.f32 %v3700, %v3943
    %3945 = vmatprep.mubr.bf16.mxu0 %v3542
    %3946 = vmatmul.mubr.bf16.gmra.mrb[0].mxu0 %v3541
    %v3947 = vpop.f32.mrb[0].mxu0
    %v3948 = vadd.f32 %v3696, %v3947
    %v3949 = vpop.f32.mrb[0].mxu0
    %v3950 = vadd.f32 %v3700, %v3949
    %v3951 = vpop.f32.mrb[0].mxu0
    %v3952 = vadd.f32 %v3696, %v3951
    %v3953 = vpop.f32.mrb[0].mxu0
    %v3954 = vadd.f32 %v3700, %v3953
    %3955 = vmatprep.mubr.bf16.mxu0 %v3544
    %3956 = vmatmul.mubr.bf16.gmra.mrb[0].mxu0 %v3543
    %v3957 = vpop.f32.mrb[0].mxu0
    %v3958 = vadd.f32 %v3696, %v3957
    %v3959 = vpop.f32.mrb[0].mxu0
    %v3960 = vadd.f32 %v3700, %v3959
    %v3961 = vpop.f32.mrb[0].mxu0
    %v3962 = vadd.f32 %v3696, %v3961
    %v3963 = vpop.f32.mrb[0].mxu0
    %v3964 = vadd.f32 %v3700, %v3963
    %3965 = vmatprep.mubr.bf16.mxu0 %v3546
    %3966 = vmatmul.mubr.bf16.gmra.mrb[0].mxu0 %v3545
    %v3967 = vpop.f32.mrb[0].mxu0
    %v3968 = vadd.f32 %v3696, %v3967
    %v3969 = vpop.f32.mrb[0].mxu0
    %v3970 = vadd.f32 %v3700, %v3969
    %v3971 = vpop.f32.mrb[0].mxu0
    %v3972 = vadd.f32 %v3696, %v3971
    %v3973 = vpop.f32.mrb[0].mxu0
    %v3974 = vadd.f32 %v3700, %v3973
    %3975 = vmatprep.mubr.bf16.mxu0 %v3548
    %3976 = vmatmul.mubr.bf16.gmra.mrb[0].mxu0 %v3547
    %v3977 = vpop.f32.mrb[0].mxu0
    %v3978 = vadd.f32 %v3696, %v3977
    %v3979 = vpop.f32.mrb[0].mxu0
    %v3980 = vadd.f32 %v3700, %v3979
    %v3981 = vpop.f32.mrb[0].mxu0
    %v3982 = vadd.f32 %v3696, %v3981
    %v3983 = vpop.f32.mrb[0].mxu0
    %v3984 = vadd.f32 %v3700, %v3983
    %3985 = vmatprep.mubr.bf16.mxu0 %v3550
    %3986 = vmatmul.mubr.bf16.gmra.mrb[0].mxu0 %v3549
    %v3987 = vpop.f32.mrb[0].mxu0
    %v3988 = vadd.f32 %v3696, %v3987
    %v3989 = vpop.f32.mrb[0].mxu0
    %v3990 = vadd.f32 %v3700, %v3989
    %v3991 = vpop.f32.mrb[0].mxu0
    %v3992 = vadd.f32 %v3696, %v3991
    %v3993 = vpop.f32.mrb[0].mxu0
    %v3994 = vadd.f32 %v3700, %v3993
    %3995 = vmatprep.mubr.bf16.mxu0 %v3552
    %3996 = vmatmul.mubr.bf16.gmra.mrb[0].mxu0 %v3551
    %v3997 = vpop.f32.mrb[0].mxu0
    %v3998 = vadd.f32 %v3696, %v3997
    %v3999 = vpop.f32.mrb[0].mxu0
    %v4000 = vadd.f32 %v3700, %v3999
    %v4001 = vpop.f32.mrb[0].mxu0
    %v4002 = vadd.f32 %v3696, %v4001
    %v4003 = vpop.f32.mrb[0].mxu0
    %v4004 = vadd.f32 %v3700, %v4003
    %4005 = vmatprep.mubr.bf16.mxu0 %v3554
    %4006 = vmatmul.mubr.bf16.gmra.mrb[0].mxu0 %v3553
    %v4007 = vpop.f32.mrb[0].mxu0
    %v4008 = vadd.f32 %v3696, %v4007
    %v4009 = vpop.f32.mrb[0].mxu0
    %v4010 = vadd.f32 %v3700, %v4009
    %v4011 = vpop.f32.mrb[0].mxu0
    %v4012 = vadd.f32 %v3696, %v4011
    %v4013 = vpop.f32.mrb[0].mxu0
    %v4014 = vadd.f32 %v3700, %v4013
    %4015 = vmatprep.mubr.bf16.mxu0 %v3556
    %4016 = vmatmul.mubr.bf16.gmra.mrb[0].mxu0 %v3555
    %v4017 = vpop.f32.mrb[0].mxu0
    %v4018 = vadd.f32 %v3696, %v4017
    %v4019 = vpop.f32.mrb[0].mxu0
    %v4020 = vadd.f32 %v3700, %v4019
    %v4021 = vpop.f32.mrb[0].mxu0
    %v4022 = vadd.f32 %v3696, %v4021
    %v4023 = vpop.f32.mrb[0].mxu0
    %v4024 = vadd.f32 %v3700, %v4023
    %4025 = vmatprep.mubr.bf16.mxu0 %v3558
    %4026 = vmatmul.mubr.bf16.gmra.mrb[0].mxu0 %v3557
    %v4027 = vpop.f32.mrb[0].mxu0
    %v4028 = vadd.f32 %v3696, %v4027
    %v4029 = vpop.f32.mrb[0].mxu0
    %v4030 = vadd.f32 %v3700, %v4029
    %v4031 = vpop.f32.mrb[0].mxu0
    %v4032 = vadd.f32 %v3696, %v4031
    %v4033 = vpop.f32.mrb[0].mxu0
    %v4034 = vadd.f32 %v3700, %v4033
    %4035 = vmatprep.mubr.bf16.mxu0 %v3560
    %4036 = vmatmul.mubr.bf16.gmra.mrb[0].mxu0 %v3559
    %v4037 = vpop.f32.mrb[0].mxu0
    %v4038 = vadd.f32 %v3696, %v4037
    %v4039 = vpop.f32.mrb[0].mxu0
    %v4040 = vadd.f32 %v3700, %v4039
    %v4041 = vpop.f32.mrb[0].mxu0
    %v4042 = vadd.f32 %v3696, %v4041
    %v4043 = vpop.f32.mrb[0].mxu0
    %v4044 = vadd.f32 %v3700, %v4043
    %4045 = vmatprep.mubr.bf16.mxu0 %v3562
    %4046 = vmatmul.mubr.bf16.gmra.mrb[0].mxu0 %v3561
    %v4047 = vpop.f32.mrb[0].mxu0
    %v4048 = vadd.f32 %v3696, %v4047
    %v4049 = vpop.f32.mrb[0].mxu0
    %v4050 = vadd.f32 %v3700, %v4049
    %v4051 = vpop.f32.mrb[0].mxu0
    %v4052 = vadd.f32 %v3696, %v4051
    %v4053 = vpop.f32.mrb[0].mxu0
    %v4054 = vadd.f32 %v3700, %v4053
    %4055 = vmatprep.mubr.bf16.mxu0 %v3564
    %4056 = vmatmul.mubr.bf16.gmra.mrb[0].mxu0 %v3563
    %v4057 = vpop.f32.mrb[0].mxu0
    %v4058 = vadd.f32 %v3696, %v4057
    %v4059 = vpop.f32.mrb[0].mxu0
    %v4060 = vadd.f32 %v3700, %v4059
    %v4061 = vpop.f32.mrb[0].mxu0
    %v4062 = vadd.f32 %v3696, %v4061
    %v4063 = vpop.f32.mrb[0].mxu0
    %v4064 = vadd.f32 %v3700, %v4063
    %4065 = vmatprep.mubr.bf16.mxu0 %v3566
    %4066 = vmatmul.mubr.bf16.gmra.mrb[0].mxu0 %v3565
    %v4067 = vpop.f32.mrb[0].mxu0
    %v4068 = vadd.f32 %v3696, %v4067
    %v4069 = vpop.f32.mrb[0].mxu0
    %v4070 = vadd.f32 %v3700, %v4069
    %v4071 = vpop.f32.mrb[0].mxu0
    %v4072 = vadd.f32 %v3696, %v4071
    %v4073 = vpop.f32.mrb[0].mxu0
    %v4074 = vadd.f32 %v3700, %v4073
    %4075 = vmatprep.mubr.bf16.mxu0 %v3568
    %4076 = vmatmul.mubr.bf16.gmra.mrb[0].mxu0 %v3567
    %v4077 = vpop.f32.mrb[0].mxu0
    %v4078 = vadd.f32 %v3696, %v4077
    %v4079 = vpop.f32.mrb[0].mxu0
    %v4080 = vadd.f32 %v3700, %v4079
    %v4081 = vpop.f32.mrb[0].mxu0
    %v4082 = vadd.f32 %v3696, %v4081
    %v4083 = vpop.f32.mrb[0].mxu0
    %v4084 = vadd.f32 %v3700, %v4083
    %4085 = vmatprep.mubr.bf16.mxu0 %v3570
    %4086 = vmatmul.mubr.bf16.gmra.mrb[0].mxu0 %v3569
    %v4087 = vpop.f32.mrb[0].mxu0
    %v4088 = vadd.f32 %v3696, %v4087
    %v4089 = vpop.f32.mrb[0].mxu0
    %v4090 = vadd.f32 %v3700, %v4089
    %v4091 = vpop.f32.mrb[0].mxu0
    %v4092 = vadd.f32 %v3696, %v4091
    %v4093 = vpop.f32.mrb[0].mxu0
    %v4094 = vadd.f32 %v3700, %v4093
    %4095 = vmatprep.mubr.bf16.mxu0 %v3572
    %4096 = vmatmul.mubr.bf16.gmra.mrb[0].mxu0 %v3571
    %v4097 = vpop.f32.mrb[0].mxu0
    %v4098 = vadd.f32 %v3696, %v4097
    %v4099 = vpop.f32.mrb[0].mxu0
    %v4100 = vadd.f32 %v3700, %v4099
    %v4101 = vpop.f32.mrb[0].mxu0
    %v4102 = vadd.f32 %v3696, %v4101
    %v4103 = vpop.f32.mrb[0].mxu0
    %v4104 = vadd.f32 %v3700, %v4103
    %4105 = vmatprep.mubr.bf16.mxu0 %v3574
    %4106 = vmatmul.mubr.bf16.gmra.mrb[0].mxu0 %v3573
    %v4107 = vpop.f32.mrb[0].mxu0
    %v4108 = vadd.f32 %v3696, %v4107
    %v4109 = vpop.f32.mrb[0].mxu0
    %v4110 = vadd.f32 %v3700, %v4109
    %v4111 = vpop.f32.mrb[0].mxu0
    %v4112 = vadd.f32 %v3696, %v4111
    %v4113 = vpop.f32.mrb[0].mxu0
    %v4114 = vadd.f32 %v3700, %v4113
    %4115 = vmatprep.mubr.bf16.mxu0 %v3576
    %4116 = vmatmul.mubr.bf16.gmra.mrb[0].mxu0 %v3575
    %v4117 = vpop.f32.mrb[0].mxu0
    %v4118 = vadd.f32 %v3696, %v4117
    %v4119 = vpop.f32.mrb[0].mxu0
    %v4120 = vadd.f32 %v3700, %v4119
    %v4121 = vpop.f32.mrb[0].mxu0
    %v4122 = vadd.f32 %v3696, %v4121
    %v4123 = vpop.f32.mrb[0].mxu0
    %v4124 = vadd.f32 %v3700, %v4123
    %4125 = vmatprep.mubr.bf16.mxu0 %v3578
    %4126 = vmatmul.mubr.bf16.gmra.mrb[0].mxu0 %v3577
    %v4127 = vpop.f32.mrb[0].mxu0
    %v4128 = vadd.f32 %v3696, %v4127
    %v4129 = vpop.f32.mrb[0].mxu0
    %v4130 = vadd.f32 %v3700, %v4129
    %v4131 = vpop.f32.mrb[0].mxu0
    %v4132 = vadd.f32 %v3696, %v4131
    %v4133 = vpop.f32.mrb[0].mxu0
    %v4134 = vadd.f32 %v3700, %v4133
    %4135 = vmatprep.mubr.bf16.mxu0 %v3580
    %4136 = vmatmul.mubr.bf16.gmra.mrb[0].mxu0 %v3579
    %v4137 = vpop.f32.mrb[0].mxu0
    %v4138 = vadd.f32 %v3696, %v4137
    %v4139 = vpop.f32.mrb[0].mxu0
    %v4140 = vadd.f32 %v3700, %v4139
    %v4141 = vpop.f32.mrb[0].mxu0
    %v4142 = vadd.f32 %v3696, %v4141
    %v4143 = vpop.f32.mrb[0].mxu0
    %v4144 = vadd.f32 %v3700, %v4143
    %4145 = vmatprep.mubr.bf16.mxu0 %v3582
    %4146 = vmatmul.mubr.bf16.gmra.mrb[0].mxu0 %v3581
    %v4147 = vpop.f32.mrb[0].mxu0
    %v4148 = vadd.f32 %v3696, %v4147
    %v4149 = vpop.f32.mrb[0].mxu0
    %v4150 = vadd.f32 %v3700, %v4149
    %v4151 = vpop.f32.mrb[0].mxu0
    %v4152 = vadd.f32 %v3696, %v4151
    %v4153 = vpop.f32.mrb[0].mxu0
    %v4154 = vadd.f32 %v3700, %v4153
    %4155 = vmatprep.mubr.bf16.mxu0 %v3584
    %4156 = vmatmul.mubr.bf16.gmra.mrb[0].mxu0 %v3583
    %v4157 = vpop.f32.mrb[0].mxu0
    %v4158 = vadd.f32 %v3696, %v4157
    %v4159 = vpop.f32.mrb[0].mxu0
    %v4160 = vadd.f32 %v3700, %v4159
    %v4161 = vpop.f32.mrb[0].mxu0
    %v4162 = vadd.f32 %v3696, %v4161
    %v4163 = vpop.f32.mrb[0].mxu0
    %v4164 = vadd.f32 %v3700, %v4163
    %4165 = vmatprep.mubr.bf16.mxu0 %v3586
    %4166 = vmatmul.mubr.bf16.gmra.mrb[0].mxu0 %v3585
    %v4167 = vpop.f32.mrb[0].mxu0
    %v4168 = vadd.f32 %v3696, %v4167
    %v4169 = vpop.f32.mrb[0].mxu0
    %v4170 = vadd.f32 %v3700, %v4169
    %v4171 = vpop.f32.mrb[0].mxu0
    %v4172 = vadd.f32 %v3696, %v4171
    %v4173 = vpop.f32.mrb[0].mxu0
    %v4174 = vadd.f32 %v3700, %v4173
    %4175 = vmatprep.mubr.bf16.mxu0 %v3588
    %4176 = vmatmul.mubr.bf16.gmra.mrb[0].mxu0 %v3587
    %v4177 = vpop.f32.mrb[0].mxu0
    %v4178 = vadd.f32 %v3696, %v4177
    %v4179 = vpop.f32.mrb[0].mxu0
    %v4180 = vadd.f32 %v3700, %v4179
    %v4181 = vpop.f32.mrb[0].mxu0
    %v4182 = vadd.f32 %v3696, %v4181
    %v4183 = vpop.f32.mrb[0].mxu0
    %v4184 = vadd.f32 %v3700, %v4183
    %4185 = vmatprep.mubr.bf16.mxu0 %v3590
    %4186 = vmatmul.mubr.bf16.gmra.mrb[0].mxu0 %v3589
    %v4187 = vpop.f32.mrb[0].mxu0
    %v4188 = vadd.f32 %v3696, %v4187
    %v4189 = vpop.f32.mrb[0].mxu0
    %v4190 = vadd.f32 %v3700, %v4189
    %v4191 = vpop.f32.mrb[0].mxu0
    %v4192 = vadd.f32 %v3696, %v4191
    %v4193 = vpop.f32.mrb[0].mxu0
    %v4194 = vadd.f32 %v3700, %v4193
    %4195 = vmatprep.mubr.bf16.mxu0 %v3592
    %4196 = vmatmul.mubr.bf16.gmra.mrb[0].mxu0 %v3591
    %v4197 = vpop.f32.mrb[0].mxu0
    %v4198 = vadd.f32 %v3696, %v4197
    %v4199 = vpop.f32.mrb[0].mxu0
    %v4200 = vadd.f32 %v3700, %v4199
    %v4201 = vpop.f32.mrb[0].mxu0
    %v4202 = vadd.f32 %v3696, %v4201
    %v4203 = vpop.f32.mrb[0].mxu0
    %v4204 = vadd.f32 %v3700, %v4203
    %4205 = vmatprep.mubr.bf16.mxu0 %v3594
    %4206 = vmatmul.mubr.bf16.gmra.mrb[0].mxu0 %v3593
    %v4207 = vpop.f32.mrb[0].mxu0
    %v4208 = vadd.f32 %v3696, %v4207
    %v4209 = vpop.f32.mrb[0].mxu0
    %v4210 = vadd.f32 %v3700, %v4209
    %v4211 = vpop.f32.mrb[0].mxu0
    %v4212 = vadd.f32 %v3696, %v4211
    %v4213 = vpop.f32.mrb[0].mxu0
    %v4214 = vadd.f32 %v3700, %v4213
    %4215 = vmatprep.mubr.bf16.mxu0 %v3596
    %4216 = vmatmul.mubr.bf16.gmra.mrb[0].mxu0 %v3595
    %v4217 = vpop.f32.mrb[0].mxu0
    %v4218 = vadd.f32 %v3696, %v4217
    %v4219 = vpop.f32.mrb[0].mxu0
    %v4220 = vadd.f32 %v3700, %v4219
    %v4221 = vpop.f32.mrb[0].mxu0
    %v4222 = vadd.f32 %v3696, %v4221
    %v4223 = vpop.f32.mrb[0].mxu0
    %v4224 = vadd.f32 %v3700, %v4223
    %4225 = vmatprep.mubr.bf16.mxu0 %v3598
    %4226 = vmatmul.mubr.bf16.gmra.mrb[0].mxu0 %v3597
    %v4227 = vpop.f32.mrb[0].mxu0
    %v4228 = vadd.f32 %v3696, %v4227
    %v4229 = vpop.f32.mrb[0].mxu0
    %v4230 = vadd.f32 %v3700, %v4229
    %v4231 = vpop.f32.mrb[0].mxu0
    %v4232 = vadd.f32 %v3696, %v4231
    %v4233 = vpop.f32.mrb[0].mxu0
    %v4234 = vadd.f32 %v3700, %v4233
    %4235 = vmatprep.mubr.bf16.mxu0 %v3600
    %4236 = vmatmul.mubr.bf16.gmra.mrb[0].mxu0 %v3599
    %v4237 = vpop.f32.mrb[0].mxu0
    %v4238 = vadd.f32 %v3696, %v4237
    %v4239 = vpop.f32.mrb[0].mxu0
    %v4240 = vadd.f32 %v3700, %v4239
    %v4241 = vpop.f32.mrb[0].mxu0
    %v4242 = vadd.f32 %v3696, %v4241
    %v4243 = vpop.f32.mrb[0].mxu0
    %v4244 = vadd.f32 %v3700, %v4243
    %4245 = vmatprep.mubr.bf16.mxu0 %v3602
    %4246 = vmatmul.mubr.bf16.gmra.mrb[0].mxu0 %v3601
    %v4247 = vpop.f32.mrb[0].mxu0
    %v4248 = vadd.f32 %v3696, %v4247
    %v4249 = vpop.f32.mrb[0].mxu0
    %v4250 = vadd.f32 %v3700, %v4249
    %v4251 = vpop.f32.mrb[0].mxu0
    %v4252 = vadd.f32 %v3696, %v4251
    %v4253 = vpop.f32.mrb[0].mxu0
    %v4254 = vadd.f32 %v3700, %v4253
    %4255 = vmatprep.mubr.bf16.mxu0 %v3604
    %4256 = vmatmul.mubr.bf16.gmra.mrb[0].mxu0 %v3603
    %v4257 = vpop.f32.mrb[0].mxu0
    %v4258 = vadd.f32 %v3696, %v4257
    %v4259 = vpop.f32.mrb[0].mxu0
    %v4260 = vadd.f32 %v3700, %v4259
    %v4261 = vpop.f32.mrb[0].mxu0
    %v4262 = vadd.f32 %v3696, %v4261
    %v4263 = vpop.f32.mrb[0].mxu0
    %v4264 = vadd.f32 %v3700, %v4263
    %4265 = vmatprep.mubr.bf16.mxu0 %v3606
    %4266 = vmatmul.mubr.bf16.gmra.mrb[0].mxu0 %v3605
    %v4267 = vpop.f32.mrb[0].mxu0
    %v4268 = vadd.f32 %v3696, %v4267
    %v4269 = vpop.f32.mrb[0].mxu0
    %v4270 = vadd.f32 %v3700, %v4269
    %v4271 = vpop.f32.mrb[0].mxu0
    %v4272 = vadd.f32 %v3696, %v4271
    %v4273 = vpop.f32.mrb[0].mxu0
    %v4274 = vadd.f32 %v3700, %v4273
    %4275 = vmatprep.mubr.bf16.mxu0 %v3608
    %4276 = vmatmul.mubr.bf16.gmra.mrb[0].mxu0 %v3607
    %v4277 = vpop.f32.mrb[0].mxu0
    %v4278 = vadd.f32 %v3696, %v4277
    %v4279 = vpop.f32.mrb[0].mxu0
    %v4280 = vadd.f32 %v3700, %v4279
    %v4281 = vpop.f32.mrb[0].mxu0
    %v4282 = vadd.f32 %v3696, %v4281
    %v4283 = vpop.f32.mrb[0].mxu0
    %v4284 = vadd.f32 %v3700, %v4283
    %4285 = vmatprep.mubr.bf16.mxu0 %v3610
    %4286 = vmatmul.mubr.bf16.gmra.mrb[0].mxu0 %v3609
    %v4287 = vpop.f32.mrb[0].mxu0
    %v4288 = vadd.f32 %v3696, %v4287
    %v4289 = vpop.f32.mrb[0].mxu0
    %v4290 = vadd.f32 %v3700, %v4289
    %v4291 = vpop.f32.mrb[0].mxu0
    %v4292 = vadd.f32 %v3696, %v4291
    %v4293 = vpop.f32.mrb[0].mxu0
    %v4294 = vadd.f32 %v3700, %v4293
    %4295 = vmatprep.mubr.bf16.mxu0 %v3612
    %4296 = vmatmul.mubr.bf16.gmra.mrb[0].mxu0 %v3611
    %v4297 = vpop.f32.mrb[0].mxu0
    %v4298 = vadd.f32 %v3696, %v4297
    %v4299 = vpop.f32.mrb[0].mxu0
    %v4300 = vadd.f32 %v3700, %v4299
    %v4301 = vpop.f32.mrb[0].mxu0
    %v4302 = vadd.f32 %v3696, %v4301
    %v4303 = vpop.f32.mrb[0].mxu0
    %v4304 = vadd.f32 %v3700, %v4303
    %4305 = vmatprep.mubr.bf16.mxu0 %v3614
    %4306 = vmatmul.mubr.bf16.gmra.mrb[0].mxu0 %v3613
    %v4307 = vpop.f32.mrb[0].mxu0
    %v4308 = vadd.f32 %v3696, %v4307
    %v4309 = vpop.f32.mrb[0].mxu0
    %v4310 = vadd.f32 %v3700, %v4309
    %v4311 = vpop.f32.mrb[0].mxu0
    %v4312 = vadd.f32 %v3696, %v4311
    %v4313 = vpop.f32.mrb[0].mxu0
    %v4314 = vadd.f32 %v3700, %v4313
    %4315 = vmatprep.mubr.bf16.mxu0 %v3616
    %4316 = vmatmul.mubr.bf16.gmra.mrb[0].mxu0 %v3615
    %v4317 = vpop.f32.mrb[0].mxu0
    %v4318 = vadd.f32 %v3696, %v4317
    %v4319 = vpop.f32.mrb[0].mxu0
    %v4320 = vadd.f32 %v3700, %v4319
    %v4321 = vpop.f32.mrb[0].mxu0
    %v4322 = vadd.f32 %v3696, %v4321
    %v4323 = vpop.f32.mrb[0].mxu0
    %v4324 = vadd.f32 %v3700, %v4323
    %4325 = vmatprep.mubr.bf16.mxu0 %v3618
    %4326 = vmatmul.mubr.bf16.gmra.mrb[0].mxu0 %v3617
    %v4327 = vpop.f32.mrb[0].mxu0
    %v4328 = vadd.f32 %v3696, %v4327
    %v4329 = vpop.f32.mrb[0].mxu0
    %v4330 = vadd.f32 %v3700, %v4329
    %v4331 = vpop.f32.mrb[0].mxu0
    %v4332 = vadd.f32 %v3696, %v4331
    %v4333 = vpop.f32.mrb[0].mxu0
    %v4334 = vadd.f32 %v3700, %v4333
    %4335 = vmatprep.mubr.bf16.mxu0 %v3620
    %4336 = vmatmul.mubr.bf16.gmra.mrb[0].mxu0 %v3619
    %v4337 = vpop.f32.mrb[0].mxu0
    %v4338 = vadd.f32 %v3696, %v4337
    %v4339 = vpop.f32.mrb[0].mxu0
    %v4340 = vadd.f32 %v3700, %v4339
    %v4341 = vpop.f32.mrb[0].mxu0
    %v4342 = vadd.f32 %v3696, %v4341
    %v4343 = vpop.f32.mrb[0].mxu0
    %v4344 = vadd.f32 %v3700, %v4343
    %4345 = vmatprep.mubr.bf16.mxu0 %v3622
    %4346 = vmatmul.mubr.bf16.gmra.mrb[0].mxu0 %v3621
    %v4347 = vpop.f32.mrb[0].mxu0
    %v4348 = vadd.f32 %v3696, %v4347
    %v4349 = vpop.f32.mrb[0].mxu0
    %v4350 = vadd.f32 %v3700, %v4349
    %v4351 = vpop.f32.mrb[0].mxu0
    %v4352 = vadd.f32 %v3696, %v4351
    %v4353 = vpop.f32.mrb[0].mxu0
    %v4354 = vadd.f32 %v3700, %v4353
    %4355 = vmatprep.mubr.bf16.mxu0 %v3624
    %4356 = vmatmul.mubr.bf16.gmra.mrb[0].mxu0 %v3623
    %v4357 = vpop.f32.mrb[0].mxu0
    %v4358 = vadd.f32 %v3696, %v4357
    %v4359 = vpop.f32.mrb[0].mxu0
    %v4360 = vadd.f32 %v3700, %v4359
    %v4361 = vpop.f32.mrb[0].mxu0
    %v4362 = vadd.f32 %v3696, %v4361
    %v4363 = vpop.f32.mrb[0].mxu0
    %v4364 = vadd.f32 %v3700, %v4363
    %4365 = vmatprep.mubr.bf16.mxu0 %v3626
    %4366 = vmatmul.mubr.bf16.gmra.mrb[0].mxu0 %v3625
    %v4367 = vpop.f32.mrb[0].mxu0
    %v4368 = vadd.f32 %v3696, %v4367
    %v4369 = vpop.f32.mrb[0].mxu0
    %v4370 = vadd.f32 %v3700, %v4369
    %v4371 = vpop.f32.mrb[0].mxu0
    %v4372 = vadd.f32 %v3696, %v4371
    %v4373 = vpop.f32.mrb[0].mxu0
    %v4374 = vadd.f32 %v3700, %v4373
    %4375 = vmatprep.mubr.bf16.mxu0 %v3628
    %4376 = vmatmul.mubr.bf16.gmra.mrb[0].mxu0 %v3627
    %v4377 = vpop.f32.mrb[0].mxu0
    %v4378 = vadd.f32 %v3696, %v4377
    %v4379 = vpop.f32.mrb[0].mxu0
    %v4380 = vadd.f32 %v3700, %v4379
    %v4381 = vpop.f32.mrb[0].mxu0
    %v4382 = vadd.f32 %v3696, %v4381
    %v4383 = vpop.f32.mrb[0].mxu0
    %v4384 = vadd.f32 %v3700, %v4383
    %4385 = vmatprep.mubr.bf16.mxu0 %v3630
    %4386 = vmatmul.mubr.bf16.gmra.mrb[0].mxu0 %v3629
    %v4387 = vpop.f32.mrb[0].mxu0
    %v4388 = vadd.f32 %v3696, %v4387
    %v4389 = vpop.f32.mrb[0].mxu0
    %v4390 = vadd.f32 %v3700, %v4389
    %v4391 = vpop.f32.mrb[0].mxu0
    %v4392 = vadd.f32 %v3696, %v4391
    %v4393 = vpop.f32.mrb[0].mxu0
    %v4394 = vadd.f32 %v3700, %v4393
    %4395 = vmatprep.mubr.bf16.mxu0 %v3632
    %4396 = vmatmul.mubr.bf16.gmra.mrb[0].mxu0 %v3631
    %v4397 = vpop.f32.mrb[0].mxu0
    %v4398 = vadd.f32 %v3696, %v4397
    %v4399 = vpop.f32.mrb[0].mxu0
    %v4400 = vadd.f32 %v3700, %v4399
    %v4401 = vpop.f32.mrb[0].mxu0
    %v4402 = vadd.f32 %v3696, %v4401
    %v4403 = vpop.f32.mrb[0].mxu0
    %v4404 = vadd.f32 %v3700, %v4403
    %4405 = vmatprep.mubr.bf16.mxu0 %v3634
    %4406 = vmatmul.mubr.bf16.gmra.mrb[0].mxu0 %v3633
    %v4407 = vpop.f32.mrb[0].mxu0
    %v4408 = vadd.f32 %v3696, %v4407
    %v4409 = vpop.f32.mrb[0].mxu0
    %v4410 = vadd.f32 %v3700, %v4409
    %v4411 = vpop.f32.mrb[0].mxu0
    %v4412 = vadd.f32 %v3696, %v4411
    %v4413 = vpop.f32.mrb[0].mxu0
    %v4414 = vadd.f32 %v3700, %v4413
    %4415 = vmatprep.mubr.bf16.mxu0 %v3636
    %4416 = vmatmul.mubr.bf16.gmra.mrb[0].mxu0 %v3635
    %v4417 = vpop.f32.mrb[0].mxu0
    %v4418 = vadd.f32 %v3696, %v4417
    %v4419 = vpop.f32.mrb[0].mxu0
    %v4420 = vadd.f32 %v3700, %v4419
    %v4421 = vpop.f32.mrb[0].mxu0
    %v4422 = vadd.f32 %v3696, %v4421
    %v4423 = vpop.f32.mrb[0].mxu0
    %v4424 = vadd.f32 %v3700, %v4423
    %4425 = vmatprep.mubr.bf16.mxu0 %v3638
    %4426 = vmatmul.mubr.bf16.gmra.mrb[0].mxu0 %v3637
    %v4427 = vpop.f32.mrb[0].mxu0
    %v4428 = vadd.f32 %v3696, %v4427
    %v4429 = vpop.f32.mrb[0].mxu0
    %v4430 = vadd.f32 %v3700, %v4429
    %v4431 = vpop.f32.mrb[0].mxu0
    %v4432 = vadd.f32 %v3696, %v4431
    %v4433 = vpop.f32.mrb[0].mxu0
    %v4434 = vadd.f32 %v3700, %v4433
    %4435 = vmatprep.mubr.bf16.mxu0 %v3640
    %4436 = vmatmul.mubr.bf16.gmra.mrb[0].mxu0 %v3639
    %v4437 = vpop.f32.mrb[0].mxu0
    %v4438 = vadd.f32 %v3696, %v4437
    %v4439 = vpop.f32.mrb[0].mxu0
    %v4440 = vadd.f32 %v3700, %v4439
    %v4441 = vpop.f32.mrb[0].mxu0
    %v4442 = vadd.f32 %v3696, %v4441
    %v4443 = vpop.f32.mrb[0].mxu0
    %v4444 = vadd.f32 %v3700, %v4443
    %4445 = vmatprep.mubr.bf16.mxu0 %v3642
    %4446 = vmatmul.mubr.bf16.gmra.mrb[0].mxu0 %v3641
    %v4447 = vpop.f32.mrb[0].mxu0
    %v4448 = vadd.f32 %v3696, %v4447
    %v4449 = vpop.f32.mrb[0].mxu0
    %v4450 = vadd.f32 %v3700, %v4449
    %v4451 = vpop.f32.mrb[0].mxu0
    %v4452 = vadd.f32 %v3696, %v4451
    %v4453 = vpop.f32.mrb[0].mxu0
    %v4454 = vadd.f32 %v3700, %v4453
    %4455 = vmatprep.mubr.bf16.mxu0 %v3644
    %4456 = vmatmul.mubr.bf16.gmra.mrb[0].mxu0 %v3643
    %v4457 = vpop.f32.mrb[0].mxu0
    %v4458 = vadd.f32 %v3696, %v4457
    %v4459 = vpop.f32.mrb[0].mxu0
    %v4460 = vadd.f32 %v3700, %v4459
    %v4461 = vpop.f32.mrb[0].mxu0
    %v4462 = vadd.f32 %v3696, %v4461
    %v4463 = vpop.f32.mrb[0].mxu0
    %v4464 = vadd.f32 %v3700, %v4463
    %4465 = vmatprep.mubr.bf16.mxu0 %v3646
    %4466 = vmatmul.mubr.bf16.gmra.mrb[0].mxu0 %v3645
    %v4467 = vpop.f32.mrb[0].mxu0
    %v4468 = vadd.f32 %v3696, %v4467
    %v4469 = vpop.f32.mrb[0].mxu0
    %v4470 = vadd.f32 %v3700, %v4469
    %v4471 = vpop.f32.mrb[0].mxu0
    %v4472 = vadd.f32 %v3696, %v4471
    %v4473 = vpop.f32.mrb[0].mxu0
    %v4474 = vadd.f32 %v3700, %v4473
    %4475 = vmatprep.mubr.bf16.mxu0 %v3648
    %4476 = vmatmul.mubr.bf16.gmra.mrb[0].mxu0 %v3647
    %v4477 = vpop.f32.mrb[0].mxu0
    %v4478 = vadd.f32 %v3696, %v4477
    %v4479 = vpop.f32.mrb[0].mxu0
    %v4480 = vadd.f32 %v3700, %v4479
    %v4481 = vpop.f32.mrb[0].mxu0
    %v4482 = vadd.f32 %v3696, %v4481
    %v4483 = vpop.f32.mrb[0].mxu0
    %v4484 = vadd.f32 %v3700, %v4483
    %4485 = vmatprep.mubr.bf16.mxu0 %v3650
    %4486 = vmatmul.mubr.bf16.gmra.mrb[0].mxu0 %v3649
    %v4487 = vpop.f32.mrb[0].mxu0
    %v4488 = vadd.f32 %v3696, %v4487
    %v4489 = vpop.f32.mrb[0].mxu0
    %v4490 = vadd.f32 %v3700, %v4489
    %v4491 = vpop.f32.mrb[0].mxu0
    %v4492 = vadd.f32 %v3696, %v4491
    %v4493 = vpop.f32.mrb[0].mxu0
    %v4494 = vadd.f32 %v3700, %v4493
    %4495 = vmatprep.mubr.bf16.mxu0 %v3652
    %4496 = vmatmul.mubr.bf16.gmra.mrb[0].mxu0 %v3651
    %v4497 = vpop.f32.mrb[0].mxu0
    %v4498 = vadd.f32 %v3696, %v4497
    %v4499 = vpop.f32.mrb[0].mxu0
    %v4500 = vadd.f32 %v3700, %v4499
    %v4501 = vpop.f32.mrb[0].mxu0
    %v4502 = vadd.f32 %v3696, %v4501
    %v4503 = vpop.f32.mrb[0].mxu0
    %v4504 = vadd.f32 %v3700, %v4503
    %4505 = vmatprep.mubr.bf16.mxu0 %v3654
    %4506 = vmatmul.mubr.bf16.gmra.mrb[0].mxu0 %v3653
    %v4507 = vpop.f32.mrb[0].mxu0
    %v4508 = vadd.f32 %v3696, %v4507
    %v4509 = vpop.f32.mrb[0].mxu0
    %v4510 = vadd.f32 %v3700, %v4509
    %v4511 = vpop.f32.mrb[0].mxu0
    %v4512 = vadd.f32 %v3696, %v4511
    %v4513 = vpop.f32.mrb[0].mxu0
    %v4514 = vadd.f32 %v3700, %v4513
    %4515 = vmatprep.mubr.bf16.mxu0 %v3656
    %4516 = vmatmul.mubr.bf16.gmra.mrb[0].mxu0 %v3655
    %v4517 = vpop.f32.mrb[0].mxu0
    %v4518 = vadd.f32 %v3696, %v4517
    %v4519 = vpop.f32.mrb[0].mxu0
    %v4520 = vadd.f32 %v3700, %v4519
    %v4521 = vpop.f32.mrb[0].mxu0
    %v4522 = vadd.f32 %v3696, %v4521
    %v4523 = vpop.f32.mrb[0].mxu0
    %v4524 = vadd.f32 %v3700, %v4523
    %4525 = vmatprep.mubr.bf16.mxu0 %v3658
    %4526 = vmatmul.mubr.bf16.gmra.mrb[0].mxu0 %v3657
    %v4527 = vpop.f32.mrb[0].mxu0
    %v4528 = vadd.f32 %v3696, %v4527
    %v4529 = vpop.f32.mrb[0].mxu0
    %v4530 = vadd.f32 %v3700, %v4529
    %v4531 = vpop.f32.mrb[0].mxu0
    %v4532 = vadd.f32 %v3696, %v4531
    %v4533 = vpop.f32.mrb[0].mxu0
    %v4534 = vadd.f32 %v3700, %v4533
    %4535 = vdwg.mxu0
    %v4536 = vmax.f32 %v3898, %v3902
    %v4537 = vmax.f32 %v4536, %v3908
    %v4538 = vmax.f32 %v4537, %v3912
    %v4539 = vmax.f32 %v4538, %v3918
    %v4540 = vmax.f32 %v4539, %v3922
    %v4541 = vmax.f32 %v4540, %v3928
    %v4542 = vmax.f32 %v4541, %v3932
    %v4543 = vmax.f32 %v4542, %v3938
    %v4544 = vmax.f32 %v4543, %v3942
    %v4545 = vmax.f32 %v4544, %v3948
    %v4546 = vmax.f32 %v4545, %v3952
    %v4547 = vmax.f32 %v4546, %v3958
    %v4548 = vmax.f32 %v4547, %v3962
    %v4549 = vmax.f32 %v4548, %v3968
    %v4550 = vmax.f32 %v4549, %v3972
    %v4551 = vrot.slane %v4550, 4
    %v4552 = vmax.f32 %v4550, %v4551
    %v4553 = vrot.slane %v4552, 2
    %v4554 = vmax.f32 %v4552, %v4553
    %v4555 = vrot.slane %v4554, 1
    %v4556 = vmax.f32 %v4554, %v4555
    %v4557 = vmax.f32 %v3900, %v3904
    %v4558 = vmax.f32 %v4557, %v3910
    %v4559 = vmax.f32 %v4558, %v3914
    %v4560 = vmax.f32 %v4559, %v3920
    %v4561 = vmax.f32 %v4560, %v3924
    %v4562 = vmax.f32 %v4561, %v3930
    %v4563 = vmax.f32 %v4562, %v3934
    %v4564 = vmax.f32 %v4563, %v3940
    %v4565 = vmax.f32 %v4564, %v3944
    %v4566 = vmax.f32 %v4565, %v3950
    %v4567 = vmax.f32 %v4566, %v3954
    %v4568 = vmax.f32 %v4567, %v3960
    %v4569 = vmax.f32 %v4568, %v3964
    %v4570 = vmax.f32 %v4569, %v3970
    %v4571 = vmax.f32 %v4570, %v3974
    %v4572 = vrot.slane %v4571, 4
    %v4573 = vmax.f32 %v4571, %v4572
    %v4574 = vrot.slane %v4573, 2
    %v4575 = vmax.f32 %v4573, %v4574
    %v4576 = vrot.slane %v4575, 1
    %v4577 = vmax.f32 %v4575, %v4576
    %v4578 = vmax.f32 %v3978, %v3982
    %v4579 = vmax.f32 %v4578, %v3988
    %v4580 = vmax.f32 %v4579, %v3992
    %v4581 = vmax.f32 %v4580, %v3998
    %v4582 = vmax.f32 %v4581, %v4002
    %v4583 = vmax.f32 %v4582, %v4008
    %v4584 = vmax.f32 %v4583, %v4012
    %v4585 = vmax.f32 %v4584, %v4018
    %v4586 = vmax.f32 %v4585, %v4022
    %v4587 = vmax.f32 %v4586, %v4028
    %v4588 = vmax.f32 %v4587, %v4032
    %v4589 = vmax.f32 %v4588, %v4038
    %v4590 = vmax.f32 %v4589, %v4042
    %v4591 = vmax.f32 %v4590, %v4048
    %v4592 = vmax.f32 %v4591, %v4052
    %v4593 = vrot.slane %v4592, 4
    %v4594 = vmax.f32 %v4592, %v4593
    %v4595 = vrot.slane %v4594, 2
    %v4596 = vmax.f32 %v4594, %v4595
    %v4597 = vrot.slane %v4596, 1
    %v4598 = vmax.f32 %v4596, %v4597
    %v4599 = vmax.f32 %v3980, %v3984
    %v4600 = vmax.f32 %v4599, %v3990
    %v4601 = vmax.f32 %v4600, %v3994
    %v4602 = vmax.f32 %v4601, %v4000
    %v4603 = vmax.f32 %v4602, %v4004
    %v4604 = vmax.f32 %v4603, %v4010
    %v4605 = vmax.f32 %v4604, %v4014
    %v4606 = vmax.f32 %v4605, %v4020
    %v4607 = vmax.f32 %v4606, %v4024
    %v4608 = vmax.f32 %v4607, %v4030
    %v4609 = vmax.f32 %v4608, %v4034
    %v4610 = vmax.f32 %v4609, %v4040
    %v4611 = vmax.f32 %v4610, %v4044
    %v4612 = vmax.f32 %v4611, %v4050
    %v4613 = vmax.f32 %v4612, %v4054
    %v4614 = vrot.slane %v4613, 4
    %v4615 = vmax.f32 %v4613, %v4614
    %v4616 = vrot.slane %v4615, 2
    %v4617 = vmax.f32 %v4615, %v4616
    %v4618 = vrot.slane %v4617, 1
    %v4619 = vmax.f32 %v4617, %v4618
    %v4620 = vmax.f32 %v4058, %v4062
    %v4621 = vmax.f32 %v4620, %v4068
    %v4622 = vmax.f32 %v4621, %v4072
    %v4623 = vmax.f32 %v4622, %v4078
    %v4624 = vmax.f32 %v4623, %v4082
    %v4625 = vmax.f32 %v4624, %v4088
    %v4626 = vmax.f32 %v4625, %v4092
    %v4627 = vmax.f32 %v4626, %v4098
    %v4628 = vmax.f32 %v4627, %v4102
    %v4629 = vmax.f32 %v4628, %v4108
    %v4630 = vmax.f32 %v4629, %v4112
    %v4631 = vmax.f32 %v4630, %v4118
    %v4632 = vmax.f32 %v4631, %v4122
    %v4633 = vmax.f32 %v4632, %v4128
    %v4634 = vmax.f32 %v4633, %v4132
    %v4635 = vrot.slane %v4634, 4
    %v4636 = vmax.f32 %v4634, %v4635
    %v4637 = vrot.slane %v4636, 2
    %v4638 = vmax.f32 %v4636, %v4637
    %v4639 = vrot.slane %v4638, 1
    %v4640 = vmax.f32 %v4638, %v4639
    %v4641 = vmax.f32 %v4060, %v4064
    %v4642 = vmax.f32 %v4641, %v4070
    %v4643 = vmax.f32 %v4642, %v4074
    %v4644 = vmax.f32 %v4643, %v4080
    %v4645 = vmax.f32 %v4644, %v4084
    %v4646 = vmax.f32 %v4645, %v4090
    %v4647 = vmax.f32 %v4646, %v4094
    %v4648 = vmax.f32 %v4647, %v4100
    %v4649 = vmax.f32 %v4648, %v4104
    %v4650 = vmax.f32 %v4649, %v4110
    %v4651 = vmax.f32 %v4650, %v4114
    %v4652 = vmax.f32 %v4651, %v4120
    %v4653 = vmax.f32 %v4652, %v4124
    %v4654 = vmax.f32 %v4653, %v4130
    %v4655 = vmax.f32 %v4654, %v4134
    %v4656 = vrot.slane %v4655, 4
    %v4657 = vmax.f32 %v4655, %v4656
    %v4658 = vrot.slane %v4657, 2
    %v4659 = vmax.f32 %v4657, %v4658
    %v4660 = vrot.slane %v4659, 1
    %v4661 = vmax.f32 %v4659, %v4660
    %v4662 = vmax.f32 %v4138, %v4142
    %v4663 = vmax.f32 %v4662, %v4148
    %v4664 = vmax.f32 %v4663, %v4152
    %v4665 = vmax.f32 %v4664, %v4158
    %v4666 = vmax.f32 %v4665, %v4162
    %v4667 = vmax.f32 %v4666, %v4168
    %v4668 = vmax.f32 %v4667, %v4172
    %v4669 = vmax.f32 %v4668, %v4178
    %v4670 = vmax.f32 %v4669, %v4182
    %v4671 = vmax.f32 %v4670, %v4188
    %v4672 = vmax.f32 %v4671, %v4192
    %v4673 = vmax.f32 %v4672, %v4198
    %v4674 = vmax.f32 %v4673, %v4202
    %v4675 = vmax.f32 %v4674, %v4208
    %v4676 = vmax.f32 %v4675, %v4212
    %v4677 = vrot.slane %v4676, 4
    %v4678 = vmax.f32 %v4676, %v4677
    %v4679 = vrot.slane %v4678, 2
    %v4680 = vmax.f32 %v4678, %v4679
    %v4681 = vrot.slane %v4680, 1
    %v4682 = vmax.f32 %v4680, %v4681
    %v4683 = vmax.f32 %v4140, %v4144
    %v4684 = vmax.f32 %v4683, %v4150
    %v4685 = vmax.f32 %v4684, %v4154
    %v4686 = vmax.f32 %v4685, %v4160
    %v4687 = vmax.f32 %v4686, %v4164
    %v4688 = vmax.f32 %v4687, %v4170
    %v4689 = vmax.f32 %v4688, %v4174
    %v4690 = vmax.f32 %v4689, %v4180
    %v4691 = vmax.f32 %v4690, %v4184
    %v4692 = vmax.f32 %v4691, %v4190
    %v4693 = vmax.f32 %v4692, %v4194
    %v4694 = vmax.f32 %v4693, %v4200
    %v4695 = vmax.f32 %v4694, %v4204
    %v4696 = vmax.f32 %v4695, %v4210
    %v4697 = vmax.f32 %v4696, %v4214
    %v4698 = vrot.slane %v4697, 4
    %v4699 = vmax.f32 %v4697, %v4698
    %v4700 = vrot.slane %v4699, 2
    %v4701 = vmax.f32 %v4699, %v4700
    %v4702 = vrot.slane %v4701, 1
    %v4703 = vmax.f32 %v4701, %v4702
    %v4704 = vmax.f32 %v4218, %v4222
    %v4705 = vmax.f32 %v4704, %v4228
    %v4706 = vmax.f32 %v4705, %v4232
    %v4707 = vmax.f32 %v4706, %v4238
    %v4708 = vmax.f32 %v4707, %v4242
    %v4709 = vmax.f32 %v4708, %v4248
    %v4710 = vmax.f32 %v4709, %v4252
    %v4711 = vmax.f32 %v4710, %v4258
    %v4712 = vmax.f32 %v4711, %v4262
    %v4713 = vmax.f32 %v4712, %v4268
    %v4714 = vmax.f32 %v4713, %v4272
    %v4715 = vmax.f32 %v4714, %v4278
    %v4716 = vmax.f32 %v4715, %v4282
    %v4717 = vmax.f32 %v4716, %v4288
    %v4718 = vmax.f32 %v4717, %v4292
    %v4719 = vrot.slane %v4718, 4
    %v4720 = vmax.f32 %v4718, %v4719
    %v4721 = vrot.slane %v4720, 2
    %v4722 = vmax.f32 %v4720, %v4721
    %v4723 = vrot.slane %v4722, 1
    %v4724 = vmax.f32 %v4722, %v4723
    %v4725 = vmax.f32 %v4220, %v4224
    %v4726 = vmax.f32 %v4725, %v4230
    %v4727 = vmax.f32 %v4726, %v4234
    %v4728 = vmax.f32 %v4727, %v4240
    %v4729 = vmax.f32 %v4728, %v4244
    %v4730 = vmax.f32 %v4729, %v4250
    %v4731 = vmax.f32 %v4730, %v4254
    %v4732 = vmax.f32 %v4731, %v4260
    %v4733 = vmax.f32 %v4732, %v4264
    %v4734 = vmax.f32 %v4733, %v4270
    %v4735 = vmax.f32 %v4734, %v4274
    %v4736 = vmax.f32 %v4735, %v4280
    %v4737 = vmax.f32 %v4736, %v4284
    %v4738 = vmax.f32 %v4737, %v4290
    %v4739 = vmax.f32 %v4738, %v4294
    %v4740 = vrot.slane %v4739, 4
    %v4741 = vmax.f32 %v4739, %v4740
    %v4742 = vrot.slane %v4741, 2
    %v4743 = vmax.f32 %v4741, %v4742
    %v4744 = vrot.slane %v4743, 1
    %v4745 = vmax.f32 %v4743, %v4744
    %v4746 = vmax.f32 %v4298, %v4302
    %v4747 = vmax.f32 %v4746, %v4308
    %v4748 = vmax.f32 %v4747, %v4312
    %v4749 = vmax.f32 %v4748, %v4318
    %v4750 = vmax.f32 %v4749, %v4322
    %v4751 = vmax.f32 %v4750, %v4328
    %v4752 = vmax.f32 %v4751, %v4332
    %v4753 = vmax.f32 %v4752, %v4338
    %v4754 = vmax.f32 %v4753, %v4342
    %v4755 = vmax.f32 %v4754, %v4348
    %v4756 = vmax.f32 %v4755, %v4352
    %v4757 = vmax.f32 %v4756, %v4358
    %v4758 = vmax.f32 %v4757, %v4362
    %v4759 = vmax.f32 %v4758, %v4368
    %v4760 = vmax.f32 %v4759, %v4372
    %v4761 = vrot.slane %v4760, 4
    %v4762 = vmax.f32 %v4760, %v4761
    %v4763 = vrot.slane %v4762, 2
    %v4764 = vmax.f32 %v4762, %v4763
    %v4765 = vrot.slane %v4764, 1
    %v4766 = vmax.f32 %v4764, %v4765
    %v4767 = vmax.f32 %v4300, %v4304
    %v4768 = vmax.f32 %v4767, %v4310
    %v4769 = vmax.f32 %v4768, %v4314
    %v4770 = vmax.f32 %v4769, %v4320
    %v4771 = vmax.f32 %v4770, %v4324
    %v4772 = vmax.f32 %v4771, %v4330
    %v4773 = vmax.f32 %v4772, %v4334
    %v4774 = vmax.f32 %v4773, %v4340
    %v4775 = vmax.f32 %v4774, %v4344
    %v4776 = vmax.f32 %v4775, %v4350
    %v4777 = vmax.f32 %v4776, %v4354
    %v4778 = vmax.f32 %v4777, %v4360
    %v4779 = vmax.f32 %v4778, %v4364
    %v4780 = vmax.f32 %v4779, %v4370
    %v4781 = vmax.f32 %v4780, %v4374
    %v4782 = vrot.slane %v4781, 4
    %v4783 = vmax.f32 %v4781, %v4782
    %v4784 = vrot.slane %v4783, 2
    %v4785 = vmax.f32 %v4783, %v4784
    %v4786 = vrot.slane %v4785, 1
    %v4787 = vmax.f32 %v4785, %v4786
    %v4788 = vmax.f32 %v4378, %v4382
    %v4789 = vmax.f32 %v4788, %v4388
    %v4790 = vmax.f32 %v4789, %v4392
    %v4791 = vmax.f32 %v4790, %v4398
    %v4792 = vmax.f32 %v4791, %v4402
    %v4793 = vmax.f32 %v4792, %v4408
    %v4794 = vmax.f32 %v4793, %v4412
    %v4795 = vmax.f32 %v4794, %v4418
    %v4796 = vmax.f32 %v4795, %v4422
    %v4797 = vmax.f32 %v4796, %v4428
    %v4798 = vmax.f32 %v4797, %v4432
    %v4799 = vmax.f32 %v4798, %v4438
    %v4800 = vmax.f32 %v4799, %v4442
    %v4801 = vmax.f32 %v4800, %v4448
    %v4802 = vmax.f32 %v4801, %v4452
    %v4803 = vrot.slane %v4802, 4
    %v4804 = vmax.f32 %v4802, %v4803
    %v4805 = vrot.slane %v4804, 2
    %v4806 = vmax.f32 %v4804, %v4805
    %v4807 = vrot.slane %v4806, 1
    %v4808 = vmax.f32 %v4806, %v4807
    %v4809 = vmax.f32 %v4380, %v4384
    %v4810 = vmax.f32 %v4809, %v4390
    %v4811 = vmax.f32 %v4810, %v4394
    %v4812 = vmax.f32 %v4811, %v4400
    %v4813 = vmax.f32 %v4812, %v4404
    %v4814 = vmax.f32 %v4813, %v4410
    %v4815 = vmax.f32 %v4814, %v4414
    %v4816 = vmax.f32 %v4815, %v4420
    %v4817 = vmax.f32 %v4816, %v4424
    %v4818 = vmax.f32 %v4817, %v4430
    %v4819 = vmax.f32 %v4818, %v4434
    %v4820 = vmax.f32 %v4819, %v4440
    %v4821 = vmax.f32 %v4820, %v4444
    %v4822 = vmax.f32 %v4821, %v4450
    %v4823 = vmax.f32 %v4822, %v4454
    %v4824 = vrot.slane %v4823, 4
    %v4825 = vmax.f32 %v4823, %v4824
    %v4826 = vrot.slane %v4825, 2
    %v4827 = vmax.f32 %v4825, %v4826
    %v4828 = vrot.slane %v4827, 1
    %v4829 = vmax.f32 %v4827, %v4828
    %v4830 = vmax.f32 %v4458, %v4462
    %v4831 = vmax.f32 %v4830, %v4468
    %v4832 = vmax.f32 %v4831, %v4472
    %v4833 = vmax.f32 %v4832, %v4478
    %v4834 = vmax.f32 %v4833, %v4482
    %v4835 = vmax.f32 %v4834, %v4488
    %v4836 = vmax.f32 %v4835, %v4492
    %v4837 = vmax.f32 %v4836, %v4498
    %v4838 = vmax.f32 %v4837, %v4502
    %v4839 = vmax.f32 %v4838, %v4508
    %v4840 = vmax.f32 %v4839, %v4512
    %v4841 = vmax.f32 %v4840, %v4518
    %v4842 = vmax.f32 %v4841, %v4522
    %v4843 = vmax.f32 %v4842, %v4528
    %v4844 = vmax.f32 %v4843, %v4532
    %v4845 = vrot.slane %v4844, 4
    %v4846 = vmax.f32 %v4844, %v4845
    %v4847 = vrot.slane %v4846, 2
    %v4848 = vmax.f32 %v4846, %v4847
    %v4849 = vrot.slane %v4848, 1
    %v4850 = vmax.f32 %v4848, %v4849
    %v4851 = vmax.f32 %v4460, %v4464
    %v4852 = vmax.f32 %v4851, %v4470
    %v4853 = vmax.f32 %v4852, %v4474
    %v4854 = vmax.f32 %v4853, %v4480
    %v4855 = vmax.f32 %v4854, %v4484
    %v4856 = vmax.f32 %v4855, %v4490
    %v4857 = vmax.f32 %v4856, %v4494
    %v4858 = vmax.f32 %v4857, %v4500
    %v4859 = vmax.f32 %v4858, %v4504
    %v4860 = vmax.f32 %v4859, %v4510
    %v4861 = vmax.f32 %v4860, %v4514
    %v4862 = vmax.f32 %v4861, %v4520
    %v4863 = vmax.f32 %v4862, %v4524
    %v4864 = vmax.f32 %v4863, %v4530
    %v4865 = vmax.f32 %v4864, %v4534
    %v4866 = vrot.slane %v4865, 4
    %v4867 = vmax.f32 %v4865, %v4866
    %v4868 = vrot.slane %v4867, 2
    %v4869 = vmax.f32 %v4867, %v4868
    %v4870 = vrot.slane %v4869, 1
    %v4871 = vmax.f32 %v4869, %v4870
    %v4872 = vld [vmem:[%s7 + $0x8] sm:$0xff]
    %v4873 = vld [vmem:[%s7 + $0x28] sm:$0xff]
    %v4874 = vld [vmem:[%s7 + $0x48] sm:$0xff]
    %v4875 = vld [vmem:[%s7 + $0x68] sm:$0xff]
    %v4876 = vld [vmem:[%s7 + $0x88] sm:$0xff]
    %v4877 = vld [vmem:[%s7 + $0xa8] sm:$0xff]
    %v4878 = vld [vmem:[%s7 + $0xc8] sm:$0xff]
    %v4879 = vld [vmem:[%s7 + $0xe8] sm:$0xff]
    %v4880 = vld [vmem:[%s7 + $0x108] sm:$0xff]
    %v4881 = vld [vmem:[%s7 + $0x128] sm:$0xff]
    %v4882 = vld [vmem:[%s7 + $0x148] sm:$0xff]
    %v4883 = vld [vmem:[%s7 + $0x168] sm:$0xff]
    %v4884 = vld [vmem:[%s7 + $0x188] sm:$0xff]
    %v4885 = vld [vmem:[%s7 + $0x1a8] sm:$0xff]
    %v4886 = vld [vmem:[%s7 + $0x1c8] sm:$0xff]
    %v4887 = vld [vmem:[%s7 + $0x1e8] sm:$0xff]
    %v4888 = vld [vmem:[%s7 + $0x208] sm:$0xff]
    %v4889 = vld [vmem:[%s7 + $0x228] sm:$0xff]
    %v4890 = vld [vmem:[%s7 + $0x248] sm:$0xff]
    %v4891 = vld [vmem:[%s7 + $0x268] sm:$0xff]
    %v4892 = vld [vmem:[%s7 + $0x288] sm:$0xff]
    %v4893 = vld [vmem:[%s7 + $0x2a8] sm:$0xff]
    %v4894 = vld [vmem:[%s7 + $0x2c8] sm:$0xff]
    %v4895 = vld [vmem:[%s7 + $0x2e8] sm:$0xff]
    %v4896 = vld [vmem:[%s7 + $0x308] sm:$0xff]
    %v4897 = vld [vmem:[%s7 + $0x328] sm:$0xff]
    %v4898 = vld [vmem:[%s7 + $0x348] sm:$0xff]
    %v4899 = vld [vmem:[%s7 + $0x368] sm:$0xff]
    %v4900 = vld [vmem:[%s7 + $0x388] sm:$0xff]
    %v4901 = vld [vmem:[%s7 + $0x3a8] sm:$0xff]
    %v4902 = vld [vmem:[%s7 + $0x3c8] sm:$0xff]
    %v4903 = vld [vmem:[%s7 + $0x3e8] sm:$0xff]
    %v4904 = vld [vmem:[%s8 + $0x2] sm:$0x3]
    %v4906 = vlaneseq
    %v4907 = vshrl.u32 %v4906, 7
    %v4908 = vsub.s32 0, %v4907
    %v4909 = vrot.slane %v4904, %v4908
    %v4910 = vlaneseq
    %v4911 = vshrl.u32 %v4910, 7
    %v4912 = vsub.s32 1, %v4911
    %v4913 = vrot.slane %v4904, %v4912
    %v4948 = vunpack.c.l.b16 %v4872
    %v4949 = vunpack.c.h.b16 %v4872
    %v4950 = vunpack.c.l.b16 %v4873
    %v4951 = vunpack.c.h.b16 %v4873
    %v4952 = vunpack.c.l.b16 %v4874
    %v4953 = vunpack.c.h.b16 %v4874
    %v4954 = vunpack.c.l.b16 %v4875
    %v4955 = vunpack.c.h.b16 %v4875
    %v4956 = vunpack.c.l.b16 %v4876
    %v4957 = vunpack.c.h.b16 %v4876
    %v4958 = vunpack.c.l.b16 %v4877
    %v4959 = vunpack.c.h.b16 %v4877
    %v4960 = vunpack.c.l.b16 %v4878
    %v4961 = vunpack.c.h.b16 %v4878
    %v4962 = vunpack.c.l.b16 %v4879
    %v4963 = vunpack.c.h.b16 %v4879
    %v4964 = vunpack.c.l.b16 %v4880
    %v4965 = vunpack.c.h.b16 %v4880
    %v4966 = vunpack.c.l.b16 %v4881
    %v4967 = vunpack.c.h.b16 %v4881
    %v4968 = vunpack.c.l.b16 %v4882
    %v4969 = vunpack.c.h.b16 %v4882
    %v4970 = vunpack.c.l.b16 %v4883
    %v4971 = vunpack.c.h.b16 %v4883
    %v4972 = vunpack.c.l.b16 %v4884
    %v4973 = vunpack.c.h.b16 %v4884
    %v4974 = vunpack.c.l.b16 %v4885
    %v4975 = vunpack.c.h.b16 %v4885
    %v4976 = vunpack.c.l.b16 %v4886
    %v4977 = vunpack.c.h.b16 %v4886
    %v4978 = vunpack.c.l.b16 %v4887
    %v4979 = vunpack.c.h.b16 %v4887
    %v4980 = vunpack.c.l.b16 %v4888
    %v4981 = vunpack.c.h.b16 %v4888
    %v4982 = vunpack.c.l.b16 %v4889
    %v4983 = vunpack.c.h.b16 %v4889
    %v4984 = vunpack.c.l.b16 %v4890
    %v4985 = vunpack.c.h.b16 %v4890
    %v4986 = vunpack.c.l.b16 %v4891
    %v4987 = vunpack.c.h.b16 %v4891
    %v4988 = vunpack.c.l.b16 %v4892
    %v4989 = vunpack.c.h.b16 %v4892
    %v4990 = vunpack.c.l.b16 %v4893
    %v4991 = vunpack.c.h.b16 %v4893
    %v4992 = vunpack.c.l.b16 %v4894
    %v4993 = vunpack.c.h.b16 %v4894
    %v4994 = vunpack.c.l.b16 %v4895
    %v4995 = vunpack.c.h.b16 %v4895
    %v4996 = vunpack.c.l.b16 %v4896
    %v4997 = vunpack.c.h.b16 %v4896
    %v4998 = vunpack.c.l.b16 %v4897
    %v4999 = vunpack.c.h.b16 %v4897
    %v5000 = vunpack.c.l.b16 %v4898
    %v5001 = vunpack.c.h.b16 %v4898
    %v5002 = vunpack.c.l.b16 %v4899
    %v5003 = vunpack.c.h.b16 %v4899
    %v5004 = vunpack.c.l.b16 %v4900
    %v5005 = vunpack.c.h.b16 %v4900
    %v5006 = vunpack.c.l.b16 %v4901
    %v5007 = vunpack.c.h.b16 %v4901
    %v5008 = vunpack.c.l.b16 %v4902
    %v5009 = vunpack.c.h.b16 %v4902
    %v5010 = vunpack.c.l.b16 %v4903
    %v5011 = vunpack.c.h.b16 %v4903
    %v5012 = vpack.c.b16 %v4950, %v4948
    %v5013 = vpack.c.b16 %v4951, %v4949
    %v5014 = vpack.c.b16 %v4954, %v4952
    %v5015 = vpack.c.b16 %v4955, %v4953
    %v5016 = vpack.c.b16 %v4958, %v4956
    %v5017 = vpack.c.b16 %v4959, %v4957
    %v5018 = vpack.c.b16 %v4962, %v4960
    %v5019 = vpack.c.b16 %v4963, %v4961
    %v5020 = vpack.c.b16 %v4966, %v4964
    %v5021 = vpack.c.b16 %v4967, %v4965
    %v5022 = vpack.c.b16 %v4970, %v4968
    %v5023 = vpack.c.b16 %v4971, %v4969
    %v5024 = vpack.c.b16 %v4974, %v4972
    %v5025 = vpack.c.b16 %v4975, %v4973
    %v5026 = vpack.c.b16 %v4978, %v4976
    %v5027 = vpack.c.b16 %v4979, %v4977
    %v5028 = vpack.c.b16 %v4982, %v4980
    %v5029 = vpack.c.b16 %v4983, %v4981
    %v5030 = vpack.c.b16 %v4986, %v4984
    %v5031 = vpack.c.b16 %v4987, %v4985
    %v5032 = vpack.c.b16 %v4990, %v4988
    %v5033 = vpack.c.b16 %v4991, %v4989
    %v5034 = vpack.c.b16 %v4994, %v4992
    %v5035 = vpack.c.b16 %v4995, %v4993
    %v5036 = vpack.c.b16 %v4998, %v4996
    %v5037 = vpack.c.b16 %v4999, %v4997
    %v5038 = vpack.c.b16 %v5002, %v5000
    %v5039 = vpack.c.b16 %v5003, %v5001
    %v5040 = vpack.c.b16 %v5006, %v5004
    %v5041 = vpack.c.b16 %v5007, %v5005
    %v5042 = vpack.c.b16 %v5010, %v5008
    %v5043 = vpack.c.b16 %v5011, %v5009
    %5076 = vmatprep.subr.bf16.mxu0 %v5013
    %5077 = vmatpush1.bf16.msra.mxu0 %v5012
    %5078 = vmatprep.subr.bf16.mxu0 %v5015
    %5079 = vmatpush1.bf16.msra.mxu0 %v5014
    %5080 = vmatprep.subr.bf16.mxu0 %v5017
    %5081 = vmatpush1.bf16.msra.mxu0 %v5016
    %5082 = vmatprep.subr.bf16.mxu0 %v5019
    %5083 = vmatpush1.bf16.msra.mxu0 %v5018
    %5084 = vmatprep.subr.bf16.mxu0 %v5021
    %5085 = vmatpush1.bf16.msra.mxu0 %v5020
    %5086 = vmatprep.subr.bf16.mxu0 %v5023
    %5087 = vmatpush1.bf16.msra.mxu0 %v5022
    %5088 = vmatprep.subr.bf16.mxu0 %v5025
    %5089 = vmatpush1.bf16.msra.mxu0 %v5024
    %5090 = vmatprep.subr.bf16.mxu0 %v5027
    %5091 = vmatpush1.bf16.msra.mxu0 %v5026
    %5092 = vmatprep.subr.bf16.mxu0 %v5029
    %5093 = vmatpush1.bf16.msra.mxu0 %v5028
    %5094 = vmatprep.subr.bf16.mxu0 %v5031
    %5095 = vmatpush1.bf16.msra.mxu0 %v5030
    %5096 = vmatprep.subr.bf16.mxu0 %v5033
    %5097 = vmatpush1.bf16.msra.mxu0 %v5032
    %5098 = vmatprep.subr.bf16.mxu0 %v5035
    %5099 = vmatpush1.bf16.msra.mxu0 %v5034
    %5100 = vmatprep.subr.bf16.mxu0 %v5037
    %5101 = vmatpush1.bf16.msra.mxu0 %v5036
    %5102 = vmatprep.subr.bf16.mxu0 %v5039
    %5103 = vmatpush1.bf16.msra.mxu0 %v5038
    %5104 = vmatprep.subr.bf16.mxu0 %v5041
    %5105 = vmatpush1.bf16.msra.mxu0 %v5040
    %5106 = vmatprep.subr.bf16.mxu0 %v5043
    %5107 = vmatpush1.bf16.msra.mxu0 %v5042
    %5108 = vmatprep.mubr.bf16.mxu0 %v3532
    %5109 = vmatmul.mubr.bf16.gmra.mrb[0].mxu0 %v3531
    %v5110 = vpop.f32.mrb[0].mxu0
    %v5111 = vadd.f32 %v4909, %v5110
    %v5112 = vpop.f32.mrb[0].mxu0
    %v5113 = vadd.f32 %v4913, %v5112
    %v5114 = vpop.f32.mrb[0].mxu0
    %v5115 = vadd.f32 %v4909, %v5114
    %v5116 = vpop.f32.mrb[0].mxu0
    %v5117 = vadd.f32 %v4913, %v5116
    %5118 = vmatprep.mubr.bf16.mxu0 %v3534
    %5119 = vmatmul.mubr.bf16.gmra.mrb[0].mxu0 %v3533
    %v5120 = vpop.f32.mrb[0].mxu0
    %v5121 = vadd.f32 %v4909, %v5120
    %v5122 = vpop.f32.mrb[0].mxu0
    %v5123 = vadd.f32 %v4913, %v5122
    %v5124 = vpop.f32.mrb[0].mxu0
    %v5125 = vadd.f32 %v4909, %v5124
    %v5126 = vpop.f32.mrb[0].mxu0
    %v5127 = vadd.f32 %v4913, %v5126
    %5128 = vmatprep.mubr.bf16.mxu0 %v3536
    %5129 = vmatmul.mubr.bf16.gmra.mrb[0].mxu0 %v3535
    %v5130 = vpop.f32.mrb[0].mxu0
    %v5131 = vadd.f32 %v4909, %v5130
    %v5132 = vpop.f32.mrb[0].mxu0
    %v5133 = vadd.f32 %v4913, %v5132
    %v5134 = vpop.f32.mrb[0].mxu0
    %v5135 = vadd.f32 %v4909, %v5134
    %v5136 = vpop.f32.mrb[0].mxu0
    %v5137 = vadd.f32 %v4913, %v5136
    %5138 = vmatprep.mubr.bf16.mxu0 %v3538
    %5139 = vmatmul.mubr.bf16.gmra.mrb[0].mxu0 %v3537
    %v5140 = vpop.f32.mrb[0].mxu0
    %v5141 = vadd.f32 %v4909, %v5140
    %v5142 = vpop.f32.mrb[0].mxu0
    %v5143 = vadd.f32 %v4913, %v5142
    %v5144 = vpop.f32.mrb[0].mxu0
    %v5145 = vadd.f32 %v4909, %v5144
    %v5146 = vpop.f32.mrb[0].mxu0
    %v5147 = vadd.f32 %v4913, %v5146
    %5148 = vmatprep.mubr.bf16.mxu0 %v3540
    %5149 = vmatmul.mubr.bf16.gmra.mrb[0].mxu0 %v3539
    %v5150 = vpop.f32.mrb[0].mxu0
    %v5151 = vadd.f32 %v4909, %v5150
    %v5152 = vpop.f32.mrb[0].mxu0
    %v5153 = vadd.f32 %v4913, %v5152
    %v5154 = vpop.f32.mrb[0].mxu0
    %v5155 = vadd.f32 %v4909, %v5154
    %v5156 = vpop.f32.mrb[0].mxu0
    %v5157 = vadd.f32 %v4913, %v5156
    %5158 = vmatprep.mubr.bf16.mxu0 %v3542
    %5159 = vmatmul.mubr.bf16.gmra.mrb[0].mxu0 %v3541
    %v5160 = vpop.f32.mrb[0].mxu0
    %v5161 = vadd.f32 %v4909, %v5160
    %v5162 = vpop.f32.mrb[0].mxu0
    %v5163 = vadd.f32 %v4913, %v5162
    %v5164 = vpop.f32.mrb[0].mxu0
    %v5165 = vadd.f32 %v4909, %v5164
    %v5166 = vpop.f32.mrb[0].mxu0
    %v5167 = vadd.f32 %v4913, %v5166
    %5168 = vmatprep.mubr.bf16.mxu0 %v3544
    %5169 = vmatmul.mubr.bf16.gmra.mrb[0].mxu0 %v3543
    %v5170 = vpop.f32.mrb[0].mxu0
    %v5171 = vadd.f32 %v4909, %v5170
    %v5172 = vpop.f32.mrb[0].mxu0
    %v5173 = vadd.f32 %v4913, %v5172
    %v5174 = vpop.f32.mrb[0].mxu0
    %v5175 = vadd.f32 %v4909, %v5174
    %v5176 = vpop.f32.mrb[0].mxu0
    %v5177 = vadd.f32 %v4913, %v5176
    %5178 = vmatprep.mubr.bf16.mxu0 %v3546
    %5179 = vmatmul.mubr.bf16.gmra.mrb[0].mxu0 %v3545
    %v5180 = vpop.f32.mrb[0].mxu0
    %v5181 = vadd.f32 %v4909, %v5180
    %v5182 = vpop.f32.mrb[0].mxu0
    %v5183 = vadd.f32 %v4913, %v5182
    %v5184 = vpop.f32.mrb[0].mxu0
    %v5185 = vadd.f32 %v4909, %v5184
    %v5186 = vpop.f32.mrb[0].mxu0
    %v5187 = vadd.f32 %v4913, %v5186
    %5188 = vmatprep.mubr.bf16.mxu0 %v3548
    %5189 = vmatmul.mubr.bf16.gmra.mrb[0].mxu0 %v3547
    %v5190 = vpop.f32.mrb[0].mxu0
    %v5191 = vadd.f32 %v4909, %v5190
    %v5192 = vpop.f32.mrb[0].mxu0
    %v5193 = vadd.f32 %v4913, %v5192
    %v5194 = vpop.f32.mrb[0].mxu0
    %v5195 = vadd.f32 %v4909, %v5194
    %v5196 = vpop.f32.mrb[0].mxu0
    %v5197 = vadd.f32 %v4913, %v5196
    %5198 = vmatprep.mubr.bf16.mxu0 %v3550
    %5199 = vmatmul.mubr.bf16.gmra.mrb[0].mxu0 %v3549
    %v5200 = vpop.f32.mrb[0].mxu0
    %v5201 = vadd.f32 %v4909, %v5200
    %v5202 = vpop.f32.mrb[0].mxu0
    %v5203 = vadd.f32 %v4913, %v5202
    %v5204 = vpop.f32.mrb[0].mxu0
    %v5205 = vadd.f32 %v4909, %v5204
    %v5206 = vpop.f32.mrb[0].mxu0
    %v5207 = vadd.f32 %v4913, %v5206
    %5208 = vmatprep.mubr.bf16.mxu0 %v3552
    %5209 = vmatmul.mubr.bf16.gmra.mrb[0].mxu0 %v3551
    %v5210 = vpop.f32.mrb[0].mxu0
    %v5211 = vadd.f32 %v4909, %v5210
    %v5212 = vpop.f32.mrb[0].mxu0
    %v5213 = vadd.f32 %v4913, %v5212
    %v5214 = vpop.f32.mrb[0].mxu0
    %v5215 = vadd.f32 %v4909, %v5214
    %v5216 = vpop.f32.mrb[0].mxu0
    %v5217 = vadd.f32 %v4913, %v5216
    %5218 = vmatprep.mubr.bf16.mxu0 %v3554
    %5219 = vmatmul.mubr.bf16.gmra.mrb[0].mxu0 %v3553
    %v5220 = vpop.f32.mrb[0].mxu0
    %v5221 = vadd.f32 %v4909, %v5220
    %v5222 = vpop.f32.mrb[0].mxu0
    %v5223 = vadd.f32 %v4913, %v5222
    %v5224 = vpop.f32.mrb[0].mxu0
    %v5225 = vadd.f32 %v4909, %v5224
    %v5226 = vpop.f32.mrb[0].mxu0
    %v5227 = vadd.f32 %v4913, %v5226
    %5228 = vmatprep.mubr.bf16.mxu0 %v3556
    %5229 = vmatmul.mubr.bf16.gmra.mrb[0].mxu0 %v3555
    %v5230 = vpop.f32.mrb[0].mxu0
    %v5231 = vadd.f32 %v4909, %v5230
    %v5232 = vpop.f32.mrb[0].mxu0
    %v5233 = vadd.f32 %v4913, %v5232
    %v5234 = vpop.f32.mrb[0].mxu0
    %v5235 = vadd.f32 %v4909, %v5234
    %v5236 = vpop.f32.mrb[0].mxu0
    %v5237 = vadd.f32 %v4913, %v5236
    %5238 = vmatprep.mubr.bf16.mxu0 %v3558
    %5239 = vmatmul.mubr.bf16.gmra.mrb[0].mxu0 %v3557
    %v5240 = vpop.f32.mrb[0].mxu0
    %v5241 = vadd.f32 %v4909, %v5240
    %v5242 = vpop.f32.mrb[0].mxu0
    %v5243 = vadd.f32 %v4913, %v5242
    %v5244 = vpop.f32.mrb[0].mxu0
    %v5245 = vadd.f32 %v4909, %v5244
    %v5246 = vpop.f32.mrb[0].mxu0
    %v5247 = vadd.f32 %v4913, %v5246
    %5248 = vmatprep.mubr.bf16.mxu0 %v3560
    %5249 = vmatmul.mubr.bf16.gmra.mrb[0].mxu0 %v3559
    %v5250 = vpop.f32.mrb[0].mxu0
    %v5251 = vadd.f32 %v4909, %v5250
    %v5252 = vpop.f32.mrb[0].mxu0
    %v5253 = vadd.f32 %v4913, %v5252
    %v5254 = vpop.f32.mrb[0].mxu0
    %v5255 = vadd.f32 %v4909, %v5254
    %v5256 = vpop.f32.mrb[0].mxu0
    %v5257 = vadd.f32 %v4913, %v5256
    %5258 = vmatprep.mubr.bf16.mxu0 %v3562
    %5259 = vmatmul.mubr.bf16.gmra.mrb[0].mxu0 %v3561
    %v5260 = vpop.f32.mrb[0].mxu0
    %v5261 = vadd.f32 %v4909, %v5260
    %v5262 = vpop.f32.mrb[0].mxu0
    %v5263 = vadd.f32 %v4913, %v5262
    %v5264 = vpop.f32.mrb[0].mxu0
    %v5265 = vadd.f32 %v4909, %v5264
    %v5266 = vpop.f32.mrb[0].mxu0
    %v5267 = vadd.f32 %v4913, %v5266
    %5268 = vmatprep.mubr.bf16.mxu0 %v3564
    %5269 = vmatmul.mubr.bf16.gmra.mrb[0].mxu0 %v3563
    %v5270 = vpop.f32.mrb[0].mxu0
    %v5271 = vadd.f32 %v4909, %v5270
    %v5272 = vpop.f32.mrb[0].mxu0
    %v5273 = vadd.f32 %v4913, %v5272
    %v5274 = vpop.f32.mrb[0].mxu0
    %v5275 = vadd.f32 %v4909, %v5274
    %v5276 = vpop.f32.mrb[0].mxu0
    %v5277 = vadd.f32 %v4913, %v5276
    %5278 = vmatprep.mubr.bf16.mxu0 %v3566
    %5279 = vmatmul.mubr.bf16.gmra.mrb[0].mxu0 %v3565
    %v5280 = vpop.f32.mrb[0].mxu0
    %v5281 = vadd.f32 %v4909, %v5280
    %v5282 = vpop.f32.mrb[0].mxu0
    %v5283 = vadd.f32 %v4913, %v5282
    %v5284 = vpop.f32.mrb[0].mxu0
    %v5285 = vadd.f32 %v4909, %v5284
    %v5286 = vpop.f32.mrb[0].mxu0
    %v5287 = vadd.f32 %v4913, %v5286
    %5288 = vmatprep.mubr.bf16.mxu0 %v3568
    %5289 = vmatmul.mubr.bf16.gmra.mrb[0].mxu0 %v3567
    %v5290 = vpop.f32.mrb[0].mxu0
    %v5291 = vadd.f32 %v4909, %v5290
    %v5292 = vpop.f32.mrb[0].mxu0
    %v5293 = vadd.f32 %v4913, %v5292
    %v5294 = vpop.f32.mrb[0].mxu0
    %v5295 = vadd.f32 %v4909, %v5294
    %v5296 = vpop.f32.mrb[0].mxu0
    %v5297 = vadd.f32 %v4913, %v5296
    %5298 = vmatprep.mubr.bf16.mxu0 %v3570
    %5299 = vmatmul.mubr.bf16.gmra.mrb[0].mxu0 %v3569
    %v5300 = vpop.f32.mrb[0].mxu0
    %v5301 = vadd.f32 %v4909, %v5300
    %v5302 = vpop.f32.mrb[0].mxu0
    %v5303 = vadd.f32 %v4913, %v5302
    %v5304 = vpop.f32.mrb[0].mxu0
    %v5305 = vadd.f32 %v4909, %v5304
    %v5306 = vpop.f32.mrb[0].mxu0
    %v5307 = vadd.f32 %v4913, %v5306
    %5308 = vmatprep.mubr.bf16.mxu0 %v3572
    %5309 = vmatmul.mubr.bf16.gmra.mrb[0].mxu0 %v3571
    %v5310 = vpop.f32.mrb[0].mxu0
    %v5311 = vadd.f32 %v4909, %v5310
    %v5312 = vpop.f32.mrb[0].mxu0
    %v5313 = vadd.f32 %v4913, %v5312
    %v5314 = vpop.f32.mrb[0].mxu0
    %v5315 = vadd.f32 %v4909, %v5314
    %v5316 = vpop.f32.mrb[0].mxu0
    %v5317 = vadd.f32 %v4913, %v5316
    %5318 = vmatprep.mubr.bf16.mxu0 %v3574
    %5319 = vmatmul.mubr.bf16.gmra.mrb[0].mxu0 %v3573
    %v5320 = vpop.f32.mrb[0].mxu0
    %v5321 = vadd.f32 %v4909, %v5320
    %v5322 = vpop.f32.mrb[0].mxu0
    %v5323 = vadd.f32 %v4913, %v5322
    %v5324 = vpop.f32.mrb[0].mxu0
    %v5325 = vadd.f32 %v4909, %v5324
    %v5326 = vpop.f32.mrb[0].mxu0
    %v5327 = vadd.f32 %v4913, %v5326
    %5328 = vmatprep.mubr.bf16.mxu0 %v3576
    %5329 = vmatmul.mubr.bf16.gmra.mrb[0].mxu0 %v3575
    %v5330 = vpop.f32.mrb[0].mxu0
    %v5331 = vadd.f32 %v4909, %v5330
    %v5332 = vpop.f32.mrb[0].mxu0
    %v5333 = vadd.f32 %v4913, %v5332
    %v5334 = vpop.f32.mrb[0].mxu0
    %v5335 = vadd.f32 %v4909, %v5334
    %v5336 = vpop.f32.mrb[0].mxu0
    %v5337 = vadd.f32 %v4913, %v5336
    %5338 = vmatprep.mubr.bf16.mxu0 %v3578
    %5339 = vmatmul.mubr.bf16.gmra.mrb[0].mxu0 %v3577
    %v5340 = vpop.f32.mrb[0].mxu0
    %v5341 = vadd.f32 %v4909, %v5340
    %v5342 = vpop.f32.mrb[0].mxu0
    %v5343 = vadd.f32 %v4913, %v5342
    %v5344 = vpop.f32.mrb[0].mxu0
    %v5345 = vadd.f32 %v4909, %v5344
    %v5346 = vpop.f32.mrb[0].mxu0
    %v5347 = vadd.f32 %v4913, %v5346
    %5348 = vmatprep.mubr.bf16.mxu0 %v3580
    %5349 = vmatmul.mubr.bf16.gmra.mrb[0].mxu0 %v3579
    %v5350 = vpop.f32.mrb[0].mxu0
    %v5351 = vadd.f32 %v4909, %v5350
    %v5352 = vpop.f32.mrb[0].mxu0
    %v5353 = vadd.f32 %v4913, %v5352
    %v5354 = vpop.f32.mrb[0].mxu0
    %v5355 = vadd.f32 %v4909, %v5354
    %v5356 = vpop.f32.mrb[0].mxu0
    %v5357 = vadd.f32 %v4913, %v5356
    %5358 = vmatprep.mubr.bf16.mxu0 %v3582
    %5359 = vmatmul.mubr.bf16.gmra.mrb[0].mxu0 %v3581
    %v5360 = vpop.f32.mrb[0].mxu0
    %v5361 = vadd.f32 %v4909, %v5360
    %v5362 = vpop.f32.mrb[0].mxu0
    %v5363 = vadd.f32 %v4913, %v5362
    %v5364 = vpop.f32.mrb[0].mxu0
    %v5365 = vadd.f32 %v4909, %v5364
    %v5366 = vpop.f32.mrb[0].mxu0
    %v5367 = vadd.f32 %v4913, %v5366
    %5368 = vmatprep.mubr.bf16.mxu0 %v3584
    %5369 = vmatmul.mubr.bf16.gmra.mrb[0].mxu0 %v3583
    %v5370 = vpop.f32.mrb[0].mxu0
    %v5371 = vadd.f32 %v4909, %v5370
    %v5372 = vpop.f32.mrb[0].mxu0
    %v5373 = vadd.f32 %v4913, %v5372
    %v5374 = vpop.f32.mrb[0].mxu0
    %v5375 = vadd.f32 %v4909, %v5374
    %v5376 = vpop.f32.mrb[0].mxu0
    %v5377 = vadd.f32 %v4913, %v5376
    %5378 = vmatprep.mubr.bf16.mxu0 %v3586
    %5379 = vmatmul.mubr.bf16.gmra.mrb[0].mxu0 %v3585
    %v5380 = vpop.f32.mrb[0].mxu0
    %v5381 = vadd.f32 %v4909, %v5380
    %v5382 = vpop.f32.mrb[0].mxu0
    %v5383 = vadd.f32 %v4913, %v5382
    %v5384 = vpop.f32.mrb[0].mxu0
    %v5385 = vadd.f32 %v4909, %v5384
    %v5386 = vpop.f32.mrb[0].mxu0
    %v5387 = vadd.f32 %v4913, %v5386
    %5388 = vmatprep.mubr.bf16.mxu0 %v3588
    %5389 = vmatmul.mubr.bf16.gmra.mrb[0].mxu0 %v3587
    %v5390 = vpop.f32.mrb[0].mxu0
    %v5391 = vadd.f32 %v4909, %v5390
    %v5392 = vpop.f32.mrb[0].mxu0
    %v5393 = vadd.f32 %v4913, %v5392
    %v5394 = vpop.f32.mrb[0].mxu0
    %v5395 = vadd.f32 %v4909, %v5394
    %v5396 = vpop.f32.mrb[0].mxu0
    %v5397 = vadd.f32 %v4913, %v5396
    %5398 = vmatprep.mubr.bf16.mxu0 %v3590
    %5399 = vmatmul.mubr.bf16.gmra.mrb[0].mxu0 %v3589
    %v5400 = vpop.f32.mrb[0].mxu0
    %v5401 = vadd.f32 %v4909, %v5400
    %v5402 = vpop.f32.mrb[0].mxu0
    %v5403 = vadd.f32 %v4913, %v5402
    %v5404 = vpop.f32.mrb[0].mxu0
    %v5405 = vadd.f32 %v4909, %v5404
    %v5406 = vpop.f32.mrb[0].mxu0
    %v5407 = vadd.f32 %v4913, %v5406
    %5408 = vmatprep.mubr.bf16.mxu0 %v3592
    %5409 = vmatmul.mubr.bf16.gmra.mrb[0].mxu0 %v3591
    %v5410 = vpop.f32.mrb[0].mxu0
    %v5411 = vadd.f32 %v4909, %v5410
    %v5412 = vpop.f32.mrb[0].mxu0
    %v5413 = vadd.f32 %v4913, %v5412
    %v5414 = vpop.f32.mrb[0].mxu0
    %v5415 = vadd.f32 %v4909, %v5414
    %v5416 = vpop.f32.mrb[0].mxu0
    %v5417 = vadd.f32 %v4913, %v5416
    %5418 = vmatprep.mubr.bf16.mxu0 %v3594
    %5419 = vmatmul.mubr.bf16.gmra.mrb[0].mxu0 %v3593
    %v5420 = vpop.f32.mrb[0].mxu0
    %v5421 = vadd.f32 %v4909, %v5420
    %v5422 = vpop.f32.mrb[0].mxu0
    %v5423 = vadd.f32 %v4913, %v5422
    %v5424 = vpop.f32.mrb[0].mxu0
    %v5425 = vadd.f32 %v4909, %v5424
    %v5426 = vpop.f32.mrb[0].mxu0
    %v5427 = vadd.f32 %v4913, %v5426
    %5428 = vmatprep.mubr.bf16.mxu0 %v3596
    %5429 = vmatmul.mubr.bf16.gmra.mrb[0].mxu0 %v3595
    %v5430 = vpop.f32.mrb[0].mxu0
    %v5431 = vadd.f32 %v4909, %v5430
    %v5432 = vpop.f32.mrb[0].mxu0
    %v5433 = vadd.f32 %v4913, %v5432
    %v5434 = vpop.f32.mrb[0].mxu0
    %v5435 = vadd.f32 %v4909, %v5434
    %v5436 = vpop.f32.mrb[0].mxu0
    %v5437 = vadd.f32 %v4913, %v5436
    %5438 = vmatprep.mubr.bf16.mxu0 %v3598
    %5439 = vmatmul.mubr.bf16.gmra.mrb[0].mxu0 %v3597
    %v5440 = vpop.f32.mrb[0].mxu0
    %v5441 = vadd.f32 %v4909, %v5440
    %v5442 = vpop.f32.mrb[0].mxu0
    %v5443 = vadd.f32 %v4913, %v5442
    %v5444 = vpop.f32.mrb[0].mxu0
    %v5445 = vadd.f32 %v4909, %v5444
    %v5446 = vpop.f32.mrb[0].mxu0
    %v5447 = vadd.f32 %v4913, %v5446
    %5448 = vmatprep.mubr.bf16.mxu0 %v3600
    %5449 = vmatmul.mubr.bf16.gmra.mrb[0].mxu0 %v3599
    %v5450 = vpop.f32.mrb[0].mxu0
    %v5451 = vadd.f32 %v4909, %v5450
    %v5452 = vpop.f32.mrb[0].mxu0
    %v5453 = vadd.f32 %v4913, %v5452
    %v5454 = vpop.f32.mrb[0].mxu0
    %v5455 = vadd.f32 %v4909, %v5454
    %v5456 = vpop.f32.mrb[0].mxu0
    %v5457 = vadd.f32 %v4913, %v5456
    %5458 = vmatprep.mubr.bf16.mxu0 %v3602
    %5459 = vmatmul.mubr.bf16.gmra.mrb[0].mxu0 %v3601
    %v5460 = vpop.f32.mrb[0].mxu0
    %v5461 = vadd.f32 %v4909, %v5460
    %v5462 = vpop.f32.mrb[0].mxu0
    %v5463 = vadd.f32 %v4913, %v5462
    %v5464 = vpop.f32.mrb[0].mxu0
    %v5465 = vadd.f32 %v4909, %v5464
    %v5466 = vpop.f32.mrb[0].mxu0
    %v5467 = vadd.f32 %v4913, %v5466
    %5468 = vmatprep.mubr.bf16.mxu0 %v3604
    %5469 = vmatmul.mubr.bf16.gmra.mrb[0].mxu0 %v3603
    %v5470 = vpop.f32.mrb[0].mxu0
    %v5471 = vadd.f32 %v4909, %v5470
    %v5472 = vpop.f32.mrb[0].mxu0
    %v5473 = vadd.f32 %v4913, %v5472
    %v5474 = vpop.f32.mrb[0].mxu0
    %v5475 = vadd.f32 %v4909, %v5474
    %v5476 = vpop.f32.mrb[0].mxu0
    %v5477 = vadd.f32 %v4913, %v5476
    %5478 = vmatprep.mubr.bf16.mxu0 %v3606
    %5479 = vmatmul.mubr.bf16.gmra.mrb[0].mxu0 %v3605
    %v5480 = vpop.f32.mrb[0].mxu0
    %v5481 = vadd.f32 %v4909, %v5480
    %v5482 = vpop.f32.mrb[0].mxu0
    %v5483 = vadd.f32 %v4913, %v5482
    %v5484 = vpop.f32.mrb[0].mxu0
    %v5485 = vadd.f32 %v4909, %v5484
    %v5486 = vpop.f32.mrb[0].mxu0
    %v5487 = vadd.f32 %v4913, %v5486
    %5488 = vmatprep.mubr.bf16.mxu0 %v3608
    %5489 = vmatmul.mubr.bf16.gmra.mrb[0].mxu0 %v3607
    %v5490 = vpop.f32.mrb[0].mxu0
    %v5491 = vadd.f32 %v4909, %v5490
    %v5492 = vpop.f32.mrb[0].mxu0
    %v5493 = vadd.f32 %v4913, %v5492
    %v5494 = vpop.f32.mrb[0].mxu0
    %v5495 = vadd.f32 %v4909, %v5494
    %v5496 = vpop.f32.mrb[0].mxu0
    %v5497 = vadd.f32 %v4913, %v5496
    %5498 = vmatprep.mubr.bf16.mxu0 %v3610
    %5499 = vmatmul.mubr.bf16.gmra.mrb[0].mxu0 %v3609
    %v5500 = vpop.f32.mrb[0].mxu0
    %v5501 = vadd.f32 %v4909, %v5500
    %v5502 = vpop.f32.mrb[0].mxu0
    %v5503 = vadd.f32 %v4913, %v5502
    %v5504 = vpop.f32.mrb[0].mxu0
    %v5505 = vadd.f32 %v4909, %v5504
    %v5506 = vpop.f32.mrb[0].mxu0
    %v5507 = vadd.f32 %v4913, %v5506
    %5508 = vmatprep.mubr.bf16.mxu0 %v3612
    %5509 = vmatmul.mubr.bf16.gmra.mrb[0].mxu0 %v3611
    %v5510 = vpop.f32.mrb[0].mxu0
    %v5511 = vadd.f32 %v4909, %v5510
    %v5512 = vpop.f32.mrb[0].mxu0
    %v5513 = vadd.f32 %v4913, %v5512
    %v5514 = vpop.f32.mrb[0].mxu0
    %v5515 = vadd.f32 %v4909, %v5514
    %v5516 = vpop.f32.mrb[0].mxu0
    %v5517 = vadd.f32 %v4913, %v5516
    %5518 = vmatprep.mubr.bf16.mxu0 %v3614
    %5519 = vmatmul.mubr.bf16.gmra.mrb[0].mxu0 %v3613
    %v5520 = vpop.f32.mrb[0].mxu0
    %v5521 = vadd.f32 %v4909, %v5520
    %v5522 = vpop.f32.mrb[0].mxu0
    %v5523 = vadd.f32 %v4913, %v5522
    %v5524 = vpop.f32.mrb[0].mxu0
    %v5525 = vadd.f32 %v4909, %v5524
    %v5526 = vpop.f32.mrb[0].mxu0
    %v5527 = vadd.f32 %v4913, %v5526
    %5528 = vmatprep.mubr.bf16.mxu0 %v3616
    %5529 = vmatmul.mubr.bf16.gmra.mrb[0].mxu0 %v3615
    %v5530 = vpop.f32.mrb[0].mxu0
    %v5531 = vadd.f32 %v4909, %v5530
    %v5532 = vpop.f32.mrb[0].mxu0
    %v5533 = vadd.f32 %v4913, %v5532
    %v5534 = vpop.f32.mrb[0].mxu0
    %v5535 = vadd.f32 %v4909, %v5534
    %v5536 = vpop.f32.mrb[0].mxu0
    %v5537 = vadd.f32 %v4913, %v5536
    %5538 = vmatprep.mubr.bf16.mxu0 %v3618
    %5539 = vmatmul.mubr.bf16.gmra.mrb[0].mxu0 %v3617
    %v5540 = vpop.f32.mrb[0].mxu0
    %v5541 = vadd.f32 %v4909, %v5540
    %v5542 = vpop.f32.mrb[0].mxu0
    %v5543 = vadd.f32 %v4913, %v5542
    %v5544 = vpop.f32.mrb[0].mxu0
    %v5545 = vadd.f32 %v4909, %v5544
    %v5546 = vpop.f32.mrb[0].mxu0
    %v5547 = vadd.f32 %v4913, %v5546
    %5548 = vmatprep.mubr.bf16.mxu0 %v3620
    %5549 = vmatmul.mubr.bf16.gmra.mrb[0].mxu0 %v3619
    %v5550 = vpop.f32.mrb[0].mxu0
    %v5551 = vadd.f32 %v4909, %v5550
    %v5552 = vpop.f32.mrb[0].mxu0
    %v5553 = vadd.f32 %v4913, %v5552
    %v5554 = vpop.f32.mrb[0].mxu0
    %v5555 = vadd.f32 %v4909, %v5554
    %v5556 = vpop.f32.mrb[0].mxu0
    %v5557 = vadd.f32 %v4913, %v5556
    %5558 = vmatprep.mubr.bf16.mxu0 %v3622
    %5559 = vmatmul.mubr.bf16.gmra.mrb[0].mxu0 %v3621
    %v5560 = vpop.f32.mrb[0].mxu0
    %v5561 = vadd.f32 %v4909, %v5560
    %v5562 = vpop.f32.mrb[0].mxu0
    %v5563 = vadd.f32 %v4913, %v5562
    %v5564 = vpop.f32.mrb[0].mxu0
    %v5565 = vadd.f32 %v4909, %v5564
    %v5566 = vpop.f32.mrb[0].mxu0
    %v5567 = vadd.f32 %v4913, %v5566
    %5568 = vmatprep.mubr.bf16.mxu0 %v3624
    %5569 = vmatmul.mubr.bf16.gmra.mrb[0].mxu0 %v3623
    %v5570 = vpop.f32.mrb[0].mxu0
    %v5571 = vadd.f32 %v4909, %v5570
    %v5572 = vpop.f32.mrb[0].mxu0
    %v5573 = vadd.f32 %v4913, %v5572
    %v5574 = vpop.f32.mrb[0].mxu0
    %v5575 = vadd.f32 %v4909, %v5574
    %v5576 = vpop.f32.mrb[0].mxu0
    %v5577 = vadd.f32 %v4913, %v5576
    %5578 = vmatprep.mubr.bf16.mxu0 %v3626
    %5579 = vmatmul.mubr.bf16.gmra.mrb[0].mxu0 %v3625
    %v5580 = vpop.f32.mrb[0].mxu0
    %v5581 = vadd.f32 %v4909, %v5580
    %v5582 = vpop.f32.mrb[0].mxu0
    %v5583 = vadd.f32 %v4913, %v5582
    %v5584 = vpop.f32.mrb[0].mxu0
    %v5585 = vadd.f32 %v4909, %v5584
    %v5586 = vpop.f32.mrb[0].mxu0
    %v5587 = vadd.f32 %v4913, %v5586
    %5588 = vmatprep.mubr.bf16.mxu0 %v3628
    %5589 = vmatmul.mubr.bf16.gmra.mrb[0].mxu0 %v3627
    %v5590 = vpop.f32.mrb[0].mxu0
    %v5591 = vadd.f32 %v4909, %v5590
    %v5592 = vpop.f32.mrb[0].mxu0
    %v5593 = vadd.f32 %v4913, %v5592
    %v5594 = vpop.f32.mrb[0].mxu0
    %v5595 = vadd.f32 %v4909, %v5594
    %v5596 = vpop.f32.mrb[0].mxu0
    %v5597 = vadd.f32 %v4913, %v5596
    %5598 = vmatprep.mubr.bf16.mxu0 %v3630
    %5599 = vmatmul.mubr.bf16.gmra.mrb[0].mxu0 %v3629
    %v5600 = vpop.f32.mrb[0].mxu0
    %v5601 = vadd.f32 %v4909, %v5600
    %v5602 = vpop.f32.mrb[0].mxu0
    %v5603 = vadd.f32 %v4913, %v5602
    %v5604 = vpop.f32.mrb[0].mxu0
    %v5605 = vadd.f32 %v4909, %v5604
    %v5606 = vpop.f32.mrb[0].mxu0
    %v5607 = vadd.f32 %v4913, %v5606
    %5608 = vmatprep.mubr.bf16.mxu0 %v3632
    %5609 = vmatmul.mubr.bf16.gmra.mrb[0].mxu0 %v3631
    %v5610 = vpop.f32.mrb[0].mxu0
    %v5611 = vadd.f32 %v4909, %v5610
    %v5612 = vpop.f32.mrb[0].mxu0
    %v5613 = vadd.f32 %v4913, %v5612
    %v5614 = vpop.f32.mrb[0].mxu0
    %v5615 = vadd.f32 %v4909, %v5614
    %v5616 = vpop.f32.mrb[0].mxu0
    %v5617 = vadd.f32 %v4913, %v5616
    %5618 = vmatprep.mubr.bf16.mxu0 %v3634
    %5619 = vmatmul.mubr.bf16.gmra.mrb[0].mxu0 %v3633
    %v5620 = vpop.f32.mrb[0].mxu0
    %v5621 = vadd.f32 %v4909, %v5620
    %v5622 = vpop.f32.mrb[0].mxu0
    %v5623 = vadd.f32 %v4913, %v5622
    %v5624 = vpop.f32.mrb[0].mxu0
    %v5625 = vadd.f32 %v4909, %v5624
    %v5626 = vpop.f32.mrb[0].mxu0
    %v5627 = vadd.f32 %v4913, %v5626
    %5628 = vmatprep.mubr.bf16.mxu0 %v3636
    %5629 = vmatmul.mubr.bf16.gmra.mrb[0].mxu0 %v3635
    %v5630 = vpop.f32.mrb[0].mxu0
    %v5631 = vadd.f32 %v4909, %v5630
    %v5632 = vpop.f32.mrb[0].mxu0
    %v5633 = vadd.f32 %v4913, %v5632
    %v5634 = vpop.f32.mrb[0].mxu0
    %v5635 = vadd.f32 %v4909, %v5634
    %v5636 = vpop.f32.mrb[0].mxu0
    %v5637 = vadd.f32 %v4913, %v5636
    %5638 = vmatprep.mubr.bf16.mxu0 %v3638
    %5639 = vmatmul.mubr.bf16.gmra.mrb[0].mxu0 %v3637
    %v5640 = vpop.f32.mrb[0].mxu0
    %v5641 = vadd.f32 %v4909, %v5640
    %v5642 = vpop.f32.mrb[0].mxu0
    %v5643 = vadd.f32 %v4913, %v5642
    %v5644 = vpop.f32.mrb[0].mxu0
    %v5645 = vadd.f32 %v4909, %v5644
    %v5646 = vpop.f32.mrb[0].mxu0
    %v5647 = vadd.f32 %v4913, %v5646
    %5648 = vmatprep.mubr.bf16.mxu0 %v3640
    %5649 = vmatmul.mubr.bf16.gmra.mrb[0].mxu0 %v3639
    %v5650 = vpop.f32.mrb[0].mxu0
    %v5651 = vadd.f32 %v4909, %v5650
    %v5652 = vpop.f32.mrb[0].mxu0
    %v5653 = vadd.f32 %v4913, %v5652
    %v5654 = vpop.f32.mrb[0].mxu0
    %v5655 = vadd.f32 %v4909, %v5654
    %v5656 = vpop.f32.mrb[0].mxu0
    %v5657 = vadd.f32 %v4913, %v5656
    %5658 = vmatprep.mubr.bf16.mxu0 %v3642
    %5659 = vmatmul.mubr.bf16.gmra.mrb[0].mxu0 %v3641
    %v5660 = vpop.f32.mrb[0].mxu0
    %v5661 = vadd.f32 %v4909, %v5660
    %v5662 = vpop.f32.mrb[0].mxu0
    %v5663 = vadd.f32 %v4913, %v5662
    %v5664 = vpop.f32.mrb[0].mxu0
    %v5665 = vadd.f32 %v4909, %v5664
    %v5666 = vpop.f32.mrb[0].mxu0
    %v5667 = vadd.f32 %v4913, %v5666
    %5668 = vmatprep.mubr.bf16.mxu0 %v3644
    %5669 = vmatmul.mubr.bf16.gmra.mrb[0].mxu0 %v3643
    %v5670 = vpop.f32.mrb[0].mxu0
    %v5671 = vadd.f32 %v4909, %v5670
    %v5672 = vpop.f32.mrb[0].mxu0
    %v5673 = vadd.f32 %v4913, %v5672
    %v5674 = vpop.f32.mrb[0].mxu0
    %v5675 = vadd.f32 %v4909, %v5674
    %v5676 = vpop.f32.mrb[0].mxu0
    %v5677 = vadd.f32 %v4913, %v5676
    %5678 = vmatprep.mubr.bf16.mxu0 %v3646
    %5679 = vmatmul.mubr.bf16.gmra.mrb[0].mxu0 %v3645
    %v5680 = vpop.f32.mrb[0].mxu0
    %v5681 = vadd.f32 %v4909, %v5680
    %v5682 = vpop.f32.mrb[0].mxu0
    %v5683 = vadd.f32 %v4913, %v5682
    %v5684 = vpop.f32.mrb[0].mxu0
    %v5685 = vadd.f32 %v4909, %v5684
    %v5686 = vpop.f32.mrb[0].mxu0
    %v5687 = vadd.f32 %v4913, %v5686
    %5688 = vmatprep.mubr.bf16.mxu0 %v3648
    %5689 = vmatmul.mubr.bf16.gmra.mrb[0].mxu0 %v3647
    %v5690 = vpop.f32.mrb[0].mxu0
    %v5691 = vadd.f32 %v4909, %v5690
    %v5692 = vpop.f32.mrb[0].mxu0
    %v5693 = vadd.f32 %v4913, %v5692
    %v5694 = vpop.f32.mrb[0].mxu0
    %v5695 = vadd.f32 %v4909, %v5694
    %v5696 = vpop.f32.mrb[0].mxu0
    %v5697 = vadd.f32 %v4913, %v5696
    %5698 = vmatprep.mubr.bf16.mxu0 %v3650
    %5699 = vmatmul.mubr.bf16.gmra.mrb[0].mxu0 %v3649
    %v5700 = vpop.f32.mrb[0].mxu0
    %v5701 = vadd.f32 %v4909, %v5700
    %v5702 = vpop.f32.mrb[0].mxu0
    %v5703 = vadd.f32 %v4913, %v5702
    %v5704 = vpop.f32.mrb[0].mxu0
    %v5705 = vadd.f32 %v4909, %v5704
    %v5706 = vpop.f32.mrb[0].mxu0
    %v5707 = vadd.f32 %v4913, %v5706
    %5708 = vmatprep.mubr.bf16.mxu0 %v3652
    %5709 = vmatmul.mubr.bf16.gmra.mrb[0].mxu0 %v3651
    %v5710 = vpop.f32.mrb[0].mxu0
    %v5711 = vadd.f32 %v4909, %v5710
    %v5712 = vpop.f32.mrb[0].mxu0
    %v5713 = vadd.f32 %v4913, %v5712
    %v5714 = vpop.f32.mrb[0].mxu0
    %v5715 = vadd.f32 %v4909, %v5714
    %v5716 = vpop.f32.mrb[0].mxu0
    %v5717 = vadd.f32 %v4913, %v5716
    %5718 = vmatprep.mubr.bf16.mxu0 %v3654
    %5719 = vmatmul.mubr.bf16.gmra.mrb[0].mxu0 %v3653
    %v5720 = vpop.f32.mrb[0].mxu0
    %v5721 = vadd.f32 %v4909, %v5720
    %v5722 = vpop.f32.mrb[0].mxu0
    %v5723 = vadd.f32 %v4913, %v5722
    %v5724 = vpop.f32.mrb[0].mxu0
    %v5725 = vadd.f32 %v4909, %v5724
    %v5726 = vpop.f32.mrb[0].mxu0
    %v5727 = vadd.f32 %v4913, %v5726
    %5728 = vmatprep.mubr.bf16.mxu0 %v3656
    %5729 = vmatmul.mubr.bf16.gmra.mrb[0].mxu0 %v3655
    %v5730 = vpop.f32.mrb[0].mxu0
    %v5731 = vadd.f32 %v4909, %v5730
    %v5732 = vpop.f32.mrb[0].mxu0
    %v5733 = vadd.f32 %v4913, %v5732
    %v5734 = vpop.f32.mrb[0].mxu0
    %v5735 = vadd.f32 %v4909, %v5734
    %v5736 = vpop.f32.mrb[0].mxu0
    %v5737 = vadd.f32 %v4913, %v5736
    %5738 = vmatprep.mubr.bf16.mxu0 %v3658
    %5739 = vmatmul.mubr.bf16.gmra.mrb[0].mxu0 %v3657
    %v5740 = vpop.f32.mrb[0].mxu0
    %v5741 = vadd.f32 %v4909, %v5740
    %v5742 = vpop.f32.mrb[0].mxu0
    %v5743 = vadd.f32 %v4913, %v5742
    %v5744 = vpop.f32.mrb[0].mxu0
    %v5745 = vadd.f32 %v4909, %v5744
    %v5746 = vpop.f32.mrb[0].mxu0
    %v5747 = vadd.f32 %v4913, %v5746
    %5748 = vdwg.mxu0
    %v5749 = vmax.f32 %v5111, %v5115
    %v5750 = vmax.f32 %v5749, %v5121
    %v5751 = vmax.f32 %v5750, %v5125
    %v5752 = vmax.f32 %v5751, %v5131
    %v5753 = vmax.f32 %v5752, %v5135
    %v5754 = vmax.f32 %v5753, %v5141
    %v5755 = vmax.f32 %v5754, %v5145
    %v5756 = vmax.f32 %v5755, %v5151
    %v5757 = vmax.f32 %v5756, %v5155
    %v5758 = vmax.f32 %v5757, %v5161
    %v5759 = vmax.f32 %v5758, %v5165
    %v5760 = vmax.f32 %v5759, %v5171
    %v5761 = vmax.f32 %v5760, %v5175
    %v5762 = vmax.f32 %v5761, %v5181
    %v5763 = vmax.f32 %v5762, %v5185
    %v5764 = vrot.slane %v5763, 4
    %v5765 = vmax.f32 %v5763, %v5764
    %v5766 = vrot.slane %v5765, 2
    %v5767 = vmax.f32 %v5765, %v5766
    %v5768 = vrot.slane %v5767, 1
    %v5769 = vmax.f32 %v5767, %v5768
    %v5770 = vmax.f32 %v5113, %v5117
    %v5771 = vmax.f32 %v5770, %v5123
    %v5772 = vmax.f32 %v5771, %v5127
    %v5773 = vmax.f32 %v5772, %v5133
    %v5774 = vmax.f32 %v5773, %v5137
    %v5775 = vmax.f32 %v5774, %v5143
    %v5776 = vmax.f32 %v5775, %v5147
    %v5777 = vmax.f32 %v5776, %v5153
    %v5778 = vmax.f32 %v5777, %v5157
    %v5779 = vmax.f32 %v5778, %v5163
    %v5780 = vmax.f32 %v5779, %v5167
    %v5781 = vmax.f32 %v5780, %v5173
    %v5782 = vmax.f32 %v5781, %v5177
    %v5783 = vmax.f32 %v5782, %v5183
    %v5784 = vmax.f32 %v5783, %v5187
    %v5785 = vrot.slane %v5784, 4
    %v5786 = vmax.f32 %v5784, %v5785
    %v5787 = vrot.slane %v5786, 2
    %v5788 = vmax.f32 %v5786, %v5787
    %v5789 = vrot.slane %v5788, 1
    %v5790 = vmax.f32 %v5788, %v5789
    %v5791 = vmax.f32 %v5191, %v5195
    %v5792 = vmax.f32 %v5791, %v5201
    %v5793 = vmax.f32 %v5792, %v5205
    %v5794 = vmax.f32 %v5793, %v5211
    %v5795 = vmax.f32 %v5794, %v5215
    %v5796 = vmax.f32 %v5795, %v5221
    %v5797 = vmax.f32 %v5796, %v5225
    %v5798 = vmax.f32 %v5797, %v5231
    %v5799 = vmax.f32 %v5798, %v5235
    %v5800 = vmax.f32 %v5799, %v5241
    %v5801 = vmax.f32 %v5800, %v5245
    %v5802 = vmax.f32 %v5801, %v5251
    %v5803 = vmax.f32 %v5802, %v5255
    %v5804 = vmax.f32 %v5803, %v5261
    %v5805 = vmax.f32 %v5804, %v5265
    %v5806 = vrot.slane %v5805, 4
    %v5807 = vmax.f32 %v5805, %v5806
    %v5808 = vrot.slane %v5807, 2
    %v5809 = vmax.f32 %v5807, %v5808
    %v5810 = vrot.slane %v5809, 1
    %v5811 = vmax.f32 %v5809, %v5810
    %v5812 = vmax.f32 %v5193, %v5197
    %v5813 = vmax.f32 %v5812, %v5203
    %v5814 = vmax.f32 %v5813, %v5207
    %v5815 = vmax.f32 %v5814, %v5213
    %v5816 = vmax.f32 %v5815, %v5217
    %v5817 = vmax.f32 %v5816, %v5223
    %v5818 = vmax.f32 %v5817, %v5227
    %v5819 = vmax.f32 %v5818, %v5233
    %v5820 = vmax.f32 %v5819, %v5237
    %v5821 = vmax.f32 %v5820, %v5243
    %v5822 = vmax.f32 %v5821, %v5247
    %v5823 = vmax.f32 %v5822, %v5253
    %v5824 = vmax.f32 %v5823, %v5257
    %v5825 = vmax.f32 %v5824, %v5263
    %v5826 = vmax.f32 %v5825, %v5267
    %v5827 = vrot.slane %v5826, 4
    %v5828 = vmax.f32 %v5826, %v5827
    %v5829 = vrot.slane %v5828, 2
    %v5830 = vmax.f32 %v5828, %v5829
    %v5831 = vrot.slane %v5830, 1
    %v5832 = vmax.f32 %v5830, %v5831
    %v5833 = vmax.f32 %v5271, %v5275
    %v5834 = vmax.f32 %v5833, %v5281
    %v5835 = vmax.f32 %v5834, %v5285
    %v5836 = vmax.f32 %v5835, %v5291
    %v5837 = vmax.f32 %v5836, %v5295
    %v5838 = vmax.f32 %v5837, %v5301
    %v5839 = vmax.f32 %v5838, %v5305
    %v5840 = vmax.f32 %v5839, %v5311
    %v5841 = vmax.f32 %v5840, %v5315
    %v5842 = vmax.f32 %v5841, %v5321
    %v5843 = vmax.f32 %v5842, %v5325
    %v5844 = vmax.f32 %v5843, %v5331
    %v5845 = vmax.f32 %v5844, %v5335
    %v5846 = vmax.f32 %v5845, %v5341
    %v5847 = vmax.f32 %v5846, %v5345
    %v5848 = vrot.slane %v5847, 4
    %v5849 = vmax.f32 %v5847, %v5848
    %v5850 = vrot.slane %v5849, 2
    %v5851 = vmax.f32 %v5849, %v5850
    %v5852 = vrot.slane %v5851, 1
    %v5853 = vmax.f32 %v5851, %v5852
    %v5854 = vmax.f32 %v5273, %v5277
    %v5855 = vmax.f32 %v5854, %v5283
    %v5856 = vmax.f32 %v5855, %v5287
    %v5857 = vmax.f32 %v5856, %v5293
    %v5858 = vmax.f32 %v5857, %v5297
    %v5859 = vmax.f32 %v5858, %v5303
    %v5860 = vmax.f32 %v5859, %v5307
    %v5861 = vmax.f32 %v5860, %v5313
    %v5862 = vmax.f32 %v5861, %v5317
    %v5863 = vmax.f32 %v5862, %v5323
    %v5864 = vmax.f32 %v5863, %v5327
    %v5865 = vmax.f32 %v5864, %v5333
    %v5866 = vmax.f32 %v5865, %v5337
    %v5867 = vmax.f32 %v5866, %v5343
    %v5868 = vmax.f32 %v5867, %v5347
    %v5869 = vrot.slane %v5868, 4
    %v5870 = vmax.f32 %v5868, %v5869
    %v5871 = vrot.slane %v5870, 2
    %v5872 = vmax.f32 %v5870, %v5871
    %v5873 = vrot.slane %v5872, 1
    %v5874 = vmax.f32 %v5872, %v5873
    %v5875 = vmax.f32 %v5351, %v5355
    %v5876 = vmax.f32 %v5875, %v5361
    %v5877 = vmax.f32 %v5876, %v5365
    %v5878 = vmax.f32 %v5877, %v5371
    %v5879 = vmax.f32 %v5878, %v5375
    %v5880 = vmax.f32 %v5879, %v5381
    %v5881 = vmax.f32 %v5880, %v5385
    %v5882 = vmax.f32 %v5881, %v5391
    %v5883 = vmax.f32 %v5882, %v5395
    %v5884 = vmax.f32 %v5883, %v5401
    %v5885 = vmax.f32 %v5884, %v5405
    %v5886 = vmax.f32 %v5885, %v5411
    %v5887 = vmax.f32 %v5886, %v5415
    %v5888 = vmax.f32 %v5887, %v5421
    %v5889 = vmax.f32 %v5888, %v5425
    %v5890 = vrot.slane %v5889, 4
    %v5891 = vmax.f32 %v5889, %v5890
    %v5892 = vrot.slane %v5891, 2
    %v5893 = vmax.f32 %v5891, %v5892
    %v5894 = vrot.slane %v5893, 1
    %v5895 = vmax.f32 %v5893, %v5894
    %v5896 = vmax.f32 %v5353, %v5357
    %v5897 = vmax.f32 %v5896, %v5363
    %v5898 = vmax.f32 %v5897, %v5367
    %v5899 = vmax.f32 %v5898, %v5373
    %v5900 = vmax.f32 %v5899, %v5377
    %v5901 = vmax.f32 %v5900, %v5383
    %v5902 = vmax.f32 %v5901, %v5387
    %v5903 = vmax.f32 %v5902, %v5393
    %v5904 = vmax.f32 %v5903, %v5397
    %v5905 = vmax.f32 %v5904, %v5403
    %v5906 = vmax.f32 %v5905, %v5407
    %v5907 = vmax.f32 %v5906, %v5413
    %v5908 = vmax.f32 %v5907, %v5417
    %v5909 = vmax.f32 %v5908, %v5423
    %v5910 = vmax.f32 %v5909, %v5427
    %v5911 = vrot.slane %v5910, 4
    %v5912 = vmax.f32 %v5910, %v5911
    %v5913 = vrot.slane %v5912, 2
    %v5914 = vmax.f32 %v5912, %v5913
    %v5915 = vrot.slane %v5914, 1
    %v5916 = vmax.f32 %v5914, %v5915
    %v5917 = vmax.f32 %v5431, %v5435
    %v5918 = vmax.f32 %v5917, %v5441
    %v5919 = vmax.f32 %v5918, %v5445
    %v5920 = vmax.f32 %v5919, %v5451
    %v5921 = vmax.f32 %v5920, %v5455
    %v5922 = vmax.f32 %v5921, %v5461
    %v5923 = vmax.f32 %v5922, %v5465
    %v5924 = vmax.f32 %v5923, %v5471
    %v5925 = vmax.f32 %v5924, %v5475
    %v5926 = vmax.f32 %v5925, %v5481
    %v5927 = vmax.f32 %v5926, %v5485
    %v5928 = vmax.f32 %v5927, %v5491
    %v5929 = vmax.f32 %v5928, %v5495
    %v5930 = vmax.f32 %v5929, %v5501
    %v5931 = vmax.f32 %v5930, %v5505
    %v5932 = vrot.slane %v5931, 4
    %v5933 = vmax.f32 %v5931, %v5932
    %v5934 = vrot.slane %v5933, 2
    %v5935 = vmax.f32 %v5933, %v5934
    %v5936 = vrot.slane %v5935, 1
    %v5937 = vmax.f32 %v5935, %v5936
    %v5938 = vmax.f32 %v5433, %v5437
    %v5939 = vmax.f32 %v5938, %v5443
    %v5940 = vmax.f32 %v5939, %v5447
    %v5941 = vmax.f32 %v5940, %v5453
    %v5942 = vmax.f32 %v5941, %v5457
    %v5943 = vmax.f32 %v5942, %v5463
    %v5944 = vmax.f32 %v5943, %v5467
    %v5945 = vmax.f32 %v5944, %v5473
    %v5946 = vmax.f32 %v5945, %v5477
    %v5947 = vmax.f32 %v5946, %v5483
    %v5948 = vmax.f32 %v5947, %v5487
    %v5949 = vmax.f32 %v5948, %v5493
    %v5950 = vmax.f32 %v5949, %v5497
    %v5951 = vmax.f32 %v5950, %v5503
    %v5952 = vmax.f32 %v5951, %v5507
    %v5953 = vrot.slane %v5952, 4
    %v5954 = vmax.f32 %v5952, %v5953
    %v5955 = vrot.slane %v5954, 2
    %v5956 = vmax.f32 %v5954, %v5955
    %v5957 = vrot.slane %v5956, 1
    %v5958 = vmax.f32 %v5956, %v5957
    %v5959 = vmax.f32 %v5511, %v5515
    %v5960 = vmax.f32 %v5959, %v5521
    %v5961 = vmax.f32 %v5960, %v5525
    %v5962 = vmax.f32 %v5961, %v5531
    %v5963 = vmax.f32 %v5962, %v5535
    %v5964 = vmax.f32 %v5963, %v5541
    %v5965 = vmax.f32 %v5964, %v5545
    %v5966 = vmax.f32 %v5965, %v5551
    %v5967 = vmax.f32 %v5966, %v5555
    %v5968 = vmax.f32 %v5967, %v5561
    %v5969 = vmax.f32 %v5968, %v5565
    %v5970 = vmax.f32 %v5969, %v5571
    %v5971 = vmax.f32 %v5970, %v5575
    %v5972 = vmax.f32 %v5971, %v5581
    %v5973 = vmax.f32 %v5972, %v5585
    %v5974 = vrot.slane %v5973, 4
    %v5975 = vmax.f32 %v5973, %v5974
    %v5976 = vrot.slane %v5975, 2
    %v5977 = vmax.f32 %v5975, %v5976
    %v5978 = vrot.slane %v5977, 1
    %v5979 = vmax.f32 %v5977, %v5978
    %v5980 = vmax.f32 %v5513, %v5517
    %v5981 = vmax.f32 %v5980, %v5523
    %v5982 = vmax.f32 %v5981, %v5527
    %v5983 = vmax.f32 %v5982, %v5533
    %v5984 = vmax.f32 %v5983, %v5537
    %v5985 = vmax.f32 %v5984, %v5543
    %v5986 = vmax.f32 %v5985, %v5547
    %v5987 = vmax.f32 %v5986, %v5553
    %v5988 = vmax.f32 %v5987, %v5557
    %v5989 = vmax.f32 %v5988, %v5563
    %v5990 = vmax.f32 %v5989, %v5567
    %v5991 = vmax.f32 %v5990, %v5573
    %v5992 = vmax.f32 %v5991, %v5577
    %v5993 = vmax.f32 %v5992, %v5583
    %v5994 = vmax.f32 %v5993, %v5587
    %v5995 = vrot.slane %v5994, 4
    %v5996 = vmax.f32 %v5994, %v5995
    %v5997 = vrot.slane %v5996, 2
    %v5998 = vmax.f32 %v5996, %v5997
    %v5999 = vrot.slane %v5998, 1
    %v6000 = vmax.f32 %v5998, %v5999
    %v6001 = vmax.f32 %v5591, %v5595
    %v6002 = vmax.f32 %v6001, %v5601
    %v6003 = vmax.f32 %v6002, %v5605
    %v6004 = vmax.f32 %v6003, %v5611
    %v6005 = vmax.f32 %v6004, %v5615
    %v6006 = vmax.f32 %v6005, %v5621
    %v6007 = vmax.f32 %v6006, %v5625
    %v6008 = vmax.f32 %v6007, %v5631
    %v6009 = vmax.f32 %v6008, %v5635
    %v6010 = vmax.f32 %v6009, %v5641
    %v6011 = vmax.f32 %v6010, %v5645
    %v6012 = vmax.f32 %v6011, %v5651
    %v6013 = vmax.f32 %v6012, %v5655
    %v6014 = vmax.f32 %v6013, %v5661
    %v6015 = vmax.f32 %v6014, %v5665
    %v6016 = vrot.slane %v6015, 4
    %v6017 = vmax.f32 %v6015, %v6016
    %v6018 = vrot.slane %v6017, 2
    %v6019 = vmax.f32 %v6017, %v6018
    %v6020 = vrot.slane %v6019, 1
    %v6021 = vmax.f32 %v6019, %v6020
    %v6022 = vmax.f32 %v5593, %v5597
    %v6023 = vmax.f32 %v6022, %v5603
    %v6024 = vmax.f32 %v6023, %v5607
    %v6025 = vmax.f32 %v6024, %v5613
    %v6026 = vmax.f32 %v6025, %v5617
    %v6027 = vmax.f32 %v6026, %v5623
    %v6028 = vmax.f32 %v6027, %v5627
    %v6029 = vmax.f32 %v6028, %v5633
    %v6030 = vmax.f32 %v6029, %v5637
    %v6031 = vmax.f32 %v6030, %v5643
    %v6032 = vmax.f32 %v6031, %v5647
    %v6033 = vmax.f32 %v6032, %v5653
    %v6034 = vmax.f32 %v6033, %v5657
    %v6035 = vmax.f32 %v6034, %v5663
    %v6036 = vmax.f32 %v6035, %v5667
    %v6037 = vrot.slane %v6036, 4
    %v6038 = vmax.f32 %v6036, %v6037
    %v6039 = vrot.slane %v6038, 2
    %v6040 = vmax.f32 %v6038, %v6039
    %v6041 = vrot.slane %v6040, 1
    %v6042 = vmax.f32 %v6040, %v6041
    %v6043 = vmax.f32 %v5671, %v5675
    %v6044 = vmax.f32 %v6043, %v5681
    %v6045 = vmax.f32 %v6044, %v5685
    %v6046 = vmax.f32 %v6045, %v5691
    %v6047 = vmax.f32 %v6046, %v5695
    %v6048 = vmax.f32 %v6047, %v5701
    %v6049 = vmax.f32 %v6048, %v5705
    %v6050 = vmax.f32 %v6049, %v5711
    %v6051 = vmax.f32 %v6050, %v5715
    %v6052 = vmax.f32 %v6051, %v5721
    %v6053 = vmax.f32 %v6052, %v5725
    %v6054 = vmax.f32 %v6053, %v5731
    %v6055 = vmax.f32 %v6054, %v5735
    %v6056 = vmax.f32 %v6055, %v5741
    %v6057 = vmax.f32 %v6056, %v5745
    %v6058 = vrot.slane %v6057, 4
    %v6059 = vmax.f32 %v6057, %v6058
    %v6060 = vrot.slane %v6059, 2
    %v6061 = vmax.f32 %v6059, %v6060
    %v6062 = vrot.slane %v6061, 1
    %v6063 = vmax.f32 %v6061, %v6062
    %v6064 = vmax.f32 %v5673, %v5677
    %v6065 = vmax.f32 %v6064, %v5683
    %v6066 = vmax.f32 %v6065, %v5687
    %v6067 = vmax.f32 %v6066, %v5693
    %v6068 = vmax.f32 %v6067, %v5697
    %v6069 = vmax.f32 %v6068, %v5703
    %v6070 = vmax.f32 %v6069, %v5707
    %v6071 = vmax.f32 %v6070, %v5713
    %v6072 = vmax.f32 %v6071, %v5717
    %v6073 = vmax.f32 %v6072, %v5723
    %v6074 = vmax.f32 %v6073, %v5727
    %v6075 = vmax.f32 %v6074, %v5733
    %v6076 = vmax.f32 %v6075, %v5737
    %v6077 = vmax.f32 %v6076, %v5743
    %v6078 = vmax.f32 %v6077, %v5747
    %v6079 = vrot.slane %v6078, 4
    %v6080 = vmax.f32 %v6078, %v6079
    %v6081 = vrot.slane %v6080, 2
    %v6082 = vmax.f32 %v6080, %v6081
    %v6083 = vrot.slane %v6082, 1
    %v6084 = vmax.f32 %v6082, %v6083
    %v6085 = vld [vmem:[%s7 + $0x10] sm:$0xff]
    %v6086 = vld [vmem:[%s7 + $0x30] sm:$0xff]
    %v6087 = vld [vmem:[%s7 + $0x50] sm:$0xff]
    %v6088 = vld [vmem:[%s7 + $0x70] sm:$0xff]
    %v6089 = vld [vmem:[%s7 + $0x90] sm:$0xff]
    %v6090 = vld [vmem:[%s7 + $0xb0] sm:$0xff]
    %v6091 = vld [vmem:[%s7 + $0xd0] sm:$0xff]
    %v6092 = vld [vmem:[%s7 + $0xf0] sm:$0xff]
    %v6093 = vld [vmem:[%s7 + $0x110] sm:$0xff]
    %v6094 = vld [vmem:[%s7 + $0x130] sm:$0xff]
    %v6095 = vld [vmem:[%s7 + $0x150] sm:$0xff]
    %v6096 = vld [vmem:[%s7 + $0x170] sm:$0xff]
    %v6097 = vld [vmem:[%s7 + $0x190] sm:$0xff]
    %v6098 = vld [vmem:[%s7 + $0x1b0] sm:$0xff]
    %v6099 = vld [vmem:[%s7 + $0x1d0] sm:$0xff]
    %v6100 = vld [vmem:[%s7 + $0x1f0] sm:$0xff]
    %v6101 = vld [vmem:[%s7 + $0x210] sm:$0xff]
    %v6102 = vld [vmem:[%s7 + $0x230] sm:$0xff]
    %v6103 = vld [vmem:[%s7 + $0x250] sm:$0xff]
    %v6104 = vld [vmem:[%s7 + $0x270] sm:$0xff]
    %v6105 = vld [vmem:[%s7 + $0x290] sm:$0xff]
    %v6106 = vld [vmem:[%s7 + $0x2b0] sm:$0xff]
    %v6107 = vld [vmem:[%s7 + $0x2d0] sm:$0xff]
    %v6108 = vld [vmem:[%s7 + $0x2f0] sm:$0xff]
    %v6109 = vld [vmem:[%s7 + $0x310] sm:$0xff]
    %v6110 = vld [vmem:[%s7 + $0x330] sm:$0xff]
    %v6111 = vld [vmem:[%s7 + $0x350] sm:$0xff]
    %v6112 = vld [vmem:[%s7 + $0x370] sm:$0xff]
    %v6113 = vld [vmem:[%s7 + $0x390] sm:$0xff]
    %v6114 = vld [vmem:[%s7 + $0x3b0] sm:$0xff]
    %v6115 = vld [vmem:[%s7 + $0x3d0] sm:$0xff]
    %v6116 = vld [vmem:[%s7 + $0x3f0] sm:$0xff]
    %v6117 = vld [vmem:[%s8 + $0x4] sm:$0x3]
    %v6119 = vlaneseq
    %v6120 = vshrl.u32 %v6119, 7
    %v6121 = vsub.s32 0, %v6120
    %v6122 = vrot.slane %v6117, %v6121
    %v6123 = vlaneseq
    %v6124 = vshrl.u32 %v6123, 7
    %v6125 = vsub.s32 1, %v6124
    %v6126 = vrot.slane %v6117, %v6125
    %v6161 = vunpack.c.l.b16 %v6085
    %v6162 = vunpack.c.h.b16 %v6085
    %v6163 = vunpack.c.l.b16 %v6086
    %v6164 = vunpack.c.h.b16 %v6086
    %v6165 = vunpack.c.l.b16 %v6087
    %v6166 = vunpack.c.h.b16 %v6087
    %v6167 = vunpack.c.l.b16 %v6088
    %v6168 = vunpack.c.h.b16 %v6088
    %v6169 = vunpack.c.l.b16 %v6089
    %v6170 = vunpack.c.h.b16 %v6089
    %v6171 = vunpack.c.l.b16 %v6090
    %v6172 = vunpack.c.h.b16 %v6090
    %v6173 = vunpack.c.l.b16 %v6091
    %v6174 = vunpack.c.h.b16 %v6091
    %v6175 = vunpack.c.l.b16 %v6092
    %v6176 = vunpack.c.h.b16 %v6092
    %v6177 = vunpack.c.l.b16 %v6093
    %v6178 = vunpack.c.h.b16 %v6093
    %v6179 = vunpack.c.l.b16 %v6094
    %v6180 = vunpack.c.h.b16 %v6094
    %v6181 = vunpack.c.l.b16 %v6095
    %v6182 = vunpack.c.h.b16 %v6095
    %v6183 = vunpack.c.l.b16 %v6096
    %v6184 = vunpack.c.h.b16 %v6096
    %v6185 = vunpack.c.l.b16 %v6097
    %v6186 = vunpack.c.h.b16 %v6097
    %v6187 = vunpack.c.l.b16 %v6098
    %v6188 = vunpack.c.h.b16 %v6098
    %v6189 = vunpack.c.l.b16 %v6099
    %v6190 = vunpack.c.h.b16 %v6099
    %v6191 = vunpack.c.l.b16 %v6100
    %v6192 = vunpack.c.h.b16 %v6100
    %v6193 = vunpack.c.l.b16 %v6101
    %v6194 = vunpack.c.h.b16 %v6101
    %v6195 = vunpack.c.l.b16 %v6102
    %v6196 = vunpack.c.h.b16 %v6102
    %v6197 = vunpack.c.l.b16 %v6103
    %v6198 = vunpack.c.h.b16 %v6103
    %v6199 = vunpack.c.l.b16 %v6104
    %v6200 = vunpack.c.h.b16 %v6104
    %v6201 = vunpack.c.l.b16 %v6105
    %v6202 = vunpack.c.h.b16 %v6105
    %v6203 = vunpack.c.l.b16 %v6106
    %v6204 = vunpack.c.h.b16 %v6106
    %v6205 = vunpack.c.l.b16 %v6107
    %v6206 = vunpack.c.h.b16 %v6107
    %v6207 = vunpack.c.l.b16 %v6108
    %v6208 = vunpack.c.h.b16 %v6108
    %v6209 = vunpack.c.l.b16 %v6109
    %v6210 = vunpack.c.h.b16 %v6109
    %v6211 = vunpack.c.l.b16 %v6110
    %v6212 = vunpack.c.h.b16 %v6110
    %v6213 = vunpack.c.l.b16 %v6111
    %v6214 = vunpack.c.h.b16 %v6111
    %v6215 = vunpack.c.l.b16 %v6112
    %v6216 = vunpack.c.h.b16 %v6112
    %v6217 = vunpack.c.l.b16 %v6113
    %v6218 = vunpack.c.h.b16 %v6113
    %v6219 = vunpack.c.l.b16 %v6114
    %v6220 = vunpack.c.h.b16 %v6114
    %v6221 = vunpack.c.l.b16 %v6115
    %v6222 = vunpack.c.h.b16 %v6115
    %v6223 = vunpack.c.l.b16 %v6116
    %v6224 = vunpack.c.h.b16 %v6116
    %v6225 = vpack.c.b16 %v6163, %v6161
    %v6226 = vpack.c.b16 %v6164, %v6162
    %v6227 = vpack.c.b16 %v6167, %v6165
    %v6228 = vpack.c.b16 %v6168, %v6166
    %v6229 = vpack.c.b16 %v6171, %v6169
    %v6230 = vpack.c.b16 %v6172, %v6170
    %v6231 = vpack.c.b16 %v6175, %v6173
    %v6232 = vpack.c.b16 %v6176, %v6174
    %v6233 = vpack.c.b16 %v6179, %v6177
    %v6234 = vpack.c.b16 %v6180, %v6178
    %v6235 = vpack.c.b16 %v6183, %v6181
    %v6236 = vpack.c.b16 %v6184, %v6182
    %v6237 = vpack.c.b16 %v6187, %v6185
    %v6238 = vpack.c.b16 %v6188, %v6186
    %v6239 = vpack.c.b16 %v6191, %v6189
    %v6240 = vpack.c.b16 %v6192, %v6190
    %v6241 = vpack.c.b16 %v6195, %v6193
    %v6242 = vpack.c.b16 %v6196, %v6194
    %v6243 = vpack.c.b16 %v6199, %v6197
    %v6244 = vpack.c.b16 %v6200, %v6198
    %v6245 = vpack.c.b16 %v6203, %v6201
    %v6246 = vpack.c.b16 %v6204, %v6202
    %v6247 = vpack.c.b16 %v6207, %v6205
    %v6248 = vpack.c.b16 %v6208, %v6206
    %v6249 = vpack.c.b16 %v6211, %v6209
    %v6250 = vpack.c.b16 %v6212, %v6210
    %v6251 = vpack.c.b16 %v6215, %v6213
    %v6252 = vpack.c.b16 %v6216, %v6214
    %v6253 = vpack.c.b16 %v6219, %v6217
    %v6254 = vpack.c.b16 %v6220, %v6218
    %v6255 = vpack.c.b16 %v6223, %v6221
    %v6256 = vpack.c.b16 %v6224, %v6222
    %6289 = vmatprep.subr.bf16.mxu0 %v6226
    %6290 = vmatpush1.bf16.msra.mxu0 %v6225
    %6291 = vmatprep.subr.bf16.mxu0 %v6228
    %6292 = vmatpush1.bf16.msra.mxu0 %v6227
    %6293 = vmatprep.subr.bf16.mxu0 %v6230
    %6294 = vmatpush1.bf16.msra.mxu0 %v6229
    %6295 = vmatprep.subr.bf16.mxu0 %v6232
    %6296 = vmatpush1.bf16.msra.mxu0 %v6231
    %6297 = vmatprep.subr.bf16.mxu0 %v6234
    %6298 = vmatpush1.bf16.msra.mxu0 %v6233
    %6299 = vmatprep.subr.bf16.mxu0 %v6236
    %6300 = vmatpush1.bf16.msra.mxu0 %v6235
    %6301 = vmatprep.subr.bf16.mxu0 %v6238
    %6302 = vmatpush1.bf16.msra.mxu0 %v6237
    %6303 = vmatprep.subr.bf16.mxu0 %v6240
    %6304 = vmatpush1.bf16.msra.mxu0 %v6239
    %6305 = vmatprep.subr.bf16.mxu0 %v6242
    %6306 = vmatpush1.bf16.msra.mxu0 %v6241
    %6307 = vmatprep.subr.bf16.mxu0 %v6244
    %6308 = vmatpush1.bf16.msra.mxu0 %v6243
    %6309 = vmatprep.subr.bf16.mxu0 %v6246
    %6310 = vmatpush1.bf16.msra.mxu0 %v6245
    %6311 = vmatprep.subr.bf16.mxu0 %v6248
    %6312 = vmatpush1.bf16.msra.mxu0 %v6247
    %6313 = vmatprep.subr.bf16.mxu0 %v6250
    %6314 = vmatpush1.bf16.msra.mxu0 %v6249
    %6315 = vmatprep.subr.bf16.mxu0 %v6252
    %6316 = vmatpush1.bf16.msra.mxu0 %v6251
    %6317 = vmatprep.subr.bf16.mxu0 %v6254
    %6318 = vmatpush1.bf16.msra.mxu0 %v6253
    %6319 = vmatprep.subr.bf16.mxu0 %v6256
    %6320 = vmatpush1.bf16.msra.mxu0 %v6255
    %6321 = vmatprep.mubr.bf16.mxu0 %v3532
    %6322 = vmatmul.mubr.bf16.gmra.mrb[0].mxu0 %v3531
    %v6323 = vpop.f32.mrb[0].mxu0
    %v6324 = vadd.f32 %v6122, %v6323
    %v6325 = vpop.f32.mrb[0].mxu0
    %v6326 = vadd.f32 %v6126, %v6325
    %v6327 = vpop.f32.mrb[0].mxu0
    %v6328 = vadd.f32 %v6122, %v6327
    %v6329 = vpop.f32.mrb[0].mxu0
    %v6330 = vadd.f32 %v6126, %v6329
    %6331 = vmatprep.mubr.bf16.mxu0 %v3534
    %6332 = vmatmul.mubr.bf16.gmra.mrb[0].mxu0 %v3533
    %v6333 = vpop.f32.mrb[0].mxu0
    %v6334 = vadd.f32 %v6122, %v6333
    %v6335 = vpop.f32.mrb[0].mxu0
    %v6336 = vadd.f32 %v6126, %v6335
    %v6337 = vpop.f32.mrb[0].mxu0
    %v6338 = vadd.f32 %v6122, %v6337
    %v6339 = vpop.f32.mrb[0].mxu0
    %v6340 = vadd.f32 %v6126, %v6339
    %6341 = vmatprep.mubr.bf16.mxu0 %v3536
    %6342 = vmatmul.mubr.bf16.gmra.mrb[0].mxu0 %v3535
    %v6343 = vpop.f32.mrb[0].mxu0
    %v6344 = vadd.f32 %v6122, %v6343
    %v6345 = vpop.f32.mrb[0].mxu0
    %v6346 = vadd.f32 %v6126, %v6345
    %v6347 = vpop.f32.mrb[0].mxu0
    %v6348 = vadd.f32 %v6122, %v6347
    %v6349 = vpop.f32.mrb[0].mxu0
    %v6350 = vadd.f32 %v6126, %v6349
    %6351 = vmatprep.mubr.bf16.mxu0 %v3538
    %6352 = vmatmul.mubr.bf16.gmra.mrb[0].mxu0 %v3537
    %v6353 = vpop.f32.mrb[0].mxu0
    %v6354 = vadd.f32 %v6122, %v6353
    %v6355 = vpop.f32.mrb[0].mxu0
    %v6356 = vadd.f32 %v6126, %v6355
    %v6357 = vpop.f32.mrb[0].mxu0
    %v6358 = vadd.f32 %v6122, %v6357
    %v6359 = vpop.f32.mrb[0].mxu0
    %v6360 = vadd.f32 %v6126, %v6359
    %6361 = vmatprep.mubr.bf16.mxu0 %v3540
    %6362 = vmatmul.mubr.bf16.gmra.mrb[0].mxu0 %v3539
    %v6363 = vpop.f32.mrb[0].mxu0
    %v6364 = vadd.f32 %v6122, %v6363
    %v6365 = vpop.f32.mrb[0].mxu0
    %v6366 = vadd.f32 %v6126, %v6365
    %v6367 = vpop.f32.mrb[0].mxu0
    %v6368 = vadd.f32 %v6122, %v6367
    %v6369 = vpop.f32.mrb[0].mxu0
    %v6370 = vadd.f32 %v6126, %v6369
    %6371 = vmatprep.mubr.bf16.mxu0 %v3542
    %6372 = vmatmul.mubr.bf16.gmra.mrb[0].mxu0 %v3541
    %v6373 = vpop.f32.mrb[0].mxu0
    %v6374 = vadd.f32 %v6122, %v6373
    %v6375 = vpop.f32.mrb[0].mxu0
    %v6376 = vadd.f32 %v6126, %v6375
    %v6377 = vpop.f32.mrb[0].mxu0
    %v6378 = vadd.f32 %v6122, %v6377
    %v6379 = vpop.f32.mrb[0].mxu0
    %v6380 = vadd.f32 %v6126, %v6379
    %6381 = vmatprep.mubr.bf16.mxu0 %v3544
    %6382 = vmatmul.mubr.bf16.gmra.mrb[0].mxu0 %v3543
    %v6383 = vpop.f32.mrb[0].mxu0
    %v6384 = vadd.f32 %v6122, %v6383
    %v6385 = vpop.f32.mrb[0].mxu0
    %v6386 = vadd.f32 %v6126, %v6385
    %v6387 = vpop.f32.mrb[0].mxu0
    %v6388 = vadd.f32 %v6122, %v6387
    %v6389 = vpop.f32.mrb[0].mxu0
    %v6390 = vadd.f32 %v6126, %v6389
    %6391 = vmatprep.mubr.bf16.mxu0 %v3546
    %6392 = vmatmul.mubr.bf16.gmra.mrb[0].mxu0 %v3545
    %v6393 = vpop.f32.mrb[0].mxu0
    %v6394 = vadd.f32 %v6122, %v6393
    %v6395 = vpop.f32.mrb[0].mxu0
    %v6396 = vadd.f32 %v6126, %v6395
    %v6397 = vpop.f32.mrb[0].mxu0
    %v6398 = vadd.f32 %v6122, %v6397
    %v6399 = vpop.f32.mrb[0].mxu0
    %v6400 = vadd.f32 %v6126, %v6399
    %6401 = vmatprep.mubr.bf16.mxu0 %v3548
    %6402 = vmatmul.mubr.bf16.gmra.mrb[0].mxu0 %v3547
    %v6403 = vpop.f32.mrb[0].mxu0
    %v6404 = vadd.f32 %v6122, %v6403
    %v6405 = vpop.f32.mrb[0].mxu0
    %v6406 = vadd.f32 %v6126, %v6405
    %v6407 = vpop.f32.mrb[0].mxu0
    %v6408 = vadd.f32 %v6122, %v6407
    %v6409 = vpop.f32.mrb[0].mxu0
    %v6410 = vadd.f32 %v6126, %v6409
    %6411 = vmatprep.mubr.bf16.mxu0 %v3550
    %6412 = vmatmul.mubr.bf16.gmra.mrb[0].mxu0 %v3549
    %v6413 = vpop.f32.mrb[0].mxu0
    %v6414 = vadd.f32 %v6122, %v6413
    %v6415 = vpop.f32.mrb[0].mxu0
    %v6416 = vadd.f32 %v6126, %v6415
    %v6417 = vpop.f32.mrb[0].mxu0
    %v6418 = vadd.f32 %v6122, %v6417
    %v6419 = vpop.f32.mrb[0].mxu0
    %v6420 = vadd.f32 %v6126, %v6419
    %6421 = vmatprep.mubr.bf16.mxu0 %v3552
    %6422 = vmatmul.mubr.bf16.gmra.mrb[0].mxu0 %v3551
    %v6423 = vpop.f32.mrb[0].mxu0
    %v6424 = vadd.f32 %v6122, %v6423
    %v6425 = vpop.f32.mrb[0].mxu0
    %v6426 = vadd.f32 %v6126, %v6425
    %v6427 = vpop.f32.mrb[0].mxu0
    %v6428 = vadd.f32 %v6122, %v6427
    %v6429 = vpop.f32.mrb[0].mxu0
    %v6430 = vadd.f32 %v6126, %v6429
    %6431 = vmatprep.mubr.bf16.mxu0 %v3554
    %6432 = vmatmul.mubr.bf16.gmra.mrb[0].mxu0 %v3553
    %v6433 = vpop.f32.mrb[0].mxu0
    %v6434 = vadd.f32 %v6122, %v6433
    %v6435 = vpop.f32.mrb[0].mxu0
    %v6436 = vadd.f32 %v6126, %v6435
    %v6437 = vpop.f32.mrb[0].mxu0
    %v6438 = vadd.f32 %v6122, %v6437
    %v6439 = vpop.f32.mrb[0].mxu0
    %v6440 = vadd.f32 %v6126, %v6439
    %6441 = vmatprep.mubr.bf16.mxu0 %v3556
    %6442 = vmatmul.mubr.bf16.gmra.mrb[0].mxu0 %v3555
    %v6443 = vpop.f32.mrb[0].mxu0
    %v6444 = vadd.f32 %v6122, %v6443
    %v6445 = vpop.f32.mrb[0].mxu0
    %v6446 = vadd.f32 %v6126, %v6445
    %v6447 = vpop.f32.mrb[0].mxu0
    %v6448 = vadd.f32 %v6122, %v6447
    %v6449 = vpop.f32.mrb[0].mxu0
    %v6450 = vadd.f32 %v6126, %v6449
    %6451 = vmatprep.mubr.bf16.mxu0 %v3558
    %6452 = vmatmul.mubr.bf16.gmra.mrb[0].mxu0 %v3557
    %v6453 = vpop.f32.mrb[0].mxu0
    %v6454 = vadd.f32 %v6122, %v6453
    %v6455 = vpop.f32.mrb[0].mxu0
    %v6456 = vadd.f32 %v6126, %v6455
    %v6457 = vpop.f32.mrb[0].mxu0
    %v6458 = vadd.f32 %v6122, %v6457
    %v6459 = vpop.f32.mrb[0].mxu0
    %v6460 = vadd.f32 %v6126, %v6459
    %6461 = vmatprep.mubr.bf16.mxu0 %v3560
    %6462 = vmatmul.mubr.bf16.gmra.mrb[0].mxu0 %v3559
    %v6463 = vpop.f32.mrb[0].mxu0
    %v6464 = vadd.f32 %v6122, %v6463
    %v6465 = vpop.f32.mrb[0].mxu0
    %v6466 = vadd.f32 %v6126, %v6465
    %v6467 = vpop.f32.mrb[0].mxu0
    %v6468 = vadd.f32 %v6122, %v6467
    %v6469 = vpop.f32.mrb[0].mxu0
    %v6470 = vadd.f32 %v6126, %v6469
    %6471 = vmatprep.mubr.bf16.mxu0 %v3562
    %6472 = vmatmul.mubr.bf16.gmra.mrb[0].mxu0 %v3561
    %v6473 = vpop.f32.mrb[0].mxu0
    %v6474 = vadd.f32 %v6122, %v6473
    %v6475 = vpop.f32.mrb[0].mxu0
    %v6476 = vadd.f32 %v6126, %v6475
    %v6477 = vpop.f32.mrb[0].mxu0
    %v6478 = vadd.f32 %v6122, %v6477
    %v6479 = vpop.f32.mrb[0].mxu0
    %v6480 = vadd.f32 %v6126, %v6479
    %6481 = vmatprep.mubr.bf16.mxu0 %v3564
    %6482 = vmatmul.mubr.bf16.gmra.mrb[0].mxu0 %v3563
    %v6483 = vpop.f32.mrb[0].mxu0
    %v6484 = vadd.f32 %v6122, %v6483
    %v6485 = vpop.f32.mrb[0].mxu0
    %v6486 = vadd.f32 %v6126, %v6485
    %v6487 = vpop.f32.mrb[0].mxu0
    %v6488 = vadd.f32 %v6122, %v6487
    %v6489 = vpop.f32.mrb[0].mxu0
    %v6490 = vadd.f32 %v6126, %v6489
    %6491 = vmatprep.mubr.bf16.mxu0 %v3566
    %6492 = vmatmul.mubr.bf16.gmra.mrb[0].mxu0 %v3565
    %v6493 = vpop.f32.mrb[0].mxu0
    %v6494 = vadd.f32 %v6122, %v6493
    %v6495 = vpop.f32.mrb[0].mxu0
    %v6496 = vadd.f32 %v6126, %v6495
    %v6497 = vpop.f32.mrb[0].mxu0
    %v6498 = vadd.f32 %v6122, %v6497
    %v6499 = vpop.f32.mrb[0].mxu0
    %v6500 = vadd.f32 %v6126, %v6499
    %6501 = vmatprep.mubr.bf16.mxu0 %v3568
    %6502 = vmatmul.mubr.bf16.gmra.mrb[0].mxu0 %v3567
    %v6503 = vpop.f32.mrb[0].mxu0
    %v6504 = vadd.f32 %v6122, %v6503
    %v6505 = vpop.f32.mrb[0].mxu0
    %v6506 = vadd.f32 %v6126, %v6505
    %v6507 = vpop.f32.mrb[0].mxu0
    %v6508 = vadd.f32 %v6122, %v6507
    %v6509 = vpop.f32.mrb[0].mxu0
    %v6510 = vadd.f32 %v6126, %v6509
    %6511 = vmatprep.mubr.bf16.mxu0 %v3570
    %6512 = vmatmul.mubr.bf16.gmra.mrb[0].mxu0 %v3569
    %v6513 = vpop.f32.mrb[0].mxu0
    %v6514 = vadd.f32 %v6122, %v6513
    %v6515 = vpop.f32.mrb[0].mxu0
    %v6516 = vadd.f32 %v6126, %v6515
    %v6517 = vpop.f32.mrb[0].mxu0
    %v6518 = vadd.f32 %v6122, %v6517
    %v6519 = vpop.f32.mrb[0].mxu0
    %v6520 = vadd.f32 %v6126, %v6519
    %6521 = vmatprep.mubr.bf16.mxu0 %v3572
    %6522 = vmatmul.mubr.bf16.gmra.mrb[0].mxu0 %v3571
    %v6523 = vpop.f32.mrb[0].mxu0
    %v6524 = vadd.f32 %v6122, %v6523
    %v6525 = vpop.f32.mrb[0].mxu0
    %v6526 = vadd.f32 %v6126, %v6525
    %v6527 = vpop.f32.mrb[0].mxu0
    %v6528 = vadd.f32 %v6122, %v6527
    %v6529 = vpop.f32.mrb[0].mxu0
    %v6530 = vadd.f32 %v6126, %v6529
    %6531 = vmatprep.mubr.bf16.mxu0 %v3574
    %6532 = vmatmul.mubr.bf16.gmra.mrb[0].mxu0 %v3573
    %v6533 = vpop.f32.mrb[0].mxu0
    %v6534 = vadd.f32 %v6122, %v6533
    %v6535 = vpop.f32.mrb[0].mxu0
    %v6536 = vadd.f32 %v6126, %v6535
    %v6537 = vpop.f32.mrb[0].mxu0
    %v6538 = vadd.f32 %v6122, %v6537
    %v6539 = vpop.f32.mrb[0].mxu0
    %v6540 = vadd.f32 %v6126, %v6539
    %6541 = vmatprep.mubr.bf16.mxu0 %v3576
    %6542 = vmatmul.mubr.bf16.gmra.mrb[0].mxu0 %v3575
    %v6543 = vpop.f32.mrb[0].mxu0
    %v6544 = vadd.f32 %v6122, %v6543
    %v6545 = vpop.f32.mrb[0].mxu0
    %v6546 = vadd.f32 %v6126, %v6545
    %v6547 = vpop.f32.mrb[0].mxu0
    %v6548 = vadd.f32 %v6122, %v6547
    %v6549 = vpop.f32.mrb[0].mxu0
    %v6550 = vadd.f32 %v6126, %v6549
    %6551 = vmatprep.mubr.bf16.mxu0 %v3578
    %6552 = vmatmul.mubr.bf16.gmra.mrb[0].mxu0 %v3577
    %v6553 = vpop.f32.mrb[0].mxu0
    %v6554 = vadd.f32 %v6122, %v6553
    %v6555 = vpop.f32.mrb[0].mxu0
    %v6556 = vadd.f32 %v6126, %v6555
    %v6557 = vpop.f32.mrb[0].mxu0
    %v6558 = vadd.f32 %v6122, %v6557
    %v6559 = vpop.f32.mrb[0].mxu0
    %v6560 = vadd.f32 %v6126, %v6559
    %6561 = vmatprep.mubr.bf16.mxu0 %v3580
    %6562 = vmatmul.mubr.bf16.gmra.mrb[0].mxu0 %v3579
    %v6563 = vpop.f32.mrb[0].mxu0
    %v6564 = vadd.f32 %v6122, %v6563
    %v6565 = vpop.f32.mrb[0].mxu0
    %v6566 = vadd.f32 %v6126, %v6565
    %v6567 = vpop.f32.mrb[0].mxu0
    %v6568 = vadd.f32 %v6122, %v6567
    %v6569 = vpop.f32.mrb[0].mxu0
    %v6570 = vadd.f32 %v6126, %v6569
    %6571 = vmatprep.mubr.bf16.mxu0 %v3582
    %6572 = vmatmul.mubr.bf16.gmra.mrb[0].mxu0 %v3581
    %v6573 = vpop.f32.mrb[0].mxu0
    %v6574 = vadd.f32 %v6122, %v6573
    %v6575 = vpop.f32.mrb[0].mxu0
    %v6576 = vadd.f32 %v6126, %v6575
    %v6577 = vpop.f32.mrb[0].mxu0
    %v6578 = vadd.f32 %v6122, %v6577
    %v6579 = vpop.f32.mrb[0].mxu0
    %v6580 = vadd.f32 %v6126, %v6579
    %6581 = vmatprep.mubr.bf16.mxu0 %v3584
    %6582 = vmatmul.mubr.bf16.gmra.mrb[0].mxu0 %v3583
    %v6583 = vpop.f32.mrb[0].mxu0
    %v6584 = vadd.f32 %v6122, %v6583
    %v6585 = vpop.f32.mrb[0].mxu0
    %v6586 = vadd.f32 %v6126, %v6585
    %v6587 = vpop.f32.mrb[0].mxu0
    %v6588 = vadd.f32 %v6122, %v6587
    %v6589 = vpop.f32.mrb[0].mxu0
    %v6590 = vadd.f32 %v6126, %v6589
    %6591 = vmatprep.mubr.bf16.mxu0 %v3586
    %6592 = vmatmul.mubr.bf16.gmra.mrb[0].mxu0 %v3585
    %v6593 = vpop.f32.mrb[0].mxu0
    %v6594 = vadd.f32 %v6122, %v6593
    %v6595 = vpop.f32.mrb[0].mxu0
    %v6596 = vadd.f32 %v6126, %v6595
    %v6597 = vpop.f32.mrb[0].mxu0
    %v6598 = vadd.f32 %v6122, %v6597
    %v6599 = vpop.f32.mrb[0].mxu0
    %v6600 = vadd.f32 %v6126, %v6599
    %6601 = vmatprep.mubr.bf16.mxu0 %v3588
    %6602 = vmatmul.mubr.bf16.gmra.mrb[0].mxu0 %v3587
    %v6603 = vpop.f32.mrb[0].mxu0
    %v6604 = vadd.f32 %v6122, %v6603
    %v6605 = vpop.f32.mrb[0].mxu0
    %v6606 = vadd.f32 %v6126, %v6605
    %v6607 = vpop.f32.mrb[0].mxu0
    %v6608 = vadd.f32 %v6122, %v6607
    %v6609 = vpop.f32.mrb[0].mxu0
    %v6610 = vadd.f32 %v6126, %v6609
    %6611 = vmatprep.mubr.bf16.mxu0 %v3590
    %6612 = vmatmul.mubr.bf16.gmra.mrb[0].mxu0 %v3589
    %v6613 = vpop.f32.mrb[0].mxu0
    %v6614 = vadd.f32 %v6122, %v6613
    %v6615 = vpop.f32.mrb[0].mxu0
    %v6616 = vadd.f32 %v6126, %v6615
    %v6617 = vpop.f32.mrb[0].mxu0
    %v6618 = vadd.f32 %v6122, %v6617
    %v6619 = vpop.f32.mrb[0].mxu0
    %v6620 = vadd.f32 %v6126, %v6619
    %6621 = vmatprep.mubr.bf16.mxu0 %v3592
    %6622 = vmatmul.mubr.bf16.gmra.mrb[0].mxu0 %v3591
    %v6623 = vpop.f32.mrb[0].mxu0
    %v6624 = vadd.f32 %v6122, %v6623
    %v6625 = vpop.f32.mrb[0].mxu0
    %v6626 = vadd.f32 %v6126, %v6625
    %v6627 = vpop.f32.mrb[0].mxu0
    %v6628 = vadd.f32 %v6122, %v6627
    %v6629 = vpop.f32.mrb[0].mxu0
    %v6630 = vadd.f32 %v6126, %v6629
    %6631 = vmatprep.mubr.bf16.mxu0 %v3594
    %6632 = vmatmul.mubr.bf16.gmra.mrb[0].mxu0 %v3593
    %v6633 = vpop.f32.mrb[0].mxu0
    %v6634 = vadd.f32 %v6122, %v6633
    %v6635 = vpop.f32.mrb[0].mxu0
    %v6636 = vadd.f32 %v6126, %v6635
    %v6637 = vpop.f32.mrb[0].mxu0
    %v6638 = vadd.f32 %v6122, %v6637
    %v6639 = vpop.f32.mrb[0].mxu0
    %v6640 = vadd.f32 %v6126, %v6639
    %6641 = vmatprep.mubr.bf16.mxu0 %v3596
    %6642 = vmatmul.mubr.bf16.gmra.mrb[0].mxu0 %v3595
    %v6643 = vpop.f32.mrb[0].mxu0
    %v6644 = vadd.f32 %v6122, %v6643
    %v6645 = vpop.f32.mrb[0].mxu0
    %v6646 = vadd.f32 %v6126, %v6645
    %v6647 = vpop.f32.mrb[0].mxu0
    %v6648 = vadd.f32 %v6122, %v6647
    %v6649 = vpop.f32.mrb[0].mxu0
    %v6650 = vadd.f32 %v6126, %v6649
    %6651 = vmatprep.mubr.bf16.mxu0 %v3598
    %6652 = vmatmul.mubr.bf16.gmra.mrb[0].mxu0 %v3597
    %v6653 = vpop.f32.mrb[0].mxu0
    %v6654 = vadd.f32 %v6122, %v6653
    %v6655 = vpop.f32.mrb[0].mxu0
    %v6656 = vadd.f32 %v6126, %v6655
    %v6657 = vpop.f32.mrb[0].mxu0
    %v6658 = vadd.f32 %v6122, %v6657
    %v6659 = vpop.f32.mrb[0].mxu0
    %v6660 = vadd.f32 %v6126, %v6659
    %6661 = vmatprep.mubr.bf16.mxu0 %v3600
    %6662 = vmatmul.mubr.bf16.gmra.mrb[0].mxu0 %v3599
    %v6663 = vpop.f32.mrb[0].mxu0
    %v6664 = vadd.f32 %v6122, %v6663
    %v6665 = vpop.f32.mrb[0].mxu0
    %v6666 = vadd.f32 %v6126, %v6665
    %v6667 = vpop.f32.mrb[0].mxu0
    %v6668 = vadd.f32 %v6122, %v6667
    %v6669 = vpop.f32.mrb[0].mxu0
    %v6670 = vadd.f32 %v6126, %v6669
    %6671 = vmatprep.mubr.bf16.mxu0 %v3602
    %6672 = vmatmul.mubr.bf16.gmra.mrb[0].mxu0 %v3601
    %v6673 = vpop.f32.mrb[0].mxu0
    %v6674 = vadd.f32 %v6122, %v6673
    %v6675 = vpop.f32.mrb[0].mxu0
    %v6676 = vadd.f32 %v6126, %v6675
    %v6677 = vpop.f32.mrb[0].mxu0
    %v6678 = vadd.f32 %v6122, %v6677
    %v6679 = vpop.f32.mrb[0].mxu0
    %v6680 = vadd.f32 %v6126, %v6679
    %6681 = vmatprep.mubr.bf16.mxu0 %v3604
    %6682 = vmatmul.mubr.bf16.gmra.mrb[0].mxu0 %v3603
    %v6683 = vpop.f32.mrb[0].mxu0
    %v6684 = vadd.f32 %v6122, %v6683
    %v6685 = vpop.f32.mrb[0].mxu0
    %v6686 = vadd.f32 %v6126, %v6685
    %v6687 = vpop.f32.mrb[0].mxu0
    %v6688 = vadd.f32 %v6122, %v6687
    %v6689 = vpop.f32.mrb[0].mxu0
    %v6690 = vadd.f32 %v6126, %v6689
    %6691 = vmatprep.mubr.bf16.mxu0 %v3606
    %6692 = vmatmul.mubr.bf16.gmra.mrb[0].mxu0 %v3605
    %v6693 = vpop.f32.mrb[0].mxu0
    %v6694 = vadd.f32 %v6122, %v6693
    %v6695 = vpop.f32.mrb[0].mxu0
    %v6696 = vadd.f32 %v6126, %v6695
    %v6697 = vpop.f32.mrb[0].mxu0
    %v6698 = vadd.f32 %v6122, %v6697
    %v6699 = vpop.f32.mrb[0].mxu0
    %v6700 = vadd.f32 %v6126, %v6699
    %6701 = vmatprep.mubr.bf16.mxu0 %v3608
    %6702 = vmatmul.mubr.bf16.gmra.mrb[0].mxu0 %v3607
    %v6703 = vpop.f32.mrb[0].mxu0
    %v6704 = vadd.f32 %v6122, %v6703
    %v6705 = vpop.f32.mrb[0].mxu0
    %v6706 = vadd.f32 %v6126, %v6705
    %v6707 = vpop.f32.mrb[0].mxu0
    %v6708 = vadd.f32 %v6122, %v6707
    %v6709 = vpop.f32.mrb[0].mxu0
    %v6710 = vadd.f32 %v6126, %v6709
    %6711 = vmatprep.mubr.bf16.mxu0 %v3610
    %6712 = vmatmul.mubr.bf16.gmra.mrb[0].mxu0 %v3609
    %v6713 = vpop.f32.mrb[0].mxu0
    %v6714 = vadd.f32 %v6122, %v6713
    %v6715 = vpop.f32.mrb[0].mxu0
    %v6716 = vadd.f32 %v6126, %v6715
    %v6717 = vpop.f32.mrb[0].mxu0
    %v6718 = vadd.f32 %v6122, %v6717
    %v6719 = vpop.f32.mrb[0].mxu0
    %v6720 = vadd.f32 %v6126, %v6719
    %6721 = vmatprep.mubr.bf16.mxu0 %v3612
    %6722 = vmatmul.mubr.bf16.gmra.mrb[0].mxu0 %v3611
    %v6723 = vpop.f32.mrb[0].mxu0
    %v6724 = vadd.f32 %v6122, %v6723
    %v6725 = vpop.f32.mrb[0].mxu0
    %v6726 = vadd.f32 %v6126, %v6725
    %v6727 = vpop.f32.mrb[0].mxu0
    %v6728 = vadd.f32 %v6122, %v6727
    %v6729 = vpop.f32.mrb[0].mxu0
    %v6730 = vadd.f32 %v6126, %v6729
    %6731 = vmatprep.mubr.bf16.mxu0 %v3614
    %6732 = vmatmul.mubr.bf16.gmra.mrb[0].mxu0 %v3613
    %v6733 = vpop.f32.mrb[0].mxu0
    %v6734 = vadd.f32 %v6122, %v6733
    %v6735 = vpop.f32.mrb[0].mxu0
    %v6736 = vadd.f32 %v6126, %v6735
    %v6737 = vpop.f32.mrb[0].mxu0
    %v6738 = vadd.f32 %v6122, %v6737
    %v6739 = vpop.f32.mrb[0].mxu0
    %v6740 = vadd.f32 %v6126, %v6739
    %6741 = vmatprep.mubr.bf16.mxu0 %v3616
    %6742 = vmatmul.mubr.bf16.gmra.mrb[0].mxu0 %v3615
    %v6743 = vpop.f32.mrb[0].mxu0
    %v6744 = vadd.f32 %v6122, %v6743
    %v6745 = vpop.f32.mrb[0].mxu0
    %v6746 = vadd.f32 %v6126, %v6745
    %v6747 = vpop.f32.mrb[0].mxu0
    %v6748 = vadd.f32 %v6122, %v6747
    %v6749 = vpop.f32.mrb[0].mxu0
    %v6750 = vadd.f32 %v6126, %v6749
    %6751 = vmatprep.mubr.bf16.mxu0 %v3618
    %6752 = vmatmul.mubr.bf16.gmra.mrb[0].mxu0 %v3617
    %v6753 = vpop.f32.mrb[0].mxu0
    %v6754 = vadd.f32 %v6122, %v6753
    %v6755 = vpop.f32.mrb[0].mxu0
    %v6756 = vadd.f32 %v6126, %v6755
    %v6757 = vpop.f32.mrb[0].mxu0
    %v6758 = vadd.f32 %v6122, %v6757
    %v6759 = vpop.f32.mrb[0].mxu0
    %v6760 = vadd.f32 %v6126, %v6759
    %6761 = vmatprep.mubr.bf16.mxu0 %v3620
    %6762 = vmatmul.mubr.bf16.gmra.mrb[0].mxu0 %v3619
    %v6763 = vpop.f32.mrb[0].mxu0
    %v6764 = vadd.f32 %v6122, %v6763
    %v6765 = vpop.f32.mrb[0].mxu0
    %v6766 = vadd.f32 %v6126, %v6765
    %v6767 = vpop.f32.mrb[0].mxu0
    %v6768 = vadd.f32 %v6122, %v6767
    %v6769 = vpop.f32.mrb[0].mxu0
    %v6770 = vadd.f32 %v6126, %v6769
    %6771 = vmatprep.mubr.bf16.mxu0 %v3622
    %6772 = vmatmul.mubr.bf16.gmra.mrb[0].mxu0 %v3621
    %v6773 = vpop.f32.mrb[0].mxu0
    %v6774 = vadd.f32 %v6122, %v6773
    %v6775 = vpop.f32.mrb[0].mxu0
    %v6776 = vadd.f32 %v6126, %v6775
    %v6777 = vpop.f32.mrb[0].mxu0
    %v6778 = vadd.f32 %v6122, %v6777
    %v6779 = vpop.f32.mrb[0].mxu0
    %v6780 = vadd.f32 %v6126, %v6779
    %6781 = vmatprep.mubr.bf16.mxu0 %v3624
    %6782 = vmatmul.mubr.bf16.gmra.mrb[0].mxu0 %v3623
    %v6783 = vpop.f32.mrb[0].mxu0
    %v6784 = vadd.f32 %v6122, %v6783
    %v6785 = vpop.f32.mrb[0].mxu0
    %v6786 = vadd.f32 %v6126, %v6785
    %v6787 = vpop.f32.mrb[0].mxu0
    %v6788 = vadd.f32 %v6122, %v6787
    %v6789 = vpop.f32.mrb[0].mxu0
    %v6790 = vadd.f32 %v6126, %v6789
    %6791 = vmatprep.mubr.bf16.mxu0 %v3626
    %6792 = vmatmul.mubr.bf16.gmra.mrb[0].mxu0 %v3625
    %v6793 = vpop.f32.mrb[0].mxu0
    %v6794 = vadd.f32 %v6122, %v6793
    %v6795 = vpop.f32.mrb[0].mxu0
    %v6796 = vadd.f32 %v6126, %v6795
    %v6797 = vpop.f32.mrb[0].mxu0
    %v6798 = vadd.f32 %v6122, %v6797
    %v6799 = vpop.f32.mrb[0].mxu0
    %v6800 = vadd.f32 %v6126, %v6799
    %6801 = vmatprep.mubr.bf16.mxu0 %v3628
    %6802 = vmatmul.mubr.bf16.gmra.mrb[0].mxu0 %v3627
    %v6803 = vpop.f32.mrb[0].mxu0
    %v6804 = vadd.f32 %v6122, %v6803
    %v6805 = vpop.f32.mrb[0].mxu0
    %v6806 = vadd.f32 %v6126, %v6805
    %v6807 = vpop.f32.mrb[0].mxu0
    %v6808 = vadd.f32 %v6122, %v6807
    %v6809 = vpop.f32.mrb[0].mxu0
    %v6810 = vadd.f32 %v6126, %v6809
    %6811 = vmatprep.mubr.bf16.mxu0 %v3630
    %6812 = vmatmul.mubr.bf16.gmra.mrb[0].mxu0 %v3629
    %v6813 = vpop.f32.mrb[0].mxu0
    %v6814 = vadd.f32 %v6122, %v6813
    %v6815 = vpop.f32.mrb[0].mxu0
    %v6816 = vadd.f32 %v6126, %v6815
    %v6817 = vpop.f32.mrb[0].mxu0
    %v6818 = vadd.f32 %v6122, %v6817
    %v6819 = vpop.f32.mrb[0].mxu0
    %v6820 = vadd.f32 %v6126, %v6819
    %6821 = vmatprep.mubr.bf16.mxu0 %v3632
    %6822 = vmatmul.mubr.bf16.gmra.mrb[0].mxu0 %v3631
    %v6823 = vpop.f32.mrb[0].mxu0
    %v6824 = vadd.f32 %v6122, %v6823
    %v6825 = vpop.f32.mrb[0].mxu0
    %v6826 = vadd.f32 %v6126, %v6825
    %v6827 = vpop.f32.mrb[0].mxu0
    %v6828 = vadd.f32 %v6122, %v6827
    %v6829 = vpop.f32.mrb[0].mxu0
    %v6830 = vadd.f32 %v6126, %v6829
    %6831 = vmatprep.mubr.bf16.mxu0 %v3634
    %6832 = vmatmul.mubr.bf16.gmra.mrb[0].mxu0 %v3633
    %v6833 = vpop.f32.mrb[0].mxu0
    %v6834 = vadd.f32 %v6122, %v6833
    %v6835 = vpop.f32.mrb[0].mxu0
    %v6836 = vadd.f32 %v6126, %v6835
    %v6837 = vpop.f32.mrb[0].mxu0
    %v6838 = vadd.f32 %v6122, %v6837
    %v6839 = vpop.f32.mrb[0].mxu0
    %v6840 = vadd.f32 %v6126, %v6839
    %6841 = vmatprep.mubr.bf16.mxu0 %v3636
    %6842 = vmatmul.mubr.bf16.gmra.mrb[0].mxu0 %v3635
    %v6843 = vpop.f32.mrb[0].mxu0
    %v6844 = vadd.f32 %v6122, %v6843
    %v6845 = vpop.f32.mrb[0].mxu0
    %v6846 = vadd.f32 %v6126, %v6845
    %v6847 = vpop.f32.mrb[0].mxu0
    %v6848 = vadd.f32 %v6122, %v6847
    %v6849 = vpop.f32.mrb[0].mxu0
    %v6850 = vadd.f32 %v6126, %v6849
    %6851 = vmatprep.mubr.bf16.mxu0 %v3638
    %6852 = vmatmul.mubr.bf16.gmra.mrb[0].mxu0 %v3637
    %v6853 = vpop.f32.mrb[0].mxu0
    %v6854 = vadd.f32 %v6122, %v6853
    %v6855 = vpop.f32.mrb[0].mxu0
    %v6856 = vadd.f32 %v6126, %v6855
    %v6857 = vpop.f32.mrb[0].mxu0
    %v6858 = vadd.f32 %v6122, %v6857
    %v6859 = vpop.f32.mrb[0].mxu0
    %v6860 = vadd.f32 %v6126, %v6859
    %6861 = vmatprep.mubr.bf16.mxu0 %v3640
    %6862 = vmatmul.mubr.bf16.gmra.mrb[0].mxu0 %v3639
    %v6863 = vpop.f32.mrb[0].mxu0
    %v6864 = vadd.f32 %v6122, %v6863
    %v6865 = vpop.f32.mrb[0].mxu0
    %v6866 = vadd.f32 %v6126, %v6865
    %v6867 = vpop.f32.mrb[0].mxu0
    %v6868 = vadd.f32 %v6122, %v6867
    %v6869 = vpop.f32.mrb[0].mxu0
    %v6870 = vadd.f32 %v6126, %v6869
    %6871 = vmatprep.mubr.bf16.mxu0 %v3642
    %6872 = vmatmul.mubr.bf16.gmra.mrb[0].mxu0 %v3641
    %v6873 = vpop.f32.mrb[0].mxu0
    %v6874 = vadd.f32 %v6122, %v6873
    %v6875 = vpop.f32.mrb[0].mxu0
    %v6876 = vadd.f32 %v6126, %v6875
    %v6877 = vpop.f32.mrb[0].mxu0
    %v6878 = vadd.f32 %v6122, %v6877
    %v6879 = vpop.f32.mrb[0].mxu0
    %v6880 = vadd.f32 %v6126, %v6879
    %6881 = vmatprep.mubr.bf16.mxu0 %v3644
    %6882 = vmatmul.mubr.bf16.gmra.mrb[0].mxu0 %v3643
    %v6883 = vpop.f32.mrb[0].mxu0
    %v6884 = vadd.f32 %v6122, %v6883
    %v6885 = vpop.f32.mrb[0].mxu0
    %v6886 = vadd.f32 %v6126, %v6885
    %v6887 = vpop.f32.mrb[0].mxu0
    %v6888 = vadd.f32 %v6122, %v6887
    %v6889 = vpop.f32.mrb[0].mxu0
    %v6890 = vadd.f32 %v6126, %v6889
    %6891 = vmatprep.mubr.bf16.mxu0 %v3646
    %6892 = vmatmul.mubr.bf16.gmra.mrb[0].mxu0 %v3645
    %v6893 = vpop.f32.mrb[0].mxu0
    %v6894 = vadd.f32 %v6122, %v6893
    %v6895 = vpop.f32.mrb[0].mxu0
    %v6896 = vadd.f32 %v6126, %v6895
    %v6897 = vpop.f32.mrb[0].mxu0
    %v6898 = vadd.f32 %v6122, %v6897
    %v6899 = vpop.f32.mrb[0].mxu0
    %v6900 = vadd.f32 %v6126, %v6899
    %6901 = vmatprep.mubr.bf16.mxu0 %v3648
    %6902 = vmatmul.mubr.bf16.gmra.mrb[0].mxu0 %v3647
    %v6903 = vpop.f32.mrb[0].mxu0
    %v6904 = vadd.f32 %v6122, %v6903
    %v6905 = vpop.f32.mrb[0].mxu0
    %v6906 = vadd.f32 %v6126, %v6905
    %v6907 = vpop.f32.mrb[0].mxu0
    %v6908 = vadd.f32 %v6122, %v6907
    %v6909 = vpop.f32.mrb[0].mxu0
    %v6910 = vadd.f32 %v6126, %v6909
    %6911 = vmatprep.mubr.bf16.mxu0 %v3650
    %6912 = vmatmul.mubr.bf16.gmra.mrb[0].mxu0 %v3649
    %v6913 = vpop.f32.mrb[0].mxu0
    %v6914 = vadd.f32 %v6122, %v6913
    %v6915 = vpop.f32.mrb[0].mxu0
    %v6916 = vadd.f32 %v6126, %v6915
    %v6917 = vpop.f32.mrb[0].mxu0
    %v6918 = vadd.f32 %v6122, %v6917
    %v6919 = vpop.f32.mrb[0].mxu0
    %v6920 = vadd.f32 %v6126, %v6919
    %6921 = vmatprep.mubr.bf16.mxu0 %v3652
    %6922 = vmatmul.mubr.bf16.gmra.mrb[0].mxu0 %v3651
    %v6923 = vpop.f32.mrb[0].mxu0
    %v6924 = vadd.f32 %v6122, %v6923
    %v6925 = vpop.f32.mrb[0].mxu0
    %v6926 = vadd.f32 %v6126, %v6925
    %v6927 = vpop.f32.mrb[0].mxu0
    %v6928 = vadd.f32 %v6122, %v6927
    %v6929 = vpop.f32.mrb[0].mxu0
    %v6930 = vadd.f32 %v6126, %v6929
    %6931 = vmatprep.mubr.bf16.mxu0 %v3654
    %6932 = vmatmul.mubr.bf16.gmra.mrb[0].mxu0 %v3653
    %v6933 = vpop.f32.mrb[0].mxu0
    %v6934 = vadd.f32 %v6122, %v6933
    %v6935 = vpop.f32.mrb[0].mxu0
    %v6936 = vadd.f32 %v6126, %v6935
    %v6937 = vpop.f32.mrb[0].mxu0
    %v6938 = vadd.f32 %v6122, %v6937
    %v6939 = vpop.f32.mrb[0].mxu0
    %v6940 = vadd.f32 %v6126, %v6939
    %6941 = vmatprep.mubr.bf16.mxu0 %v3656
    %6942 = vmatmul.mubr.bf16.gmra.mrb[0].mxu0 %v3655
    %v6943 = vpop.f32.mrb[0].mxu0
    %v6944 = vadd.f32 %v6122, %v6943
    %v6945 = vpop.f32.mrb[0].mxu0
    %v6946 = vadd.f32 %v6126, %v6945
    %v6947 = vpop.f32.mrb[0].mxu0
    %v6948 = vadd.f32 %v6122, %v6947
    %v6949 = vpop.f32.mrb[0].mxu0
    %v6950 = vadd.f32 %v6126, %v6949
    %6951 = vmatprep.mubr.bf16.mxu0 %v3658
    %6952 = vmatmul.mubr.bf16.gmra.mrb[0].mxu0 %v3657
    %v6953 = vpop.f32.mrb[0].mxu0
    %v6954 = vadd.f32 %v6122, %v6953
    %v6955 = vpop.f32.mrb[0].mxu0
    %v6956 = vadd.f32 %v6126, %v6955
    %v6957 = vpop.f32.mrb[0].mxu0
    %v6958 = vadd.f32 %v6122, %v6957
    %v6959 = vpop.f32.mrb[0].mxu0
    %v6960 = vadd.f32 %v6126, %v6959
    %6961 = vdwg.mxu0
    %v6962 = vmax.f32 %v6324, %v6328
    %v6963 = vmax.f32 %v6962, %v6334
    %v6964 = vmax.f32 %v6963, %v6338
    %v6965 = vmax.f32 %v6964, %v6344
    %v6966 = vmax.f32 %v6965, %v6348
    %v6967 = vmax.f32 %v6966, %v6354
    %v6968 = vmax.f32 %v6967, %v6358
    %v6969 = vmax.f32 %v6968, %v6364
    %v6970 = vmax.f32 %v6969, %v6368
    %v6971 = vmax.f32 %v6970, %v6374
    %v6972 = vmax.f32 %v6971, %v6378
    %v6973 = vmax.f32 %v6972, %v6384
    %v6974 = vmax.f32 %v6973, %v6388
    %v6975 = vmax.f32 %v6974, %v6394
    %v6976 = vmax.f32 %v6975, %v6398
    %v6977 = vrot.slane %v6976, 4
    %v6978 = vmax.f32 %v6976, %v6977
    %v6979 = vrot.slane %v6978, 2
    %v6980 = vmax.f32 %v6978, %v6979
    %v6981 = vrot.slane %v6980, 1
    %v6982 = vmax.f32 %v6980, %v6981
    %v6983 = vmax.f32 %v6326, %v6330
    %v6984 = vmax.f32 %v6983, %v6336
    %v6985 = vmax.f32 %v6984, %v6340
    %v6986 = vmax.f32 %v6985, %v6346
    %v6987 = vmax.f32 %v6986, %v6350
    %v6988 = vmax.f32 %v6987, %v6356
    %v6989 = vmax.f32 %v6988, %v6360
    %v6990 = vmax.f32 %v6989, %v6366
    %v6991 = vmax.f32 %v6990, %v6370
    %v6992 = vmax.f32 %v6991, %v6376
    %v6993 = vmax.f32 %v6992, %v6380
    %v6994 = vmax.f32 %v6993, %v6386
    %v6995 = vmax.f32 %v6994, %v6390
    %v6996 = vmax.f32 %v6995, %v6396
    %v6997 = vmax.f32 %v6996, %v6400
    %v6998 = vrot.slane %v6997, 4
    %v6999 = vmax.f32 %v6997, %v6998
    %v7000 = vrot.slane %v6999, 2
    %v7001 = vmax.f32 %v6999, %v7000
    %v7002 = vrot.slane %v7001, 1
    %v7003 = vmax.f32 %v7001, %v7002
    %v7004 = vmax.f32 %v6404, %v6408
    %v7005 = vmax.f32 %v7004, %v6414
    %v7006 = vmax.f32 %v7005, %v6418
    %v7007 = vmax.f32 %v7006, %v6424
    %v7008 = vmax.f32 %v7007, %v6428
    %v7009 = vmax.f32 %v7008, %v6434
    %v7010 = vmax.f32 %v7009, %v6438
    %v7011 = vmax.f32 %v7010, %v6444
    %v7012 = vmax.f32 %v7011, %v6448
    %v7013 = vmax.f32 %v7012, %v6454
    %v7014 = vmax.f32 %v7013, %v6458
    %v7015 = vmax.f32 %v7014, %v6464
    %v7016 = vmax.f32 %v7015, %v6468
    %v7017 = vmax.f32 %v7016, %v6474
    %v7018 = vmax.f32 %v7017, %v6478
    %v7019 = vrot.slane %v7018, 4
    %v7020 = vmax.f32 %v7018, %v7019
    %v7021 = vrot.slane %v7020, 2
    %v7022 = vmax.f32 %v7020, %v7021
    %v7023 = vrot.slane %v7022, 1
    %v7024 = vmax.f32 %v7022, %v7023
    %v7025 = vmax.f32 %v6406, %v6410
    %v7026 = vmax.f32 %v7025, %v6416
    %v7027 = vmax.f32 %v7026, %v6420
    %v7028 = vmax.f32 %v7027, %v6426
    %v7029 = vmax.f32 %v7028, %v6430
    %v7030 = vmax.f32 %v7029, %v6436
    %v7031 = vmax.f32 %v7030, %v6440
    %v7032 = vmax.f32 %v7031, %v6446
    %v7033 = vmax.f32 %v7032, %v6450
    %v7034 = vmax.f32 %v7033, %v6456
    %v7035 = vmax.f32 %v7034, %v6460
    %v7036 = vmax.f32 %v7035, %v6466
    %v7037 = vmax.f32 %v7036, %v6470
    %v7038 = vmax.f32 %v7037, %v6476
    %v7039 = vmax.f32 %v7038, %v6480
    %v7040 = vrot.slane %v7039, 4
    %v7041 = vmax.f32 %v7039, %v7040
    %v7042 = vrot.slane %v7041, 2
    %v7043 = vmax.f32 %v7041, %v7042
    %v7044 = vrot.slane %v7043, 1
    %v7045 = vmax.f32 %v7043, %v7044
    %v7046 = vmax.f32 %v6484, %v6488
    %v7047 = vmax.f32 %v7046, %v6494
    %v7048 = vmax.f32 %v7047, %v6498
    %v7049 = vmax.f32 %v7048, %v6504
    %v7050 = vmax.f32 %v7049, %v6508
    %v7051 = vmax.f32 %v7050, %v6514
    %v7052 = vmax.f32 %v7051, %v6518
    %v7053 = vmax.f32 %v7052, %v6524
    %v7054 = vmax.f32 %v7053, %v6528
    %v7055 = vmax.f32 %v7054, %v6534
    %v7056 = vmax.f32 %v7055, %v6538
    %v7057 = vmax.f32 %v7056, %v6544
    %v7058 = vmax.f32 %v7057, %v6548
    %v7059 = vmax.f32 %v7058, %v6554
    %v7060 = vmax.f32 %v7059, %v6558
    %v7061 = vrot.slane %v7060, 4
    %v7062 = vmax.f32 %v7060, %v7061
    %v7063 = vrot.slane %v7062, 2
    %v7064 = vmax.f32 %v7062, %v7063
    %v7065 = vrot.slane %v7064, 1
    %v7066 = vmax.f32 %v7064, %v7065
    %v7067 = vmax.f32 %v6486, %v6490
    %v7068 = vmax.f32 %v7067, %v6496
    %v7069 = vmax.f32 %v7068, %v6500
    %v7070 = vmax.f32 %v7069, %v6506
    %v7071 = vmax.f32 %v7070, %v6510
    %v7072 = vmax.f32 %v7071, %v6516
    %v7073 = vmax.f32 %v7072, %v6520
    %v7074 = vmax.f32 %v7073, %v6526
    %v7075 = vmax.f32 %v7074, %v6530
    %v7076 = vmax.f32 %v7075, %v6536
    %v7077 = vmax.f32 %v7076, %v6540
    %v7078 = vmax.f32 %v7077, %v6546
    %v7079 = vmax.f32 %v7078, %v6550
    %v7080 = vmax.f32 %v7079, %v6556
    %v7081 = vmax.f32 %v7080, %v6560
    %v7082 = vrot.slane %v7081, 4
    %v7083 = vmax.f32 %v7081, %v7082
    %v7084 = vrot.slane %v7083, 2
    %v7085 = vmax.f32 %v7083, %v7084
    %v7086 = vrot.slane %v7085, 1
    %v7087 = vmax.f32 %v7085, %v7086
    %v7088 = vmax.f32 %v6564, %v6568
    %v7089 = vmax.f32 %v7088, %v6574
    %v7090 = vmax.f32 %v7089, %v6578
    %v7091 = vmax.f32 %v7090, %v6584
    %v7092 = vmax.f32 %v7091, %v6588
    %v7093 = vmax.f32 %v7092, %v6594
    %v7094 = vmax.f32 %v7093, %v6598
    %v7095 = vmax.f32 %v7094, %v6604
    %v7096 = vmax.f32 %v7095, %v6608
    %v7097 = vmax.f32 %v7096, %v6614
    %v7098 = vmax.f32 %v7097, %v6618
    %v7099 = vmax.f32 %v7098, %v6624
    %v7100 = vmax.f32 %v7099, %v6628
    %v7101 = vmax.f32 %v7100, %v6634
    %v7102 = vmax.f32 %v7101, %v6638
    %v7103 = vrot.slane %v7102, 4
    %v7104 = vmax.f32 %v7102, %v7103
    %v7105 = vrot.slane %v7104, 2
    %v7106 = vmax.f32 %v7104, %v7105
    %v7107 = vrot.slane %v7106, 1
    %v7108 = vmax.f32 %v7106, %v7107
    %v7109 = vmax.f32 %v6566, %v6570
    %v7110 = vmax.f32 %v7109, %v6576
    %v7111 = vmax.f32 %v7110, %v6580
    %v7112 = vmax.f32 %v7111, %v6586
    %v7113 = vmax.f32 %v7112, %v6590
    %v7114 = vmax.f32 %v7113, %v6596
    %v7115 = vmax.f32 %v7114, %v6600
    %v7116 = vmax.f32 %v7115, %v6606
    %v7117 = vmax.f32 %v7116, %v6610
    %v7118 = vmax.f32 %v7117, %v6616
    %v7119 = vmax.f32 %v7118, %v6620
    %v7120 = vmax.f32 %v7119, %v6626
    %v7121 = vmax.f32 %v7120, %v6630
    %v7122 = vmax.f32 %v7121, %v6636
    %v7123 = vmax.f32 %v7122, %v6640
    %v7124 = vrot.slane %v7123, 4
    %v7125 = vmax.f32 %v7123, %v7124
    %v7126 = vrot.slane %v7125, 2
    %v7127 = vmax.f32 %v7125, %v7126
    %v7128 = vrot.slane %v7127, 1
    %v7129 = vmax.f32 %v7127, %v7128
    %v7130 = vmax.f32 %v6644, %v6648
    %v7131 = vmax.f32 %v7130, %v6654
    %v7132 = vmax.f32 %v7131, %v6658
    %v7133 = vmax.f32 %v7132, %v6664
    %v7134 = vmax.f32 %v7133, %v6668
    %v7135 = vmax.f32 %v7134, %v6674
    %v7136 = vmax.f32 %v7135, %v6678
    %v7137 = vmax.f32 %v7136, %v6684
    %v7138 = vmax.f32 %v7137, %v6688
    %v7139 = vmax.f32 %v7138, %v6694
    %v7140 = vmax.f32 %v7139, %v6698
    %v7141 = vmax.f32 %v7140, %v6704
    %v7142 = vmax.f32 %v7141, %v6708
    %v7143 = vmax.f32 %v7142, %v6714
    %v7144 = vmax.f32 %v7143, %v6718
    %v7145 = vrot.slane %v7144, 4
    %v7146 = vmax.f32 %v7144, %v7145
    %v7147 = vrot.slane %v7146, 2
    %v7148 = vmax.f32 %v7146, %v7147
    %v7149 = vrot.slane %v7148, 1
    %v7150 = vmax.f32 %v7148, %v7149
    %v7151 = vmax.f32 %v6646, %v6650
    %v7152 = vmax.f32 %v7151, %v6656
    %v7153 = vmax.f32 %v7152, %v6660
    %v7154 = vmax.f32 %v7153, %v6666
    %v7155 = vmax.f32 %v7154, %v6670
    %v7156 = vmax.f32 %v7155, %v6676
    %v7157 = vmax.f32 %v7156, %v6680
    %v7158 = vmax.f32 %v7157, %v6686
    %v7159 = vmax.f32 %v7158, %v6690
    %v7160 = vmax.f32 %v7159, %v6696
    %v7161 = vmax.f32 %v7160, %v6700
    %v7162 = vmax.f32 %v7161, %v6706
    %v7163 = vmax.f32 %v7162, %v6710
    %v7164 = vmax.f32 %v7163, %v6716
    %v7165 = vmax.f32 %v7164, %v6720
    %v7166 = vrot.slane %v7165, 4
    %v7167 = vmax.f32 %v7165, %v7166
    %v7168 = vrot.slane %v7167, 2
    %v7169 = vmax.f32 %v7167, %v7168
    %v7170 = vrot.slane %v7169, 1
    %v7171 = vmax.f32 %v7169, %v7170
    %v7172 = vmax.f32 %v6724, %v6728
    %v7173 = vmax.f32 %v7172, %v6734
    %v7174 = vmax.f32 %v7173, %v6738
    %v7175 = vmax.f32 %v7174, %v6744
    %v7176 = vmax.f32 %v7175, %v6748
    %v7177 = vmax.f32 %v7176, %v6754
    %v7178 = vmax.f32 %v7177, %v6758
    %v7179 = vmax.f32 %v7178, %v6764
    %v7180 = vmax.f32 %v7179, %v6768
    %v7181 = vmax.f32 %v7180, %v6774
    %v7182 = vmax.f32 %v7181, %v6778
    %v7183 = vmax.f32 %v7182, %v6784
    %v7184 = vmax.f32 %v7183, %v6788
    %v7185 = vmax.f32 %v7184, %v6794
    %v7186 = vmax.f32 %v7185, %v6798
    %v7187 = vrot.slane %v7186, 4
    %v7188 = vmax.f32 %v7186, %v7187
    %v7189 = vrot.slane %v7188, 2
    %v7190 = vmax.f32 %v7188, %v7189
    %v7191 = vrot.slane %v7190, 1
    %v7192 = vmax.f32 %v7190, %v7191
    %v7193 = vmax.f32 %v6726, %v6730
    %v7194 = vmax.f32 %v7193, %v6736
    %v7195 = vmax.f32 %v7194, %v6740
    %v7196 = vmax.f32 %v7195, %v6746
    %v7197 = vmax.f32 %v7196, %v6750
    %v7198 = vmax.f32 %v7197, %v6756
    %v7199 = vmax.f32 %v7198, %v6760
    %v7200 = vmax.f32 %v7199, %v6766
    %v7201 = vmax.f32 %v7200, %v6770
    %v7202 = vmax.f32 %v7201, %v6776
    %v7203 = vmax.f32 %v7202, %v6780
    %v7204 = vmax.f32 %v7203, %v6786
    %v7205 = vmax.f32 %v7204, %v6790
    %v7206 = vmax.f32 %v7205, %v6796
    %v7207 = vmax.f32 %v7206, %v6800
    %v7208 = vrot.slane %v7207, 4
    %v7209 = vmax.f32 %v7207, %v7208
    %v7210 = vrot.slane %v7209, 2
    %v7211 = vmax.f32 %v7209, %v7210
    %v7212 = vrot.slane %v7211, 1
    %v7213 = vmax.f32 %v7211, %v7212
    %v7214 = vmax.f32 %v6804, %v6808
    %v7215 = vmax.f32 %v7214, %v6814
    %v7216 = vmax.f32 %v7215, %v6818
    %v7217 = vmax.f32 %v7216, %v6824
    %v7218 = vmax.f32 %v7217, %v6828
    %v7219 = vmax.f32 %v7218, %v6834
    %v7220 = vmax.f32 %v7219, %v6838
    %v7221 = vmax.f32 %v7220, %v6844
    %v7222 = vmax.f32 %v7221, %v6848
    %v7223 = vmax.f32 %v7222, %v6854
    %v7224 = vmax.f32 %v7223, %v6858
    %v7225 = vmax.f32 %v7224, %v6864
    %v7226 = vmax.f32 %v7225, %v6868
    %v7227 = vmax.f32 %v7226, %v6874
    %v7228 = vmax.f32 %v7227, %v6878
    %v7229 = vrot.slane %v7228, 4
    %v7230 = vmax.f32 %v7228, %v7229
    %v7231 = vrot.slane %v7230, 2
    %v7232 = vmax.f32 %v7230, %v7231
    %v7233 = vrot.slane %v7232, 1
    %v7234 = vmax.f32 %v7232, %v7233
    %v7235 = vmax.f32 %v6806, %v6810
    %v7236 = vmax.f32 %v7235, %v6816
    %v7237 = vmax.f32 %v7236, %v6820
    %v7238 = vmax.f32 %v7237, %v6826
    %v7239 = vmax.f32 %v7238, %v6830
    %v7240 = vmax.f32 %v7239, %v6836
    %v7241 = vmax.f32 %v7240, %v6840
    %v7242 = vmax.f32 %v7241, %v6846
    %v7243 = vmax.f32 %v7242, %v6850
    %v7244 = vmax.f32 %v7243, %v6856
    %v7245 = vmax.f32 %v7244, %v6860
    %v7246 = vmax.f32 %v7245, %v6866
    %v7247 = vmax.f32 %v7246, %v6870
    %v7248 = vmax.f32 %v7247, %v6876
    %v7249 = vmax.f32 %v7248, %v6880
    %v7250 = vrot.slane %v7249, 4
    %v7251 = vmax.f32 %v7249, %v7250
    %v7252 = vrot.slane %v7251, 2
    %v7253 = vmax.f32 %v7251, %v7252
    %v7254 = vrot.slane %v7253, 1
    %v7255 = vmax.f32 %v7253, %v7254
    %v7256 = vmax.f32 %v6884, %v6888
    %v7257 = vmax.f32 %v7256, %v6894
    %v7258 = vmax.f32 %v7257, %v6898
    %v7259 = vmax.f32 %v7258, %v6904
    %v7260 = vmax.f32 %v7259, %v6908
    %v7261 = vmax.f32 %v7260, %v6914
    %v7262 = vmax.f32 %v7261, %v6918
    %v7263 = vmax.f32 %v7262, %v6924
    %v7264 = vmax.f32 %v7263, %v6928
    %v7265 = vmax.f32 %v7264, %v6934
    %v7266 = vmax.f32 %v7265, %v6938
    %v7267 = vmax.f32 %v7266, %v6944
    %v7268 = vmax.f32 %v7267, %v6948
    %v7269 = vmax.f32 %v7268, %v6954
    %v7270 = vmax.f32 %v7269, %v6958
    %v7271 = vrot.slane %v7270, 4
    %v7272 = vmax.f32 %v7270, %v7271
    %v7273 = vrot.slane %v7272, 2
    %v7274 = vmax.f32 %v7272, %v7273
    %v7275 = vrot.slane %v7274, 1
    %v7276 = vmax.f32 %v7274, %v7275
    %v7277 = vmax.f32 %v6886, %v6890
    %v7278 = vmax.f32 %v7277, %v6896
    %v7279 = vmax.f32 %v7278, %v6900
    %v7280 = vmax.f32 %v7279, %v6906
    %v7281 = vmax.f32 %v7280, %v6910
    %v7282 = vmax.f32 %v7281, %v6916
    %v7283 = vmax.f32 %v7282, %v6920
    %v7284 = vmax.f32 %v7283, %v6926
    %v7285 = vmax.f32 %v7284, %v6930
    %v7286 = vmax.f32 %v7285, %v6936
    %v7287 = vmax.f32 %v7286, %v6940
    %v7288 = vmax.f32 %v7287, %v6946
    %v7289 = vmax.f32 %v7288, %v6950
    %v7290 = vmax.f32 %v7289, %v6956
    %v7291 = vmax.f32 %v7290, %v6960
    %v7292 = vrot.slane %v7291, 4
    %v7293 = vmax.f32 %v7291, %v7292
    %v7294 = vrot.slane %v7293, 2
    %v7295 = vmax.f32 %v7293, %v7294
    %v7296 = vrot.slane %v7295, 1
    %v7297 = vmax.f32 %v7295, %v7296
    %v7298 = vld [vmem:[%s7 + $0x18] sm:$0xff]
    %v7299 = vld [vmem:[%s7 + $0x38] sm:$0xff]
    %v7300 = vld [vmem:[%s7 + $0x58] sm:$0xff]
    %v7301 = vld [vmem:[%s7 + $0x78] sm:$0xff]
    %v7302 = vld [vmem:[%s7 + $0x98] sm:$0xff]
    %v7303 = vld [vmem:[%s7 + $0xb8] sm:$0xff]
    %v7304 = vld [vmem:[%s7 + $0xd8] sm:$0xff]
    %v7305 = vld [vmem:[%s7 + $0xf8] sm:$0xff]
    %v7306 = vld [vmem:[%s7 + $0x118] sm:$0xff]
    %v7307 = vld [vmem:[%s7 + $0x138] sm:$0xff]
    %v7308 = vld [vmem:[%s7 + $0x158] sm:$0xff]
    %v7309 = vld [vmem:[%s7 + $0x178] sm:$0xff]
    %v7310 = vld [vmem:[%s7 + $0x198] sm:$0xff]
    %v7311 = vld [vmem:[%s7 + $0x1b8] sm:$0xff]
    %v7312 = vld [vmem:[%s7 + $0x1d8] sm:$0xff]
    %v7313 = vld [vmem:[%s7 + $0x1f8] sm:$0xff]
    %v7314 = vld [vmem:[%s7 + $0x218] sm:$0xff]
    %v7315 = vld [vmem:[%s7 + $0x238] sm:$0xff]
    %v7316 = vld [vmem:[%s7 + $0x258] sm:$0xff]
    %v7317 = vld [vmem:[%s7 + $0x278] sm:$0xff]
    %v7318 = vld [vmem:[%s7 + $0x298] sm:$0xff]
    %v7319 = vld [vmem:[%s7 + $0x2b8] sm:$0xff]
    %v7320 = vld [vmem:[%s7 + $0x2d8] sm:$0xff]
    %v7321 = vld [vmem:[%s7 + $0x2f8] sm:$0xff]
    %v7322 = vld [vmem:[%s7 + $0x318] sm:$0xff]
    %v7323 = vld [vmem:[%s7 + $0x338] sm:$0xff]
    %v7324 = vld [vmem:[%s7 + $0x358] sm:$0xff]
    %v7325 = vld [vmem:[%s7 + $0x378] sm:$0xff]
    %v7326 = vld [vmem:[%s7 + $0x398] sm:$0xff]
    %v7327 = vld [vmem:[%s7 + $0x3b8] sm:$0xff]
    %v7328 = vld [vmem:[%s7 + $0x3d8] sm:$0xff]
    %v7329 = vld [vmem:[%s7 + $0x3f8] sm:$0xff]
    %v7330 = vld [vmem:[%s8 + $0x6] sm:$0x3]
    %v7332 = vlaneseq
    %v7333 = vshrl.u32 %v7332, 7
    %v7334 = vsub.s32 0, %v7333
    %v7335 = vrot.slane %v7330, %v7334
    %v7336 = vlaneseq
    %v7337 = vshrl.u32 %v7336, 7
    %v7338 = vsub.s32 1, %v7337
    %v7339 = vrot.slane %v7330, %v7338
    %v7374 = vunpack.c.l.b16 %v7298
    %v7375 = vunpack.c.h.b16 %v7298
    %v7376 = vunpack.c.l.b16 %v7299
    %v7377 = vunpack.c.h.b16 %v7299
    %v7378 = vunpack.c.l.b16 %v7300
    %v7379 = vunpack.c.h.b16 %v7300
    %v7380 = vunpack.c.l.b16 %v7301
    %v7381 = vunpack.c.h.b16 %v7301
    %v7382 = vunpack.c.l.b16 %v7302
    %v7383 = vunpack.c.h.b16 %v7302
    %v7384 = vunpack.c.l.b16 %v7303
    %v7385 = vunpack.c.h.b16 %v7303
    %v7386 = vunpack.c.l.b16 %v7304
    %v7387 = vunpack.c.h.b16 %v7304
    %v7388 = vunpack.c.l.b16 %v7305
    %v7389 = vunpack.c.h.b16 %v7305
    %v7390 = vunpack.c.l.b16 %v7306
    %v7391 = vunpack.c.h.b16 %v7306
    %v7392 = vunpack.c.l.b16 %v7307
    %v7393 = vunpack.c.h.b16 %v7307
    %v7394 = vunpack.c.l.b16 %v7308
    %v7395 = vunpack.c.h.b16 %v7308
    %v7396 = vunpack.c.l.b16 %v7309
    %v7397 = vunpack.c.h.b16 %v7309
    %v7398 = vunpack.c.l.b16 %v7310
    %v7399 = vunpack.c.h.b16 %v7310
    %v7400 = vunpack.c.l.b16 %v7311
    %v7401 = vunpack.c.h.b16 %v7311
    %v7402 = vunpack.c.l.b16 %v7312
    %v7403 = vunpack.c.h.b16 %v7312
    %v7404 = vunpack.c.l.b16 %v7313
    %v7405 = vunpack.c.h.b16 %v7313
    %v7406 = vunpack.c.l.b16 %v7314
    %v7407 = vunpack.c.h.b16 %v7314
    %v7408 = vunpack.c.l.b16 %v7315
    %v7409 = vunpack.c.h.b16 %v7315
    %v7410 = vunpack.c.l.b16 %v7316
    %v7411 = vunpack.c.h.b16 %v7316
    %v7412 = vunpack.c.l.b16 %v7317
    %v7413 = vunpack.c.h.b16 %v7317
    %v7414 = vunpack.c.l.b16 %v7318
    %v7415 = vunpack.c.h.b16 %v7318
    %v7416 = vunpack.c.l.b16 %v7319
    %v7417 = vunpack.c.h.b16 %v7319
    %v7418 = vunpack.c.l.b16 %v7320
    %v7419 = vunpack.c.h.b16 %v7320
    %v7420 = vunpack.c.l.b16 %v7321
    %v7421 = vunpack.c.h.b16 %v7321
    %v7422 = vunpack.c.l.b16 %v7322
    %v7423 = vunpack.c.h.b16 %v7322
    %v7424 = vunpack.c.l.b16 %v7323
    %v7425 = vunpack.c.h.b16 %v7323
    %v7426 = vunpack.c.l.b16 %v7324
    %v7427 = vunpack.c.h.b16 %v7324
    %v7428 = vunpack.c.l.b16 %v7325
    %v7429 = vunpack.c.h.b16 %v7325
    %v7430 = vunpack.c.l.b16 %v7326
    %v7431 = vunpack.c.h.b16 %v7326
    %v7432 = vunpack.c.l.b16 %v7327
    %v7433 = vunpack.c.h.b16 %v7327
    %v7434 = vunpack.c.l.b16 %v7328
    %v7435 = vunpack.c.h.b16 %v7328
    %v7436 = vunpack.c.l.b16 %v7329
    %v7437 = vunpack.c.h.b16 %v7329
    %v7438 = vpack.c.b16 %v7376, %v7374
    %v7439 = vpack.c.b16 %v7377, %v7375
    %v7440 = vpack.c.b16 %v7380, %v7378
    %v7441 = vpack.c.b16 %v7381, %v7379
    %v7442 = vpack.c.b16 %v7384, %v7382
    %v7443 = vpack.c.b16 %v7385, %v7383
    %v7444 = vpack.c.b16 %v7388, %v7386
    %v7445 = vpack.c.b16 %v7389, %v7387
    %v7446 = vpack.c.b16 %v7392, %v7390
    %v7447 = vpack.c.b16 %v7393, %v7391
    %v7448 = vpack.c.b16 %v7396, %v7394
    %v7449 = vpack.c.b16 %v7397, %v7395
    %v7450 = vpack.c.b16 %v7400, %v7398
    %v7451 = vpack.c.b16 %v7401, %v7399
    %v7452 = vpack.c.b16 %v7404, %v7402
    %v7453 = vpack.c.b16 %v7405, %v7403
    %v7454 = vpack.c.b16 %v7408, %v7406
    %v7455 = vpack.c.b16 %v7409, %v7407
    %v7456 = vpack.c.b16 %v7412, %v7410
    %v7457 = vpack.c.b16 %v7413, %v7411
    %v7458 = vpack.c.b16 %v7416, %v7414
    %v7459 = vpack.c.b16 %v7417, %v7415
    %v7460 = vpack.c.b16 %v7420, %v7418
    %v7461 = vpack.c.b16 %v7421, %v7419
    %v7462 = vpack.c.b16 %v7424, %v7422
    %v7463 = vpack.c.b16 %v7425, %v7423
    %v7464 = vpack.c.b16 %v7428, %v7426
    %v7465 = vpack.c.b16 %v7429, %v7427
    %v7466 = vpack.c.b16 %v7432, %v7430
    %v7467 = vpack.c.b16 %v7433, %v7431
    %v7468 = vpack.c.b16 %v7436, %v7434
    %v7469 = vpack.c.b16 %v7437, %v7435
    %7502 = vmatprep.subr.bf16.mxu0 %v7439
    %7503 = vmatpush1.bf16.msra.mxu0 %v7438
    %7504 = vmatprep.subr.bf16.mxu0 %v7441
    %7505 = vmatpush1.bf16.msra.mxu0 %v7440
    %7506 = vmatprep.subr.bf16.mxu0 %v7443
    %7507 = vmatpush1.bf16.msra.mxu0 %v7442
    %7508 = vmatprep.subr.bf16.mxu0 %v7445
    %7509 = vmatpush1.bf16.msra.mxu0 %v7444
    %7510 = vmatprep.subr.bf16.mxu0 %v7447
    %7511 = vmatpush1.bf16.msra.mxu0 %v7446
    %7512 = vmatprep.subr.bf16.mxu0 %v7449
    %7513 = vmatpush1.bf16.msra.mxu0 %v7448
    %7514 = vmatprep.subr.bf16.mxu0 %v7451
    %7515 = vmatpush1.bf16.msra.mxu0 %v7450
    %7516 = vmatprep.subr.bf16.mxu0 %v7453
    %7517 = vmatpush1.bf16.msra.mxu0 %v7452
    %7518 = vmatprep.subr.bf16.mxu0 %v7455
    %7519 = vmatpush1.bf16.msra.mxu0 %v7454
    %7520 = vmatprep.subr.bf16.mxu0 %v7457
    %7521 = vmatpush1.bf16.msra.mxu0 %v7456
    %7522 = vmatprep.subr.bf16.mxu0 %v7459
    %7523 = vmatpush1.bf16.msra.mxu0 %v7458
    %7524 = vmatprep.subr.bf16.mxu0 %v7461
    %7525 = vmatpush1.bf16.msra.mxu0 %v7460
    %7526 = vmatprep.subr.bf16.mxu0 %v7463
    %7527 = vmatpush1.bf16.msra.mxu0 %v7462
    %7528 = vmatprep.subr.bf16.mxu0 %v7465
    %7529 = vmatpush1.bf16.msra.mxu0 %v7464
    %7530 = vmatprep.subr.bf16.mxu0 %v7467
    %7531 = vmatpush1.bf16.msra.mxu0 %v7466
    %7532 = vmatprep.subr.bf16.mxu0 %v7469
    %7533 = vmatpush1.bf16.msra.mxu0 %v7468
    %7534 = vmatprep.mubr.bf16.mxu0 %v3532
    %7535 = vmatmul.mubr.bf16.gmra.mrb[0].mxu0 %v3531
    %v7536 = vpop.f32.mrb[0].mxu0
    %v7537 = vadd.f32 %v7335, %v7536
    %v7538 = vpop.f32.mrb[0].mxu0
    %v7539 = vadd.f32 %v7339, %v7538
    %v7540 = vpop.f32.mrb[0].mxu0
    %v7541 = vadd.f32 %v7335, %v7540
    %v7542 = vpop.f32.mrb[0].mxu0
    %v7543 = vadd.f32 %v7339, %v7542
    %7544 = vmatprep.mubr.bf16.mxu0 %v3534
    %7545 = vmatmul.mubr.bf16.gmra.mrb[0].mxu0 %v3533
    %v7546 = vpop.f32.mrb[0].mxu0
    %v7547 = vadd.f32 %v7335, %v7546
    %v7548 = vpop.f32.mrb[0].mxu0
    %v7549 = vadd.f32 %v7339, %v7548
    %v7550 = vpop.f32.mrb[0].mxu0
    %v7551 = vadd.f32 %v7335, %v7550
    %v7552 = vpop.f32.mrb[0].mxu0
    %v7553 = vadd.f32 %v7339, %v7552
    %7554 = vmatprep.mubr.bf16.mxu0 %v3536
    %7555 = vmatmul.mubr.bf16.gmra.mrb[0].mxu0 %v3535
    %v7556 = vpop.f32.mrb[0].mxu0
    %v7557 = vadd.f32 %v7335, %v7556
    %v7558 = vpop.f32.mrb[0].mxu0
    %v7559 = vadd.f32 %v7339, %v7558
    %v7560 = vpop.f32.mrb[0].mxu0
    %v7561 = vadd.f32 %v7335, %v7560
    %v7562 = vpop.f32.mrb[0].mxu0
    %v7563 = vadd.f32 %v7339, %v7562
    %7564 = vmatprep.mubr.bf16.mxu0 %v3538
    %7565 = vmatmul.mubr.bf16.gmra.mrb[0].mxu0 %v3537
    %v7566 = vpop.f32.mrb[0].mxu0
    %v7567 = vadd.f32 %v7335, %v7566
    %v7568 = vpop.f32.mrb[0].mxu0
    %v7569 = vadd.f32 %v7339, %v7568
    %v7570 = vpop.f32.mrb[0].mxu0
    %v7571 = vadd.f32 %v7335, %v7570
    %v7572 = vpop.f32.mrb[0].mxu0
    %v7573 = vadd.f32 %v7339, %v7572
    %7574 = vmatprep.mubr.bf16.mxu0 %v3540
    %7575 = vmatmul.mubr.bf16.gmra.mrb[0].mxu0 %v3539
    %v7576 = vpop.f32.mrb[0].mxu0
    %v7577 = vadd.f32 %v7335, %v7576
    %v7578 = vpop.f32.mrb[0].mxu0
    %v7579 = vadd.f32 %v7339, %v7578
    %v7580 = vpop.f32.mrb[0].mxu0
    %v7581 = vadd.f32 %v7335, %v7580
    %v7582 = vpop.f32.mrb[0].mxu0
    %v7583 = vadd.f32 %v7339, %v7582
    %7584 = vmatprep.mubr.bf16.mxu0 %v3542
    %7585 = vmatmul.mubr.bf16.gmra.mrb[0].mxu0 %v3541
    %v7586 = vpop.f32.mrb[0].mxu0
    %v7587 = vadd.f32 %v7335, %v7586
    %v7588 = vpop.f32.mrb[0].mxu0
    %v7589 = vadd.f32 %v7339, %v7588
    %v7590 = vpop.f32.mrb[0].mxu0
    %v7591 = vadd.f32 %v7335, %v7590
    %v7592 = vpop.f32.mrb[0].mxu0
    %v7593 = vadd.f32 %v7339, %v7592
    %7594 = vmatprep.mubr.bf16.mxu0 %v3544
    %7595 = vmatmul.mubr.bf16.gmra.mrb[0].mxu0 %v3543
    %v7596 = vpop.f32.mrb[0].mxu0
    %v7597 = vadd.f32 %v7335, %v7596
    %v7598 = vpop.f32.mrb[0].mxu0
    %v7599 = vadd.f32 %v7339, %v7598
    %v7600 = vpop.f32.mrb[0].mxu0
    %v7601 = vadd.f32 %v7335, %v7600
    %v7602 = vpop.f32.mrb[0].mxu0
    %v7603 = vadd.f32 %v7339, %v7602
    %7604 = vmatprep.mubr.bf16.mxu0 %v3546
    %7605 = vmatmul.mubr.bf16.gmra.mrb[0].mxu0 %v3545
    %v7606 = vpop.f32.mrb[0].mxu0
    %v7607 = vadd.f32 %v7335, %v7606
    %v7608 = vpop.f32.mrb[0].mxu0
    %v7609 = vadd.f32 %v7339, %v7608
    %v7610 = vpop.f32.mrb[0].mxu0
    %v7611 = vadd.f32 %v7335, %v7610
    %v7612 = vpop.f32.mrb[0].mxu0
    %v7613 = vadd.f32 %v7339, %v7612
    %7614 = vmatprep.mubr.bf16.mxu0 %v3548
    %7615 = vmatmul.mubr.bf16.gmra.mrb[0].mxu0 %v3547
    %v7616 = vpop.f32.mrb[0].mxu0
    %v7617 = vadd.f32 %v7335, %v7616
    %v7618 = vpop.f32.mrb[0].mxu0
    %v7619 = vadd.f32 %v7339, %v7618
    %v7620 = vpop.f32.mrb[0].mxu0
    %v7621 = vadd.f32 %v7335, %v7620
    %v7622 = vpop.f32.mrb[0].mxu0
    %v7623 = vadd.f32 %v7339, %v7622
    %7624 = vmatprep.mubr.bf16.mxu0 %v3550
    %7625 = vmatmul.mubr.bf16.gmra.mrb[0].mxu0 %v3549
    %v7626 = vpop.f32.mrb[0].mxu0
    %v7627 = vadd.f32 %v7335, %v7626
    %v7628 = vpop.f32.mrb[0].mxu0
    %v7629 = vadd.f32 %v7339, %v7628
    %v7630 = vpop.f32.mrb[0].mxu0
    %v7631 = vadd.f32 %v7335, %v7630
    %v7632 = vpop.f32.mrb[0].mxu0
    %v7633 = vadd.f32 %v7339, %v7632
    %7634 = vmatprep.mubr.bf16.mxu0 %v3552
    %7635 = vmatmul.mubr.bf16.gmra.mrb[0].mxu0 %v3551
    %v7636 = vpop.f32.mrb[0].mxu0
    %v7637 = vadd.f32 %v7335, %v7636
    %v7638 = vpop.f32.mrb[0].mxu0
    %v7639 = vadd.f32 %v7339, %v7638
    %v7640 = vpop.f32.mrb[0].mxu0
    %v7641 = vadd.f32 %v7335, %v7640
    %v7642 = vpop.f32.mrb[0].mxu0
    %v7643 = vadd.f32 %v7339, %v7642
    %7644 = vmatprep.mubr.bf16.mxu0 %v3554
    %7645 = vmatmul.mubr.bf16.gmra.mrb[0].mxu0 %v3553
    %v7646 = vpop.f32.mrb[0].mxu0
    %v7647 = vadd.f32 %v7335, %v7646
    %v7648 = vpop.f32.mrb[0].mxu0
    %v7649 = vadd.f32 %v7339, %v7648
    %v7650 = vpop.f32.mrb[0].mxu0
    %v7651 = vadd.f32 %v7335, %v7650
    %v7652 = vpop.f32.mrb[0].mxu0
    %v7653 = vadd.f32 %v7339, %v7652
    %7654 = vmatprep.mubr.bf16.mxu0 %v3556
    %7655 = vmatmul.mubr.bf16.gmra.mrb[0].mxu0 %v3555
    %v7656 = vpop.f32.mrb[0].mxu0
    %v7657 = vadd.f32 %v7335, %v7656
    %v7658 = vpop.f32.mrb[0].mxu0
    %v7659 = vadd.f32 %v7339, %v7658
    %v7660 = vpop.f32.mrb[0].mxu0
    %v7661 = vadd.f32 %v7335, %v7660
    %v7662 = vpop.f32.mrb[0].mxu0
    %v7663 = vadd.f32 %v7339, %v7662
    %7664 = vmatprep.mubr.bf16.mxu0 %v3558
    %7665 = vmatmul.mubr.bf16.gmra.mrb[0].mxu0 %v3557
    %v7666 = vpop.f32.mrb[0].mxu0
    %v7667 = vadd.f32 %v7335, %v7666
    %v7668 = vpop.f32.mrb[0].mxu0
    %v7669 = vadd.f32 %v7339, %v7668
    %v7670 = vpop.f32.mrb[0].mxu0
    %v7671 = vadd.f32 %v7335, %v7670
    %v7672 = vpop.f32.mrb[0].mxu0
    %v7673 = vadd.f32 %v7339, %v7672
    %7674 = vmatprep.mubr.bf16.mxu0 %v3560
    %7675 = vmatmul.mubr.bf16.gmra.mrb[0].mxu0 %v3559
    %v7676 = vpop.f32.mrb[0].mxu0
    %v7677 = vadd.f32 %v7335, %v7676
    %v7678 = vpop.f32.mrb[0].mxu0
    %v7679 = vadd.f32 %v7339, %v7678
    %v7680 = vpop.f32.mrb[0].mxu0
    %v7681 = vadd.f32 %v7335, %v7680
    %v7682 = vpop.f32.mrb[0].mxu0
    %v7683 = vadd.f32 %v7339, %v7682
    %7684 = vmatprep.mubr.bf16.mxu0 %v3562
    %7685 = vmatmul.mubr.bf16.gmra.mrb[0].mxu0 %v3561
    %v7686 = vpop.f32.mrb[0].mxu0
    %v7687 = vadd.f32 %v7335, %v7686
    %v7688 = vpop.f32.mrb[0].mxu0
    %v7689 = vadd.f32 %v7339, %v7688
    %v7690 = vpop.f32.mrb[0].mxu0
    %v7691 = vadd.f32 %v7335, %v7690
    %v7692 = vpop.f32.mrb[0].mxu0
    %v7693 = vadd.f32 %v7339, %v7692
    %7694 = vmatprep.mubr.bf16.mxu0 %v3564
    %7695 = vmatmul.mubr.bf16.gmra.mrb[0].mxu0 %v3563
    %v7696 = vpop.f32.mrb[0].mxu0
    %v7697 = vadd.f32 %v7335, %v7696
    %v7698 = vpop.f32.mrb[0].mxu0
    %v7699 = vadd.f32 %v7339, %v7698
    %v7700 = vpop.f32.mrb[0].mxu0
    %v7701 = vadd.f32 %v7335, %v7700
    %v7702 = vpop.f32.mrb[0].mxu0
    %v7703 = vadd.f32 %v7339, %v7702
    %7704 = vmatprep.mubr.bf16.mxu0 %v3566
    %7705 = vmatmul.mubr.bf16.gmra.mrb[0].mxu0 %v3565
    %v7706 = vpop.f32.mrb[0].mxu0
    %v7707 = vadd.f32 %v7335, %v7706
    %v7708 = vpop.f32.mrb[0].mxu0
    %v7709 = vadd.f32 %v7339, %v7708
    %v7710 = vpop.f32.mrb[0].mxu0
    %v7711 = vadd.f32 %v7335, %v7710
    %v7712 = vpop.f32.mrb[0].mxu0
    %v7713 = vadd.f32 %v7339, %v7712
    %7714 = vmatprep.mubr.bf16.mxu0 %v3568
    %7715 = vmatmul.mubr.bf16.gmra.mrb[0].mxu0 %v3567
    %v7716 = vpop.f32.mrb[0].mxu0
    %v7717 = vadd.f32 %v7335, %v7716
    %v7718 = vpop.f32.mrb[0].mxu0
    %v7719 = vadd.f32 %v7339, %v7718
    %v7720 = vpop.f32.mrb[0].mxu0
    %v7721 = vadd.f32 %v7335, %v7720
    %v7722 = vpop.f32.mrb[0].mxu0
    %v7723 = vadd.f32 %v7339, %v7722
    %7724 = vmatprep.mubr.bf16.mxu0 %v3570
    %7725 = vmatmul.mubr.bf16.gmra.mrb[0].mxu0 %v3569
    %v7726 = vpop.f32.mrb[0].mxu0
    %v7727 = vadd.f32 %v7335, %v7726
    %v7728 = vpop.f32.mrb[0].mxu0
    %v7729 = vadd.f32 %v7339, %v7728
    %v7730 = vpop.f32.mrb[0].mxu0
    %v7731 = vadd.f32 %v7335, %v7730
    %v7732 = vpop.f32.mrb[0].mxu0
    %v7733 = vadd.f32 %v7339, %v7732
    %7734 = vmatprep.mubr.bf16.mxu0 %v3572
    %7735 = vmatmul.mubr.bf16.gmra.mrb[0].mxu0 %v3571
    %v7736 = vpop.f32.mrb[0].mxu0
    %v7737 = vadd.f32 %v7335, %v7736
    %v7738 = vpop.f32.mrb[0].mxu0
    %v7739 = vadd.f32 %v7339, %v7738
    %v7740 = vpop.f32.mrb[0].mxu0
    %v7741 = vadd.f32 %v7335, %v7740
    %v7742 = vpop.f32.mrb[0].mxu0
    %v7743 = vadd.f32 %v7339, %v7742
    %7744 = vmatprep.mubr.bf16.mxu0 %v3574
    %7745 = vmatmul.mubr.bf16.gmra.mrb[0].mxu0 %v3573
    %v7746 = vpop.f32.mrb[0].mxu0
    %v7747 = vadd.f32 %v7335, %v7746
    %v7748 = vpop.f32.mrb[0].mxu0
    %v7749 = vadd.f32 %v7339, %v7748
    %v7750 = vpop.f32.mrb[0].mxu0
    %v7751 = vadd.f32 %v7335, %v7750
    %v7752 = vpop.f32.mrb[0].mxu0
    %v7753 = vadd.f32 %v7339, %v7752
    %7754 = vmatprep.mubr.bf16.mxu0 %v3576
    %7755 = vmatmul.mubr.bf16.gmra.mrb[0].mxu0 %v3575
    %v7756 = vpop.f32.mrb[0].mxu0
    %v7757 = vadd.f32 %v7335, %v7756
    %v7758 = vpop.f32.mrb[0].mxu0
    %v7759 = vadd.f32 %v7339, %v7758
    %v7760 = vpop.f32.mrb[0].mxu0
    %v7761 = vadd.f32 %v7335, %v7760
    %v7762 = vpop.f32.mrb[0].mxu0
    %v7763 = vadd.f32 %v7339, %v7762
    %7764 = vmatprep.mubr.bf16.mxu0 %v3578
    %7765 = vmatmul.mubr.bf16.gmra.mrb[0].mxu0 %v3577
    %v7766 = vpop.f32.mrb[0].mxu0
    %v7767 = vadd.f32 %v7335, %v7766
    %v7768 = vpop.f32.mrb[0].mxu0
    %v7769 = vadd.f32 %v7339, %v7768
    %v7770 = vpop.f32.mrb[0].mxu0
    %v7771 = vadd.f32 %v7335, %v7770
    %v7772 = vpop.f32.mrb[0].mxu0
    %v7773 = vadd.f32 %v7339, %v7772
    %7774 = vmatprep.mubr.bf16.mxu0 %v3580
    %7775 = vmatmul.mubr.bf16.gmra.mrb[0].mxu0 %v3579
    %v7776 = vpop.f32.mrb[0].mxu0
    %v7777 = vadd.f32 %v7335, %v7776
    %v7778 = vpop.f32.mrb[0].mxu0
    %v7779 = vadd.f32 %v7339, %v7778
    %v7780 = vpop.f32.mrb[0].mxu0
    %v7781 = vadd.f32 %v7335, %v7780
    %v7782 = vpop.f32.mrb[0].mxu0
    %v7783 = vadd.f32 %v7339, %v7782
    %7784 = vmatprep.mubr.bf16.mxu0 %v3582
    %7785 = vmatmul.mubr.bf16.gmra.mrb[0].mxu0 %v3581
    %v7786 = vpop.f32.mrb[0].mxu0
    %v7787 = vadd.f32 %v7335, %v7786
    %v7788 = vpop.f32.mrb[0].mxu0
    %v7789 = vadd.f32 %v7339, %v7788
    %v7790 = vpop.f32.mrb[0].mxu0
    %v7791 = vadd.f32 %v7335, %v7790
    %v7792 = vpop.f32.mrb[0].mxu0
    %v7793 = vadd.f32 %v7339, %v7792
    %7794 = vmatprep.mubr.bf16.mxu0 %v3584
    %7795 = vmatmul.mubr.bf16.gmra.mrb[0].mxu0 %v3583
    %v7796 = vpop.f32.mrb[0].mxu0
    %v7797 = vadd.f32 %v7335, %v7796
    %v7798 = vpop.f32.mrb[0].mxu0
    %v7799 = vadd.f32 %v7339, %v7798
    %v7800 = vpop.f32.mrb[0].mxu0
    %v7801 = vadd.f32 %v7335, %v7800
    %v7802 = vpop.f32.mrb[0].mxu0
    %v7803 = vadd.f32 %v7339, %v7802
    %7804 = vmatprep.mubr.bf16.mxu0 %v3586
    %7805 = vmatmul.mubr.bf16.gmra.mrb[0].mxu0 %v3585
    %v7806 = vpop.f32.mrb[0].mxu0
    %v7807 = vadd.f32 %v7335, %v7806
    %v7808 = vpop.f32.mrb[0].mxu0
    %v7809 = vadd.f32 %v7339, %v7808
    %v7810 = vpop.f32.mrb[0].mxu0
    %v7811 = vadd.f32 %v7335, %v7810
    %v7812 = vpop.f32.mrb[0].mxu0
    %v7813 = vadd.f32 %v7339, %v7812
    %7814 = vmatprep.mubr.bf16.mxu0 %v3588
    %7815 = vmatmul.mubr.bf16.gmra.mrb[0].mxu0 %v3587
    %v7816 = vpop.f32.mrb[0].mxu0
    %v7817 = vadd.f32 %v7335, %v7816
    %v7818 = vpop.f32.mrb[0].mxu0
    %v7819 = vadd.f32 %v7339, %v7818
    %v7820 = vpop.f32.mrb[0].mxu0
    %v7821 = vadd.f32 %v7335, %v7820
    %v7822 = vpop.f32.mrb[0].mxu0
    %v7823 = vadd.f32 %v7339, %v7822
    %7824 = vmatprep.mubr.bf16.mxu0 %v3590
    %7825 = vmatmul.mubr.bf16.gmra.mrb[0].mxu0 %v3589
    %v7826 = vpop.f32.mrb[0].mxu0
    %v7827 = vadd.f32 %v7335, %v7826
    %v7828 = vpop.f32.mrb[0].mxu0
    %v7829 = vadd.f32 %v7339, %v7828
    %v7830 = vpop.f32.mrb[0].mxu0
    %v7831 = vadd.f32 %v7335, %v7830
    %v7832 = vpop.f32.mrb[0].mxu0
    %v7833 = vadd.f32 %v7339, %v7832
    %7834 = vmatprep.mubr.bf16.mxu0 %v3592
    %7835 = vmatmul.mubr.bf16.gmra.mrb[0].mxu0 %v3591
    %v7836 = vpop.f32.mrb[0].mxu0
    %v7837 = vadd.f32 %v7335, %v7836
    %v7838 = vpop.f32.mrb[0].mxu0
    %v7839 = vadd.f32 %v7339, %v7838
    %v7840 = vpop.f32.mrb[0].mxu0
    %v7841 = vadd.f32 %v7335, %v7840
    %v7842 = vpop.f32.mrb[0].mxu0
    %v7843 = vadd.f32 %v7339, %v7842
    %7844 = vmatprep.mubr.bf16.mxu0 %v3594
    %7845 = vmatmul.mubr.bf16.gmra.mrb[0].mxu0 %v3593
    %v7846 = vpop.f32.mrb[0].mxu0
    %v7847 = vadd.f32 %v7335, %v7846
    %v7848 = vpop.f32.mrb[0].mxu0
    %v7849 = vadd.f32 %v7339, %v7848
    %v7850 = vpop.f32.mrb[0].mxu0
    %v7851 = vadd.f32 %v7335, %v7850
    %v7852 = vpop.f32.mrb[0].mxu0
    %v7853 = vadd.f32 %v7339, %v7852
    %7854 = vmatprep.mubr.bf16.mxu0 %v3596
    %7855 = vmatmul.mubr.bf16.gmra.mrb[0].mxu0 %v3595
    %v7856 = vpop.f32.mrb[0].mxu0
    %v7857 = vadd.f32 %v7335, %v7856
    %v7858 = vpop.f32.mrb[0].mxu0
    %v7859 = vadd.f32 %v7339, %v7858
    %v7860 = vpop.f32.mrb[0].mxu0
    %v7861 = vadd.f32 %v7335, %v7860
    %v7862 = vpop.f32.mrb[0].mxu0
    %v7863 = vadd.f32 %v7339, %v7862
    %7864 = vmatprep.mubr.bf16.mxu0 %v3598
    %7865 = vmatmul.mubr.bf16.gmra.mrb[0].mxu0 %v3597
    %v7866 = vpop.f32.mrb[0].mxu0
    %v7867 = vadd.f32 %v7335, %v7866
    %v7868 = vpop.f32.mrb[0].mxu0
    %v7869 = vadd.f32 %v7339, %v7868
    %v7870 = vpop.f32.mrb[0].mxu0
    %v7871 = vadd.f32 %v7335, %v7870
    %v7872 = vpop.f32.mrb[0].mxu0
    %v7873 = vadd.f32 %v7339, %v7872
    %7874 = vmatprep.mubr.bf16.mxu0 %v3600
    %7875 = vmatmul.mubr.bf16.gmra.mrb[0].mxu0 %v3599
    %v7876 = vpop.f32.mrb[0].mxu0
    %v7877 = vadd.f32 %v7335, %v7876
    %v7878 = vpop.f32.mrb[0].mxu0
    %v7879 = vadd.f32 %v7339, %v7878
    %v7880 = vpop.f32.mrb[0].mxu0
    %v7881 = vadd.f32 %v7335, %v7880
    %v7882 = vpop.f32.mrb[0].mxu0
    %v7883 = vadd.f32 %v7339, %v7882
    %7884 = vmatprep.mubr.bf16.mxu0 %v3602
    %7885 = vmatmul.mubr.bf16.gmra.mrb[0].mxu0 %v3601
    %v7886 = vpop.f32.mrb[0].mxu0
    %v7887 = vadd.f32 %v7335, %v7886
    %v7888 = vpop.f32.mrb[0].mxu0
    %v7889 = vadd.f32 %v7339, %v7888
    %v7890 = vpop.f32.mrb[0].mxu0
    %v7891 = vadd.f32 %v7335, %v7890
    %v7892 = vpop.f32.mrb[0].mxu0
    %v7893 = vadd.f32 %v7339, %v7892
    %7894 = vmatprep.mubr.bf16.mxu0 %v3604
    %7895 = vmatmul.mubr.bf16.gmra.mrb[0].mxu0 %v3603
    %v7896 = vpop.f32.mrb[0].mxu0
    %v7897 = vadd.f32 %v7335, %v7896
    %v7898 = vpop.f32.mrb[0].mxu0
    %v7899 = vadd.f32 %v7339, %v7898
    %v7900 = vpop.f32.mrb[0].mxu0
    %v7901 = vadd.f32 %v7335, %v7900
    %v7902 = vpop.f32.mrb[0].mxu0
    %v7903 = vadd.f32 %v7339, %v7902
    %7904 = vmatprep.mubr.bf16.mxu0 %v3606
    %7905 = vmatmul.mubr.bf16.gmra.mrb[0].mxu0 %v3605
    %v7906 = vpop.f32.mrb[0].mxu0
    %v7907 = vadd.f32 %v7335, %v7906
    %v7908 = vpop.f32.mrb[0].mxu0
    %v7909 = vadd.f32 %v7339, %v7908
    %v7910 = vpop.f32.mrb[0].mxu0
    %v7911 = vadd.f32 %v7335, %v7910
    %v7912 = vpop.f32.mrb[0].mxu0
    %v7913 = vadd.f32 %v7339, %v7912
    %7914 = vmatprep.mubr.bf16.mxu0 %v3608
    %7915 = vmatmul.mubr.bf16.gmra.mrb[0].mxu0 %v3607
    %v7916 = vpop.f32.mrb[0].mxu0
    %v7917 = vadd.f32 %v7335, %v7916
    %v7918 = vpop.f32.mrb[0].mxu0
    %v7919 = vadd.f32 %v7339, %v7918
    %v7920 = vpop.f32.mrb[0].mxu0
    %v7921 = vadd.f32 %v7335, %v7920
    %v7922 = vpop.f32.mrb[0].mxu0
    %v7923 = vadd.f32 %v7339, %v7922
    %7924 = vmatprep.mubr.bf16.mxu0 %v3610
    %7925 = vmatmul.mubr.bf16.gmra.mrb[0].mxu0 %v3609
    %v7926 = vpop.f32.mrb[0].mxu0
    %v7927 = vadd.f32 %v7335, %v7926
    %v7928 = vpop.f32.mrb[0].mxu0
    %v7929 = vadd.f32 %v7339, %v7928
    %v7930 = vpop.f32.mrb[0].mxu0
    %v7931 = vadd.f32 %v7335, %v7930
    %v7932 = vpop.f32.mrb[0].mxu0
    %v7933 = vadd.f32 %v7339, %v7932
    %7934 = vmatprep.mubr.bf16.mxu0 %v3612
    %7935 = vmatmul.mubr.bf16.gmra.mrb[0].mxu0 %v3611
    %v7936 = vpop.f32.mrb[0].mxu0
    %v7937 = vadd.f32 %v7335, %v7936
    %v7938 = vpop.f32.mrb[0].mxu0
    %v7939 = vadd.f32 %v7339, %v7938
    %v7940 = vpop.f32.mrb[0].mxu0
    %v7941 = vadd.f32 %v7335, %v7940
    %v7942 = vpop.f32.mrb[0].mxu0
    %v7943 = vadd.f32 %v7339, %v7942
    %7944 = vmatprep.mubr.bf16.mxu0 %v3614
    %7945 = vmatmul.mubr.bf16.gmra.mrb[0].mxu0 %v3613
    %v7946 = vpop.f32.mrb[0].mxu0
    %v7947 = vadd.f32 %v7335, %v7946
    %v7948 = vpop.f32.mrb[0].mxu0
    %v7949 = vadd.f32 %v7339, %v7948
    %v7950 = vpop.f32.mrb[0].mxu0
    %v7951 = vadd.f32 %v7335, %v7950
    %v7952 = vpop.f32.mrb[0].mxu0
    %v7953 = vadd.f32 %v7339, %v7952
    %7954 = vmatprep.mubr.bf16.mxu0 %v3616
    %7955 = vmatmul.mubr.bf16.gmra.mrb[0].mxu0 %v3615
    %v7956 = vpop.f32.mrb[0].mxu0
    %v7957 = vadd.f32 %v7335, %v7956
    %v7958 = vpop.f32.mrb[0].mxu0
    %v7959 = vadd.f32 %v7339, %v7958
    %v7960 = vpop.f32.mrb[0].mxu0
    %v7961 = vadd.f32 %v7335, %v7960
    %v7962 = vpop.f32.mrb[0].mxu0
    %v7963 = vadd.f32 %v7339, %v7962
    %7964 = vmatprep.mubr.bf16.mxu0 %v3618
    %7965 = vmatmul.mubr.bf16.gmra.mrb[0].mxu0 %v3617
    %v7966 = vpop.f32.mrb[0].mxu0
    %v7967 = vadd.f32 %v7335, %v7966
    %v7968 = vpop.f32.mrb[0].mxu0
    %v7969 = vadd.f32 %v7339, %v7968
    %v7970 = vpop.f32.mrb[0].mxu0
    %v7971 = vadd.f32 %v7335, %v7970
    %v7972 = vpop.f32.mrb[0].mxu0
    %v7973 = vadd.f32 %v7339, %v7972
    %7974 = vmatprep.mubr.bf16.mxu0 %v3620
    %7975 = vmatmul.mubr.bf16.gmra.mrb[0].mxu0 %v3619
    %v7976 = vpop.f32.mrb[0].mxu0
    %v7977 = vadd.f32 %v7335, %v7976
    %v7978 = vpop.f32.mrb[0].mxu0
    %v7979 = vadd.f32 %v7339, %v7978
    %v7980 = vpop.f32.mrb[0].mxu0
    %v7981 = vadd.f32 %v7335, %v7980
    %v7982 = vpop.f32.mrb[0].mxu0
    %v7983 = vadd.f32 %v7339, %v7982
    %7984 = vmatprep.mubr.bf16.mxu0 %v3622
    %7985 = vmatmul.mubr.bf16.gmra.mrb[0].mxu0 %v3621
    %v7986 = vpop.f32.mrb[0].mxu0
    %v7987 = vadd.f32 %v7335, %v7986
    %v7988 = vpop.f32.mrb[0].mxu0
    %v7989 = vadd.f32 %v7339, %v7988
    %v7990 = vpop.f32.mrb[0].mxu0
    %v7991 = vadd.f32 %v7335, %v7990
    %v7992 = vpop.f32.mrb[0].mxu0
    %v7993 = vadd.f32 %v7339, %v7992
    %7994 = vmatprep.mubr.bf16.mxu0 %v3624
    %7995 = vmatmul.mubr.bf16.gmra.mrb[0].mxu0 %v3623
    %v7996 = vpop.f32.mrb[0].mxu0
    %v7997 = vadd.f32 %v7335, %v7996
    %v7998 = vpop.f32.mrb[0].mxu0
    %v7999 = vadd.f32 %v7339, %v7998
    %v8000 = vpop.f32.mrb[0].mxu0
    %v8001 = vadd.f32 %v7335, %v8000
    %v8002 = vpop.f32.mrb[0].mxu0
    %v8003 = vadd.f32 %v7339, %v8002
    %8004 = vmatprep.mubr.bf16.mxu0 %v3626
    %8005 = vmatmul.mubr.bf16.gmra.mrb[0].mxu0 %v3625
    %v8006 = vpop.f32.mrb[0].mxu0
    %v8007 = vadd.f32 %v7335, %v8006
    %v8008 = vpop.f32.mrb[0].mxu0
    %v8009 = vadd.f32 %v7339, %v8008
    %v8010 = vpop.f32.mrb[0].mxu0
    %v8011 = vadd.f32 %v7335, %v8010
    %v8012 = vpop.f32.mrb[0].mxu0
    %v8013 = vadd.f32 %v7339, %v8012
    %8014 = vmatprep.mubr.bf16.mxu0 %v3628
    %8015 = vmatmul.mubr.bf16.gmra.mrb[0].mxu0 %v3627
    %v8016 = vpop.f32.mrb[0].mxu0
    %v8017 = vadd.f32 %v7335, %v8016
    %v8018 = vpop.f32.mrb[0].mxu0
    %v8019 = vadd.f32 %v7339, %v8018
    %v8020 = vpop.f32.mrb[0].mxu0
    %v8021 = vadd.f32 %v7335, %v8020
    %v8022 = vpop.f32.mrb[0].mxu0
    %v8023 = vadd.f32 %v7339, %v8022
    %8024 = vmatprep.mubr.bf16.mxu0 %v3630
    %8025 = vmatmul.mubr.bf16.gmra.mrb[0].mxu0 %v3629
    %v8026 = vpop.f32.mrb[0].mxu0
    %v8027 = vadd.f32 %v7335, %v8026
    %v8028 = vpop.f32.mrb[0].mxu0
    %v8029 = vadd.f32 %v7339, %v8028
    %v8030 = vpop.f32.mrb[0].mxu0
    %v8031 = vadd.f32 %v7335, %v8030
    %v8032 = vpop.f32.mrb[0].mxu0
    %v8033 = vadd.f32 %v7339, %v8032
    %8034 = vmatprep.mubr.bf16.mxu0 %v3632
    %8035 = vmatmul.mubr.bf16.gmra.mrb[0].mxu0 %v3631
    %v8036 = vpop.f32.mrb[0].mxu0
    %v8037 = vadd.f32 %v7335, %v8036
    %v8038 = vpop.f32.mrb[0].mxu0
    %v8039 = vadd.f32 %v7339, %v8038
    %v8040 = vpop.f32.mrb[0].mxu0
    %v8041 = vadd.f32 %v7335, %v8040
    %v8042 = vpop.f32.mrb[0].mxu0
    %v8043 = vadd.f32 %v7339, %v8042
    %8044 = vmatprep.mubr.bf16.mxu0 %v3634
    %8045 = vmatmul.mubr.bf16.gmra.mrb[0].mxu0 %v3633
    %v8046 = vpop.f32.mrb[0].mxu0
    %v8047 = vadd.f32 %v7335, %v8046
    %v8048 = vpop.f32.mrb[0].mxu0
    %v8049 = vadd.f32 %v7339, %v8048
    %v8050 = vpop.f32.mrb[0].mxu0
    %v8051 = vadd.f32 %v7335, %v8050
    %v8052 = vpop.f32.mrb[0].mxu0
    %v8053 = vadd.f32 %v7339, %v8052
    %8054 = vmatprep.mubr.bf16.mxu0 %v3636
    %8055 = vmatmul.mubr.bf16.gmra.mrb[0].mxu0 %v3635
    %v8056 = vpop.f32.mrb[0].mxu0
    %v8057 = vadd.f32 %v7335, %v8056
    %v8058 = vpop.f32.mrb[0].mxu0
    %v8059 = vadd.f32 %v7339, %v8058
    %v8060 = vpop.f32.mrb[0].mxu0
    %v8061 = vadd.f32 %v7335, %v8060
    %v8062 = vpop.f32.mrb[0].mxu0
    %v8063 = vadd.f32 %v7339, %v8062
    %8064 = vmatprep.mubr.bf16.mxu0 %v3638
    %8065 = vmatmul.mubr.bf16.gmra.mrb[0].mxu0 %v3637
    %v8066 = vpop.f32.mrb[0].mxu0
    %v8067 = vadd.f32 %v7335, %v8066
    %v8068 = vpop.f32.mrb[0].mxu0
    %v8069 = vadd.f32 %v7339, %v8068
    %v8070 = vpop.f32.mrb[0].mxu0
    %v8071 = vadd.f32 %v7335, %v8070
    %v8072 = vpop.f32.mrb[0].mxu0
    %v8073 = vadd.f32 %v7339, %v8072
    %8074 = vmatprep.mubr.bf16.mxu0 %v3640
    %8075 = vmatmul.mubr.bf16.gmra.mrb[0].mxu0 %v3639
    %v8076 = vpop.f32.mrb[0].mxu0
    %v8077 = vadd.f32 %v7335, %v8076
    %v8078 = vpop.f32.mrb[0].mxu0
    %v8079 = vadd.f32 %v7339, %v8078
    %v8080 = vpop.f32.mrb[0].mxu0
    %v8081 = vadd.f32 %v7335, %v8080
    %v8082 = vpop.f32.mrb[0].mxu0
    %v8083 = vadd.f32 %v7339, %v8082
    %8084 = vmatprep.mubr.bf16.mxu0 %v3642
    %8085 = vmatmul.mubr.bf16.gmra.mrb[0].mxu0 %v3641
    %v8086 = vpop.f32.mrb[0].mxu0
    %v8087 = vadd.f32 %v7335, %v8086
    %v8088 = vpop.f32.mrb[0].mxu0
    %v8089 = vadd.f32 %v7339, %v8088
    %v8090 = vpop.f32.mrb[0].mxu0
    %v8091 = vadd.f32 %v7335, %v8090
    %v8092 = vpop.f32.mrb[0].mxu0
    %v8093 = vadd.f32 %v7339, %v8092
    %8094 = vmatprep.mubr.bf16.mxu0 %v3644
    %8095 = vmatmul.mubr.bf16.gmra.mrb[0].mxu0 %v3643
    %v8096 = vpop.f32.mrb[0].mxu0
    %v8097 = vadd.f32 %v7335, %v8096
    %v8098 = vpop.f32.mrb[0].mxu0
    %v8099 = vadd.f32 %v7339, %v8098
    %v8100 = vpop.f32.mrb[0].mxu0
    %v8101 = vadd.f32 %v7335, %v8100
    %v8102 = vpop.f32.mrb[0].mxu0
    %v8103 = vadd.f32 %v7339, %v8102
    %8104 = vmatprep.mubr.bf16.mxu0 %v3646
    %8105 = vmatmul.mubr.bf16.gmra.mrb[0].mxu0 %v3645
    %v8106 = vpop.f32.mrb[0].mxu0
    %v8107 = vadd.f32 %v7335, %v8106
    %v8108 = vpop.f32.mrb[0].mxu0
    %v8109 = vadd.f32 %v7339, %v8108
    %v8110 = vpop.f32.mrb[0].mxu0
    %v8111 = vadd.f32 %v7335, %v8110
    %v8112 = vpop.f32.mrb[0].mxu0
    %v8113 = vadd.f32 %v7339, %v8112
    %8114 = vmatprep.mubr.bf16.mxu0 %v3648
    %8115 = vmatmul.mubr.bf16.gmra.mrb[0].mxu0 %v3647
    %v8116 = vpop.f32.mrb[0].mxu0
    %v8117 = vadd.f32 %v7335, %v8116
    %v8118 = vpop.f32.mrb[0].mxu0
    %v8119 = vadd.f32 %v7339, %v8118
    %v8120 = vpop.f32.mrb[0].mxu0
    %v8121 = vadd.f32 %v7335, %v8120
    %v8122 = vpop.f32.mrb[0].mxu0
    %v8123 = vadd.f32 %v7339, %v8122
    %8124 = vmatprep.mubr.bf16.mxu0 %v3650
    %8125 = vmatmul.mubr.bf16.gmra.mrb[0].mxu0 %v3649
    %v8126 = vpop.f32.mrb[0].mxu0
    %v8127 = vadd.f32 %v7335, %v8126
    %v8128 = vpop.f32.mrb[0].mxu0
    %v8129 = vadd.f32 %v7339, %v8128
    %v8130 = vpop.f32.mrb[0].mxu0
    %v8131 = vadd.f32 %v7335, %v8130
    %v8132 = vpop.f32.mrb[0].mxu0
    %v8133 = vadd.f32 %v7339, %v8132
    %8134 = vmatprep.mubr.bf16.mxu0 %v3652
    %8135 = vmatmul.mubr.bf16.gmra.mrb[0].mxu0 %v3651
    %v8136 = vpop.f32.mrb[0].mxu0
    %v8137 = vadd.f32 %v7335, %v8136
    %v8138 = vpop.f32.mrb[0].mxu0
    %v8139 = vadd.f32 %v7339, %v8138
    %v8140 = vpop.f32.mrb[0].mxu0
    %v8141 = vadd.f32 %v7335, %v8140
    %v8142 = vpop.f32.mrb[0].mxu0
    %v8143 = vadd.f32 %v7339, %v8142
    %8144 = vmatprep.mubr.bf16.mxu0 %v3654
    %8145 = vmatmul.mubr.bf16.gmra.mrb[0].mxu0 %v3653
    %v8146 = vpop.f32.mrb[0].mxu0
    %v8147 = vadd.f32 %v7335, %v8146
    %v8148 = vpop.f32.mrb[0].mxu0
    %v8149 = vadd.f32 %v7339, %v8148
    %v8150 = vpop.f32.mrb[0].mxu0
    %v8151 = vadd.f32 %v7335, %v8150
    %v8152 = vpop.f32.mrb[0].mxu0
    %v8153 = vadd.f32 %v7339, %v8152
    %8154 = vmatprep.mubr.bf16.mxu0 %v3656
    %8155 = vmatmul.mubr.bf16.gmra.mrb[0].mxu0 %v3655
    %v8156 = vpop.f32.mrb[0].mxu0
    %v8157 = vadd.f32 %v7335, %v8156
    %v8158 = vpop.f32.mrb[0].mxu0
    %v8159 = vadd.f32 %v7339, %v8158
    %v8160 = vpop.f32.mrb[0].mxu0
    %v8161 = vadd.f32 %v7335, %v8160
    %v8162 = vpop.f32.mrb[0].mxu0
    %v8163 = vadd.f32 %v7339, %v8162
    %8164 = vmatprep.mubr.bf16.mxu0 %v3658
    %8165 = vmatmul.mubr.bf16.gmra.mrb[0].mxu0 %v3657
    %v8166 = vpop.f32.mrb[0].mxu0
    %v8167 = vadd.f32 %v7335, %v8166
    %v8168 = vpop.f32.mrb[0].mxu0
    %v8169 = vadd.f32 %v7339, %v8168
    %v8170 = vpop.f32.mrb[0].mxu0
    %v8171 = vadd.f32 %v7335, %v8170
    %v8172 = vpop.f32.mrb[0].mxu0
    %v8173 = vadd.f32 %v7339, %v8172
    %8174 = vdwg.mxu0
    %v8175 = vmax.f32 %v7537, %v7541
    %v8176 = vmax.f32 %v8175, %v7547
    %v8177 = vmax.f32 %v8176, %v7551
    %v8178 = vmax.f32 %v8177, %v7557
    %v8179 = vmax.f32 %v8178, %v7561
    %v8180 = vmax.f32 %v8179, %v7567
    %v8181 = vmax.f32 %v8180, %v7571
    %v8182 = vmax.f32 %v8181, %v7577
    %v8183 = vmax.f32 %v8182, %v7581
    %v8184 = vmax.f32 %v8183, %v7587
    %v8185 = vmax.f32 %v8184, %v7591
    %v8186 = vmax.f32 %v8185, %v7597
    %v8187 = vmax.f32 %v8186, %v7601
    %v8188 = vmax.f32 %v8187, %v7607
    %v8189 = vmax.f32 %v8188, %v7611
    %v8190 = vrot.slane %v8189, 4
    %v8191 = vmax.f32 %v8189, %v8190
    %v8192 = vrot.slane %v8191, 2
    %v8193 = vmax.f32 %v8191, %v8192
    %v8194 = vrot.slane %v8193, 1
    %v8195 = vmax.f32 %v8193, %v8194
    %v8196 = vmax.f32 %v7539, %v7543
    %v8197 = vmax.f32 %v8196, %v7549
    %v8198 = vmax.f32 %v8197, %v7553
    %v8199 = vmax.f32 %v8198, %v7559
    %v8200 = vmax.f32 %v8199, %v7563
    %v8201 = vmax.f32 %v8200, %v7569
    %v8202 = vmax.f32 %v8201, %v7573
    %v8203 = vmax.f32 %v8202, %v7579
    %v8204 = vmax.f32 %v8203, %v7583
    %v8205 = vmax.f32 %v8204, %v7589
    %v8206 = vmax.f32 %v8205, %v7593
    %v8207 = vmax.f32 %v8206, %v7599
    %v8208 = vmax.f32 %v8207, %v7603
    %v8209 = vmax.f32 %v8208, %v7609
    %v8210 = vmax.f32 %v8209, %v7613
    %v8211 = vrot.slane %v8210, 4
    %v8212 = vmax.f32 %v8210, %v8211
    %v8213 = vrot.slane %v8212, 2
    %v8214 = vmax.f32 %v8212, %v8213
    %v8215 = vrot.slane %v8214, 1
    %v8216 = vmax.f32 %v8214, %v8215
    %v8217 = vmax.f32 %v7617, %v7621
    %v8218 = vmax.f32 %v8217, %v7627
    %v8219 = vmax.f32 %v8218, %v7631
    %v8220 = vmax.f32 %v8219, %v7637
    %v8221 = vmax.f32 %v8220, %v7641
    %v8222 = vmax.f32 %v8221, %v7647
    %v8223 = vmax.f32 %v8222, %v7651
    %v8224 = vmax.f32 %v8223, %v7657
    %v8225 = vmax.f32 %v8224, %v7661
    %v8226 = vmax.f32 %v8225, %v7667
    %v8227 = vmax.f32 %v8226, %v7671
    %v8228 = vmax.f32 %v8227, %v7677
    %v8229 = vmax.f32 %v8228, %v7681
    %v8230 = vmax.f32 %v8229, %v7687
    %v8231 = vmax.f32 %v8230, %v7691
    %v8232 = vrot.slane %v8231, 4
    %v8233 = vmax.f32 %v8231, %v8232
    %v8234 = vrot.slane %v8233, 2
    %v8235 = vmax.f32 %v8233, %v8234
    %v8236 = vrot.slane %v8235, 1
    %v8237 = vmax.f32 %v8235, %v8236
    %v8238 = vmax.f32 %v7619, %v7623
    %v8239 = vmax.f32 %v8238, %v7629
    %v8240 = vmax.f32 %v8239, %v7633
    %v8241 = vmax.f32 %v8240, %v7639
    %v8242 = vmax.f32 %v8241, %v7643
    %v8243 = vmax.f32 %v8242, %v7649
    %v8244 = vmax.f32 %v8243, %v7653
    %v8245 = vmax.f32 %v8244, %v7659
    %v8246 = vmax.f32 %v8245, %v7663
    %v8247 = vmax.f32 %v8246, %v7669
    %v8248 = vmax.f32 %v8247, %v7673
    %v8249 = vmax.f32 %v8248, %v7679
    %v8250 = vmax.f32 %v8249, %v7683
    %v8251 = vmax.f32 %v8250, %v7689
    %v8252 = vmax.f32 %v8251, %v7693
    %v8253 = vrot.slane %v8252, 4
    %v8254 = vmax.f32 %v8252, %v8253
    %v8255 = vrot.slane %v8254, 2
    %v8256 = vmax.f32 %v8254, %v8255
    %v8257 = vrot.slane %v8256, 1
    %v8258 = vmax.f32 %v8256, %v8257
    %v8259 = vmax.f32 %v7697, %v7701
    %v8260 = vmax.f32 %v8259, %v7707
    %v8261 = vmax.f32 %v8260, %v7711
    %v8262 = vmax.f32 %v8261, %v7717
    %v8263 = vmax.f32 %v8262, %v7721
    %v8264 = vmax.f32 %v8263, %v7727
    %v8265 = vmax.f32 %v8264, %v7731
    %v8266 = vmax.f32 %v8265, %v7737
    %v8267 = vmax.f32 %v8266, %v7741
    %v8268 = vmax.f32 %v8267, %v7747
    %v8269 = vmax.f32 %v8268, %v7751
    %v8270 = vmax.f32 %v8269, %v7757
    %v8271 = vmax.f32 %v8270, %v7761
    %v8272 = vmax.f32 %v8271, %v7767
    %v8273 = vmax.f32 %v8272, %v7771
    %v8274 = vrot.slane %v8273, 4
    %v8275 = vmax.f32 %v8273, %v8274
    %v8276 = vrot.slane %v8275, 2
    %v8277 = vmax.f32 %v8275, %v8276
    %v8278 = vrot.slane %v8277, 1
    %v8279 = vmax.f32 %v8277, %v8278
    %v8280 = vmax.f32 %v7699, %v7703
    %v8281 = vmax.f32 %v8280, %v7709
    %v8282 = vmax.f32 %v8281, %v7713
    %v8283 = vmax.f32 %v8282, %v7719
    %v8284 = vmax.f32 %v8283, %v7723
    %v8285 = vmax.f32 %v8284, %v7729
    %v8286 = vmax.f32 %v8285, %v7733
    %v8287 = vmax.f32 %v8286, %v7739
    %v8288 = vmax.f32 %v8287, %v7743
    %v8289 = vmax.f32 %v8288, %v7749
    %v8290 = vmax.f32 %v8289, %v7753
    %v8291 = vmax.f32 %v8290, %v7759
    %v8292 = vmax.f32 %v8291, %v7763
    %v8293 = vmax.f32 %v8292, %v7769
    %v8294 = vmax.f32 %v8293, %v7773
    %v8295 = vrot.slane %v8294, 4
    %v8296 = vmax.f32 %v8294, %v8295
    %v8297 = vrot.slane %v8296, 2
    %v8298 = vmax.f32 %v8296, %v8297
    %v8299 = vrot.slane %v8298, 1
    %v8300 = vmax.f32 %v8298, %v8299
    %v8301 = vmax.f32 %v7777, %v7781
    %v8302 = vmax.f32 %v8301, %v7787
    %v8303 = vmax.f32 %v8302, %v7791
    %v8304 = vmax.f32 %v8303, %v7797
    %v8305 = vmax.f32 %v8304, %v7801
    %v8306 = vmax.f32 %v8305, %v7807
    %v8307 = vmax.f32 %v8306, %v7811
    %v8308 = vmax.f32 %v8307, %v7817
    %v8309 = vmax.f32 %v8308, %v7821
    %v8310 = vmax.f32 %v8309, %v7827
    %v8311 = vmax.f32 %v8310, %v7831
    %v8312 = vmax.f32 %v8311, %v7837
    %v8313 = vmax.f32 %v8312, %v7841
    %v8314 = vmax.f32 %v8313, %v7847
    %v8315 = vmax.f32 %v8314, %v7851
    %v8316 = vrot.slane %v8315, 4
    %v8317 = vmax.f32 %v8315, %v8316
    %v8318 = vrot.slane %v8317, 2
    %v8319 = vmax.f32 %v8317, %v8318
    %v8320 = vrot.slane %v8319, 1
    %v8321 = vmax.f32 %v8319, %v8320
    %v8322 = vmax.f32 %v7779, %v7783
    %v8323 = vmax.f32 %v8322, %v7789
    %v8324 = vmax.f32 %v8323, %v7793
    %v8325 = vmax.f32 %v8324, %v7799
    %v8326 = vmax.f32 %v8325, %v7803
    %v8327 = vmax.f32 %v8326, %v7809
    %v8328 = vmax.f32 %v8327, %v7813
    %v8329 = vmax.f32 %v8328, %v7819
    %v8330 = vmax.f32 %v8329, %v7823
    %v8331 = vmax.f32 %v8330, %v7829
    %v8332 = vmax.f32 %v8331, %v7833
    %v8333 = vmax.f32 %v8332, %v7839
    %v8334 = vmax.f32 %v8333, %v7843
    %v8335 = vmax.f32 %v8334, %v7849
    %v8336 = vmax.f32 %v8335, %v7853
    %v8337 = vrot.slane %v8336, 4
    %v8338 = vmax.f32 %v8336, %v8337
    %v8339 = vrot.slane %v8338, 2
    %v8340 = vmax.f32 %v8338, %v8339
    %v8341 = vrot.slane %v8340, 1
    %v8342 = vmax.f32 %v8340, %v8341
    %v8343 = vmax.f32 %v7857, %v7861
    %v8344 = vmax.f32 %v8343, %v7867
    %v8345 = vmax.f32 %v8344, %v7871
    %v8346 = vmax.f32 %v8345, %v7877
    %v8347 = vmax.f32 %v8346, %v7881
    %v8348 = vmax.f32 %v8347, %v7887
    %v8349 = vmax.f32 %v8348, %v7891
    %v8350 = vmax.f32 %v8349, %v7897
    %v8351 = vmax.f32 %v8350, %v7901
    %v8352 = vmax.f32 %v8351, %v7907
    %v8353 = vmax.f32 %v8352, %v7911
    %v8354 = vmax.f32 %v8353, %v7917
    %v8355 = vmax.f32 %v8354, %v7921
    %v8356 = vmax.f32 %v8355, %v7927
    %v8357 = vmax.f32 %v8356, %v7931
    %v8358 = vrot.slane %v8357, 4
    %v8359 = vmax.f32 %v8357, %v8358
    %v8360 = vrot.slane %v8359, 2
    %v8361 = vmax.f32 %v8359, %v8360
    %v8362 = vrot.slane %v8361, 1
    %v8363 = vmax.f32 %v8361, %v8362
    %v8364 = vmax.f32 %v7859, %v7863
    %v8365 = vmax.f32 %v8364, %v7869
    %v8366 = vmax.f32 %v8365, %v7873
    %v8367 = vmax.f32 %v8366, %v7879
    %v8368 = vmax.f32 %v8367, %v7883
    %v8369 = vmax.f32 %v8368, %v7889
    %v8370 = vmax.f32 %v8369, %v7893
    %v8371 = vmax.f32 %v8370, %v7899
    %v8372 = vmax.f32 %v8371, %v7903
    %v8373 = vmax.f32 %v8372, %v7909
    %v8374 = vmax.f32 %v8373, %v7913
    %v8375 = vmax.f32 %v8374, %v7919
    %v8376 = vmax.f32 %v8375, %v7923
    %v8377 = vmax.f32 %v8376, %v7929
    %v8378 = vmax.f32 %v8377, %v7933
    %v8379 = vrot.slane %v8378, 4
    %v8380 = vmax.f32 %v8378, %v8379
    %v8381 = vrot.slane %v8380, 2
    %v8382 = vmax.f32 %v8380, %v8381
    %v8383 = vrot.slane %v8382, 1
    %v8384 = vmax.f32 %v8382, %v8383
    %v8385 = vmax.f32 %v7937, %v7941
    %v8386 = vmax.f32 %v8385, %v7947
    %v8387 = vmax.f32 %v8386, %v7951
    %v8388 = vmax.f32 %v8387, %v7957
    %v8389 = vmax.f32 %v8388, %v7961
    %v8390 = vmax.f32 %v8389, %v7967
    %v8391 = vmax.f32 %v8390, %v7971
    %v8392 = vmax.f32 %v8391, %v7977
    %v8393 = vmax.f32 %v8392, %v7981
    %v8394 = vmax.f32 %v8393, %v7987
    %v8395 = vmax.f32 %v8394, %v7991
    %v8396 = vmax.f32 %v8395, %v7997
    %v8397 = vmax.f32 %v8396, %v8001
    %v8398 = vmax.f32 %v8397, %v8007
    %v8399 = vmax.f32 %v8398, %v8011
    %v8400 = vrot.slane %v8399, 4
    %v8401 = vmax.f32 %v8399, %v8400
    %v8402 = vrot.slane %v8401, 2
    %v8403 = vmax.f32 %v8401, %v8402
    %v8404 = vrot.slane %v8403, 1
    %v8405 = vmax.f32 %v8403, %v8404
    %v8406 = vmax.f32 %v7939, %v7943
    %v8407 = vmax.f32 %v8406, %v7949
    %v8408 = vmax.f32 %v8407, %v7953
    %v8409 = vmax.f32 %v8408, %v7959
    %v8410 = vmax.f32 %v8409, %v7963
    %v8411 = vmax.f32 %v8410, %v7969
    %v8412 = vmax.f32 %v8411, %v7973
    %v8413 = vmax.f32 %v8412, %v7979
    %v8414 = vmax.f32 %v8413, %v7983
    %v8415 = vmax.f32 %v8414, %v7989
    %v8416 = vmax.f32 %v8415, %v7993
    %v8417 = vmax.f32 %v8416, %v7999
    %v8418 = vmax.f32 %v8417, %v8003
    %v8419 = vmax.f32 %v8418, %v8009
    %v8420 = vmax.f32 %v8419, %v8013
    %v8421 = vrot.slane %v8420, 4
    %v8422 = vmax.f32 %v8420, %v8421
    %v8423 = vrot.slane %v8422, 2
    %v8424 = vmax.f32 %v8422, %v8423
    %v8425 = vrot.slane %v8424, 1
    %v8426 = vmax.f32 %v8424, %v8425
    %v8427 = vmax.f32 %v8017, %v8021
    %v8428 = vmax.f32 %v8427, %v8027
    %v8429 = vmax.f32 %v8428, %v8031
    %v8430 = vmax.f32 %v8429, %v8037
    %v8431 = vmax.f32 %v8430, %v8041
    %v8432 = vmax.f32 %v8431, %v8047
    %v8433 = vmax.f32 %v8432, %v8051
    %v8434 = vmax.f32 %v8433, %v8057
    %v8435 = vmax.f32 %v8434, %v8061
    %v8436 = vmax.f32 %v8435, %v8067
    %v8437 = vmax.f32 %v8436, %v8071
    %v8438 = vmax.f32 %v8437, %v8077
    %v8439 = vmax.f32 %v8438, %v8081
    %v8440 = vmax.f32 %v8439, %v8087
    %v8441 = vmax.f32 %v8440, %v8091
    %v8442 = vrot.slane %v8441, 4
    %v8443 = vmax.f32 %v8441, %v8442
    %v8444 = vrot.slane %v8443, 2
    %v8445 = vmax.f32 %v8443, %v8444
    %v8446 = vrot.slane %v8445, 1
    %v8447 = vmax.f32 %v8445, %v8446
    %v8448 = vmax.f32 %v8019, %v8023
    %v8449 = vmax.f32 %v8448, %v8029
    %v8450 = vmax.f32 %v8449, %v8033
    %v8451 = vmax.f32 %v8450, %v8039
    %v8452 = vmax.f32 %v8451, %v8043
    %v8453 = vmax.f32 %v8452, %v8049
    %v8454 = vmax.f32 %v8453, %v8053
    %v8455 = vmax.f32 %v8454, %v8059
    %v8456 = vmax.f32 %v8455, %v8063
    %v8457 = vmax.f32 %v8456, %v8069
    %v8458 = vmax.f32 %v8457, %v8073
    %v8459 = vmax.f32 %v8458, %v8079
    %v8460 = vmax.f32 %v8459, %v8083
    %v8461 = vmax.f32 %v8460, %v8089
    %v8462 = vmax.f32 %v8461, %v8093
    %v8463 = vrot.slane %v8462, 4
    %v8464 = vmax.f32 %v8462, %v8463
    %v8465 = vrot.slane %v8464, 2
    %v8466 = vmax.f32 %v8464, %v8465
    %v8467 = vrot.slane %v8466, 1
    %v8468 = vmax.f32 %v8466, %v8467
    %v8469 = vmax.f32 %v8097, %v8101
    %v8470 = vmax.f32 %v8469, %v8107
    %v8471 = vmax.f32 %v8470, %v8111
    %v8472 = vmax.f32 %v8471, %v8117
    %v8473 = vmax.f32 %v8472, %v8121
    %v8474 = vmax.f32 %v8473, %v8127
    %v8475 = vmax.f32 %v8474, %v8131
    %v8476 = vmax.f32 %v8475, %v8137
    %v8477 = vmax.f32 %v8476, %v8141
    %v8478 = vmax.f32 %v8477, %v8147
    %v8479 = vmax.f32 %v8478, %v8151
    %v8480 = vmax.f32 %v8479, %v8157
    %v8481 = vmax.f32 %v8480, %v8161
    %v8482 = vmax.f32 %v8481, %v8167
    %v8483 = vmax.f32 %v8482, %v8171
    %v8484 = vrot.slane %v8483, 4
    %v8485 = vmax.f32 %v8483, %v8484
    %v8486 = vrot.slane %v8485, 2
    %v8487 = vmax.f32 %v8485, %v8486
    %v8488 = vrot.slane %v8487, 1
    %v8489 = vmax.f32 %v8487, %v8488
    %v8490 = vmax.f32 %v8099, %v8103
    %v8491 = vmax.f32 %v8490, %v8109
    %v8492 = vmax.f32 %v8491, %v8113
    %v8493 = vmax.f32 %v8492, %v8119
    %v8494 = vmax.f32 %v8493, %v8123
    %v8495 = vmax.f32 %v8494, %v8129
    %v8496 = vmax.f32 %v8495, %v8133
    %v8497 = vmax.f32 %v8496, %v8139
    %v8498 = vmax.f32 %v8497, %v8143
    %v8499 = vmax.f32 %v8498, %v8149
    %v8500 = vmax.f32 %v8499, %v8153
    %v8501 = vmax.f32 %v8500, %v8159
    %v8502 = vmax.f32 %v8501, %v8163
    %v8503 = vmax.f32 %v8502, %v8169
    %v8504 = vmax.f32 %v8503, %v8173
    %v8505 = vrot.slane %v8504, 4
    %v8506 = vmax.f32 %v8504, %v8505
    %v8507 = vrot.slane %v8506, 2
    %v8508 = vmax.f32 %v8506, %v8507
    %v8509 = vrot.slane %v8508, 1
    %v8510 = vmax.f32 %v8508, %v8509
    %vm8527 = vcmask 1041409
    %v8528 = vsel %vm8527, %v4598, %v4556
    %vm8529 = vcmask 1042434
    %v8530 = vsel %vm8529, %v4640, %v8528
    %vm8531 = vcmask 1043459
    %v8532 = vsel %vm8531, %v4682, %v8530
    %vm8533 = vcmask 1044484
    %v8534 = vsel %vm8533, %v4724, %v8532
    %vm8535 = vcmask 1045509
    %v8536 = vsel %vm8535, %v4766, %v8534
    %vm8537 = vcmask 1046534
    %v8538 = vsel %vm8537, %v4808, %v8536
    %vm8539 = vcmask 1047559
    %v8540 = vsel %vm8539, %v4850, %v8538
    %v8541 = vsel %vm8527, %v4619, %v4577
    %v8542 = vsel %vm8529, %v4661, %v8541
    %v8543 = vsel %vm8531, %v4703, %v8542
    %v8544 = vsel %vm8533, %v4745, %v8543
    %v8545 = vsel %vm8535, %v4787, %v8544
    %v8546 = vsel %vm8537, %v4829, %v8545
    %v8547 = vsel %vm8539, %v4871, %v8546
    %v8566 = vsel %vm8527, %v5811, %v5769
    %v8567 = vsel %vm8529, %v5853, %v8566
    %v8568 = vsel %vm8531, %v5895, %v8567
    %v8569 = vsel %vm8533, %v5937, %v8568
    %v8570 = vsel %vm8535, %v5979, %v8569
    %v8571 = vsel %vm8537, %v6021, %v8570
    %v8572 = vsel %vm8539, %v6063, %v8571
    %v8573 = vsel %vm8527, %v5832, %v5790
    %v8574 = vsel %vm8529, %v5874, %v8573
    %v8575 = vsel %vm8531, %v5916, %v8574
    %v8576 = vsel %vm8533, %v5958, %v8575
    %v8577 = vsel %vm8535, %v6000, %v8576
    %v8578 = vsel %vm8537, %v6042, %v8577
    %v8579 = vsel %vm8539, %v6084, %v8578
    %v8598 = vsel %vm8527, %v7024, %v6982
    %v8599 = vsel %vm8529, %v7066, %v8598
    %v8600 = vsel %vm8531, %v7108, %v8599
    %v8601 = vsel %vm8533, %v7150, %v8600
    %v8602 = vsel %vm8535, %v7192, %v8601
    %v8603 = vsel %vm8537, %v7234, %v8602
    %v8604 = vsel %vm8539, %v7276, %v8603
    %v8605 = vsel %vm8527, %v7045, %v7003
    %v8606 = vsel %vm8529, %v7087, %v8605
    %v8607 = vsel %vm8531, %v7129, %v8606
    %v8608 = vsel %vm8533, %v7171, %v8607
    %v8609 = vsel %vm8535, %v7213, %v8608
    %v8610 = vsel %vm8537, %v7255, %v8609
    %v8611 = vsel %vm8539, %v7297, %v8610
    %v8630 = vsel %vm8527, %v8237, %v8195
    %v8631 = vsel %vm8529, %v8279, %v8630
    %v8632 = vsel %vm8531, %v8321, %v8631
    %v8633 = vsel %vm8533, %v8363, %v8632
    %v8634 = vsel %vm8535, %v8405, %v8633
    %v8635 = vsel %vm8537, %v8447, %v8634
    %v8636 = vsel %vm8539, %v8489, %v8635
    %v8637 = vsel %vm8527, %v8258, %v8216
    %v8638 = vsel %vm8529, %v8300, %v8637
    %v8639 = vsel %vm8531, %v8342, %v8638
    %v8640 = vsel %vm8533, %v8384, %v8639
    %v8641 = vsel %vm8535, %v8426, %v8640
    %v8642 = vsel %vm8537, %v8468, %v8641
    %v8643 = vsel %vm8539, %v8510, %v8642
    %v8646 = vpack.c.bf16 %v8540, %v8540
    %v8647 = vpack.c.bf16 %v8547, %v8547
    %v8648 = vpack.c.bf16 %v8572, %v8572
    %v8649 = vpack.c.bf16 %v8579, %v8579
    %v8650 = vpack.c.bf16 %v8604, %v8604
    %v8651 = vpack.c.bf16 %v8611, %v8611
    %v8652 = vpack.c.bf16 %v8636, %v8636
    %v8653 = vpack.c.bf16 %v8643, %v8643
    %v8654 = vld [vmem:[#allocation5] sm:$0xff]
    %v8655 = vld [vmem:[#allocation5 + $0x8] sm:$0xff]
    %v8656 = vld [vmem:[#allocation5 + $0x10] sm:$0xff]
    %v8657 = vld [vmem:[#allocation5 + $0x18] sm:$0xff]
    %v8658 = vld [vmem:[#allocation5 + $0x20] sm:$0xff]
    %v8659 = vld [vmem:[#allocation5 + $0x28] sm:$0xff]
    %v8660 = vld [vmem:[#allocation5 + $0x30] sm:$0xff]
    %v8661 = vld [vmem:[#allocation5 + $0x38] sm:$0xff]
    %v8662 = vld [vmem:[#allocation5 + $0x40] sm:$0xff]
    %v8663 = vld [vmem:[#allocation5 + $0x48] sm:$0xff]
    %v8664 = vld [vmem:[#allocation5 + $0x50] sm:$0xff]
    %v8665 = vld [vmem:[#allocation5 + $0x58] sm:$0xff]
    %v8666 = vld [vmem:[#allocation5 + $0x60] sm:$0xff]
    %v8667 = vld [vmem:[#allocation5 + $0x68] sm:$0xff]
    %v8668 = vld [vmem:[#allocation5 + $0x70] sm:$0xff]
    %v8669 = vld [vmem:[#allocation5 + $0x78] sm:$0xff]
    %v8670 = vld [vmem:[#allocation5 + $0x80] sm:$0xff]
    %v8671 = vld [vmem:[#allocation5 + $0x88] sm:$0xff]
    %v8672 = vld [vmem:[#allocation5 + $0x90] sm:$0xff]
    %v8673 = vld [vmem:[#allocation5 + $0x98] sm:$0xff]
    %v8674 = vld [vmem:[#allocation5 + $0xa0] sm:$0xff]
    %v8675 = vld [vmem:[#allocation5 + $0xa8] sm:$0xff]
    %v8676 = vld [vmem:[#allocation5 + $0xb0] sm:$0xff]
    %v8677 = vld [vmem:[#allocation5 + $0xb8] sm:$0xff]
    %v8678 = vld [vmem:[#allocation5 + $0xc0] sm:$0xff]
    %v8679 = vld [vmem:[#allocation5 + $0xc8] sm:$0xff]
    %v8680 = vld [vmem:[#allocation5 + $0xd0] sm:$0xff]
    %v8681 = vld [vmem:[#allocation5 + $0xd8] sm:$0xff]
    %v8682 = vld [vmem:[#allocation5 + $0xe0] sm:$0xff]
    %v8683 = vld [vmem:[#allocation5 + $0xe8] sm:$0xff]
    %v8684 = vld [vmem:[#allocation5 + $0xf0] sm:$0xff]
    %v8685 = vld [vmem:[#allocation5 + $0xf8] sm:$0xff]
    %v8686 = vld [vmem:[#allocation5 + $0x100] sm:$0xff]
    %v8687 = vld [vmem:[#allocation5 + $0x108] sm:$0xff]
    %v8688 = vld [vmem:[#allocation5 + $0x110] sm:$0xff]
    %v8689 = vld [vmem:[#allocation5 + $0x118] sm:$0xff]
    %v8690 = vld [vmem:[#allocation5 + $0x120] sm:$0xff]
    %v8691 = vld [vmem:[#allocation5 + $0x128] sm:$0xff]
    %v8692 = vld [vmem:[#allocation5 + $0x130] sm:$0xff]
    %v8693 = vld [vmem:[#allocation5 + $0x138] sm:$0xff]
    %v8694 = vld [vmem:[#allocation5 + $0x140] sm:$0xff]
    %v8695 = vld [vmem:[#allocation5 + $0x148] sm:$0xff]
    %v8696 = vld [vmem:[#allocation5 + $0x150] sm:$0xff]
    %v8697 = vld [vmem:[#allocation5 + $0x158] sm:$0xff]
    %v8698 = vld [vmem:[#allocation5 + $0x160] sm:$0xff]
    %v8699 = vld [vmem:[#allocation5 + $0x168] sm:$0xff]
    %v8700 = vld [vmem:[#allocation5 + $0x170] sm:$0xff]
    %v8701 = vld [vmem:[#allocation5 + $0x178] sm:$0xff]
    %v8702 = vld [vmem:[#allocation5 + $0x180] sm:$0xff]
    %v8703 = vld [vmem:[#allocation5 + $0x188] sm:$0xff]
    %v8704 = vld [vmem:[#allocation5 + $0x190] sm:$0xff]
    %v8705 = vld [vmem:[#allocation5 + $0x198] sm:$0xff]
    %v8706 = vld [vmem:[#allocation5 + $0x1a0] sm:$0xff]
    %v8707 = vld [vmem:[#allocation5 + $0x1a8] sm:$0xff]
    %v8708 = vld [vmem:[#allocation5 + $0x1b0] sm:$0xff]
    %v8709 = vld [vmem:[#allocation5 + $0x1b8] sm:$0xff]
    %v8710 = vld [vmem:[#allocation5 + $0x1c0] sm:$0xff]
    %v8711 = vld [vmem:[#allocation5 + $0x1c8] sm:$0xff]
    %v8712 = vld [vmem:[#allocation5 + $0x1d0] sm:$0xff]
    %v8713 = vld [vmem:[#allocation5 + $0x1d8] sm:$0xff]
    %v8714 = vld [vmem:[#allocation5 + $0x1e0] sm:$0xff]
    %v8715 = vld [vmem:[#allocation5 + $0x1e8] sm:$0xff]
    %v8716 = vld [vmem:[#allocation5 + $0x1f0] sm:$0xff]
    %v8717 = vld [vmem:[#allocation5 + $0x1f8] sm:$0xff]
    %v8718 = vld [vmem:[#allocation5 + $0x200] sm:$0xff]
    %v8719 = vld [vmem:[#allocation5 + $0x208] sm:$0xff]
    %v8720 = vld [vmem:[#allocation5 + $0x210] sm:$0xff]
    %v8721 = vld [vmem:[#allocation5 + $0x218] sm:$0xff]
    %v8722 = vld [vmem:[#allocation5 + $0x220] sm:$0xff]
    %v8723 = vld [vmem:[#allocation5 + $0x228] sm:$0xff]
    %v8724 = vld [vmem:[#allocation5 + $0x230] sm:$0xff]
    %v8725 = vld [vmem:[#allocation5 + $0x238] sm:$0xff]
    %v8726 = vld [vmem:[#allocation5 + $0x240] sm:$0xff]
    %v8727 = vld [vmem:[#allocation5 + $0x248] sm:$0xff]
    %v8728 = vld [vmem:[#allocation5 + $0x250] sm:$0xff]
    %v8729 = vld [vmem:[#allocation5 + $0x258] sm:$0xff]
    %v8730 = vld [vmem:[#allocation5 + $0x260] sm:$0xff]
    %v8731 = vld [vmem:[#allocation5 + $0x268] sm:$0xff]
    %v8732 = vld [vmem:[#allocation5 + $0x270] sm:$0xff]
    %v8733 = vld [vmem:[#allocation5 + $0x278] sm:$0xff]
    %v8734 = vld [vmem:[#allocation5 + $0x280] sm:$0xff]
    %v8735 = vld [vmem:[#allocation5 + $0x288] sm:$0xff]
    %v8736 = vld [vmem:[#allocation5 + $0x290] sm:$0xff]
    %v8737 = vld [vmem:[#allocation5 + $0x298] sm:$0xff]
    %v8738 = vld [vmem:[#allocation5 + $0x2a0] sm:$0xff]
    %v8739 = vld [vmem:[#allocation5 + $0x2a8] sm:$0xff]
    %v8740 = vld [vmem:[#allocation5 + $0x2b0] sm:$0xff]
    %v8741 = vld [vmem:[#allocation5 + $0x2b8] sm:$0xff]
    %v8742 = vld [vmem:[#allocation5 + $0x2c0] sm:$0xff]
    %v8743 = vld [vmem:[#allocation5 + $0x2c8] sm:$0xff]
    %v8744 = vld [vmem:[#allocation5 + $0x2d0] sm:$0xff]
    %v8745 = vld [vmem:[#allocation5 + $0x2d8] sm:$0xff]
    %v8746 = vld [vmem:[#allocation5 + $0x2e0] sm:$0xff]
    %v8747 = vld [vmem:[#allocation5 + $0x2e8] sm:$0xff]
    %v8748 = vld [vmem:[#allocation5 + $0x2f0] sm:$0xff]
    %v8749 = vld [vmem:[#allocation5 + $0x2f8] sm:$0xff]
    %v8750 = vld [vmem:[#allocation5 + $0x300] sm:$0xff]
    %v8751 = vld [vmem:[#allocation5 + $0x308] sm:$0xff]
    %v8752 = vld [vmem:[#allocation5 + $0x310] sm:$0xff]
    %v8753 = vld [vmem:[#allocation5 + $0x318] sm:$0xff]
    %v8754 = vld [vmem:[#allocation5 + $0x320] sm:$0xff]
    %v8755 = vld [vmem:[#allocation5 + $0x328] sm:$0xff]
    %v8756 = vld [vmem:[#allocation5 + $0x330] sm:$0xff]
    %v8757 = vld [vmem:[#allocation5 + $0x338] sm:$0xff]
    %v8758 = vld [vmem:[#allocation5 + $0x340] sm:$0xff]
    %v8759 = vld [vmem:[#allocation5 + $0x348] sm:$0xff]
    %v8760 = vld [vmem:[#allocation5 + $0x350] sm:$0xff]
    %v8761 = vld [vmem:[#allocation5 + $0x358] sm:$0xff]
    %v8762 = vld [vmem:[#allocation5 + $0x360] sm:$0xff]
    %v8763 = vld [vmem:[#allocation5 + $0x368] sm:$0xff]
    %v8764 = vld [vmem:[#allocation5 + $0x370] sm:$0xff]
    %v8765 = vld [vmem:[#allocation5 + $0x378] sm:$0xff]
    %v8766 = vld [vmem:[#allocation5 + $0x380] sm:$0xff]
    %v8767 = vld [vmem:[#allocation5 + $0x388] sm:$0xff]
    %v8768 = vld [vmem:[#allocation5 + $0x390] sm:$0xff]
    %v8769 = vld [vmem:[#allocation5 + $0x398] sm:$0xff]
    %v8770 = vld [vmem:[#allocation5 + $0x3a0] sm:$0xff]
    %v8771 = vld [vmem:[#allocation5 + $0x3a8] sm:$0xff]
    %v8772 = vld [vmem:[#allocation5 + $0x3b0] sm:$0xff]
    %v8773 = vld [vmem:[#allocation5 + $0x3b8] sm:$0xff]
    %v8774 = vld [vmem:[#allocation5 + $0x3c0] sm:$0xff]
    %v8775 = vld [vmem:[#allocation5 + $0x3c8] sm:$0xff]
    %v8776 = vld [vmem:[#allocation5 + $0x3d0] sm:$0xff]
    %v8777 = vld [vmem:[#allocation5 + $0x3d8] sm:$0xff]
    %v8778 = vld [vmem:[#allocation5 + $0x3e0] sm:$0xff]
    %v8779 = vld [vmem:[#allocation5 + $0x3e8] sm:$0xff]
    %v8780 = vld [vmem:[#allocation5 + $0x3f0] sm:$0xff]
    %v8781 = vld [vmem:[#allocation5 + $0x3f8] sm:$0xff]
    %v8782 = vld [vmem:[#allocation5 + $0x400] sm:$0xff]
    %v8783 = vld [vmem:[#allocation5 + $0x408] sm:$0xff]
    %v8784 = vld [vmem:[#allocation5 + $0x410] sm:$0xff]
    %v8785 = vld [vmem:[#allocation5 + $0x418] sm:$0xff]
    %v8786 = vld [vmem:[#allocation5 + $0x420] sm:$0xff]
    %v8787 = vld [vmem:[#allocation5 + $0x428] sm:$0xff]
    %v8788 = vld [vmem:[#allocation5 + $0x430] sm:$0xff]
    %v8789 = vld [vmem:[#allocation5 + $0x438] sm:$0xff]
    %v8790 = vld [vmem:[#allocation5 + $0x440] sm:$0xff]
    %v8791 = vld [vmem:[#allocation5 + $0x448] sm:$0xff]
    %v8792 = vld [vmem:[#allocation5 + $0x450] sm:$0xff]
    %v8793 = vld [vmem:[#allocation5 + $0x458] sm:$0xff]
    %v8794 = vld [vmem:[#allocation5 + $0x460] sm:$0xff]
    %v8795 = vld [vmem:[#allocation5 + $0x468] sm:$0xff]
    %v8796 = vld [vmem:[#allocation5 + $0x470] sm:$0xff]
    %v8797 = vld [vmem:[#allocation5 + $0x478] sm:$0xff]
    %v8798 = vld [vmem:[#allocation5 + $0x480] sm:$0xff]
    %v8799 = vld [vmem:[#allocation5 + $0x488] sm:$0xff]
    %v8800 = vld [vmem:[#allocation5 + $0x490] sm:$0xff]
    %v8801 = vld [vmem:[#allocation5 + $0x498] sm:$0xff]
    %v8802 = vld [vmem:[#allocation5 + $0x4a0] sm:$0xff]
    %v8803 = vld [vmem:[#allocation5 + $0x4a8] sm:$0xff]
    %v8804 = vld [vmem:[#allocation5 + $0x4b0] sm:$0xff]
    %v8805 = vld [vmem:[#allocation5 + $0x4b8] sm:$0xff]
    %v8806 = vld [vmem:[#allocation5 + $0x4c0] sm:$0xff]
    %v8807 = vld [vmem:[#allocation5 + $0x4c8] sm:$0xff]
    %v8808 = vld [vmem:[#allocation5 + $0x4d0] sm:$0xff]
    %v8809 = vld [vmem:[#allocation5 + $0x4d8] sm:$0xff]
    %v8810 = vld [vmem:[#allocation5 + $0x4e0] sm:$0xff]
    %v8811 = vld [vmem:[#allocation5 + $0x4e8] sm:$0xff]
    %v8812 = vld [vmem:[#allocation5 + $0x4f0] sm:$0xff]
    %v8813 = vld [vmem:[#allocation5 + $0x4f8] sm:$0xff]
    %v8814 = vld [vmem:[#allocation5 + $0x500] sm:$0xff]
    %v8815 = vld [vmem:[#allocation5 + $0x508] sm:$0xff]
    %v8816 = vld [vmem:[#allocation5 + $0x510] sm:$0xff]
    %v8817 = vld [vmem:[#allocation5 + $0x518] sm:$0xff]
    %v8818 = vld [vmem:[#allocation5 + $0x520] sm:$0xff]
    %v8819 = vld [vmem:[#allocation5 + $0x528] sm:$0xff]
    %v8820 = vld [vmem:[#allocation5 + $0x530] sm:$0xff]
    %v8821 = vld [vmem:[#allocation5 + $0x538] sm:$0xff]
    %v8822 = vld [vmem:[#allocation5 + $0x540] sm:$0xff]
    %v8823 = vld [vmem:[#allocation5 + $0x548] sm:$0xff]
    %v8824 = vld [vmem:[#allocation5 + $0x550] sm:$0xff]
    %v8825 = vld [vmem:[#allocation5 + $0x558] sm:$0xff]
    %v8826 = vld [vmem:[#allocation5 + $0x560] sm:$0xff]
    %v8827 = vld [vmem:[#allocation5 + $0x568] sm:$0xff]
    %v8828 = vld [vmem:[#allocation5 + $0x570] sm:$0xff]
    %v8829 = vld [vmem:[#allocation5 + $0x578] sm:$0xff]
    %v8830 = vld [vmem:[#allocation5 + $0x580] sm:$0xff]
    %v8831 = vld [vmem:[#allocation5 + $0x588] sm:$0xff]
    %v8832 = vld [vmem:[#allocation5 + $0x590] sm:$0xff]
    %v8833 = vld [vmem:[#allocation5 + $0x598] sm:$0xff]
    %v8834 = vld [vmem:[#allocation5 + $0x5a0] sm:$0xff]
    %v8835 = vld [vmem:[#allocation5 + $0x5a8] sm:$0xff]
    %v8836 = vld [vmem:[#allocation5 + $0x5b0] sm:$0xff]
    %v8837 = vld [vmem:[#allocation5 + $0x5b8] sm:$0xff]
    %v8838 = vld [vmem:[#allocation5 + $0x5c0] sm:$0xff]
    %v8839 = vld [vmem:[#allocation5 + $0x5c8] sm:$0xff]
    %v8840 = vld [vmem:[#allocation5 + $0x5d0] sm:$0xff]
    %v8841 = vld [vmem:[#allocation5 + $0x5d8] sm:$0xff]
    %v8842 = vld [vmem:[#allocation5 + $0x5e0] sm:$0xff]
    %v8843 = vld [vmem:[#allocation5 + $0x5e8] sm:$0xff]
    %v8844 = vld [vmem:[#allocation5 + $0x5f0] sm:$0xff]
    %v8845 = vld [vmem:[#allocation5 + $0x5f8] sm:$0xff]
    %v8846 = vld [vmem:[#allocation5 + $0x600] sm:$0xff]
    %v8847 = vld [vmem:[#allocation5 + $0x608] sm:$0xff]
    %v8848 = vld [vmem:[#allocation5 + $0x610] sm:$0xff]
    %v8849 = vld [vmem:[#allocation5 + $0x618] sm:$0xff]
    %v8850 = vld [vmem:[#allocation5 + $0x620] sm:$0xff]
    %v8851 = vld [vmem:[#allocation5 + $0x628] sm:$0xff]
    %v8852 = vld [vmem:[#allocation5 + $0x630] sm:$0xff]
    %v8853 = vld [vmem:[#allocation5 + $0x638] sm:$0xff]
    %v8854 = vld [vmem:[#allocation5 + $0x640] sm:$0xff]
    %v8855 = vld [vmem:[#allocation5 + $0x648] sm:$0xff]
    %v8856 = vld [vmem:[#allocation5 + $0x650] sm:$0xff]
    %v8857 = vld [vmem:[#allocation5 + $0x658] sm:$0xff]
    %v8858 = vld [vmem:[#allocation5 + $0x660] sm:$0xff]
    %v8859 = vld [vmem:[#allocation5 + $0x668] sm:$0xff]
    %v8860 = vld [vmem:[#allocation5 + $0x670] sm:$0xff]
    %v8861 = vld [vmem:[#allocation5 + $0x678] sm:$0xff]
    %v8862 = vld [vmem:[#allocation5 + $0x680] sm:$0xff]
    %v8863 = vld [vmem:[#allocation5 + $0x688] sm:$0xff]
    %v8864 = vld [vmem:[#allocation5 + $0x690] sm:$0xff]
    %v8865 = vld [vmem:[#allocation5 + $0x698] sm:$0xff]
    %v8866 = vld [vmem:[#allocation5 + $0x6a0] sm:$0xff]
    %v8867 = vld [vmem:[#allocation5 + $0x6a8] sm:$0xff]
    %v8868 = vld [vmem:[#allocation5 + $0x6b0] sm:$0xff]
    %v8869 = vld [vmem:[#allocation5 + $0x6b8] sm:$0xff]
    %v8870 = vld [vmem:[#allocation5 + $0x6c0] sm:$0xff]
    %v8871 = vld [vmem:[#allocation5 + $0x6c8] sm:$0xff]
    %v8872 = vld [vmem:[#allocation5 + $0x6d0] sm:$0xff]
    %v8873 = vld [vmem:[#allocation5 + $0x6d8] sm:$0xff]
    %v8874 = vld [vmem:[#allocation5 + $0x6e0] sm:$0xff]
    %v8875 = vld [vmem:[#allocation5 + $0x6e8] sm:$0xff]
    %v8876 = vld [vmem:[#allocation5 + $0x6f0] sm:$0xff]
    %v8877 = vld [vmem:[#allocation5 + $0x6f8] sm:$0xff]
    %v8878 = vld [vmem:[#allocation5 + $0x700] sm:$0xff]
    %v8879 = vld [vmem:[#allocation5 + $0x708] sm:$0xff]
    %v8880 = vld [vmem:[#allocation5 + $0x710] sm:$0xff]
    %v8881 = vld [vmem:[#allocation5 + $0x718] sm:$0xff]
    %v8882 = vld [vmem:[#allocation5 + $0x720] sm:$0xff]
    %v8883 = vld [vmem:[#allocation5 + $0x728] sm:$0xff]
    %v8884 = vld [vmem:[#allocation5 + $0x730] sm:$0xff]
    %v8885 = vld [vmem:[#allocation5 + $0x738] sm:$0xff]
    %v8886 = vld [vmem:[#allocation5 + $0x740] sm:$0xff]
    %v8887 = vld [vmem:[#allocation5 + $0x748] sm:$0xff]
    %v8888 = vld [vmem:[#allocation5 + $0x750] sm:$0xff]
    %v8889 = vld [vmem:[#allocation5 + $0x758] sm:$0xff]
    %v8890 = vld [vmem:[#allocation5 + $0x760] sm:$0xff]
    %v8891 = vld [vmem:[#allocation5 + $0x768] sm:$0xff]
    %v8892 = vld [vmem:[#allocation5 + $0x770] sm:$0xff]
    %v8893 = vld [vmem:[#allocation5 + $0x778] sm:$0xff]
    %v8894 = vld [vmem:[#allocation5 + $0x780] sm:$0xff]
    %v8895 = vld [vmem:[#allocation5 + $0x788] sm:$0xff]
    %v8896 = vld [vmem:[#allocation5 + $0x790] sm:$0xff]
    %v8897 = vld [vmem:[#allocation5 + $0x798] sm:$0xff]
    %v8898 = vld [vmem:[#allocation5 + $0x7a0] sm:$0xff]
    %v8899 = vld [vmem:[#allocation5 + $0x7a8] sm:$0xff]
    %v8900 = vld [vmem:[#allocation5 + $0x7b0] sm:$0xff]
    %v8901 = vld [vmem:[#allocation5 + $0x7b8] sm:$0xff]
    %v8902 = vld [vmem:[#allocation5 + $0x7c0] sm:$0xff]
    %v8903 = vld [vmem:[#allocation5 + $0x7c8] sm:$0xff]
    %v8904 = vld [vmem:[#allocation5 + $0x7d0] sm:$0xff]
    %v8905 = vld [vmem:[#allocation5 + $0x7d8] sm:$0xff]
    %v8906 = vld [vmem:[#allocation5 + $0x7e0] sm:$0xff]
    %v8907 = vld [vmem:[#allocation5 + $0x7e8] sm:$0xff]
    %v8908 = vld [vmem:[#allocation5 + $0x7f0] sm:$0xff]
    %v8909 = vld [vmem:[#allocation5 + $0x7f8] sm:$0xff]
    %v8910 = vld [vmem:[%s10] sm:$0xf]
    %v8912 = vlaneseq
    %v8913 = vshrl.u32 %v8912, 7
    %v8914 = vsub.s32 0, %v8913
    %v8915 = vrot.slane %v8910, %v8914
    %v8916 = vlaneseq
    %v8917 = vshrl.u32 %v8916, 7
    %v8918 = vsub.s32 1, %v8917
    %v8919 = vrot.slane %v8910, %v8918
    %v8920 = vlaneseq
    %v8921 = vshrl.u32 %v8920, 7
    %v8922 = vsub.s32 2, %v8921
    %v8923 = vrot.slane %v8910, %v8922
    %v8924 = vlaneseq
    %v8925 = vshrl.u32 %v8924, 7
    %v8926 = vsub.s32 3, %v8925
    %v8927 = vrot.slane %v8910, %v8926
    %v9188 = vunpack.c.l.b16 %v8654
    %v9189 = vunpack.c.h.b16 %v8654
    %v9190 = vunpack.c.l.b16 %v8655
    %v9191 = vunpack.c.h.b16 %v8655
    %v9192 = vunpack.c.l.b16 %v8656
    %v9193 = vunpack.c.h.b16 %v8656
    %v9194 = vunpack.c.l.b16 %v8657
    %v9195 = vunpack.c.h.b16 %v8657
    %v9196 = vunpack.c.l.b16 %v8658
    %v9197 = vunpack.c.h.b16 %v8658
    %v9198 = vunpack.c.l.b16 %v8659
    %v9199 = vunpack.c.h.b16 %v8659
    %v9200 = vunpack.c.l.b16 %v8660
    %v9201 = vunpack.c.h.b16 %v8660
    %v9202 = vunpack.c.l.b16 %v8661
    %v9203 = vunpack.c.h.b16 %v8661
    %v9204 = vunpack.c.l.b16 %v8662
    %v9205 = vunpack.c.h.b16 %v8662
    %v9206 = vunpack.c.l.b16 %v8663
    %v9207 = vunpack.c.h.b16 %v8663
    %v9208 = vunpack.c.l.b16 %v8664
    %v9209 = vunpack.c.h.b16 %v8664
    %v9210 = vunpack.c.l.b16 %v8665
    %v9211 = vunpack.c.h.b16 %v8665
    %v9212 = vunpack.c.l.b16 %v8666
    %v9213 = vunpack.c.h.b16 %v8666
    %v9214 = vunpack.c.l.b16 %v8667
    %v9215 = vunpack.c.h.b16 %v8667
    %v9216 = vunpack.c.l.b16 %v8668
    %v9217 = vunpack.c.h.b16 %v8668
    %v9218 = vunpack.c.l.b16 %v8669
    %v9219 = vunpack.c.h.b16 %v8669
    %v9220 = vunpack.c.l.b16 %v8670
    %v9221 = vunpack.c.h.b16 %v8670
    %v9222 = vunpack.c.l.b16 %v8671
    %v9223 = vunpack.c.h.b16 %v8671
    %v9224 = vunpack.c.l.b16 %v8672
    %v9225 = vunpack.c.h.b16 %v8672
    %v9226 = vunpack.c.l.b16 %v8673
    %v9227 = vunpack.c.h.b16 %v8673
    %v9228 = vunpack.c.l.b16 %v8674
    %v9229 = vunpack.c.h.b16 %v8674
    %v9230 = vunpack.c.l.b16 %v8675
    %v9231 = vunpack.c.h.b16 %v8675
    %v9232 = vunpack.c.l.b16 %v8676
    %v9233 = vunpack.c.h.b16 %v8676
    %v9234 = vunpack.c.l.b16 %v8677
    %v9235 = vunpack.c.h.b16 %v8677
    %v9236 = vunpack.c.l.b16 %v8678
    %v9237 = vunpack.c.h.b16 %v8678
    %v9238 = vunpack.c.l.b16 %v8679
    %v9239 = vunpack.c.h.b16 %v8679
    %v9240 = vunpack.c.l.b16 %v8680
    %v9241 = vunpack.c.h.b16 %v8680
    %v9242 = vunpack.c.l.b16 %v8681
    %v9243 = vunpack.c.h.b16 %v8681
    %v9244 = vunpack.c.l.b16 %v8682
    %v9245 = vunpack.c.h.b16 %v8682
    %v9246 = vunpack.c.l.b16 %v8683
    %v9247 = vunpack.c.h.b16 %v8683
    %v9248 = vunpack.c.l.b16 %v8684
    %v9249 = vunpack.c.h.b16 %v8684
    %v9250 = vunpack.c.l.b16 %v8685
    %v9251 = vunpack.c.h.b16 %v8685
    %v9252 = vunpack.c.l.b16 %v8686
    %v9253 = vunpack.c.h.b16 %v8686
    %v9254 = vunpack.c.l.b16 %v8687
    %v9255 = vunpack.c.h.b16 %v8687
    %v9256 = vunpack.c.l.b16 %v8688
    %v9257 = vunpack.c.h.b16 %v8688
    %v9258 = vunpack.c.l.b16 %v8689
    %v9259 = vunpack.c.h.b16 %v8689
    %v9260 = vunpack.c.l.b16 %v8690
    %v9261 = vunpack.c.h.b16 %v8690
    %v9262 = vunpack.c.l.b16 %v8691
    %v9263 = vunpack.c.h.b16 %v8691
    %v9264 = vunpack.c.l.b16 %v8692
    %v9265 = vunpack.c.h.b16 %v8692
    %v9266 = vunpack.c.l.b16 %v8693
    %v9267 = vunpack.c.h.b16 %v8693
    %v9268 = vunpack.c.l.b16 %v8694
    %v9269 = vunpack.c.h.b16 %v8694
    %v9270 = vunpack.c.l.b16 %v8695
    %v9271 = vunpack.c.h.b16 %v8695
    %v9272 = vunpack.c.l.b16 %v8696
    %v9273 = vunpack.c.h.b16 %v8696
    %v9274 = vunpack.c.l.b16 %v8697
    %v9275 = vunpack.c.h.b16 %v8697
    %v9276 = vunpack.c.l.b16 %v8698
    %v9277 = vunpack.c.h.b16 %v8698
    %v9278 = vunpack.c.l.b16 %v8699
    %v9279 = vunpack.c.h.b16 %v8699
    %v9280 = vunpack.c.l.b16 %v8700
    %v9281 = vunpack.c.h.b16 %v8700
    %v9282 = vunpack.c.l.b16 %v8701
    %v9283 = vunpack.c.h.b16 %v8701
    %v9284 = vunpack.c.l.b16 %v8702
    %v9285 = vunpack.c.h.b16 %v8702
    %v9286 = vunpack.c.l.b16 %v8703
    %v9287 = vunpack.c.h.b16 %v8703
    %v9288 = vunpack.c.l.b16 %v8704
    %v9289 = vunpack.c.h.b16 %v8704
    %v9290 = vunpack.c.l.b16 %v8705
    %v9291 = vunpack.c.h.b16 %v8705
    %v9292 = vunpack.c.l.b16 %v8706
    %v9293 = vunpack.c.h.b16 %v8706
    %v9294 = vunpack.c.l.b16 %v8707
    %v9295 = vunpack.c.h.b16 %v8707
    %v9296 = vunpack.c.l.b16 %v8708
    %v9297 = vunpack.c.h.b16 %v8708
    %v9298 = vunpack.c.l.b16 %v8709
    %v9299 = vunpack.c.h.b16 %v8709
    %v9300 = vunpack.c.l.b16 %v8710
    %v9301 = vunpack.c.h.b16 %v8710
    %v9302 = vunpack.c.l.b16 %v8711
    %v9303 = vunpack.c.h.b16 %v8711
    %v9304 = vunpack.c.l.b16 %v8712
    %v9305 = vunpack.c.h.b16 %v8712
    %v9306 = vunpack.c.l.b16 %v8713
    %v9307 = vunpack.c.h.b16 %v8713
    %v9308 = vunpack.c.l.b16 %v8714
    %v9309 = vunpack.c.h.b16 %v8714
    %v9310 = vunpack.c.l.b16 %v8715
    %v9311 = vunpack.c.h.b16 %v8715
    %v9312 = vunpack.c.l.b16 %v8716
    %v9313 = vunpack.c.h.b16 %v8716
    %v9314 = vunpack.c.l.b16 %v8717
    %v9315 = vunpack.c.h.b16 %v8717
    %v9316 = vunpack.c.l.b16 %v8718
    %v9317 = vunpack.c.h.b16 %v8718
    %v9318 = vunpack.c.l.b16 %v8719
    %v9319 = vunpack.c.h.b16 %v8719
    %v9320 = vunpack.c.l.b16 %v8720
    %v9321 = vunpack.c.h.b16 %v8720
    %v9322 = vunpack.c.l.b16 %v8721
    %v9323 = vunpack.c.h.b16 %v8721
    %v9324 = vunpack.c.l.b16 %v8722
    %v9325 = vunpack.c.h.b16 %v8722
    %v9326 = vunpack.c.l.b16 %v8723
    %v9327 = vunpack.c.h.b16 %v8723
    %v9328 = vunpack.c.l.b16 %v8724
    %v9329 = vunpack.c.h.b16 %v8724
    %v9330 = vunpack.c.l.b16 %v8725
    %v9331 = vunpack.c.h.b16 %v8725
    %v9332 = vunpack.c.l.b16 %v8726
    %v9333 = vunpack.c.h.b16 %v8726
    %v9334 = vunpack.c.l.b16 %v8727
    %v9335 = vunpack.c.h.b16 %v8727
    %v9336 = vunpack.c.l.b16 %v8728
    %v9337 = vunpack.c.h.b16 %v8728
    %v9338 = vunpack.c.l.b16 %v8729
    %v9339 = vunpack.c.h.b16 %v8729
    %v9340 = vunpack.c.l.b16 %v8730
    %v9341 = vunpack.c.h.b16 %v8730
    %v9342 = vunpack.c.l.b16 %v8731
    %v9343 = vunpack.c.h.b16 %v8731
    %v9344 = vunpack.c.l.b16 %v8732
    %v9345 = vunpack.c.h.b16 %v8732
    %v9346 = vunpack.c.l.b16 %v8733
    %v9347 = vunpack.c.h.b16 %v8733
    %v9348 = vunpack.c.l.b16 %v8734
    %v9349 = vunpack.c.h.b16 %v8734
    %v9350 = vunpack.c.l.b16 %v8735
    %v9351 = vunpack.c.h.b16 %v8735
    %v9352 = vunpack.c.l.b16 %v8736
    %v9353 = vunpack.c.h.b16 %v8736
    %v9354 = vunpack.c.l.b16 %v8737
    %v9355 = vunpack.c.h.b16 %v8737
    %v9356 = vunpack.c.l.b16 %v8738
    %v9357 = vunpack.c.h.b16 %v8738
    %v9358 = vunpack.c.l.b16 %v8739
    %v9359 = vunpack.c.h.b16 %v8739
    %v9360 = vunpack.c.l.b16 %v8740
    %v9361 = vunpack.c.h.b16 %v8740
    %v9362 = vunpack.c.l.b16 %v8741
    %v9363 = vunpack.c.h.b16 %v8741
    %v9364 = vunpack.c.l.b16 %v8742
    %v9365 = vunpack.c.h.b16 %v8742
    %v9366 = vunpack.c.l.b16 %v8743
    %v9367 = vunpack.c.h.b16 %v8743
    %v9368 = vunpack.c.l.b16 %v8744
    %v9369 = vunpack.c.h.b16 %v8744
    %v9370 = vunpack.c.l.b16 %v8745
    %v9371 = vunpack.c.h.b16 %v8745
    %v9372 = vunpack.c.l.b16 %v8746
    %v9373 = vunpack.c.h.b16 %v8746
    %v9374 = vunpack.c.l.b16 %v8747
    %v9375 = vunpack.c.h.b16 %v8747
    %v9376 = vunpack.c.l.b16 %v8748
    %v9377 = vunpack.c.h.b16 %v8748
    %v9378 = vunpack.c.l.b16 %v8749
    %v9379 = vunpack.c.h.b16 %v8749
    %v9380 = vunpack.c.l.b16 %v8750
    %v9381 = vunpack.c.h.b16 %v8750
    %v9382 = vunpack.c.l.b16 %v8751
    %v9383 = vunpack.c.h.b16 %v8751
    %v9384 = vunpack.c.l.b16 %v8752
    %v9385 = vunpack.c.h.b16 %v8752
    %v9386 = vunpack.c.l.b16 %v8753
    %v9387 = vunpack.c.h.b16 %v8753
    %v9388 = vunpack.c.l.b16 %v8754
    %v9389 = vunpack.c.h.b16 %v8754
    %v9390 = vunpack.c.l.b16 %v8755
    %v9391 = vunpack.c.h.b16 %v8755
    %v9392 = vunpack.c.l.b16 %v8756
    %v9393 = vunpack.c.h.b16 %v8756
    %v9394 = vunpack.c.l.b16 %v8757
    %v9395 = vunpack.c.h.b16 %v8757
    %v9396 = vunpack.c.l.b16 %v8758
    %v9397 = vunpack.c.h.b16 %v8758
    %v9398 = vunpack.c.l.b16 %v8759
    %v9399 = vunpack.c.h.b16 %v8759
    %v9400 = vunpack.c.l.b16 %v8760
    %v9401 = vunpack.c.h.b16 %v8760
    %v9402 = vunpack.c.l.b16 %v8761
    %v9403 = vunpack.c.h.b16 %v8761
    %v9404 = vunpack.c.l.b16 %v8762
    %v9405 = vunpack.c.h.b16 %v8762
    %v9406 = vunpack.c.l.b16 %v8763
    %v9407 = vunpack.c.h.b16 %v8763
    %v9408 = vunpack.c.l.b16 %v8764
    %v9409 = vunpack.c.h.b16 %v8764
    %v9410 = vunpack.c.l.b16 %v8765
    %v9411 = vunpack.c.h.b16 %v8765
    %v9412 = vunpack.c.l.b16 %v8766
    %v9413 = vunpack.c.h.b16 %v8766
    %v9414 = vunpack.c.l.b16 %v8767
    %v9415 = vunpack.c.h.b16 %v8767
    %v9416 = vunpack.c.l.b16 %v8768
    %v9417 = vunpack.c.h.b16 %v8768
    %v9418 = vunpack.c.l.b16 %v8769
    %v9419 = vunpack.c.h.b16 %v8769
    %v9420 = vunpack.c.l.b16 %v8770
    %v9421 = vunpack.c.h.b16 %v8770
    %v9422 = vunpack.c.l.b16 %v8771
    %v9423 = vunpack.c.h.b16 %v8771
    %v9424 = vunpack.c.l.b16 %v8772
    %v9425 = vunpack.c.h.b16 %v8772
    %v9426 = vunpack.c.l.b16 %v8773
    %v9427 = vunpack.c.h.b16 %v8773
    %v9428 = vunpack.c.l.b16 %v8774
    %v9429 = vunpack.c.h.b16 %v8774
    %v9430 = vunpack.c.l.b16 %v8775
    %v9431 = vunpack.c.h.b16 %v8775
    %v9432 = vunpack.c.l.b16 %v8776
    %v9433 = vunpack.c.h.b16 %v8776
    %v9434 = vunpack.c.l.b16 %v8777
    %v9435 = vunpack.c.h.b16 %v8777
    %v9436 = vunpack.c.l.b16 %v8778
    %v9437 = vunpack.c.h.b16 %v8778
    %v9438 = vunpack.c.l.b16 %v8779
    %v9439 = vunpack.c.h.b16 %v8779
    %v9440 = vunpack.c.l.b16 %v8780
    %v9441 = vunpack.c.h.b16 %v8780
    %v9442 = vunpack.c.l.b16 %v8781
    %v9443 = vunpack.c.h.b16 %v8781
    %v9444 = vunpack.c.l.b16 %v8782
    %v9445 = vunpack.c.h.b16 %v8782
    %v9446 = vunpack.c.l.b16 %v8783
    %v9447 = vunpack.c.h.b16 %v8783
    %v9448 = vunpack.c.l.b16 %v8784
    %v9449 = vunpack.c.h.b16 %v8784
    %v9450 = vunpack.c.l.b16 %v8785
    %v9451 = vunpack.c.h.b16 %v8785
    %v9452 = vunpack.c.l.b16 %v8786
    %v9453 = vunpack.c.h.b16 %v8786
    %v9454 = vunpack.c.l.b16 %v8787
    %v9455 = vunpack.c.h.b16 %v8787
    %v9456 = vunpack.c.l.b16 %v8788
    %v9457 = vunpack.c.h.b16 %v8788
    %v9458 = vunpack.c.l.b16 %v8789
    %v9459 = vunpack.c.h.b16 %v8789
    %v9460 = vunpack.c.l.b16 %v8790
    %v9461 = vunpack.c.h.b16 %v8790
    %v9462 = vunpack.c.l.b16 %v8791
    %v9463 = vunpack.c.h.b16 %v8791
    %v9464 = vunpack.c.l.b16 %v8792
    %v9465 = vunpack.c.h.b16 %v8792
    %v9466 = vunpack.c.l.b16 %v8793
    %v9467 = vunpack.c.h.b16 %v8793
    %v9468 = vunpack.c.l.b16 %v8794
    %v9469 = vunpack.c.h.b16 %v8794
    %v9470 = vunpack.c.l.b16 %v8795
    %v9471 = vunpack.c.h.b16 %v8795
    %v9472 = vunpack.c.l.b16 %v8796
    %v9473 = vunpack.c.h.b16 %v8796
    %v9474 = vunpack.c.l.b16 %v8797
    %v9475 = vunpack.c.h.b16 %v8797
    %v9476 = vunpack.c.l.b16 %v8798
    %v9477 = vunpack.c.h.b16 %v8798
    %v9478 = vunpack.c.l.b16 %v8799
    %v9479 = vunpack.c.h.b16 %v8799
    %v9480 = vunpack.c.l.b16 %v8800
    %v9481 = vunpack.c.h.b16 %v8800
    %v9482 = vunpack.c.l.b16 %v8801
    %v9483 = vunpack.c.h.b16 %v8801
    %v9484 = vunpack.c.l.b16 %v8802
    %v9485 = vunpack.c.h.b16 %v8802
    %v9486 = vunpack.c.l.b16 %v8803
    %v9487 = vunpack.c.h.b16 %v8803
    %v9488 = vunpack.c.l.b16 %v8804
    %v9489 = vunpack.c.h.b16 %v8804
    %v9490 = vunpack.c.l.b16 %v8805
    %v9491 = vunpack.c.h.b16 %v8805
    %v9492 = vunpack.c.l.b16 %v8806
    %v9493 = vunpack.c.h.b16 %v8806
    %v9494 = vunpack.c.l.b16 %v8807
    %v9495 = vunpack.c.h.b16 %v8807
    %v9496 = vunpack.c.l.b16 %v8808
    %v9497 = vunpack.c.h.b16 %v8808
    %v9498 = vunpack.c.l.b16 %v8809
    %v9499 = vunpack.c.h.b16 %v8809
    %v9500 = vunpack.c.l.b16 %v8810
    %v9501 = vunpack.c.h.b16 %v8810
    %v9502 = vunpack.c.l.b16 %v8811
    %v9503 = vunpack.c.h.b16 %v8811
    %v9504 = vunpack.c.l.b16 %v8812
    %v9505 = vunpack.c.h.b16 %v8812
    %v9506 = vunpack.c.l.b16 %v8813
    %v9507 = vunpack.c.h.b16 %v8813
    %v9508 = vunpack.c.l.b16 %v8814
    %v9509 = vunpack.c.h.b16 %v8814
    %v9510 = vunpack.c.l.b16 %v8815
    %v9511 = vunpack.c.h.b16 %v8815
    %v9512 = vunpack.c.l.b16 %v8816
    %v9513 = vunpack.c.h.b16 %v8816
    %v9514 = vunpack.c.l.b16 %v8817
    %v9515 = vunpack.c.h.b16 %v8817
    %v9516 = vunpack.c.l.b16 %v8818
    %v9517 = vunpack.c.h.b16 %v8818
    %v9518 = vunpack.c.l.b16 %v8819
    %v9519 = vunpack.c.h.b16 %v8819
    %v9520 = vunpack.c.l.b16 %v8820
    %v9521 = vunpack.c.h.b16 %v8820
    %v9522 = vunpack.c.l.b16 %v8821
    %v9523 = vunpack.c.h.b16 %v8821
    %v9524 = vunpack.c.l.b16 %v8822
    %v9525 = vunpack.c.h.b16 %v8822
    %v9526 = vunpack.c.l.b16 %v8823
    %v9527 = vunpack.c.h.b16 %v8823
    %v9528 = vunpack.c.l.b16 %v8824
    %v9529 = vunpack.c.h.b16 %v8824
    %v9530 = vunpack.c.l.b16 %v8825
    %v9531 = vunpack.c.h.b16 %v8825
    %v9532 = vunpack.c.l.b16 %v8826
    %v9533 = vunpack.c.h.b16 %v8826
    %v9534 = vunpack.c.l.b16 %v8827
    %v9535 = vunpack.c.h.b16 %v8827
    %v9536 = vunpack.c.l.b16 %v8828
    %v9537 = vunpack.c.h.b16 %v8828
    %v9538 = vunpack.c.l.b16 %v8829
    %v9539 = vunpack.c.h.b16 %v8829
    %v9540 = vunpack.c.l.b16 %v8830
    %v9541 = vunpack.c.h.b16 %v8830
    %v9542 = vunpack.c.l.b16 %v8831
    %v9543 = vunpack.c.h.b16 %v8831
    %v9544 = vunpack.c.l.b16 %v8832
    %v9545 = vunpack.c.h.b16 %v8832
    %v9546 = vunpack.c.l.b16 %v8833
    %v9547 = vunpack.c.h.b16 %v8833
    %v9548 = vunpack.c.l.b16 %v8834
    %v9549 = vunpack.c.h.b16 %v8834
    %v9550 = vunpack.c.l.b16 %v8835
    %v9551 = vunpack.c.h.b16 %v8835
    %v9552 = vunpack.c.l.b16 %v8836
    %v9553 = vunpack.c.h.b16 %v8836
    %v9554 = vunpack.c.l.b16 %v8837
    %v9555 = vunpack.c.h.b16 %v8837
    %v9556 = vunpack.c.l.b16 %v8838
    %v9557 = vunpack.c.h.b16 %v8838
    %v9558 = vunpack.c.l.b16 %v8839
    %v9559 = vunpack.c.h.b16 %v8839
    %v9560 = vunpack.c.l.b16 %v8840
    %v9561 = vunpack.c.h.b16 %v8840
    %v9562 = vunpack.c.l.b16 %v8841
    %v9563 = vunpack.c.h.b16 %v8841
    %v9564 = vunpack.c.l.b16 %v8842
    %v9565 = vunpack.c.h.b16 %v8842
    %v9566 = vunpack.c.l.b16 %v8843
    %v9567 = vunpack.c.h.b16 %v8843
    %v9568 = vunpack.c.l.b16 %v8844
    %v9569 = vunpack.c.h.b16 %v8844
    %v9570 = vunpack.c.l.b16 %v8845
    %v9571 = vunpack.c.h.b16 %v8845
    %v9572 = vunpack.c.l.b16 %v8846
    %v9573 = vunpack.c.h.b16 %v8846
    %v9574 = vunpack.c.l.b16 %v8847
    %v9575 = vunpack.c.h.b16 %v8847
    %v9576 = vunpack.c.l.b16 %v8848
    %v9577 = vunpack.c.h.b16 %v8848
    %v9578 = vunpack.c.l.b16 %v8849
    %v9579 = vunpack.c.h.b16 %v8849
    %v9580 = vunpack.c.l.b16 %v8850
    %v9581 = vunpack.c.h.b16 %v8850
    %v9582 = vunpack.c.l.b16 %v8851
    %v9583 = vunpack.c.h.b16 %v8851
    %v9584 = vunpack.c.l.b16 %v8852
    %v9585 = vunpack.c.h.b16 %v8852
    %v9586 = vunpack.c.l.b16 %v8853
    %v9587 = vunpack.c.h.b16 %v8853
    %v9588 = vunpack.c.l.b16 %v8854
    %v9589 = vunpack.c.h.b16 %v8854
    %v9590 = vunpack.c.l.b16 %v8855
    %v9591 = vunpack.c.h.b16 %v8855
    %v9592 = vunpack.c.l.b16 %v8856
    %v9593 = vunpack.c.h.b16 %v8856
    %v9594 = vunpack.c.l.b16 %v8857
    %v9595 = vunpack.c.h.b16 %v8857
    %v9596 = vunpack.c.l.b16 %v8858
    %v9597 = vunpack.c.h.b16 %v8858
    %v9598 = vunpack.c.l.b16 %v8859
    %v9599 = vunpack.c.h.b16 %v8859
    %v9600 = vunpack.c.l.b16 %v8860
    %v9601 = vunpack.c.h.b16 %v8860
    %v9602 = vunpack.c.l.b16 %v8861
    %v9603 = vunpack.c.h.b16 %v8861
    %v9604 = vunpack.c.l.b16 %v8862
    %v9605 = vunpack.c.h.b16 %v8862
    %v9606 = vunpack.c.l.b16 %v8863
    %v9607 = vunpack.c.h.b16 %v8863
    %v9608 = vunpack.c.l.b16 %v8864
    %v9609 = vunpack.c.h.b16 %v8864
    %v9610 = vunpack.c.l.b16 %v8865
    %v9611 = vunpack.c.h.b16 %v8865
    %v9612 = vunpack.c.l.b16 %v8866
    %v9613 = vunpack.c.h.b16 %v8866
    %v9614 = vunpack.c.l.b16 %v8867
    %v9615 = vunpack.c.h.b16 %v8867
    %v9616 = vunpack.c.l.b16 %v8868
    %v9617 = vunpack.c.h.b16 %v8868
    %v9618 = vunpack.c.l.b16 %v8869
    %v9619 = vunpack.c.h.b16 %v8869
    %v9620 = vunpack.c.l.b16 %v8870
    %v9621 = vunpack.c.h.b16 %v8870
    %v9622 = vunpack.c.l.b16 %v8871
    %v9623 = vunpack.c.h.b16 %v8871
    %v9624 = vunpack.c.l.b16 %v8872
    %v9625 = vunpack.c.h.b16 %v8872
    %v9626 = vunpack.c.l.b16 %v8873
    %v9627 = vunpack.c.h.b16 %v8873
    %v9628 = vunpack.c.l.b16 %v8874
    %v9629 = vunpack.c.h.b16 %v8874
    %v9630 = vunpack.c.l.b16 %v8875
    %v9631 = vunpack.c.h.b16 %v8875
    %v9632 = vunpack.c.l.b16 %v8876
    %v9633 = vunpack.c.h.b16 %v8876
    %v9634 = vunpack.c.l.b16 %v8877
    %v9635 = vunpack.c.h.b16 %v8877
    %v9636 = vunpack.c.l.b16 %v8878
    %v9637 = vunpack.c.h.b16 %v8878
    %v9638 = vunpack.c.l.b16 %v8879
    %v9639 = vunpack.c.h.b16 %v8879
    %v9640 = vunpack.c.l.b16 %v8880
    %v9641 = vunpack.c.h.b16 %v8880
    %v9642 = vunpack.c.l.b16 %v8881
    %v9643 = vunpack.c.h.b16 %v8881
    %v9644 = vunpack.c.l.b16 %v8882
    %v9645 = vunpack.c.h.b16 %v8882
    %v9646 = vunpack.c.l.b16 %v8883
    %v9647 = vunpack.c.h.b16 %v8883
    %v9648 = vunpack.c.l.b16 %v8884
    %v9649 = vunpack.c.h.b16 %v8884
    %v9650 = vunpack.c.l.b16 %v8885
    %v9651 = vunpack.c.h.b16 %v8885
    %v9652 = vunpack.c.l.b16 %v8886
    %v9653 = vunpack.c.h.b16 %v8886
    %v9654 = vunpack.c.l.b16 %v8887
    %v9655 = vunpack.c.h.b16 %v8887
    %v9656 = vunpack.c.l.b16 %v8888
    %v9657 = vunpack.c.h.b16 %v8888
    %v9658 = vunpack.c.l.b16 %v8889
    %v9659 = vunpack.c.h.b16 %v8889
    %v9660 = vunpack.c.l.b16 %v8890
    %v9661 = vunpack.c.h.b16 %v8890
    %v9662 = vunpack.c.l.b16 %v8891
    %v9663 = vunpack.c.h.b16 %v8891
    %v9664 = vunpack.c.l.b16 %v8892
    %v9665 = vunpack.c.h.b16 %v8892
    %v9666 = vunpack.c.l.b16 %v8893
    %v9667 = vunpack.c.h.b16 %v8893
    %v9668 = vunpack.c.l.b16 %v8894
    %v9669 = vunpack.c.h.b16 %v8894
    %v9670 = vunpack.c.l.b16 %v8895
    %v9671 = vunpack.c.h.b16 %v8895
    %v9672 = vunpack.c.l.b16 %v8896
    %v9673 = vunpack.c.h.b16 %v8896
    %v9674 = vunpack.c.l.b16 %v8897
    %v9675 = vunpack.c.h.b16 %v8897
    %v9676 = vunpack.c.l.b16 %v8898
    %v9677 = vunpack.c.h.b16 %v8898
    %v9678 = vunpack.c.l.b16 %v8899
    %v9679 = vunpack.c.h.b16 %v8899
    %v9680 = vunpack.c.l.b16 %v8900
    %v9681 = vunpack.c.h.b16 %v8900
    %v9682 = vunpack.c.l.b16 %v8901
    %v9683 = vunpack.c.h.b16 %v8901
    %v9684 = vunpack.c.l.b16 %v8902
    %v9685 = vunpack.c.h.b16 %v8902
    %v9686 = vunpack.c.l.b16 %v8903
    %v9687 = vunpack.c.h.b16 %v8903
    %v9688 = vunpack.c.l.b16 %v8904
    %v9689 = vunpack.c.h.b16 %v8904
    %v9690 = vunpack.c.l.b16 %v8905
    %v9691 = vunpack.c.h.b16 %v8905
    %v9692 = vunpack.c.l.b16 %v8906
    %v9693 = vunpack.c.h.b16 %v8906
    %v9694 = vunpack.c.l.b16 %v8907
    %v9695 = vunpack.c.h.b16 %v8907
    %v9696 = vunpack.c.l.b16 %v8908
    %v9697 = vunpack.c.h.b16 %v8908
    %v9698 = vunpack.c.l.b16 %v8909
    %v9699 = vunpack.c.h.b16 %v8909
    %v9700 = vpack.c.b16 %v9192, %v9188
    %v9701 = vpack.c.b16 %v9193, %v9189
    %v9702 = vpack.c.b16 %v9194, %v9190
    %v9703 = vpack.c.b16 %v9195, %v9191
    %v9704 = vpack.c.b16 %v9200, %v9196
    %v9705 = vpack.c.b16 %v9201, %v9197
    %v9706 = vpack.c.b16 %v9202, %v9198
    %v9707 = vpack.c.b16 %v9203, %v9199
    %v9708 = vpack.c.b16 %v9208, %v9204
    %v9709 = vpack.c.b16 %v9209, %v9205
    %v9710 = vpack.c.b16 %v9210, %v9206
    %v9711 = vpack.c.b16 %v9211, %v9207
    %v9712 = vpack.c.b16 %v9216, %v9212
    %v9713 = vpack.c.b16 %v9217, %v9213
    %v9714 = vpack.c.b16 %v9218, %v9214
    %v9715 = vpack.c.b16 %v9219, %v9215
    %v9716 = vpack.c.b16 %v9224, %v9220
    %v9717 = vpack.c.b16 %v9225, %v9221
    %v9718 = vpack.c.b16 %v9226, %v9222
    %v9719 = vpack.c.b16 %v9227, %v9223
    %v9720 = vpack.c.b16 %v9232, %v9228
    %v9721 = vpack.c.b16 %v9233, %v9229
    %v9722 = vpack.c.b16 %v9234, %v9230
    %v9723 = vpack.c.b16 %v9235, %v9231
    %v9724 = vpack.c.b16 %v9240, %v9236
    %v9725 = vpack.c.b16 %v9241, %v9237
    %v9726 = vpack.c.b16 %v9242, %v9238
    %v9727 = vpack.c.b16 %v9243, %v9239
    %v9728 = vpack.c.b16 %v9248, %v9244
    %v9729 = vpack.c.b16 %v9249, %v9245
    %v9730 = vpack.c.b16 %v9250, %v9246
    %v9731 = vpack.c.b16 %v9251, %v9247
    %v9732 = vpack.c.b16 %v9256, %v9252
    %v9733 = vpack.c.b16 %v9257, %v9253
    %v9734 = vpack.c.b16 %v9258, %v9254
    %v9735 = vpack.c.b16 %v9259, %v9255
    %v9736 = vpack.c.b16 %v9264, %v9260
    %v9737 = vpack.c.b16 %v9265, %v9261
    %v9738 = vpack.c.b16 %v9266, %v9262
    %v9739 = vpack.c.b16 %v9267, %v9263
    %v9740 = vpack.c.b16 %v9272, %v9268
    %v9741 = vpack.c.b16 %v9273, %v9269
    %v9742 = vpack.c.b16 %v9274, %v9270
    %v9743 = vpack.c.b16 %v9275, %v9271
    %v9744 = vpack.c.b16 %v9280, %v9276
    %v9745 = vpack.c.b16 %v9281, %v9277
    %v9746 = vpack.c.b16 %v9282, %v9278
    %v9747 = vpack.c.b16 %v9283, %v9279
    %v9748 = vpack.c.b16 %v9288, %v9284
    %v9749 = vpack.c.b16 %v9289, %v9285
    %v9750 = vpack.c.b16 %v9290, %v9286
    %v9751 = vpack.c.b16 %v9291, %v9287
    %v9752 = vpack.c.b16 %v9296, %v9292
    %v9753 = vpack.c.b16 %v9297, %v9293
    %v9754 = vpack.c.b16 %v9298, %v9294
    %v9755 = vpack.c.b16 %v9299, %v9295
    %v9756 = vpack.c.b16 %v9304, %v9300
    %v9757 = vpack.c.b16 %v9305, %v9301
    %v9758 = vpack.c.b16 %v9306, %v9302
    %v9759 = vpack.c.b16 %v9307, %v9303
    %v9760 = vpack.c.b16 %v9312, %v9308
    %v9761 = vpack.c.b16 %v9313, %v9309
    %v9762 = vpack.c.b16 %v9314, %v9310
    %v9763 = vpack.c.b16 %v9315, %v9311
    %v9764 = vpack.c.b16 %v9320, %v9316
    %v9765 = vpack.c.b16 %v9321, %v9317
    %v9766 = vpack.c.b16 %v9322, %v9318
    %v9767 = vpack.c.b16 %v9323, %v9319
    %v9768 = vpack.c.b16 %v9328, %v9324
    %v9769 = vpack.c.b16 %v9329, %v9325
    %v9770 = vpack.c.b16 %v9330, %v9326
    %v9771 = vpack.c.b16 %v9331, %v9327
    %v9772 = vpack.c.b16 %v9336, %v9332
    %v9773 = vpack.c.b16 %v9337, %v9333
    %v9774 = vpack.c.b16 %v9338, %v9334
    %v9775 = vpack.c.b16 %v9339, %v9335
    %v9776 = vpack.c.b16 %v9344, %v9340
    %v9777 = vpack.c.b16 %v9345, %v9341
    %v9778 = vpack.c.b16 %v9346, %v9342
    %v9779 = vpack.c.b16 %v9347, %v9343
    %v9780 = vpack.c.b16 %v9352, %v9348
    %v9781 = vpack.c.b16 %v9353, %v9349
    %v9782 = vpack.c.b16 %v9354, %v9350
    %v9783 = vpack.c.b16 %v9355, %v9351
    %v9784 = vpack.c.b16 %v9360, %v9356
    %v9785 = vpack.c.b16 %v9361, %v9357
    %v9786 = vpack.c.b16 %v9362, %v9358
    %v9787 = vpack.c.b16 %v9363, %v9359
    %v9788 = vpack.c.b16 %v9368, %v9364
    %v9789 = vpack.c.b16 %v9369, %v9365
    %v9790 = vpack.c.b16 %v9370, %v9366
    %v9791 = vpack.c.b16 %v9371, %v9367
    %v9792 = vpack.c.b16 %v9376, %v9372
    %v9793 = vpack.c.b16 %v9377, %v9373
    %v9794 = vpack.c.b16 %v9378, %v9374
    %v9795 = vpack.c.b16 %v9379, %v9375
    %v9796 = vpack.c.b16 %v9384, %v9380
    %v9797 = vpack.c.b16 %v9385, %v9381
    %v9798 = vpack.c.b16 %v9386, %v9382
    %v9799 = vpack.c.b16 %v9387, %v9383
    %v9800 = vpack.c.b16 %v9392, %v9388
    %v9801 = vpack.c.b16 %v9393, %v9389
    %v9802 = vpack.c.b16 %v9394, %v9390
    %v9803 = vpack.c.b16 %v9395, %v9391
    %v9804 = vpack.c.b16 %v9400, %v9396
    %v9805 = vpack.c.b16 %v9401, %v9397
    %v9806 = vpack.c.b16 %v9402, %v9398
    %v9807 = vpack.c.b16 %v9403, %v9399
    %v9808 = vpack.c.b16 %v9408, %v9404
    %v9809 = vpack.c.b16 %v9409, %v9405
    %v9810 = vpack.c.b16 %v9410, %v9406
    %v9811 = vpack.c.b16 %v9411, %v9407
    %v9812 = vpack.c.b16 %v9416, %v9412
    %v9813 = vpack.c.b16 %v9417, %v9413
    %v9814 = vpack.c.b16 %v9418, %v9414
    %v9815 = vpack.c.b16 %v9419, %v9415
    %v9816 = vpack.c.b16 %v9424, %v9420
    %v9817 = vpack.c.b16 %v9425, %v9421
    %v9818 = vpack.c.b16 %v9426, %v9422
    %v9819 = vpack.c.b16 %v9427, %v9423
    %v9820 = vpack.c.b16 %v9432, %v9428
    %v9821 = vpack.c.b16 %v9433, %v9429
    %v9822 = vpack.c.b16 %v9434, %v9430
    %v9823 = vpack.c.b16 %v9435, %v9431
    %v9824 = vpack.c.b16 %v9440, %v9436
    %v9825 = vpack.c.b16 %v9441, %v9437
    %v9826 = vpack.c.b16 %v9442, %v9438
    %v9827 = vpack.c.b16 %v9443, %v9439
    %v9828 = vpack.c.b16 %v9448, %v9444
    %v9829 = vpack.c.b16 %v9449, %v9445
    %v9830 = vpack.c.b16 %v9450, %v9446
    %v9831 = vpack.c.b16 %v9451, %v9447
    %v9832 = vpack.c.b16 %v9456, %v9452
    %v9833 = vpack.c.b16 %v9457, %v9453
    %v9834 = vpack.c.b16 %v9458, %v9454
    %v9835 = vpack.c.b16 %v9459, %v9455
    %v9836 = vpack.c.b16 %v9464, %v9460
    %v9837 = vpack.c.b16 %v9465, %v9461
    %v9838 = vpack.c.b16 %v9466, %v9462
    %v9839 = vpack.c.b16 %v9467, %v9463
    %v9840 = vpack.c.b16 %v9472, %v9468
    %v9841 = vpack.c.b16 %v9473, %v9469
    %v9842 = vpack.c.b16 %v9474, %v9470
    %v9843 = vpack.c.b16 %v9475, %v9471
    %v9844 = vpack.c.b16 %v9480, %v9476
    %v9845 = vpack.c.b16 %v9481, %v9477
    %v9846 = vpack.c.b16 %v9482, %v9478
    %v9847 = vpack.c.b16 %v9483, %v9479
    %v9848 = vpack.c.b16 %v9488, %v9484
    %v9849 = vpack.c.b16 %v9489, %v9485
    %v9850 = vpack.c.b16 %v9490, %v9486
    %v9851 = vpack.c.b16 %v9491, %v9487
    %v9852 = vpack.c.b16 %v9496, %v9492
    %v9853 = vpack.c.b16 %v9497, %v9493
    %v9854 = vpack.c.b16 %v9498, %v9494
    %v9855 = vpack.c.b16 %v9499, %v9495
    %v9856 = vpack.c.b16 %v9504, %v9500
    %v9857 = vpack.c.b16 %v9505, %v9501
    %v9858 = vpack.c.b16 %v9506, %v9502
    %v9859 = vpack.c.b16 %v9507, %v9503
    %v9860 = vpack.c.b16 %v9512, %v9508
    %v9861 = vpack.c.b16 %v9513, %v9509
    %v9862 = vpack.c.b16 %v9514, %v9510
    %v9863 = vpack.c.b16 %v9515, %v9511
    %v9864 = vpack.c.b16 %v9520, %v9516
    %v9865 = vpack.c.b16 %v9521, %v9517
    %v9866 = vpack.c.b16 %v9522, %v9518
    %v9867 = vpack.c.b16 %v9523, %v9519
    %v9868 = vpack.c.b16 %v9528, %v9524
    %v9869 = vpack.c.b16 %v9529, %v9525
    %v9870 = vpack.c.b16 %v9530, %v9526
    %v9871 = vpack.c.b16 %v9531, %v9527
    %v9872 = vpack.c.b16 %v9536, %v9532
    %v9873 = vpack.c.b16 %v9537, %v9533
    %v9874 = vpack.c.b16 %v9538, %v9534
    %v9875 = vpack.c.b16 %v9539, %v9535
    %v9876 = vpack.c.b16 %v9544, %v9540
    %v9877 = vpack.c.b16 %v9545, %v9541
    %v9878 = vpack.c.b16 %v9546, %v9542
    %v9879 = vpack.c.b16 %v9547, %v9543
    %v9880 = vpack.c.b16 %v9552, %v9548
    %v9881 = vpack.c.b16 %v9553, %v9549
    %v9882 = vpack.c.b16 %v9554, %v9550
    %v9883 = vpack.c.b16 %v9555, %v9551
    %v9884 = vpack.c.b16 %v9560, %v9556
    %v9885 = vpack.c.b16 %v9561, %v9557
    %v9886 = vpack.c.b16 %v9562, %v9558
    %v9887 = vpack.c.b16 %v9563, %v9559
    %v9888 = vpack.c.b16 %v9568, %v9564
    %v9889 = vpack.c.b16 %v9569, %v9565
    %v9890 = vpack.c.b16 %v9570, %v9566
    %v9891 = vpack.c.b16 %v9571, %v9567
    %v9892 = vpack.c.b16 %v9576, %v9572
    %v9893 = vpack.c.b16 %v9577, %v9573
    %v9894 = vpack.c.b16 %v9578, %v9574
    %v9895 = vpack.c.b16 %v9579, %v9575
    %v9896 = vpack.c.b16 %v9584, %v9580
    %v9897 = vpack.c.b16 %v9585, %v9581
    %v9898 = vpack.c.b16 %v9586, %v9582
    %v9899 = vpack.c.b16 %v9587, %v9583
    %v9900 = vpack.c.b16 %v9592, %v9588
    %v9901 = vpack.c.b16 %v9593, %v9589
    %v9902 = vpack.c.b16 %v9594, %v9590
    %v9903 = vpack.c.b16 %v9595, %v9591
    %v9904 = vpack.c.b16 %v9600, %v9596
    %v9905 = vpack.c.b16 %v9601, %v9597
    %v9906 = vpack.c.b16 %v9602, %v9598
    %v9907 = vpack.c.b16 %v9603, %v9599
    %v9908 = vpack.c.b16 %v9608, %v9604
    %v9909 = vpack.c.b16 %v9609, %v9605
    %v9910 = vpack.c.b16 %v9610, %v9606
    %v9911 = vpack.c.b16 %v9611, %v9607
    %v9912 = vpack.c.b16 %v9616, %v9612
    %v9913 = vpack.c.b16 %v9617, %v9613
    %v9914 = vpack.c.b16 %v9618, %v9614
    %v9915 = vpack.c.b16 %v9619, %v9615
    %v9916 = vpack.c.b16 %v9624, %v9620
    %v9917 = vpack.c.b16 %v9625, %v9621
    %v9918 = vpack.c.b16 %v9626, %v9622
    %v9919 = vpack.c.b16 %v9627, %v9623
    %v9920 = vpack.c.b16 %v9632, %v9628
    %v9921 = vpack.c.b16 %v9633, %v9629
    %v9922 = vpack.c.b16 %v9634, %v9630
    %v9923 = vpack.c.b16 %v9635, %v9631
    %v9924 = vpack.c.b16 %v9640, %v9636
    %v9925 = vpack.c.b16 %v9641, %v9637
    %v9926 = vpack.c.b16 %v9642, %v9638
    %v9927 = vpack.c.b16 %v9643, %v9639
    %v9928 = vpack.c.b16 %v9648, %v9644
    %v9929 = vpack.c.b16 %v9649, %v9645
    %v9930 = vpack.c.b16 %v9650, %v9646
    %v9931 = vpack.c.b16 %v9651, %v9647
    %v9932 = vpack.c.b16 %v9656, %v9652
    %v9933 = vpack.c.b16 %v9657, %v9653
    %v9934 = vpack.c.b16 %v9658, %v9654
    %v9935 = vpack.c.b16 %v9659, %v9655
    %v9936 = vpack.c.b16 %v9664, %v9660
    %v9937 = vpack.c.b16 %v9665, %v9661
    %v9938 = vpack.c.b16 %v9666, %v9662
    %v9939 = vpack.c.b16 %v9667, %v9663
    %v9940 = vpack.c.b16 %v9672, %v9668
    %v9941 = vpack.c.b16 %v9673, %v9669
    %v9942 = vpack.c.b16 %v9674, %v9670
    %v9943 = vpack.c.b16 %v9675, %v9671
    %v9944 = vpack.c.b16 %v9680, %v9676
    %v9945 = vpack.c.b16 %v9681, %v9677
    %v9946 = vpack.c.b16 %v9682, %v9678
    %v9947 = vpack.c.b16 %v9683, %v9679
    %v9948 = vpack.c.b16 %v9688, %v9684
    %v9949 = vpack.c.b16 %v9689, %v9685
    %v9950 = vpack.c.b16 %v9690, %v9686
    %v9951 = vpack.c.b16 %v9691, %v9687
    %v9952 = vpack.c.b16 %v9696, %v9692
    %v9953 = vpack.c.b16 %v9697, %v9693
    %v9954 = vpack.c.b16 %v9698, %v9694
    %v9955 = vpack.c.b16 %v9699, %v9695
    %10212 = vmatprep.subr.bf16.mxu0 %v9701
    %10213 = vmatpush1.bf16.msra.mxu0 %v9700
    %10214 = vmatprep.subr.bf16.mxu0 %v9705
    %10215 = vmatpush1.bf16.msra.mxu0 %v9704
    %10216 = vmatprep.subr.bf16.mxu0 %v9709
    %10217 = vmatpush1.bf16.msra.mxu0 %v9708
    %10218 = vmatprep.subr.bf16.mxu0 %v9713
    %10219 = vmatpush1.bf16.msra.mxu0 %v9712
    %10220 = vmatprep.subr.bf16.mxu0 %v9717
    %10221 = vmatpush1.bf16.msra.mxu0 %v9716
    %10222 = vmatprep.subr.bf16.mxu0 %v9721
    %10223 = vmatpush1.bf16.msra.mxu0 %v9720
    %10224 = vmatprep.subr.bf16.mxu0 %v9725
    %10225 = vmatpush1.bf16.msra.mxu0 %v9724
    %10226 = vmatprep.subr.bf16.mxu0 %v9729
    %10227 = vmatpush1.bf16.msra.mxu0 %v9728
    %10228 = vmatprep.subr.bf16.mxu0 %v9733
    %10229 = vmatpush1.bf16.msra.mxu0 %v9732
    %10230 = vmatprep.subr.bf16.mxu0 %v9737
    %10231 = vmatpush1.bf16.msra.mxu0 %v9736
    %10232 = vmatprep.subr.bf16.mxu0 %v9741
    %10233 = vmatpush1.bf16.msra.mxu0 %v9740
    %10234 = vmatprep.subr.bf16.mxu0 %v9745
    %10235 = vmatpush1.bf16.msra.mxu0 %v9744
    %10236 = vmatprep.subr.bf16.mxu0 %v9749
    %10237 = vmatpush1.bf16.msra.mxu0 %v9748
    %10238 = vmatprep.subr.bf16.mxu0 %v9753
    %10239 = vmatpush1.bf16.msra.mxu0 %v9752
    %10240 = vmatprep.subr.bf16.mxu0 %v9757
    %10241 = vmatpush1.bf16.msra.mxu0 %v9756
    %10242 = vmatprep.subr.bf16.mxu0 %v9761
    %10243 = vmatpush1.bf16.msra.mxu0 %v9760
    %10244 = vmatprep.mubr.bf16.mxu0 %v8647
    %10245 = vmatmul.mubr.bf16.gmra.mrb[0].mxu0 %v8646
    %v10246 = vpop.f32.mrb[0].mxu0
    %v10247 = vadd.f32 %v8915, %v10246
    %v10248 = vpop.f32.mrb[0].mxu0
    %v10249 = vadd.f32 %v8919, %v10248
    %v10250 = vpop.f32.mrb[0].mxu0
    %v10251 = vpop.f32.mrb[0].mxu0
    %10252 = vdwg.mxu0
    %10253 = vmatprep.subr.bf16.mxu0 %v9765
    %10254 = vmatpush1.bf16.msra.mxu0 %v9764
    %10255 = vmatprep.subr.bf16.mxu0 %v9769
    %10256 = vmatpush1.bf16.msra.mxu0 %v9768
    %10257 = vmatprep.subr.bf16.mxu0 %v9773
    %10258 = vmatpush1.bf16.msra.mxu0 %v9772
    %10259 = vmatprep.subr.bf16.mxu0 %v9777
    %10260 = vmatpush1.bf16.msra.mxu0 %v9776
    %10261 = vmatprep.subr.bf16.mxu0 %v9781
    %10262 = vmatpush1.bf16.msra.mxu0 %v9780
    %10263 = vmatprep.subr.bf16.mxu0 %v9785
    %10264 = vmatpush1.bf16.msra.mxu0 %v9784
    %10265 = vmatprep.subr.bf16.mxu0 %v9789
    %10266 = vmatpush1.bf16.msra.mxu0 %v9788
    %10267 = vmatprep.subr.bf16.mxu0 %v9793
    %10268 = vmatpush1.bf16.msra.mxu0 %v9792
    %10269 = vmatprep.subr.bf16.mxu0 %v9797
    %10270 = vmatpush1.bf16.msra.mxu0 %v9796
    %10271 = vmatprep.subr.bf16.mxu0 %v9801
    %10272 = vmatpush1.bf16.msra.mxu0 %v9800
    %10273 = vmatprep.subr.bf16.mxu0 %v9805
    %10274 = vmatpush1.bf16.msra.mxu0 %v9804
    %10275 = vmatprep.subr.bf16.mxu0 %v9809
    %10276 = vmatpush1.bf16.msra.mxu0 %v9808
    %10277 = vmatprep.subr.bf16.mxu0 %v9813
    %10278 = vmatpush1.bf16.msra.mxu0 %v9812
    %10279 = vmatprep.subr.bf16.mxu0 %v9817
    %10280 = vmatpush1.bf16.msra.mxu0 %v9816
    %10281 = vmatprep.subr.bf16.mxu0 %v9821
    %10282 = vmatpush1.bf16.msra.mxu0 %v9820
    %10283 = vmatprep.subr.bf16.mxu0 %v9825
    %10284 = vmatpush1.bf16.msra.mxu0 %v9824
    %10285 = vmatprep.mubr.bf16.mxu0 %v8649
    %10286 = vmatmul.mubr.bf16.gmra.mrb[0].mxu0 %v8648
    %v10287 = vpop.f32.mrb[0].mxu0
    %v10288 = vadd.f32 %v10247, %v10287
    %v10289 = vpop.f32.mrb[0].mxu0
    %v10290 = vadd.f32 %v10249, %v10289
    %v10291 = vpop.f32.mrb[0].mxu0
    %v10292 = vpop.f32.mrb[0].mxu0
    %10293 = vdwg.mxu0
    %10294 = vmatprep.subr.bf16.mxu0 %v9829
    %10295 = vmatpush1.bf16.msra.mxu0 %v9828
    %10296 = vmatprep.subr.bf16.mxu0 %v9833
    %10297 = vmatpush1.bf16.msra.mxu0 %v9832
    %10298 = vmatprep.subr.bf16.mxu0 %v9837
    %10299 = vmatpush1.bf16.msra.mxu0 %v9836
    %10300 = vmatprep.subr.bf16.mxu0 %v9841
    %10301 = vmatpush1.bf16.msra.mxu0 %v9840
    %10302 = vmatprep.subr.bf16.mxu0 %v9845
    %10303 = vmatpush1.bf16.msra.mxu0 %v9844
    %10304 = vmatprep.subr.bf16.mxu0 %v9849
    %10305 = vmatpush1.bf16.msra.mxu0 %v9848
    %10306 = vmatprep.subr.bf16.mxu0 %v9853
    %10307 = vmatpush1.bf16.msra.mxu0 %v9852
    %10308 = vmatprep.subr.bf16.mxu0 %v9857
    %10309 = vmatpush1.bf16.msra.mxu0 %v9856
    %10310 = vmatprep.subr.bf16.mxu0 %v9861
    %10311 = vmatpush1.bf16.msra.mxu0 %v9860
    %10312 = vmatprep.subr.bf16.mxu0 %v9865
    %10313 = vmatpush1.bf16.msra.mxu0 %v9864
    %10314 = vmatprep.subr.bf16.mxu0 %v9869
    %10315 = vmatpush1.bf16.msra.mxu0 %v9868
    %10316 = vmatprep.subr.bf16.mxu0 %v9873
    %10317 = vmatpush1.bf16.msra.mxu0 %v9872
    %10318 = vmatprep.subr.bf16.mxu0 %v9877
    %10319 = vmatpush1.bf16.msra.mxu0 %v9876
    %10320 = vmatprep.subr.bf16.mxu0 %v9881
    %10321 = vmatpush1.bf16.msra.mxu0 %v9880
    %10322 = vmatprep.subr.bf16.mxu0 %v9885
    %10323 = vmatpush1.bf16.msra.mxu0 %v9884
    %10324 = vmatprep.subr.bf16.mxu0 %v9889
    %10325 = vmatpush1.bf16.msra.mxu0 %v9888
    %10326 = vmatprep.mubr.bf16.mxu0 %v8651
    %10327 = vmatmul.mubr.bf16.gmra.mrb[0].mxu0 %v8650
    %v10328 = vpop.f32.mrb[0].mxu0
    %v10329 = vadd.f32 %v10288, %v10328
    %v10330 = vpop.f32.mrb[0].mxu0
    %v10331 = vadd.f32 %v10290, %v10330
    %v10332 = vpop.f32.mrb[0].mxu0
    %v10333 = vpop.f32.mrb[0].mxu0
    %10334 = vdwg.mxu0
    %10335 = vmatprep.subr.bf16.mxu0 %v9893
    %10336 = vmatpush1.bf16.msra.mxu0 %v9892
    %10337 = vmatprep.subr.bf16.mxu0 %v9897
    %10338 = vmatpush1.bf16.msra.mxu0 %v9896
    %10339 = vmatprep.subr.bf16.mxu0 %v9901
    %10340 = vmatpush1.bf16.msra.mxu0 %v9900
    %10341 = vmatprep.subr.bf16.mxu0 %v9905
    %10342 = vmatpush1.bf16.msra.mxu0 %v9904
    %10343 = vmatprep.subr.bf16.mxu0 %v9909
    %10344 = vmatpush1.bf16.msra.mxu0 %v9908
    %10345 = vmatprep.subr.bf16.mxu0 %v9913
    %10346 = vmatpush1.bf16.msra.mxu0 %v9912
    %10347 = vmatprep.subr.bf16.mxu0 %v9917
    %10348 = vmatpush1.bf16.msra.mxu0 %v9916
    %10349 = vmatprep.subr.bf16.mxu0 %v9921
    %10350 = vmatpush1.bf16.msra.mxu0 %v9920
    %10351 = vmatprep.subr.bf16.mxu0 %v9925
    %10352 = vmatpush1.bf16.msra.mxu0 %v9924
    %10353 = vmatprep.subr.bf16.mxu0 %v9929
    %10354 = vmatpush1.bf16.msra.mxu0 %v9928
    %10355 = vmatprep.subr.bf16.mxu0 %v9933
    %10356 = vmatpush1.bf16.msra.mxu0 %v9932
    %10357 = vmatprep.subr.bf16.mxu0 %v9937
    %10358 = vmatpush1.bf16.msra.mxu0 %v9936
    %10359 = vmatprep.subr.bf16.mxu0 %v9941
    %10360 = vmatpush1.bf16.msra.mxu0 %v9940
    %10361 = vmatprep.subr.bf16.mxu0 %v9945
    %10362 = vmatpush1.bf16.msra.mxu0 %v9944
    %10363 = vmatprep.subr.bf16.mxu0 %v9949
    %10364 = vmatpush1.bf16.msra.mxu0 %v9948
    %10365 = vmatprep.subr.bf16.mxu0 %v9953
    %10366 = vmatpush1.bf16.msra.mxu0 %v9952
    %10367 = vmatprep.mubr.bf16.mxu0 %v8653
    %10368 = vmatmul.mubr.bf16.gmra.mrb[0].mxu0 %v8652
    %v10369 = vpop.f32.mrb[0].mxu0
    %v10370 = vadd.f32 %v10329, %v10369
    %v10371 = vpop.f32.mrb[0].mxu0
    %v10372 = vadd.f32 %v10331, %v10371
    %v10373 = vpop.f32.mrb[0].mxu0
    %v10374 = vpop.f32.mrb[0].mxu0
    %10375 = vdwg.mxu0
    %10376 = vmatprep.subr.bf16.mxu0 %v9703
    %10377 = vmatpush1.bf16.msra.mxu0 %v9702
    %10378 = vmatprep.subr.bf16.mxu0 %v9707
    %10379 = vmatpush1.bf16.msra.mxu0 %v9706
    %10380 = vmatprep.subr.bf16.mxu0 %v9711
    %10381 = vmatpush1.bf16.msra.mxu0 %v9710
    %10382 = vmatprep.subr.bf16.mxu0 %v9715
    %10383 = vmatpush1.bf16.msra.mxu0 %v9714
    %10384 = vmatprep.subr.bf16.mxu0 %v9719
    %10385 = vmatpush1.bf16.msra.mxu0 %v9718
    %10386 = vmatprep.subr.bf16.mxu0 %v9723
    %10387 = vmatpush1.bf16.msra.mxu0 %v9722
    %10388 = vmatprep.subr.bf16.mxu0 %v9727
    %10389 = vmatpush1.bf16.msra.mxu0 %v9726
    %10390 = vmatprep.subr.bf16.mxu0 %v9731
    %10391 = vmatpush1.bf16.msra.mxu0 %v9730
    %10392 = vmatprep.subr.bf16.mxu0 %v9735
    %10393 = vmatpush1.bf16.msra.mxu0 %v9734
    %10394 = vmatprep.subr.bf16.mxu0 %v9739
    %10395 = vmatpush1.bf16.msra.mxu0 %v9738
    %10396 = vmatprep.subr.bf16.mxu0 %v9743
    %10397 = vmatpush1.bf16.msra.mxu0 %v9742
    %10398 = vmatprep.subr.bf16.mxu0 %v9747
    %10399 = vmatpush1.bf16.msra.mxu0 %v9746
    %10400 = vmatprep.subr.bf16.mxu0 %v9751
    %10401 = vmatpush1.bf16.msra.mxu0 %v9750
    %10402 = vmatprep.subr.bf16.mxu0 %v9755
    %10403 = vmatpush1.bf16.msra.mxu0 %v9754
    %10404 = vmatprep.subr.bf16.mxu0 %v9759
    %10405 = vmatpush1.bf16.msra.mxu0 %v9758
    %10406 = vmatprep.subr.bf16.mxu0 %v9763
    %10407 = vmatpush1.bf16.msra.mxu0 %v9762
    %10408 = vmatprep.mubr.bf16.mxu0 %v8647
    %10409 = vmatmul.mubr.bf16.gmra.mrb[0].mxu0 %v8646
    %v10410 = vpop.f32.mrb[0].mxu0
    %v10411 = vadd.f32 %v8923, %v10410
    %v10412 = vpop.f32.mrb[0].mxu0
    %v10413 = vadd.f32 %v8927, %v10412
    %v10414 = vpop.f32.mrb[0].mxu0
    %v10415 = vpop.f32.mrb[0].mxu0
    %10416 = vdwg.mxu0
    %10417 = vmatprep.subr.bf16.mxu0 %v9767
    %10418 = vmatpush1.bf16.msra.mxu0 %v9766
    %10419 = vmatprep.subr.bf16.mxu0 %v9771
    %10420 = vmatpush1.bf16.msra.mxu0 %v9770
    %10421 = vmatprep.subr.bf16.mxu0 %v9775
    %10422 = vmatpush1.bf16.msra.mxu0 %v9774
    %10423 = vmatprep.subr.bf16.mxu0 %v9779
    %10424 = vmatpush1.bf16.msra.mxu0 %v9778
    %10425 = vmatprep.subr.bf16.mxu0 %v9783
    %10426 = vmatpush1.bf16.msra.mxu0 %v9782
    %10427 = vmatprep.subr.bf16.mxu0 %v9787
    %10428 = vmatpush1.bf16.msra.mxu0 %v9786
    %10429 = vmatprep.subr.bf16.mxu0 %v9791
    %10430 = vmatpush1.bf16.msra.mxu0 %v9790
    %10431 = vmatprep.subr.bf16.mxu0 %v9795
    %10432 = vmatpush1.bf16.msra.mxu0 %v9794
    %10433 = vmatprep.subr.bf16.mxu0 %v9799
    %10434 = vmatpush1.bf16.msra.mxu0 %v9798
    %10435 = vmatprep.subr.bf16.mxu0 %v9803
    %10436 = vmatpush1.bf16.msra.mxu0 %v9802
    %10437 = vmatprep.subr.bf16.mxu0 %v9807
    %10438 = vmatpush1.bf16.msra.mxu0 %v9806
    %10439 = vmatprep.subr.bf16.mxu0 %v9811
    %10440 = vmatpush1.bf16.msra.mxu0 %v9810
    %10441 = vmatprep.subr.bf16.mxu0 %v9815
    %10442 = vmatpush1.bf16.msra.mxu0 %v9814
    %10443 = vmatprep.subr.bf16.mxu0 %v9819
    %10444 = vmatpush1.bf16.msra.mxu0 %v9818
    %10445 = vmatprep.subr.bf16.mxu0 %v9823
    %10446 = vmatpush1.bf16.msra.mxu0 %v9822
    %10447 = vmatprep.subr.bf16.mxu0 %v9827
    %10448 = vmatpush1.bf16.msra.mxu0 %v9826
    %10449 = vmatprep.mubr.bf16.mxu0 %v8649
    %10450 = vmatmul.mubr.bf16.gmra.mrb[0].mxu0 %v8648
    %v10451 = vpop.f32.mrb[0].mxu0
    %v10452 = vadd.f32 %v10411, %v10451
    %v10453 = vpop.f32.mrb[0].mxu0
    %v10454 = vadd.f32 %v10413, %v10453
    %v10455 = vpop.f32.mrb[0].mxu0
    %v10456 = vpop.f32.mrb[0].mxu0
    %10457 = vdwg.mxu0
    %10458 = vmatprep.subr.bf16.mxu0 %v9831
    %10459 = vmatpush1.bf16.msra.mxu0 %v9830
    %10460 = vmatprep.subr.bf16.mxu0 %v9835
    %10461 = vmatpush1.bf16.msra.mxu0 %v9834
    %10462 = vmatprep.subr.bf16.mxu0 %v9839
    %10463 = vmatpush1.bf16.msra.mxu0 %v9838
    %10464 = vmatprep.subr.bf16.mxu0 %v9843
    %10465 = vmatpush1.bf16.msra.mxu0 %v9842
    %10466 = vmatprep.subr.bf16.mxu0 %v9847
    %10467 = vmatpush1.bf16.msra.mxu0 %v9846
    %10468 = vmatprep.subr.bf16.mxu0 %v9851
    %10469 = vmatpush1.bf16.msra.mxu0 %v9850
    %10470 = vmatprep.subr.bf16.mxu0 %v9855
    %10471 = vmatpush1.bf16.msra.mxu0 %v9854
    %10472 = vmatprep.subr.bf16.mxu0 %v9859
    %10473 = vmatpush1.bf16.msra.mxu0 %v9858
    %10474 = vmatprep.subr.bf16.mxu0 %v9863
    %10475 = vmatpush1.bf16.msra.mxu0 %v9862
    %10476 = vmatprep.subr.bf16.mxu0 %v9867
    %10477 = vmatpush1.bf16.msra.mxu0 %v9866
    %10478 = vmatprep.subr.bf16.mxu0 %v9871
    %10479 = vmatpush1.bf16.msra.mxu0 %v9870
    %10480 = vmatprep.subr.bf16.mxu0 %v9875
    %10481 = vmatpush1.bf16.msra.mxu0 %v9874
    %10482 = vmatprep.subr.bf16.mxu0 %v9879
    %10483 = vmatpush1.bf16.msra.mxu0 %v9878
    %10484 = vmatprep.subr.bf16.mxu0 %v9883
    %10485 = vmatpush1.bf16.msra.mxu0 %v9882
    %10486 = vmatprep.subr.bf16.mxu0 %v9887
    %10487 = vmatpush1.bf16.msra.mxu0 %v9886
    %10488 = vmatprep.subr.bf16.mxu0 %v9891
    %10489 = vmatpush1.bf16.msra.mxu0 %v9890
    %10490 = vmatprep.mubr.bf16.mxu0 %v8651
    %10491 = vmatmul.mubr.bf16.gmra.mrb[0].mxu0 %v8650
    %v10492 = vpop.f32.mrb[0].mxu0
    %v10493 = vadd.f32 %v10452, %v10492
    %v10494 = vpop.f32.mrb[0].mxu0
    %v10495 = vadd.f32 %v10454, %v10494
    %v10496 = vpop.f32.mrb[0].mxu0
    %v10497 = vpop.f32.mrb[0].mxu0
    %10498 = vdwg.mxu0
    %10499 = vmatprep.subr.bf16.mxu0 %v9895
    %10500 = vmatpush1.bf16.msra.mxu0 %v9894
    %10501 = vmatprep.subr.bf16.mxu0 %v9899
    %10502 = vmatpush1.bf16.msra.mxu0 %v9898
    %10503 = vmatprep.subr.bf16.mxu0 %v9903
    %10504 = vmatpush1.bf16.msra.mxu0 %v9902
    %10505 = vmatprep.subr.bf16.mxu0 %v9907
    %10506 = vmatpush1.bf16.msra.mxu0 %v9906
    %10507 = vmatprep.subr.bf16.mxu0 %v9911
    %10508 = vmatpush1.bf16.msra.mxu0 %v9910
    %10509 = vmatprep.subr.bf16.mxu0 %v9915
    %10510 = vmatpush1.bf16.msra.mxu0 %v9914
    %10511 = vmatprep.subr.bf16.mxu0 %v9919
    %10512 = vmatpush1.bf16.msra.mxu0 %v9918
    %10513 = vmatprep.subr.bf16.mxu0 %v9923
    %10514 = vmatpush1.bf16.msra.mxu0 %v9922
    %10515 = vmatprep.subr.bf16.mxu0 %v9927
    %10516 = vmatpush1.bf16.msra.mxu0 %v9926
    %10517 = vmatprep.subr.bf16.mxu0 %v9931
    %10518 = vmatpush1.bf16.msra.mxu0 %v9930
    %10519 = vmatprep.subr.bf16.mxu0 %v9935
    %10520 = vmatpush1.bf16.msra.mxu0 %v9934
    %10521 = vmatprep.subr.bf16.mxu0 %v9939
    %10522 = vmatpush1.bf16.msra.mxu0 %v9938
    %10523 = vmatprep.subr.bf16.mxu0 %v9943
    %10524 = vmatpush1.bf16.msra.mxu0 %v9942
    %10525 = vmatprep.subr.bf16.mxu0 %v9947
    %10526 = vmatpush1.bf16.msra.mxu0 %v9946
    %10527 = vmatprep.subr.bf16.mxu0 %v9951
    %10528 = vmatpush1.bf16.msra.mxu0 %v9950
    %10529 = vmatprep.subr.bf16.mxu0 %v9955
    %10530 = vmatpush1.bf16.msra.mxu0 %v9954
    %10531 = vmatprep.mubr.bf16.mxu0 %v8653
    %10532 = vmatmul.mubr.bf16.gmra.mrb[0].mxu0 %v8652
    %v10533 = vpop.f32.mrb[0].mxu0
    %v10534 = vadd.f32 %v10493, %v10533
    %v10535 = vpop.f32.mrb[0].mxu0
    %v10536 = vadd.f32 %v10495, %v10535
    %v10537 = vpop.f32.mrb[0].mxu0
    %v10538 = vpop.f32.mrb[0].mxu0
    %10539 = vdwg.mxu0
    %v10540 = vmax.f32 %v10370, 0.0
    %v10541 = vmax.f32 %v10372, 0.0
    %v10542 = vmax.f32 %v10534, 0.0
    %v10543 = vmax.f32 %v10536, 0.0
    %v10544 = vpack.c.bf16 %v10540, %v10540
    %v10545 = vpack.c.bf16 %v10541, %v10541
    %v10546 = vpack.c.bf16 %v10542, %v10542
    %v10547 = vpack.c.bf16 %v10543, %v10543
    %v10548 = vld [vmem:[#allocation7] sm:$0xff]
    %v10549 = vld [vmem:[#allocation7 + $0x8] sm:$0xff]
    %v10550 = vld [vmem:[#allocation7 + $0x10] sm:$0xff]
    %v10551 = vld [vmem:[#allocation7 + $0x18] sm:$0xff]
    %v10552 = vld [vmem:[#allocation7 + $0x20] sm:$0xff]
    %v10553 = vld [vmem:[#allocation7 + $0x28] sm:$0xff]
    %v10554 = vld [vmem:[#allocation7 + $0x30] sm:$0xff]
    %v10555 = vld [vmem:[#allocation7 + $0x38] sm:$0xff]
    %v10556 = vld [vmem:[#allocation7 + $0x40] sm:$0xff]
    %v10557 = vld [vmem:[#allocation7 + $0x48] sm:$0xff]
    %v10558 = vld [vmem:[#allocation7 + $0x50] sm:$0xff]
    %v10559 = vld [vmem:[#allocation7 + $0x58] sm:$0xff]
    %v10560 = vld [vmem:[#allocation7 + $0x60] sm:$0xff]
    %v10561 = vld [vmem:[#allocation7 + $0x68] sm:$0xff]
    %v10562 = vld [vmem:[#allocation7 + $0x70] sm:$0xff]
    %v10563 = vld [vmem:[#allocation7 + $0x78] sm:$0xff]
    %v10564 = vld [vmem:[#allocation7 + $0x80] sm:$0xff]
    %v10565 = vld [vmem:[#allocation7 + $0x88] sm:$0xff]
    %v10566 = vld [vmem:[#allocation7 + $0x90] sm:$0xff]
    %v10567 = vld [vmem:[#allocation7 + $0x98] sm:$0xff]
    %v10568 = vld [vmem:[#allocation7 + $0xa0] sm:$0xff]
    %v10569 = vld [vmem:[#allocation7 + $0xa8] sm:$0xff]
    %v10570 = vld [vmem:[#allocation7 + $0xb0] sm:$0xff]
    %v10571 = vld [vmem:[#allocation7 + $0xb8] sm:$0xff]
    %v10572 = vld [vmem:[#allocation7 + $0xc0] sm:$0xff]
    %v10573 = vld [vmem:[#allocation7 + $0xc8] sm:$0xff]
    %v10574 = vld [vmem:[#allocation7 + $0xd0] sm:$0xff]
    %v10575 = vld [vmem:[#allocation7 + $0xd8] sm:$0xff]
    %v10576 = vld [vmem:[#allocation7 + $0xe0] sm:$0xff]
    %v10577 = vld [vmem:[#allocation7 + $0xe8] sm:$0xff]
    %v10578 = vld [vmem:[#allocation7 + $0xf0] sm:$0xff]
    %v10579 = vld [vmem:[#allocation7 + $0xf8] sm:$0xff]
    %v10580 = vld [vmem:[#allocation7 + $0x100] sm:$0xff]
    %v10581 = vld [vmem:[#allocation7 + $0x108] sm:$0xff]
    %v10582 = vld [vmem:[#allocation7 + $0x110] sm:$0xff]
    %v10583 = vld [vmem:[#allocation7 + $0x118] sm:$0xff]
    %v10584 = vld [vmem:[#allocation7 + $0x120] sm:$0xff]
    %v10585 = vld [vmem:[#allocation7 + $0x128] sm:$0xff]
    %v10586 = vld [vmem:[#allocation7 + $0x130] sm:$0xff]
    %v10587 = vld [vmem:[#allocation7 + $0x138] sm:$0xff]
    %v10588 = vld [vmem:[#allocation7 + $0x140] sm:$0xff]
    %v10589 = vld [vmem:[#allocation7 + $0x148] sm:$0xff]
    %v10590 = vld [vmem:[#allocation7 + $0x150] sm:$0xff]
    %v10591 = vld [vmem:[#allocation7 + $0x158] sm:$0xff]
    %v10592 = vld [vmem:[#allocation7 + $0x160] sm:$0xff]
    %v10593 = vld [vmem:[#allocation7 + $0x168] sm:$0xff]
    %v10594 = vld [vmem:[#allocation7 + $0x170] sm:$0xff]
    %v10595 = vld [vmem:[#allocation7 + $0x178] sm:$0xff]
    %v10596 = vld [vmem:[#allocation7 + $0x180] sm:$0xff]
    %v10597 = vld [vmem:[#allocation7 + $0x188] sm:$0xff]
    %v10598 = vld [vmem:[#allocation7 + $0x190] sm:$0xff]
    %v10599 = vld [vmem:[#allocation7 + $0x198] sm:$0xff]
    %v10600 = vld [vmem:[#allocation7 + $0x1a0] sm:$0xff]
    %v10601 = vld [vmem:[#allocation7 + $0x1a8] sm:$0xff]
    %v10602 = vld [vmem:[#allocation7 + $0x1b0] sm:$0xff]
    %v10603 = vld [vmem:[#allocation7 + $0x1b8] sm:$0xff]
    %v10604 = vld [vmem:[#allocation7 + $0x1c0] sm:$0xff]
    %v10605 = vld [vmem:[#allocation7 + $0x1c8] sm:$0xff]
    %v10606 = vld [vmem:[#allocation7 + $0x1d0] sm:$0xff]
    %v10607 = vld [vmem:[#allocation7 + $0x1d8] sm:$0xff]
    %v10608 = vld [vmem:[#allocation7 + $0x1e0] sm:$0xff]
    %v10609 = vld [vmem:[#allocation7 + $0x1e8] sm:$0xff]
    %v10610 = vld [vmem:[#allocation7 + $0x1f0] sm:$0xff]
    %v10611 = vld [vmem:[#allocation7 + $0x1f8] sm:$0xff]
    %v10612 = vld [vmem:[%s12] sm:$0x3]
    %v10614 = vlaneseq
    %v10615 = vshrl.u32 %v10614, 7
    %v10616 = vsub.s32 0, %v10615
    %v10617 = vrot.slane %v10612, %v10616
    %v10618 = vlaneseq
    %v10619 = vshrl.u32 %v10618, 7
    %v10620 = vsub.s32 1, %v10619
    %v10621 = vrot.slane %v10612, %v10620
    %v10688 = vunpack.c.l.b16 %v10548
    %v10689 = vunpack.c.h.b16 %v10548
    %v10690 = vunpack.c.l.b16 %v10549
    %v10691 = vunpack.c.h.b16 %v10549
    %v10692 = vunpack.c.l.b16 %v10550
    %v10693 = vunpack.c.h.b16 %v10550
    %v10694 = vunpack.c.l.b16 %v10551
    %v10695 = vunpack.c.h.b16 %v10551
    %v10696 = vunpack.c.l.b16 %v10552
    %v10697 = vunpack.c.h.b16 %v10552
    %v10698 = vunpack.c.l.b16 %v10553
    %v10699 = vunpack.c.h.b16 %v10553
    %v10700 = vunpack.c.l.b16 %v10554
    %v10701 = vunpack.c.h.b16 %v10554
    %v10702 = vunpack.c.l.b16 %v10555
    %v10703 = vunpack.c.h.b16 %v10555
    %v10704 = vunpack.c.l.b16 %v10556
    %v10705 = vunpack.c.h.b16 %v10556
    %v10706 = vunpack.c.l.b16 %v10557
    %v10707 = vunpack.c.h.b16 %v10557
    %v10708 = vunpack.c.l.b16 %v10558
    %v10709 = vunpack.c.h.b16 %v10558
    %v10710 = vunpack.c.l.b16 %v10559
    %v10711 = vunpack.c.h.b16 %v10559
    %v10712 = vunpack.c.l.b16 %v10560
    %v10713 = vunpack.c.h.b16 %v10560
    %v10714 = vunpack.c.l.b16 %v10561
    %v10715 = vunpack.c.h.b16 %v10561
    %v10716 = vunpack.c.l.b16 %v10562
    %v10717 = vunpack.c.h.b16 %v10562
    %v10718 = vunpack.c.l.b16 %v10563
    %v10719 = vunpack.c.h.b16 %v10563
    %v10720 = vunpack.c.l.b16 %v10564
    %v10721 = vunpack.c.h.b16 %v10564
    %v10722 = vunpack.c.l.b16 %v10565
    %v10723 = vunpack.c.h.b16 %v10565
    %v10724 = vunpack.c.l.b16 %v10566
    %v10725 = vunpack.c.h.b16 %v10566
    %v10726 = vunpack.c.l.b16 %v10567
    %v10727 = vunpack.c.h.b16 %v10567
    %v10728 = vunpack.c.l.b16 %v10568
    %v10729 = vunpack.c.h.b16 %v10568
    %v10730 = vunpack.c.l.b16 %v10569
    %v10731 = vunpack.c.h.b16 %v10569
    %v10732 = vunpack.c.l.b16 %v10570
    %v10733 = vunpack.c.h.b16 %v10570
    %v10734 = vunpack.c.l.b16 %v10571
    %v10735 = vunpack.c.h.b16 %v10571
    %v10736 = vunpack.c.l.b16 %v10572
    %v10737 = vunpack.c.h.b16 %v10572
    %v10738 = vunpack.c.l.b16 %v10573
    %v10739 = vunpack.c.h.b16 %v10573
    %v10740 = vunpack.c.l.b16 %v10574
    %v10741 = vunpack.c.h.b16 %v10574
    %v10742 = vunpack.c.l.b16 %v10575
    %v10743 = vunpack.c.h.b16 %v10575
    %v10744 = vunpack.c.l.b16 %v10576
    %v10745 = vunpack.c.h.b16 %v10576
    %v10746 = vunpack.c.l.b16 %v10577
    %v10747 = vunpack.c.h.b16 %v10577
    %v10748 = vunpack.c.l.b16 %v10578
    %v10749 = vunpack.c.h.b16 %v10578
    %v10750 = vunpack.c.l.b16 %v10579
    %v10751 = vunpack.c.h.b16 %v10579
    %v10752 = vunpack.c.l.b16 %v10580
    %v10753 = vunpack.c.h.b16 %v10580
    %v10754 = vunpack.c.l.b16 %v10581
    %v10755 = vunpack.c.h.b16 %v10581
    %v10756 = vunpack.c.l.b16 %v10582
    %v10757 = vunpack.c.h.b16 %v10582
    %v10758 = vunpack.c.l.b16 %v10583
    %v10759 = vunpack.c.h.b16 %v10583
    %v10760 = vunpack.c.l.b16 %v10584
    %v10761 = vunpack.c.h.b16 %v10584
    %v10762 = vunpack.c.l.b16 %v10585
    %v10763 = vunpack.c.h.b16 %v10585
    %v10764 = vunpack.c.l.b16 %v10586
    %v10765 = vunpack.c.h.b16 %v10586
    %v10766 = vunpack.c.l.b16 %v10587
    %v10767 = vunpack.c.h.b16 %v10587
    %v10768 = vunpack.c.l.b16 %v10588
    %v10769 = vunpack.c.h.b16 %v10588
    %v10770 = vunpack.c.l.b16 %v10589
    %v10771 = vunpack.c.h.b16 %v10589
    %v10772 = vunpack.c.l.b16 %v10590
    %v10773 = vunpack.c.h.b16 %v10590
    %v10774 = vunpack.c.l.b16 %v10591
    %v10775 = vunpack.c.h.b16 %v10591
    %v10776 = vunpack.c.l.b16 %v10592
    %v10777 = vunpack.c.h.b16 %v10592
    %v10778 = vunpack.c.l.b16 %v10593
    %v10779 = vunpack.c.h.b16 %v10593
    %v10780 = vunpack.c.l.b16 %v10594
    %v10781 = vunpack.c.h.b16 %v10594
    %v10782 = vunpack.c.l.b16 %v10595
    %v10783 = vunpack.c.h.b16 %v10595
    %v10784 = vunpack.c.l.b16 %v10596
    %v10785 = vunpack.c.h.b16 %v10596
    %v10786 = vunpack.c.l.b16 %v10597
    %v10787 = vunpack.c.h.b16 %v10597
    %v10788 = vunpack.c.l.b16 %v10598
    %v10789 = vunpack.c.h.b16 %v10598
    %v10790 = vunpack.c.l.b16 %v10599
    %v10791 = vunpack.c.h.b16 %v10599
    %v10792 = vunpack.c.l.b16 %v10600
    %v10793 = vunpack.c.h.b16 %v10600
    %v10794 = vunpack.c.l.b16 %v10601
    %v10795 = vunpack.c.h.b16 %v10601
    %v10796 = vunpack.c.l.b16 %v10602
    %v10797 = vunpack.c.h.b16 %v10602
    %v10798 = vunpack.c.l.b16 %v10603
    %v10799 = vunpack.c.h.b16 %v10603
    %v10800 = vunpack.c.l.b16 %v10604
    %v10801 = vunpack.c.h.b16 %v10604
    %v10802 = vunpack.c.l.b16 %v10605
    %v10803 = vunpack.c.h.b16 %v10605
    %v10804 = vunpack.c.l.b16 %v10606
    %v10805 = vunpack.c.h.b16 %v10606
    %v10806 = vunpack.c.l.b16 %v10607
    %v10807 = vunpack.c.h.b16 %v10607
    %v10808 = vunpack.c.l.b16 %v10608
    %v10809 = vunpack.c.h.b16 %v10608
    %v10810 = vunpack.c.l.b16 %v10609
    %v10811 = vunpack.c.h.b16 %v10609
    %v10812 = vunpack.c.l.b16 %v10610
    %v10813 = vunpack.c.h.b16 %v10610
    %v10814 = vunpack.c.l.b16 %v10611
    %v10815 = vunpack.c.h.b16 %v10611
    %v10816 = vpack.c.b16 %v10690, %v10688
    %v10817 = vpack.c.b16 %v10691, %v10689
    %v10818 = vpack.c.b16 %v10694, %v10692
    %v10819 = vpack.c.b16 %v10695, %v10693
    %v10820 = vpack.c.b16 %v10698, %v10696
    %v10821 = vpack.c.b16 %v10699, %v10697
    %v10822 = vpack.c.b16 %v10702, %v10700
    %v10823 = vpack.c.b16 %v10703, %v10701
    %v10824 = vpack.c.b16 %v10706, %v10704
    %v10825 = vpack.c.b16 %v10707, %v10705
    %v10826 = vpack.c.b16 %v10710, %v10708
    %v10827 = vpack.c.b16 %v10711, %v10709
    %v10828 = vpack.c.b16 %v10714, %v10712
    %v10829 = vpack.c.b16 %v10715, %v10713
    %v10830 = vpack.c.b16 %v10718, %v10716
    %v10831 = vpack.c.b16 %v10719, %v10717
    %v10832 = vpack.c.b16 %v10722, %v10720
    %v10833 = vpack.c.b16 %v10723, %v10721
    %v10834 = vpack.c.b16 %v10726, %v10724
    %v10835 = vpack.c.b16 %v10727, %v10725
    %v10836 = vpack.c.b16 %v10730, %v10728
    %v10837 = vpack.c.b16 %v10731, %v10729
    %v10838 = vpack.c.b16 %v10734, %v10732
    %v10839 = vpack.c.b16 %v10735, %v10733
    %v10840 = vpack.c.b16 %v10738, %v10736
    %v10841 = vpack.c.b16 %v10739, %v10737
    %v10842 = vpack.c.b16 %v10742, %v10740
    %v10843 = vpack.c.b16 %v10743, %v10741
    %v10844 = vpack.c.b16 %v10746, %v10744
    %v10845 = vpack.c.b16 %v10747, %v10745
    %v10846 = vpack.c.b16 %v10750, %v10748
    %v10847 = vpack.c.b16 %v10751, %v10749
    %v10848 = vpack.c.b16 %v10754, %v10752
    %v10849 = vpack.c.b16 %v10755, %v10753
    %v10850 = vpack.c.b16 %v10758, %v10756
    %v10851 = vpack.c.b16 %v10759, %v10757
    %v10852 = vpack.c.b16 %v10762, %v10760
    %v10853 = vpack.c.b16 %v10763, %v10761
    %v10854 = vpack.c.b16 %v10766, %v10764
    %v10855 = vpack.c.b16 %v10767, %v10765
    %v10856 = vpack.c.b16 %v10770, %v10768
    %v10857 = vpack.c.b16 %v10771, %v10769
    %v10858 = vpack.c.b16 %v10774, %v10772
    %v10859 = vpack.c.b16 %v10775, %v10773
    %v10860 = vpack.c.b16 %v10778, %v10776
    %v10861 = vpack.c.b16 %v10779, %v10777
    %v10862 = vpack.c.b16 %v10782, %v10780
    %v10863 = vpack.c.b16 %v10783, %v10781
    %v10864 = vpack.c.b16 %v10786, %v10784
    %v10865 = vpack.c.b16 %v10787, %v10785
    %v10866 = vpack.c.b16 %v10790, %v10788
    %v10867 = vpack.c.b16 %v10791, %v10789
    %v10868 = vpack.c.b16 %v10794, %v10792
    %v10869 = vpack.c.b16 %v10795, %v10793
    %v10870 = vpack.c.b16 %v10798, %v10796
    %v10871 = vpack.c.b16 %v10799, %v10797
    %v10872 = vpack.c.b16 %v10802, %v10800
    %v10873 = vpack.c.b16 %v10803, %v10801
    %v10874 = vpack.c.b16 %v10806, %v10804
    %v10875 = vpack.c.b16 %v10807, %v10805
    %v10876 = vpack.c.b16 %v10810, %v10808
    %v10877 = vpack.c.b16 %v10811, %v10809
    %v10878 = vpack.c.b16 %v10814, %v10812
    %v10879 = vpack.c.b16 %v10815, %v10813
    %10944 = vmatprep.subr.bf16.mxu0 %v10817
    %10945 = vmatpush1.bf16.msra.mxu0 %v10816
    %10946 = vmatprep.subr.bf16.mxu0 %v10819
    %10947 = vmatpush1.bf16.msra.mxu0 %v10818
    %10948 = vmatprep.subr.bf16.mxu0 %v10821
    %10949 = vmatpush1.bf16.msra.mxu0 %v10820
    %10950 = vmatprep.subr.bf16.mxu0 %v10823
    %10951 = vmatpush1.bf16.msra.mxu0 %v10822
    %10952 = vmatprep.subr.bf16.mxu0 %v10825
    %10953 = vmatpush1.bf16.msra.mxu0 %v10824
    %10954 = vmatprep.subr.bf16.mxu0 %v10827
    %10955 = vmatpush1.bf16.msra.mxu0 %v10826
    %10956 = vmatprep.subr.bf16.mxu0 %v10829
    %10957 = vmatpush1.bf16.msra.mxu0 %v10828
    %10958 = vmatprep.subr.bf16.mxu0 %v10831
    %10959 = vmatpush1.bf16.msra.mxu0 %v10830
    %10960 = vmatprep.subr.bf16.mxu0 %v10833
    %10961 = vmatpush1.bf16.msra.mxu0 %v10832
    %10962 = vmatprep.subr.bf16.mxu0 %v10835
    %10963 = vmatpush1.bf16.msra.mxu0 %v10834
    %10964 = vmatprep.subr.bf16.mxu0 %v10837
    %10965 = vmatpush1.bf16.msra.mxu0 %v10836
    %10966 = vmatprep.subr.bf16.mxu0 %v10839
    %10967 = vmatpush1.bf16.msra.mxu0 %v10838
    %10968 = vmatprep.subr.bf16.mxu0 %v10841
    %10969 = vmatpush1.bf16.msra.mxu0 %v10840
    %10970 = vmatprep.subr.bf16.mxu0 %v10843
    %10971 = vmatpush1.bf16.msra.mxu0 %v10842
    %10972 = vmatprep.subr.bf16.mxu0 %v10845
    %10973 = vmatpush1.bf16.msra.mxu0 %v10844
    %10974 = vmatprep.subr.bf16.mxu0 %v10847
    %10975 = vmatpush1.bf16.msra.mxu0 %v10846
    %10976 = vmatprep.mubr.bf16.mxu0 %v10545
    %10977 = vmatmul.mubr.bf16.gmra.mrb[0].mxu0 %v10544
    %v10978 = vpop.f32.mrb[0].mxu0
    %v10979 = vadd.f32 %v10617, %v10978
    %v10980 = vpop.f32.mrb[0].mxu0
    %v10981 = vadd.f32 %v10621, %v10980
    %v10982 = vpop.f32.mrb[0].mxu0
    %v10983 = vpop.f32.mrb[0].mxu0
    %10984 = vdwg.mxu0
    %10985 = vmatprep.subr.bf16.mxu0 %v10849
    %10986 = vmatpush1.bf16.msra.mxu0 %v10848
    %10987 = vmatprep.subr.bf16.mxu0 %v10851
    %10988 = vmatpush1.bf16.msra.mxu0 %v10850
    %10989 = vmatprep.subr.bf16.mxu0 %v10853
    %10990 = vmatpush1.bf16.msra.mxu0 %v10852
    %10991 = vmatprep.subr.bf16.mxu0 %v10855
    %10992 = vmatpush1.bf16.msra.mxu0 %v10854
    %10993 = vmatprep.subr.bf16.mxu0 %v10857
    %10994 = vmatpush1.bf16.msra.mxu0 %v10856
    %10995 = vmatprep.subr.bf16.mxu0 %v10859
    %10996 = vmatpush1.bf16.msra.mxu0 %v10858
    %10997 = vmatprep.subr.bf16.mxu0 %v10861
    %10998 = vmatpush1.bf16.msra.mxu0 %v10860
    %10999 = vmatprep.subr.bf16.mxu0 %v10863
    %11000 = vmatpush1.bf16.msra.mxu0 %v10862
    %11001 = vmatprep.subr.bf16.mxu0 %v10865
    %11002 = vmatpush1.bf16.msra.mxu0 %v10864
    %11003 = vmatprep.subr.bf16.mxu0 %v10867
    %11004 = vmatpush1.bf16.msra.mxu0 %v10866
    %11005 = vmatprep.subr.bf16.mxu0 %v10869
    %11006 = vmatpush1.bf16.msra.mxu0 %v10868
    %11007 = vmatprep.subr.bf16.mxu0 %v10871
    %11008 = vmatpush1.bf16.msra.mxu0 %v10870
    %11009 = vmatprep.subr.bf16.mxu0 %v10873
    %11010 = vmatpush1.bf16.msra.mxu0 %v10872
    %11011 = vmatprep.subr.bf16.mxu0 %v10875
    %11012 = vmatpush1.bf16.msra.mxu0 %v10874
    %11013 = vmatprep.subr.bf16.mxu0 %v10877
    %11014 = vmatpush1.bf16.msra.mxu0 %v10876
    %11015 = vmatprep.subr.bf16.mxu0 %v10879
    %11016 = vmatpush1.bf16.msra.mxu0 %v10878
    %11017 = vmatprep.mubr.bf16.mxu0 %v10547
    %11018 = vmatmul.mubr.bf16.gmra.mrb[0].mxu0 %v10546
    %v11019 = vpop.f32.mrb[0].mxu0
    %v11020 = vadd.f32 %v10979, %v11019
    %v11021 = vpop.f32.mrb[0].mxu0
    %v11022 = vadd.f32 %v10981, %v11021
    %v11023 = vpop.f32.mrb[0].mxu0
    %v11024 = vpop.f32.mrb[0].mxu0
    %11025 = vdwg.mxu0
    %v11026 = vmax.f32 %v11020, 0.0
    %v11027 = vmax.f32 %v11022, 0.0
    %v11028 = vpack.c.bf16 %v11026, %v11026
    %v11029 = vpack.c.bf16 %v11027, %v11027
    %v11030 = vld [vmem:[#allocation8] sm:$0xff]
    %v11031 = vld [vmem:[#allocation8 + $0x8] sm:$0xff]
    %v11032 = vld [vmem:[#allocation8 + $0x10] sm:$0xff]
    %v11033 = vld [vmem:[#allocation8 + $0x18] sm:$0xff]
    %v11034 = vld [vmem:[#allocation8 + $0x20] sm:$0xff]
    %v11035 = vld [vmem:[#allocation8 + $0x28] sm:$0xff]
    %v11036 = vld [vmem:[#allocation8 + $0x30] sm:$0xff]
    %v11037 = vld [vmem:[#allocation8 + $0x38] sm:$0xff]
    %v11038 = vld [vmem:[#allocation8 + $0x40] sm:$0xff]
    %v11039 = vld [vmem:[#allocation8 + $0x48] sm:$0xff]
    %v11040 = vld [vmem:[#allocation8 + $0x50] sm:$0xff]
    %v11041 = vld [vmem:[#allocation8 + $0x58] sm:$0xff]
    %v11042 = vld [vmem:[#allocation8 + $0x60] sm:$0xff]
    %v11043 = vld [vmem:[#allocation8 + $0x68] sm:$0xff]
    %v11044 = vld [vmem:[#allocation8 + $0x70] sm:$0xff]
    %v11045 = vld [vmem:[#allocation8 + $0x78] sm:$0xff]
    %v11046 = vld [vmem:[#allocation8 + $0x80] sm:$0xff]
    %v11047 = vld [vmem:[#allocation8 + $0x88] sm:$0xff]
    %v11048 = vld [vmem:[#allocation8 + $0x90] sm:$0xff]
    %v11049 = vld [vmem:[#allocation8 + $0x98] sm:$0xff]
    %v11050 = vld [vmem:[#allocation8 + $0xa0] sm:$0xff]
    %v11051 = vld [vmem:[#allocation8 + $0xa8] sm:$0xff]
    %v11052 = vld [vmem:[#allocation8 + $0xb0] sm:$0xff]
    %v11053 = vld [vmem:[#allocation8 + $0xb8] sm:$0xff]
    %v11054 = vld [vmem:[#allocation8 + $0xc0] sm:$0xff]
    %v11055 = vld [vmem:[#allocation8 + $0xc8] sm:$0xff]
    %v11056 = vld [vmem:[#allocation8 + $0xd0] sm:$0xff]
    %v11057 = vld [vmem:[#allocation8 + $0xd8] sm:$0xff]
    %v11058 = vld [vmem:[#allocation8 + $0xe0] sm:$0xff]
    %v11059 = vld [vmem:[#allocation8 + $0xe8] sm:$0xff]
    %v11060 = vld [vmem:[#allocation8 + $0xf0] sm:$0xff]
    %v11061 = vld [vmem:[#allocation8 + $0xf8] sm:$0xff]
    %v11062 = vld [vmem:[%s14] sm:$0x3]
    %v11064 = vlaneseq
    %v11065 = vshrl.u32 %v11064, 7
    %v11066 = vsub.s32 0, %v11065
    %v11067 = vrot.slane %v11062, %v11066
    %v11068 = vlaneseq
    %v11069 = vshrl.u32 %v11068, 7
    %v11070 = vsub.s32 1, %v11069
    %v11071 = vrot.slane %v11062, %v11070
    %v11106 = vunpack.c.l.b16 %v11030
    %v11107 = vunpack.c.h.b16 %v11030
    %v11108 = vunpack.c.l.b16 %v11031
    %v11109 = vunpack.c.h.b16 %v11031
    %v11110 = vunpack.c.l.b16 %v11032
    %v11111 = vunpack.c.h.b16 %v11032
    %v11112 = vunpack.c.l.b16 %v11033
    %v11113 = vunpack.c.h.b16 %v11033
    %v11114 = vunpack.c.l.b16 %v11034
    %v11115 = vunpack.c.h.b16 %v11034
    %v11116 = vunpack.c.l.b16 %v11035
    %v11117 = vunpack.c.h.b16 %v11035
    %v11118 = vunpack.c.l.b16 %v11036
    %v11119 = vunpack.c.h.b16 %v11036
    %v11120 = vunpack.c.l.b16 %v11037
    %v11121 = vunpack.c.h.b16 %v11037
    %v11122 = vunpack.c.l.b16 %v11038
    %v11123 = vunpack.c.h.b16 %v11038
    %v11124 = vunpack.c.l.b16 %v11039
    %v11125 = vunpack.c.h.b16 %v11039
    %v11126 = vunpack.c.l.b16 %v11040
    %v11127 = vunpack.c.h.b16 %v11040
    %v11128 = vunpack.c.l.b16 %v11041
    %v11129 = vunpack.c.h.b16 %v11041
    %v11130 = vunpack.c.l.b16 %v11042
    %v11131 = vunpack.c.h.b16 %v11042
    %v11132 = vunpack.c.l.b16 %v11043
    %v11133 = vunpack.c.h.b16 %v11043
    %v11134 = vunpack.c.l.b16 %v11044
    %v11135 = vunpack.c.h.b16 %v11044
    %v11136 = vunpack.c.l.b16 %v11045
    %v11137 = vunpack.c.h.b16 %v11045
    %v11138 = vunpack.c.l.b16 %v11046
    %v11139 = vunpack.c.h.b16 %v11046
    %v11140 = vunpack.c.l.b16 %v11047
    %v11141 = vunpack.c.h.b16 %v11047
    %v11142 = vunpack.c.l.b16 %v11048
    %v11143 = vunpack.c.h.b16 %v11048
    %v11144 = vunpack.c.l.b16 %v11049
    %v11145 = vunpack.c.h.b16 %v11049
    %v11146 = vunpack.c.l.b16 %v11050
    %v11147 = vunpack.c.h.b16 %v11050
    %v11148 = vunpack.c.l.b16 %v11051
    %v11149 = vunpack.c.h.b16 %v11051
    %v11150 = vunpack.c.l.b16 %v11052
    %v11151 = vunpack.c.h.b16 %v11052
    %v11152 = vunpack.c.l.b16 %v11053
    %v11153 = vunpack.c.h.b16 %v11053
    %v11154 = vunpack.c.l.b16 %v11054
    %v11155 = vunpack.c.h.b16 %v11054
    %v11156 = vunpack.c.l.b16 %v11055
    %v11157 = vunpack.c.h.b16 %v11055
    %v11158 = vunpack.c.l.b16 %v11056
    %v11159 = vunpack.c.h.b16 %v11056
    %v11160 = vunpack.c.l.b16 %v11057
    %v11161 = vunpack.c.h.b16 %v11057
    %v11162 = vunpack.c.l.b16 %v11058
    %v11163 = vunpack.c.h.b16 %v11058
    %v11164 = vunpack.c.l.b16 %v11059
    %v11165 = vunpack.c.h.b16 %v11059
    %v11166 = vunpack.c.l.b16 %v11060
    %v11167 = vunpack.c.h.b16 %v11060
    %v11168 = vunpack.c.l.b16 %v11061
    %v11169 = vunpack.c.h.b16 %v11061
    %v11170 = vpack.c.b16 %v11108, %v11106
    %v11171 = vpack.c.b16 %v11109, %v11107
    %v11172 = vpack.c.b16 %v11112, %v11110
    %v11173 = vpack.c.b16 %v11113, %v11111
    %v11174 = vpack.c.b16 %v11116, %v11114
    %v11175 = vpack.c.b16 %v11117, %v11115
    %v11176 = vpack.c.b16 %v11120, %v11118
    %v11177 = vpack.c.b16 %v11121, %v11119
    %v11178 = vpack.c.b16 %v11124, %v11122
    %v11179 = vpack.c.b16 %v11125, %v11123
    %v11180 = vpack.c.b16 %v11128, %v11126
    %v11181 = vpack.c.b16 %v11129, %v11127
    %v11182 = vpack.c.b16 %v11132, %v11130
    %v11183 = vpack.c.b16 %v11133, %v11131
    %v11184 = vpack.c.b16 %v11136, %v11134
    %v11185 = vpack.c.b16 %v11137, %v11135
    %v11186 = vpack.c.b16 %v11140, %v11138
    %v11187 = vpack.c.b16 %v11141, %v11139
    %v11188 = vpack.c.b16 %v11144, %v11142
    %v11189 = vpack.c.b16 %v11145, %v11143
    %v11190 = vpack.c.b16 %v11148, %v11146
    %v11191 = vpack.c.b16 %v11149, %v11147
    %v11192 = vpack.c.b16 %v11152, %v11150
    %v11193 = vpack.c.b16 %v11153, %v11151
    %v11194 = vpack.c.b16 %v11156, %v11154
    %v11195 = vpack.c.b16 %v11157, %v11155
    %v11196 = vpack.c.b16 %v11160, %v11158
    %v11197 = vpack.c.b16 %v11161, %v11159
    %v11198 = vpack.c.b16 %v11164, %v11162
    %v11199 = vpack.c.b16 %v11165, %v11163
    %v11200 = vpack.c.b16 %v11168, %v11166
    %v11201 = vpack.c.b16 %v11169, %v11167
    %11234 = vmatprep.subr.bf16.mxu0 %v11171
    %11235 = vmatpush1.bf16.msra.mxu0 %v11170
    %11236 = vmatprep.subr.bf16.mxu0 %v11173
    %11237 = vmatpush1.bf16.msra.mxu0 %v11172
    %11238 = vmatprep.subr.bf16.mxu0 %v11175
    %11239 = vmatpush1.bf16.msra.mxu0 %v11174
    %11240 = vmatprep.subr.bf16.mxu0 %v11177
    %11241 = vmatpush1.bf16.msra.mxu0 %v11176
    %11242 = vmatprep.subr.bf16.mxu0 %v11179
    %11243 = vmatpush1.bf16.msra.mxu0 %v11178
    %11244 = vmatprep.subr.bf16.mxu0 %v11181
    %11245 = vmatpush1.bf16.msra.mxu0 %v11180
    %11246 = vmatprep.subr.bf16.mxu0 %v11183
    %11247 = vmatpush1.bf16.msra.mxu0 %v11182
    %11248 = vmatprep.subr.bf16.mxu0 %v11185
    %11249 = vmatpush1.bf16.msra.mxu0 %v11184
    %11250 = vmatprep.subr.bf16.mxu0 %v11187
    %11251 = vmatpush1.bf16.msra.mxu0 %v11186
    %11252 = vmatprep.subr.bf16.mxu0 %v11189
    %11253 = vmatpush1.bf16.msra.mxu0 %v11188
    %11254 = vmatprep.subr.bf16.mxu0 %v11191
    %11255 = vmatpush1.bf16.msra.mxu0 %v11190
    %11256 = vmatprep.subr.bf16.mxu0 %v11193
    %11257 = vmatpush1.bf16.msra.mxu0 %v11192
    %11258 = vmatprep.subr.bf16.mxu0 %v11195
    %11259 = vmatpush1.bf16.msra.mxu0 %v11194
    %11260 = vmatprep.subr.bf16.mxu0 %v11197
    %11261 = vmatpush1.bf16.msra.mxu0 %v11196
    %11262 = vmatprep.subr.bf16.mxu0 %v11199
    %11263 = vmatpush1.bf16.msra.mxu0 %v11198
    %11264 = vmatprep.subr.bf16.mxu0 %v11201
    %11265 = vmatpush1.bf16.msra.mxu0 %v11200
    %11266 = vmatprep.mubr.bf16.mxu0 %v11029
    %11267 = vmatmul.mubr.bf16.gmra.mrb[0].mxu0 %v11028
    %v11268 = vpop.f32.mrb[0].mxu0
    %v11269 = vadd.f32 %v11067, %v11268
    %v11270 = vpop.f32.mrb[0].mxu0
    %v11271 = vadd.f32 %v11071, %v11270
    %v11272 = vpop.f32.mrb[0].mxu0
    %v11273 = vpop.f32.mrb[0].mxu0
    %11274 = vdwg.mxu0
    %11275 = vst [vmem:[#allocation10] sm:$0xff] %v11269
    %11276 = vst [vmem:[#allocation10 + $0x8] sm:$0xff] %v11271
    // Predicated region
    $region78: #{tpu_custom_call.1} parent=1 // pred_check
      _
    $region79: #{tpu_custom_call.1} parent=1 // pred_check_branch
      %11278 = sbr.rel (0) target = $region81
    $region80: #{tpu_custom_call.1} parent=1 // pred_region
      %s11280 = ssub.s32 256, 256
      %11281 = vsyncadd [#allocation4], %s11280
      %s11283 = sshll.u32 [#allocation10], 4
      %s11284 = int_to_ptr.vmem [resolvable:$true] %s11283
      %11286 = dma.vmem_to_hbm [thread:$0]  %s11284, 256, %s15, [#allocation4]
    $region81: #{tpu_custom_call.1} parent=1 // pred_fallthru
      _
    // Predicated region
    $region82: #{tpu_custom_call.1} parent=1 // pred_check
      _
    $region83: #{tpu_custom_call.1} parent=1 // pred_check_branch
      %11288 = sbr.rel (0) target = $region85
    $region84: #{tpu_custom_call.1} parent=1 // pred_region
      %11289 = dma.done [#allocation4], 256
    $region85: #{tpu_custom_call.1} parent=1 // pred_fallthru
      _
    %11290 = vsyncpa [#allocation3], 1
    %11291 = vsyncpa [#allocation6], 1
    %11292 = vsyncpa [#allocation9], 1
    %11293 = vsyncpa [#allocation4], 1

</llo_original>
